<compile_context>
chip_gen: v7x
topology: tpu7x:2x2x1
jax: 0.10.0
libtpu: 0.0.40
codegen_flags: <defaults>
</compile_context>

<pallas_src>
import functools

import jax
import jax.numpy as jnp
from jax.experimental import pallas as pl
from jax.experimental.pallas import tpu as pltpu


def _expand_ln_kernel(x_ref, w_ref, g_ref, b_ref, o_ref, *, dim, eps, tile_h,
                      spatial_w, matmul_dtype):
    # x block: (1, tile_h*W, dim); w: (4, dim, 4*dim) resident; g/b: (1, 4*dim) f32.
    x = x_ref[0]                                   # (tokens, dim)
    if x.dtype != matmul_dtype:
        x = x.astype(matmul_dtype)                 # cheap VPU cast, keeps DMA in x.dtype

    g4 = g_ref[...]                                # (1, 4*dim) f32, loaded once
    b4 = b_ref[...]                                # (1, 4*dim) f32, loaded once

    for p1 in range(4):
        # Per-p1 slab: lanes [p1*4*dim, (p1+1)*4*dim) of the expanded features,
        # laid out as (p2, c) so it is exactly the NHWC row group for spatial p1.
        y = jnp.dot(x, w_ref[p1], preferred_element_type=jnp.float32)  # (tokens, 4*dim) f32

        parts = []
        for p2 in range(4):                        # 4 sub-pixel LayerNorms (static lane slices)
            seg = y[:, p2 * dim:(p2 + 1) * dim]    # (tokens, dim)
            mu = jnp.mean(seg, axis=-1, keepdims=True)
            d = seg - mu
            var = jnp.mean(d * d, axis=-1, keepdims=True)      # biased variance
            parts.append(d * jax.lax.rsqrt(var + eps))
        # One full-lane-width affine + ONE unmasked, lane-dense store per p1:
        # out[b, h, p1, w, p2*dim + c]  ==  NHWC (b, 4h+p1, 4w+p2, c).
        o = jnp.concatenate(parts, axis=-1) * g4 + b4           # (tokens, 4*dim) f32
        o_ref[0, :, p1, :, :] = o.astype(o_ref.dtype).reshape(
            tile_h, spatial_w, 4 * dim)


def _vmem_budget_bytes():
    """<= 3/4 of physical VMEM: ~48 MiB on v7x, ~96 MiB on v5e/v6e."""
    cap = 64 * 2**20                               # conservative fallback (v7x per-TC)
    try:
        info = pltpu.get_tpu_info()
        cap = int(getattr(info, "vmem_capacity_bytes", cap))
    except Exception:
        pass
    return min((cap * 3) // 4, 96 * 2**20)


def _pick_tile_h(B, H, W, dim, x_bytes, w_bytes, out_bytes, budget, max_tokens):
    """Largest row-tile th | H whose footprint fits the VMEM budget (and >=2 grid steps)."""
    def need(th):
        tokens = th * W
        return (2 * tokens * dim * x_bytes            # double-buffered x tile
                + 2 * 16 * dim * dim * w_bytes        # weight (worst case 2 copies)
                + 2 * tokens * 16 * dim * out_bytes   # double-buffered out tile
                + 6 * tokens * 4 * dim * 4            # live f32 per-p1 intermediates
                + (2 << 20))                          # Mosaic internal scratch slack

    # (8,128) rule: token-block must be 8-aligned (or the full L). If W % 8 != 0 the
    # in-kernel (tokens, 4*dim)->(tile_h, W, 4*dim) reshape pays a relayout copy but
    # stays correct.
    legal = [th for th in range(1, H + 1)
             if H % th == 0 and ((th * W) % 8 == 0 or th == H)]

    def fits(th):
        return th * W <= max_tokens and need(th) <= budget

    # Prefer tiles that leave >= 2 parallel grid steps (feed both v7x TensorCores).
    pref = [th for th in legal if fits(th) and B * (H // th) >= 2]
    if pref:
        th = max(pref)
    else:
        fitting = [th for th in legal if fits(th)]
        th = max(fitting) if fitting else min(legal, key=need)
    return th, need(th)


def final_patch_expand_x4(x, w_expand, gamma, beta, input_resolution, dim,
                          eps=1e-5, output_nchw=True, matmul_dtype=None,
                          out_dtype=None, max_tokens_per_tile=2048):
    """x: (B, L, dim); w_expand: (dim, 16*dim) (= nn.Linear weight.T); gamma/beta: (dim,).

    Returns (B, dim, 4H, 4W) NCHW (matching the PyTorch module) by default, or
    (B, 4H, 4W, dim) NHWC if output_nchw=False.  matmul_dtype=jnp.bfloat16 enables the
    native-MXU fast path; out_dtype lets downstream take bf16 output to halve HBM writes.
    """
    B, L, C = x.shape
    H, W = input_resolution
    assert L == H * W, "input feature has wrong size"
    assert C == dim
    assert w_expand.shape == (dim, 16 * dim)

    if matmul_dtype is None:
        matmul_dtype = x.dtype
    if out_dtype is None:
        out_dtype = x.dtype

    # Weight laid out per p1 slot: w4[p1] = w_expand[:, p1*4*dim:(p1+1)*4*dim].
    w4 = jnp.transpose(w_expand.reshape(dim, 4, 4 * dim), (1, 0, 2)).astype(matmul_dtype)
    # gamma/beta tiled to the full 4*dim lane width (index p2*dim + c -> gamma[c]).
    g4 = jnp.tile(gamma.astype(jnp.float32), 4).reshape(1, 4 * dim)
    b4 = jnp.tile(beta.astype(jnp.float32), 4).reshape(1, 4 * dim)

    x_bytes = jnp.dtype(x.dtype).itemsize
    w_bytes = jnp.dtype(w4.dtype).itemsize
    o_bytes = jnp.dtype(out_dtype).itemsize

    budget = _vmem_budget_bytes()
    tile_h, need = _pick_tile_h(B, H, W, dim, x_bytes, w_bytes, o_bytes,
                                budget, max_tokens_per_tile)
    tokens = tile_h * W
    grid = (B, H // tile_h)
    vmem_limit = int(min(budget, max(need, 16 * 2**20)))

    N = B * L
    cost = pl.CostEstimate(
        flops=2 * N * dim * 16 * dim + 10 * N * 16 * dim,
        transcendentals=N * 16,
        bytes_accessed=(N * dim * x_bytes + 16 * dim * dim * w_bytes
                        + N * 16 * dim * o_bytes))

    kernel = functools.partial(_expand_ln_kernel, dim=dim, eps=eps,
                               tile_h=tile_h, spatial_w=W,
                               matmul_dtype=matmul_dtype)

    def _call(single_buffer_consts):
        const_kw = ({"pipeline_mode": pl.Buffered(1)}
                    if single_buffer_consts else {})
        return pl.pallas_call(
            kernel,
            # (B, H, 4, W, 4*dim) is a contiguous view of NHWC (B, 4H, 4W, dim).
            out_shape=jax.ShapeDtypeStruct((B, H, 4, W, 4 * dim), out_dtype),
            grid_spec=pltpu.PrefetchScalarGridSpec(
                num_scalar_prefetch=0,
                grid=grid,
                in_specs=[
                    pl.BlockSpec((1, tokens, dim), lambda b, i: (b, i, 0)),   # x rows
                    pl.BlockSpec((4, dim, 4 * dim), lambda b, i: (0, 0, 0),   # weight
                                 **const_kw),
                    pl.BlockSpec((1, 4 * dim), lambda b, i: (0, 0), **const_kw),  # gamma
                    pl.BlockSpec((1, 4 * dim), lambda b, i: (0, 0), **const_kw),  # beta
                ],
                out_specs=pl.BlockSpec((1, tile_h, 4, W, 4 * dim),
                                       lambda b, i: (b, i, 0, 0, 0)),
            ),
            compiler_params=pltpu.CompilerParams(
                dimension_semantics=("parallel", "parallel"),
                vmem_limit_bytes=vmem_limit),
            cost_estimate=cost,
        )(x, w4, g4, b4)

    try:
        out = _call(True)    # single-buffer the grid-invariant weight / gamma / beta
    except Exception:
        out = _call(False)   # fallback if pl.Buffered(1) is unsupported on this jax

    # Free contiguous reshape: (B, H, 4, W, 4, dim) == (B, 4H, 4W, dim) NHWC.
    y = out.reshape(B, 4 * H, 4 * W, dim)
    if output_nchw:
        # TODO(synk): one XLA transpose to channel-first (matches the PyTorch module);
        # NHWC consumers should pass output_nchw=False and skip this HBM pass.
        y = jnp.transpose(y, (0, 3, 1, 2))
    return y


def _reference(x, w_expand, gamma, beta, input_resolution, dim, eps=1e-5):
    """Pure-JAX reference mirroring the PyTorch forward; returns NHWC (B, 4H, 4W, dim)."""
    B, L, _ = x.shape
    H, W = input_resolution
    y = x @ w_expand                                  # (B, L, 16*dim)
    y = y.reshape(B, H, W, 4, 4, dim)                 # (p1 p2 c) split
    y = jnp.transpose(y, (0, 1, 3, 2, 4, 5)).reshape(B, 4 * H, 4 * W, dim)
    mean = jnp.mean(y, axis=-1, keepdims=True)
    var = jnp.mean(jnp.square(y - mean), axis=-1, keepdims=True)
    return (y - mean) * jax.lax.rsqrt(var + eps) * gamma + beta


if __name__ == "__main__":
    # Small, deterministic setup: dim=32, input_resolution=(8, 8), B=2.
    B, H, W, dim = 2, 8, 8, 32
    L = H * W

    key = jax.random.PRNGKey(0)
    kx, kw, kg, kb = jax.random.split(key, 4)
    x = jax.random.normal(kx, (B, L, dim), dtype=jnp.float32)
    w_expand = 0.02 * jax.random.normal(kw, (dim, 16 * dim), dtype=jnp.float32)
    gamma = 1.0 + 0.1 * jax.random.normal(kg, (dim,), dtype=jnp.float32)
    beta = 0.1 * jax.random.normal(kb, (dim,), dtype=jnp.float32)

    # 1) f32 path, NCHW output (matches the PyTorch module), tight tolerance.
    out = final_patch_expand_x4(x, w_expand, gamma, beta, (H, W), dim)
    out = jax.block_until_ready(out)
    ref_nhwc = _reference(x, w_expand, gamma, beta, (H, W), dim)
    ref_nchw = jnp.transpose(ref_nhwc, (0, 3, 1, 2))
    assert out.shape == (B, dim, 4 * H, 4 * W), out.shape
    assert jnp.allclose(out, ref_nchw, atol=1e-4, rtol=1e-4), (
        float(jnp.max(jnp.abs(out - ref_nchw))))

    # 2) bf16 MXU fast path, NHWC output; compare against a bf16-operand reference.
    out2 = final_patch_expand_x4(x, w_expand, gamma, beta, (H, W), dim,
                                 matmul_dtype=jnp.bfloat16, output_nchw=False)
    out2 = jax.block_until_ready(out2)
    xb = x.astype(jnp.bfloat16).astype(jnp.float32)
    wb = w_expand.astype(jnp.bfloat16).astype(jnp.float32)
    ref2 = _reference(xb, wb, gamma, beta, (H, W), dim)
    assert out2.shape == (B, 4 * H, 4 * W, dim), out2.shape
    assert jnp.allclose(out2, ref2, atol=2e-3, rtol=2e-3), (
        float(jnp.max(jnp.abs(out2 - ref2))))

    print("KERNEL_OK")
</pallas_src>

<mosaic_0001>
module attributes {stable_mosaic.version = 11 : i64} {
  func.func @_expand_ln_kernel(%arg0: i32, %arg1: i32, %arg2: memref<1x64x32xf32, #tpu.memory_space<vmem>>, %arg3: memref<4x32x128xf32, #tpu.memory_space<vmem>>, %arg4: memref<1x128xf32, #tpu.memory_space<vmem>>, %arg5: memref<1x128xf32, #tpu.memory_space<vmem>>, %arg6: memref<1x8x4x8x128xf32, #tpu.memory_space<vmem>>) attributes {dimension_semantics = [#tpu.dimension_semantics<parallel>, #tpu.dimension_semantics<parallel>], iteration_bounds = array<i64: 2, 1>, scalar_prefetch = 0 : i64, scratch_operands = 0 : i64, tpu.core_type = #tpu.core_type<tc>, window_params = [{transform_indices = @transform_0, window_bounds = array<i64: 1, 64, 32>}, {pipeline_mode = #tpu.pipeline_mode<synchronous>, transform_indices = @transform_1, window_bounds = array<i64: 4, 32, 128>}, {pipeline_mode = #tpu.pipeline_mode<synchronous>, transform_indices = @transform_2, window_bounds = array<i64: 1, 128>}, {pipeline_mode = #tpu.pipeline_mode<synchronous>, transform_indices = @transform_3, window_bounds = array<i64: 1, 128>}, {transform_indices = @transform_4, window_bounds = array<i64: 1, 8, 4, 8, 128>}]} {
    %c0 = arith.constant 0 : index
    %c0_0 = arith.constant 0 : index
    %c0_1 = arith.constant 0 : index
    %0 = vector.load %arg2[%c0, %c0_0, %c0_1] : memref<1x64x32xf32, #tpu.memory_space<vmem>>, vector<1x64x32xf32>
    %1 = vector.shape_cast %0 : vector<1x64x32xf32> to vector<64x32xf32>
    %c0_2 = arith.constant 0 : index
    %c0_3 = arith.constant 0 : index
    %2 = vector.load %arg4[%c0_2, %c0_3] : memref<1x128xf32, #tpu.memory_space<vmem>>, vector<1x128xf32>
    %c0_4 = arith.constant 0 : index
    %c0_5 = arith.constant 0 : index
    %3 = vector.load %arg5[%c0_4, %c0_5] : memref<1x128xf32, #tpu.memory_space<vmem>>, vector<1x128xf32>
    %c0_6 = arith.constant 0 : index
    %c0_7 = arith.constant 0 : index
    %c0_8 = arith.constant 0 : index
    %4 = vector.load %arg3[%c0_6, %c0_7, %c0_8] : memref<4x32x128xf32, #tpu.memory_space<vmem>>, vector<1x32x128xf32>
    %5 = vector.shape_cast %4 : vector<1x32x128xf32> to vector<32x128xf32>
    %cst = arith.constant dense<0.000000e+00> : vector<64x128xf32>
    %6 = tpu.matmul %1, %5, %cst {dimension_numbers = #tpu.dot_dimension_numbers<[1], [0], [0], [1], [0, 0, 1, 1], [], []>} : vector<64x32xf32>, vector<32x128xf32>, vector<64x128xf32> -> vector<64x128xf32>
    %7 = vector.extract_strided_slice %6 {offsets = [0, 0], sizes = [64, 32], strides = [1, 1]} : vector<64x128xf32> to vector<64x32xf32>
    %cst_9 = arith.constant dense<0.000000e+00> : vector<64xf32>
    %8 = vector.multi_reduction <add>, %7, %cst_9 [1] : vector<64x32xf32> to vector<64xf32>
    %9 = vector.shape_cast %8 : vector<64xf32> to vector<64x1xf32>
    %cst_10 = arith.constant 3.200000e+01 : f32
    %10 = vector.broadcast %cst_10 : f32 to vector<64x1xf32>
    %11 = arith.divf %9, %10 : vector<64x1xf32>
    %12 = vector.broadcast %11 : vector<64x1xf32> to vector<64x32xf32>
    %13 = arith.subf %7, %12 : vector<64x32xf32>
    %14 = arith.mulf %13, %13 : vector<64x32xf32>
    %cst_11 = arith.constant dense<0.000000e+00> : vector<64xf32>
    %15 = vector.multi_reduction <add>, %14, %cst_11 [1] : vector<64x32xf32> to vector<64xf32>
    %16 = vector.shape_cast %15 : vector<64xf32> to vector<64x1xf32>
    %cst_12 = arith.constant 3.200000e+01 : f32
    %17 = vector.broadcast %cst_12 : f32 to vector<64x1xf32>
    %18 = arith.divf %16, %17 : vector<64x1xf32>
    %cst_13 = arith.constant 9.99999974E-6 : f32
    %19 = vector.broadcast %cst_13 : f32 to vector<64x1xf32>
    %20 = arith.addf %18, %19 : vector<64x1xf32>
    %21 = math.rsqrt %20 : vector<64x1xf32>
    %22 = vector.broadcast %21 : vector<64x1xf32> to vector<64x32xf32>
    %23 = arith.mulf %13, %22 : vector<64x32xf32>
    %24 = vector.extract_strided_slice %6 {offsets = [0, 32], sizes = [64, 32], strides = [1, 1]} : vector<64x128xf32> to vector<64x32xf32>
    %cst_14 = arith.constant dense<0.000000e+00> : vector<64xf32>
    %25 = vector.multi_reduction <add>, %24, %cst_14 [1] : vector<64x32xf32> to vector<64xf32>
    %26 = vector.shape_cast %25 : vector<64xf32> to vector<64x1xf32>
    %cst_15 = arith.constant 3.200000e+01 : f32
    %27 = vector.broadcast %cst_15 : f32 to vector<64x1xf32>
    %28 = arith.divf %26, %27 : vector<64x1xf32>
    %29 = vector.broadcast %28 : vector<64x1xf32> to vector<64x32xf32>
    %30 = arith.subf %24, %29 : vector<64x32xf32>
    %31 = arith.mulf %30, %30 : vector<64x32xf32>
    %cst_16 = arith.constant dense<0.000000e+00> : vector<64xf32>
    %32 = vector.multi_reduction <add>, %31, %cst_16 [1] : vector<64x32xf32> to vector<64xf32>
    %33 = vector.shape_cast %32 : vector<64xf32> to vector<64x1xf32>
    %cst_17 = arith.constant 3.200000e+01 : f32
    %34 = vector.broadcast %cst_17 : f32 to vector<64x1xf32>
    %35 = arith.divf %33, %34 : vector<64x1xf32>
    %cst_18 = arith.constant 9.99999974E-6 : f32
    %36 = vector.broadcast %cst_18 : f32 to vector<64x1xf32>
    %37 = arith.addf %35, %36 : vector<64x1xf32>
    %38 = math.rsqrt %37 : vector<64x1xf32>
    %39 = vector.broadcast %38 : vector<64x1xf32> to vector<64x32xf32>
    %40 = arith.mulf %30, %39 : vector<64x32xf32>
    %41 = vector.extract_strided_slice %6 {offsets = [0, 64], sizes = [64, 32], strides = [1, 1]} : vector<64x128xf32> to vector<64x32xf32>
    %cst_19 = arith.constant dense<0.000000e+00> : vector<64xf32>
    %42 = vector.multi_reduction <add>, %41, %cst_19 [1] : vector<64x32xf32> to vector<64xf32>
    %43 = vector.shape_cast %42 : vector<64xf32> to vector<64x1xf32>
    %cst_20 = arith.constant 3.200000e+01 : f32
    %44 = vector.broadcast %cst_20 : f32 to vector<64x1xf32>
    %45 = arith.divf %43, %44 : vector<64x1xf32>
    %46 = vector.broadcast %45 : vector<64x1xf32> to vector<64x32xf32>
    %47 = arith.subf %41, %46 : vector<64x32xf32>
    %48 = arith.mulf %47, %47 : vector<64x32xf32>
    %cst_21 = arith.constant dense<0.000000e+00> : vector<64xf32>
    %49 = vector.multi_reduction <add>, %48, %cst_21 [1] : vector<64x32xf32> to vector<64xf32>
    %50 = vector.shape_cast %49 : vector<64xf32> to vector<64x1xf32>
    %cst_22 = arith.constant 3.200000e+01 : f32
    %51 = vector.broadcast %cst_22 : f32 to vector<64x1xf32>
    %52 = arith.divf %50, %51 : vector<64x1xf32>
    %cst_23 = arith.constant 9.99999974E-6 : f32
    %53 = vector.broadcast %cst_23 : f32 to vector<64x1xf32>
    %54 = arith.addf %52, %53 : vector<64x1xf32>
    %55 = math.rsqrt %54 : vector<64x1xf32>
    %56 = vector.broadcast %55 : vector<64x1xf32> to vector<64x32xf32>
    %57 = arith.mulf %47, %56 : vector<64x32xf32>
    %58 = vector.extract_strided_slice %6 {offsets = [0, 96], sizes = [64, 32], strides = [1, 1]} : vector<64x128xf32> to vector<64x32xf32>
    %cst_24 = arith.constant dense<0.000000e+00> : vector<64xf32>
    %59 = vector.multi_reduction <add>, %58, %cst_24 [1] : vector<64x32xf32> to vector<64xf32>
    %60 = vector.shape_cast %59 : vector<64xf32> to vector<64x1xf32>
    %cst_25 = arith.constant 3.200000e+01 : f32
    %61 = vector.broadcast %cst_25 : f32 to vector<64x1xf32>
    %62 = arith.divf %60, %61 : vector<64x1xf32>
    %63 = vector.broadcast %62 : vector<64x1xf32> to vector<64x32xf32>
    %64 = arith.subf %58, %63 : vector<64x32xf32>
    %65 = arith.mulf %64, %64 : vector<64x32xf32>
    %cst_26 = arith.constant dense<0.000000e+00> : vector<64xf32>
    %66 = vector.multi_reduction <add>, %65, %cst_26 [1] : vector<64x32xf32> to vector<64xf32>
    %67 = vector.shape_cast %66 : vector<64xf32> to vector<64x1xf32>
    %cst_27 = arith.constant 3.200000e+01 : f32
    %68 = vector.broadcast %cst_27 : f32 to vector<64x1xf32>
    %69 = arith.divf %67, %68 : vector<64x1xf32>
    %cst_28 = arith.constant 9.99999974E-6 : f32
    %70 = vector.broadcast %cst_28 : f32 to vector<64x1xf32>
    %71 = arith.addf %69, %70 : vector<64x1xf32>
    %72 = math.rsqrt %71 : vector<64x1xf32>
    %73 = vector.broadcast %72 : vector<64x1xf32> to vector<64x32xf32>
    %74 = arith.mulf %64, %73 : vector<64x32xf32>
    %75 = tpu.concatenate %23, %40, %57, %74 in 1 : vector<64x32xf32>, vector<64x32xf32>, vector<64x32xf32>, vector<64x32xf32> -> vector<64x128xf32>
    %76 = vector.broadcast %2 : vector<1x128xf32> to vector<64x128xf32>
    %77 = arith.mulf %75, %76 : vector<64x128xf32>
    %78 = vector.broadcast %3 : vector<1x128xf32> to vector<64x128xf32>
    %79 = arith.addf %77, %78 : vector<64x128xf32>
    %80 = vector.shape_cast %79 : vector<64x128xf32> to vector<8x8x128xf32>
    %c0_29 = arith.constant 0 : index
    %c0_30 = arith.constant 0 : index
    %c0_31 = arith.constant 0 : index
    %c0_32 = arith.constant 0 : index
    %c0_33 = arith.constant 0 : index
    %81 = vector.load %arg6[%c0_29, %c0_30, %c0_31, %c0_32, %c0_33] : memref<1x8x4x8x128xf32, #tpu.memory_space<vmem>>, vector<1x8x1x8x128xf32>
    %82 = vector.shape_cast %81 : vector<1x8x1x8x128xf32> to vector<8x8x128xf32>
    %83 = vector.shape_cast %80 : vector<8x8x128xf32> to vector<1x8x1x8x128xf32>
    tpu.vector_store %arg6[%c0_29, %c0_30, %c0_31, %c0_32, %c0_33], %83 {strides = array<i32>} : memref<1x8x4x8x128xf32, #tpu.memory_space<vmem>>, vector<1x8x1x8x128xf32>,
    %c1 = arith.constant 1 : index
    %c0_34 = arith.constant 0 : index
    %c0_35 = arith.constant 0 : index
    %84 = vector.load %arg3[%c1, %c0_34, %c0_35] : memref<4x32x128xf32, #tpu.memory_space<vmem>>, vector<1x32x128xf32>
    %85 = vector.shape_cast %84 : vector<1x32x128xf32> to vector<32x128xf32>
    %cst_36 = arith.constant dense<0.000000e+00> : vector<64x128xf32>
    %86 = tpu.matmul %1, %85, %cst_36 {dimension_numbers = #tpu.dot_dimension_numbers<[1], [0], [0], [1], [0, 0, 1, 1], [], []>} : vector<64x32xf32>, vector<32x128xf32>, vector<64x128xf32> -> vector<64x128xf32>
    %87 = vector.extract_strided_slice %86 {offsets = [0, 0], sizes = [64, 32], strides = [1, 1]} : vector<64x128xf32> to vector<64x32xf32>
    %cst_37 = arith.constant dense<0.000000e+00> : vector<64xf32>
    %88 = vector.multi_reduction <add>, %87, %cst_37 [1] : vector<64x32xf32> to vector<64xf32>
    %89 = vector.shape_cast %88 : vector<64xf32> to vector<64x1xf32>
    %cst_38 = arith.constant 3.200000e+01 : f32
    %90 = vector.broadcast %cst_38 : f32 to vector<64x1xf32>
    %91 = arith.divf %89, %90 : vector<64x1xf32>
    %92 = vector.broadcast %91 : vector<64x1xf32> to vector<64x32xf32>
    %93 = arith.subf %87, %92 : vector<64x32xf32>
    %94 = arith.mulf %93, %93 : vector<64x32xf32>
    %cst_39 = arith.constant dense<0.000000e+00> : vector<64xf32>
    %95 = vector.multi_reduction <add>, %94, %cst_39 [1] : vector<64x32xf32> to vector<64xf32>
    %96 = vector.shape_cast %95 : vector<64xf32> to vector<64x1xf32>
    %cst_40 = arith.constant 3.200000e+01 : f32
    %97 = vector.broadcast %cst_40 : f32 to vector<64x1xf32>
    %98 = arith.divf %96, %97 : vector<64x1xf32>
    %cst_41 = arith.constant 9.99999974E-6 : f32
    %99 = vector.broadcast %cst_41 : f32 to vector<64x1xf32>
    %100 = arith.addf %98, %99 : vector<64x1xf32>
    %101 = math.rsqrt %100 : vector<64x1xf32>
    %102 = vector.broadcast %101 : vector<64x1xf32> to vector<64x32xf32>
    %103 = arith.mulf %93, %102 : vector<64x32xf32>
    %104 = vector.extract_strided_slice %86 {offsets = [0, 32], sizes = [64, 32], strides = [1, 1]} : vector<64x128xf32> to vector<64x32xf32>
    %cst_42 = arith.constant dense<0.000000e+00> : vector<64xf32>
    %105 = vector.multi_reduction <add>, %104, %cst_42 [1] : vector<64x32xf32> to vector<64xf32>
    %106 = vector.shape_cast %105 : vector<64xf32> to vector<64x1xf32>
    %cst_43 = arith.constant 3.200000e+01 : f32
    %107 = vector.broadcast %cst_43 : f32 to vector<64x1xf32>
    %108 = arith.divf %106, %107 : vector<64x1xf32>
    %109 = vector.broadcast %108 : vector<64x1xf32> to vector<64x32xf32>
    %110 = arith.subf %104, %109 : vector<64x32xf32>
    %111 = arith.mulf %110, %110 : vector<64x32xf32>
    %cst_44 = arith.constant dense<0.000000e+00> : vector<64xf32>
    %112 = vector.multi_reduction <add>, %111, %cst_44 [1] : vector<64x32xf32> to vector<64xf32>
    %113 = vector.shape_cast %112 : vector<64xf32> to vector<64x1xf32>
    %cst_45 = arith.constant 3.200000e+01 : f32
    %114 = vector.broadcast %cst_45 : f32 to vector<64x1xf32>
    %115 = arith.divf %113, %114 : vector<64x1xf32>
    %cst_46 = arith.constant 9.99999974E-6 : f32
    %116 = vector.broadcast %cst_46 : f32 to vector<64x1xf32>
    %117 = arith.addf %115, %116 : vector<64x1xf32>
    %118 = math.rsqrt %117 : vector<64x1xf32>
    %119 = vector.broadcast %118 : vector<64x1xf32> to vector<64x32xf32>
    %120 = arith.mulf %110, %119 : vector<64x32xf32>
    %121 = vector.extract_strided_slice %86 {offsets = [0, 64], sizes = [64, 32], strides = [1, 1]} : vector<64x128xf32> to vector<64x32xf32>
    %cst_47 = arith.constant dense<0.000000e+00> : vector<64xf32>
    %122 = vector.multi_reduction <add>, %121, %cst_47 [1] : vector<64x32xf32> to vector<64xf32>
    %123 = vector.shape_cast %122 : vector<64xf32> to vector<64x1xf32>
    %cst_48 = arith.constant 3.200000e+01 : f32
    %124 = vector.broadcast %cst_48 : f32 to vector<64x1xf32>
    %125 = arith.divf %123, %124 : vector<64x1xf32>
    %126 = vector.broadcast %125 : vector<64x1xf32> to vector<64x32xf32>
    %127 = arith.subf %121, %126 : vector<64x32xf32>
    %128 = arith.mulf %127, %127 : vector<64x32xf32>
    %cst_49 = arith.constant dense<0.000000e+00> : vector<64xf32>
    %129 = vector.multi_reduction <add>, %128, %cst_49 [1] : vector<64x32xf32> to vector<64xf32>
    %130 = vector.shape_cast %129 : vector<64xf32> to vector<64x1xf32>
    %cst_50 = arith.constant 3.200000e+01 : f32
    %131 = vector.broadcast %cst_50 : f32 to vector<64x1xf32>
    %132 = arith.divf %130, %131 : vector<64x1xf32>
    %cst_51 = arith.constant 9.99999974E-6 : f32
    %133 = vector.broadcast %cst_51 : f32 to vector<64x1xf32>
    %134 = arith.addf %132, %133 : vector<64x1xf32>
    %135 = math.rsqrt %134 : vector<64x1xf32>
    %136 = vector.broadcast %135 : vector<64x1xf32> to vector<64x32xf32>
    %137 = arith.mulf %127, %136 : vector<64x32xf32>
    %138 = vector.extract_strided_slice %86 {offsets = [0, 96], sizes = [64, 32], strides = [1, 1]} : vector<64x128xf32> to vector<64x32xf32>
    %cst_52 = arith.constant dense<0.000000e+00> : vector<64xf32>
    %139 = vector.multi_reduction <add>, %138, %cst_52 [1] : vector<64x32xf32> to vector<64xf32>
    %140 = vector.shape_cast %139 : vector<64xf32> to vector<64x1xf32>
    %cst_53 = arith.constant 3.200000e+01 : f32
    %141 = vector.broadcast %cst_53 : f32 to vector<64x1xf32>
    %142 = arith.divf %140, %141 : vector<64x1xf32>
    %143 = vector.broadcast %142 : vector<64x1xf32> to vector<64x32xf32>
    %144 = arith.subf %138, %143 : vector<64x32xf32>
    %145 = arith.mulf %144, %144 : vector<64x32xf32>
    %cst_54 = arith.constant dense<0.000000e+00> : vector<64xf32>
    %146 = vector.multi_reduction <add>, %145, %cst_54 [1] : vector<64x32xf32> to vector<64xf32>
    %147 = vector.shape_cast %146 : vector<64xf32> to vector<64x1xf32>
    %cst_55 = arith.constant 3.200000e+01 : f32
    %148 = vector.broadcast %cst_55 : f32 to vector<64x1xf32>
    %149 = arith.divf %147, %148 : vector<64x1xf32>
    %cst_56 = arith.constant 9.99999974E-6 : f32
    %150 = vector.broadcast %cst_56 : f32 to vector<64x1xf32>
    %151 = arith.addf %149, %150 : vector<64x1xf32>
    %152 = math.rsqrt %151 : vector<64x1xf32>
    %153 = vector.broadcast %152 : vector<64x1xf32> to vector<64x32xf32>
    %154 = arith.mulf %144, %153 : vector<64x32xf32>
    %155 = tpu.concatenate %103, %120, %137, %154 in 1 : vector<64x32xf32>, vector<64x32xf32>, vector<64x32xf32>, vector<64x32xf32> -> vector<64x128xf32>
    %156 = vector.broadcast %2 : vector<1x128xf32> to vector<64x128xf32>
    %157 = arith.mulf %155, %156 : vector<64x128xf32>
    %158 = vector.broadcast %3 : vector<1x128xf32> to vector<64x128xf32>
    %159 = arith.addf %157, %158 : vector<64x128xf32>
    %160 = vector.shape_cast %159 : vector<64x128xf32> to vector<8x8x128xf32>
    %c0_57 = arith.constant 0 : index
    %c0_58 = arith.constant 0 : index
    %c1_59 = arith.constant 1 : index
    %c0_60 = arith.constant 0 : index
    %c0_61 = arith.constant 0 : index
    %161 = vector.load %arg6[%c0_57, %c0_58, %c1_59, %c0_60, %c0_61] : memref<1x8x4x8x128xf32, #tpu.memory_space<vmem>>, vector<1x8x1x8x128xf32>
    %162 = vector.shape_cast %161 : vector<1x8x1x8x128xf32> to vector<8x8x128xf32>
    %163 = vector.shape_cast %160 : vector<8x8x128xf32> to vector<1x8x1x8x128xf32>
    tpu.vector_store %arg6[%c0_57, %c0_58, %c1_59, %c0_60, %c0_61], %163 {strides = array<i32>} : memref<1x8x4x8x128xf32, #tpu.memory_space<vmem>>, vector<1x8x1x8x128xf32>,
    %c2 = arith.constant 2 : index
    %c0_62 = arith.constant 0 : index
    %c0_63 = arith.constant 0 : index
    %164 = vector.load %arg3[%c2, %c0_62, %c0_63] : memref<4x32x128xf32, #tpu.memory_space<vmem>>, vector<1x32x128xf32>
    %165 = vector.shape_cast %164 : vector<1x32x128xf32> to vector<32x128xf32>
    %cst_64 = arith.constant dense<0.000000e+00> : vector<64x128xf32>
    %166 = tpu.matmul %1, %165, %cst_64 {dimension_numbers = #tpu.dot_dimension_numbers<[1], [0], [0], [1], [0, 0, 1, 1], [], []>} : vector<64x32xf32>, vector<32x128xf32>, vector<64x128xf32> -> vector<64x128xf32>
    %167 = vector.extract_strided_slice %166 {offsets = [0, 0], sizes = [64, 32], strides = [1, 1]} : vector<64x128xf32> to vector<64x32xf32>
    %cst_65 = arith.constant dense<0.000000e+00> : vector<64xf32>
    %168 = vector.multi_reduction <add>, %167, %cst_65 [1] : vector<64x32xf32> to vector<64xf32>
    %169 = vector.shape_cast %168 : vector<64xf32> to vector<64x1xf32>
    %cst_66 = arith.constant 3.200000e+01 : f32
    %170 = vector.broadcast %cst_66 : f32 to vector<64x1xf32>
    %171 = arith.divf %169, %170 : vector<64x1xf32>
    %172 = vector.broadcast %171 : vector<64x1xf32> to vector<64x32xf32>
    %173 = arith.subf %167, %172 : vector<64x32xf32>
    %174 = arith.mulf %173, %173 : vector<64x32xf32>
    %cst_67 = arith.constant dense<0.000000e+00> : vector<64xf32>
    %175 = vector.multi_reduction <add>, %174, %cst_67 [1] : vector<64x32xf32> to vector<64xf32>
    %176 = vector.shape_cast %175 : vector<64xf32> to vector<64x1xf32>
    %cst_68 = arith.constant 3.200000e+01 : f32
    %177 = vector.broadcast %cst_68 : f32 to vector<64x1xf32>
    %178 = arith.divf %176, %177 : vector<64x1xf32>
    %cst_69 = arith.constant 9.99999974E-6 : f32
    %179 = vector.broadcast %cst_69 : f32 to vector<64x1xf32>
    %180 = arith.addf %178, %179 : vector<64x1xf32>
    %181 = math.rsqrt %180 : vector<64x1xf32>
    %182 = vector.broadcast %181 : vector<64x1xf32> to vector<64x32xf32>
    %183 = arith.mulf %173, %182 : vector<64x32xf32>
    %184 = vector.extract_strided_slice %166 {offsets = [0, 32], sizes = [64, 32], strides = [1, 1]} : vector<64x128xf32> to vector<64x32xf32>
    %cst_70 = arith.constant dense<0.000000e+00> : vector<64xf32>
    %185 = vector.multi_reduction <add>, %184, %cst_70 [1] : vector<64x32xf32> to vector<64xf32>
    %186 = vector.shape_cast %185 : vector<64xf32> to vector<64x1xf32>
    %cst_71 = arith.constant 3.200000e+01 : f32
    %187 = vector.broadcast %cst_71 : f32 to vector<64x1xf32>
    %188 = arith.divf %186, %187 : vector<64x1xf32>
    %189 = vector.broadcast %188 : vector<64x1xf32> to vector<64x32xf32>
    %190 = arith.subf %184, %189 : vector<64x32xf32>
    %191 = arith.mulf %190, %190 : vector<64x32xf32>
    %cst_72 = arith.constant dense<0.000000e+00> : vector<64xf32>
    %192 = vector.multi_reduction <add>, %191, %cst_72 [1] : vector<64x32xf32> to vector<64xf32>
    %193 = vector.shape_cast %192 : vector<64xf32> to vector<64x1xf32>
    %cst_73 = arith.constant 3.200000e+01 : f32
    %194 = vector.broadcast %cst_73 : f32 to vector<64x1xf32>
    %195 = arith.divf %193, %194 : vector<64x1xf32>
    %cst_74 = arith.constant 9.99999974E-6 : f32
    %196 = vector.broadcast %cst_74 : f32 to vector<64x1xf32>
    %197 = arith.addf %195, %196 : vector<64x1xf32>
    %198 = math.rsqrt %197 : vector<64x1xf32>
    %199 = vector.broadcast %198 : vector<64x1xf32> to vector<64x32xf32>
    %200 = arith.mulf %190, %199 : vector<64x32xf32>
    %201 = vector.extract_strided_slice %166 {offsets = [0, 64], sizes = [64, 32], strides = [1, 1]} : vector<64x128xf32> to vector<64x32xf32>
    %cst_75 = arith.constant dense<0.000000e+00> : vector<64xf32>
    %202 = vector.multi_reduction <add>, %201, %cst_75 [1] : vector<64x32xf32> to vector<64xf32>
    %203 = vector.shape_cast %202 : vector<64xf32> to vector<64x1xf32>
    %cst_76 = arith.constant 3.200000e+01 : f32
    %204 = vector.broadcast %cst_76 : f32 to vector<64x1xf32>
    %205 = arith.divf %203, %204 : vector<64x1xf32>
    %206 = vector.broadcast %205 : vector<64x1xf32> to vector<64x32xf32>
    %207 = arith.subf %201, %206 : vector<64x32xf32>
    %208 = arith.mulf %207, %207 : vector<64x32xf32>
    %cst_77 = arith.constant dense<0.000000e+00> : vector<64xf32>
    %209 = vector.multi_reduction <add>, %208, %cst_77 [1] : vector<64x32xf32> to vector<64xf32>
    %210 = vector.shape_cast %209 : vector<64xf32> to vector<64x1xf32>
    %cst_78 = arith.constant 3.200000e+01 : f32
    %211 = vector.broadcast %cst_78 : f32 to vector<64x1xf32>
    %212 = arith.divf %210, %211 : vector<64x1xf32>
    %cst_79 = arith.constant 9.99999974E-6 : f32
    %213 = vector.broadcast %cst_79 : f32 to vector<64x1xf32>
    %214 = arith.addf %212, %213 : vector<64x1xf32>
    %215 = math.rsqrt %214 : vector<64x1xf32>
    %216 = vector.broadcast %215 : vector<64x1xf32> to vector<64x32xf32>
    %217 = arith.mulf %207, %216 : vector<64x32xf32>
    %218 = vector.extract_strided_slice %166 {offsets = [0, 96], sizes = [64, 32], strides = [1, 1]} : vector<64x128xf32> to vector<64x32xf32>
    %cst_80 = arith.constant dense<0.000000e+00> : vector<64xf32>
    %219 = vector.multi_reduction <add>, %218, %cst_80 [1] : vector<64x32xf32> to vector<64xf32>
    %220 = vector.shape_cast %219 : vector<64xf32> to vector<64x1xf32>
    %cst_81 = arith.constant 3.200000e+01 : f32
    %221 = vector.broadcast %cst_81 : f32 to vector<64x1xf32>
    %222 = arith.divf %220, %221 : vector<64x1xf32>
    %223 = vector.broadcast %222 : vector<64x1xf32> to vector<64x32xf32>
    %224 = arith.subf %218, %223 : vector<64x32xf32>
    %225 = arith.mulf %224, %224 : vector<64x32xf32>
    %cst_82 = arith.constant dense<0.000000e+00> : vector<64xf32>
    %226 = vector.multi_reduction <add>, %225, %cst_82 [1] : vector<64x32xf32> to vector<64xf32>
    %227 = vector.shape_cast %226 : vector<64xf32> to vector<64x1xf32>
    %cst_83 = arith.constant 3.200000e+01 : f32
    %228 = vector.broadcast %cst_83 : f32 to vector<64x1xf32>
    %229 = arith.divf %227, %228 : vector<64x1xf32>
    %cst_84 = arith.constant 9.99999974E-6 : f32
    %230 = vector.broadcast %cst_84 : f32 to vector<64x1xf32>
    %231 = arith.addf %229, %230 : vector<64x1xf32>
    %232 = math.rsqrt %231 : vector<64x1xf32>
    %233 = vector.broadcast %232 : vector<64x1xf32> to vector<64x32xf32>
    %234 = arith.mulf %224, %233 : vector<64x32xf32>
    %235 = tpu.concatenate %183, %200, %217, %234 in 1 : vector<64x32xf32>, vector<64x32xf32>, vector<64x32xf32>, vector<64x32xf32> -> vector<64x128xf32>
    %236 = vector.broadcast %2 : vector<1x128xf32> to vector<64x128xf32>
    %237 = arith.mulf %235, %236 : vector<64x128xf32>
    %238 = vector.broadcast %3 : vector<1x128xf32> to vector<64x128xf32>
    %239 = arith.addf %237, %238 : vector<64x128xf32>
    %240 = vector.shape_cast %239 : vector<64x128xf32> to vector<8x8x128xf32>
    %c0_85 = arith.constant 0 : index
    %c0_86 = arith.constant 0 : index
    %c2_87 = arith.constant 2 : index
    %c0_88 = arith.constant 0 : index
    %c0_89 = arith.constant 0 : index
    %241 = vector.load %arg6[%c0_85, %c0_86, %c2_87, %c0_88, %c0_89] : memref<1x8x4x8x128xf32, #tpu.memory_space<vmem>>, vector<1x8x1x8x128xf32>
    %242 = vector.shape_cast %241 : vector<1x8x1x8x128xf32> to vector<8x8x128xf32>
    %243 = vector.shape_cast %240 : vector<8x8x128xf32> to vector<1x8x1x8x128xf32>
    tpu.vector_store %arg6[%c0_85, %c0_86, %c2_87, %c0_88, %c0_89], %243 {strides = array<i32>} : memref<1x8x4x8x128xf32, #tpu.memory_space<vmem>>, vector<1x8x1x8x128xf32>,
    %c3 = arith.constant 3 : index
    %c0_90 = arith.constant 0 : index
    %c0_91 = arith.constant 0 : index
    %244 = vector.load %arg3[%c3, %c0_90, %c0_91] : memref<4x32x128xf32, #tpu.memory_space<vmem>>, vector<1x32x128xf32>
    %245 = vector.shape_cast %244 : vector<1x32x128xf32> to vector<32x128xf32>
    %cst_92 = arith.constant dense<0.000000e+00> : vector<64x128xf32>
    %246 = tpu.matmul %1, %245, %cst_92 {dimension_numbers = #tpu.dot_dimension_numbers<[1], [0], [0], [1], [0, 0, 1, 1], [], []>} : vector<64x32xf32>, vector<32x128xf32>, vector<64x128xf32> -> vector<64x128xf32>
    %247 = vector.extract_strided_slice %246 {offsets = [0, 0], sizes = [64, 32], strides = [1, 1]} : vector<64x128xf32> to vector<64x32xf32>
    %cst_93 = arith.constant dense<0.000000e+00> : vector<64xf32>
    %248 = vector.multi_reduction <add>, %247, %cst_93 [1] : vector<64x32xf32> to vector<64xf32>
    %249 = vector.shape_cast %248 : vector<64xf32> to vector<64x1xf32>
    %cst_94 = arith.constant 3.200000e+01 : f32
    %250 = vector.broadcast %cst_94 : f32 to vector<64x1xf32>
    %251 = arith.divf %249, %250 : vector<64x1xf32>
    %252 = vector.broadcast %251 : vector<64x1xf32> to vector<64x32xf32>
    %253 = arith.subf %247, %252 : vector<64x32xf32>
    %254 = arith.mulf %253, %253 : vector<64x32xf32>
    %cst_95 = arith.constant dense<0.000000e+00> : vector<64xf32>
    %255 = vector.multi_reduction <add>, %254, %cst_95 [1] : vector<64x32xf32> to vector<64xf32>
    %256 = vector.shape_cast %255 : vector<64xf32> to vector<64x1xf32>
    %cst_96 = arith.constant 3.200000e+01 : f32
    %257 = vector.broadcast %cst_96 : f32 to vector<64x1xf32>
    %258 = arith.divf %256, %257 : vector<64x1xf32>
    %cst_97 = arith.constant 9.99999974E-6 : f32
    %259 = vector.broadcast %cst_97 : f32 to vector<64x1xf32>
    %260 = arith.addf %258, %259 : vector<64x1xf32>
    %261 = math.rsqrt %260 : vector<64x1xf32>
    %262 = vector.broadcast %261 : vector<64x1xf32> to vector<64x32xf32>
    %263 = arith.mulf %253, %262 : vector<64x32xf32>
    %264 = vector.extract_strided_slice %246 {offsets = [0, 32], sizes = [64, 32], strides = [1, 1]} : vector<64x128xf32> to vector<64x32xf32>
    %cst_98 = arith.constant dense<0.000000e+00> : vector<64xf32>
    %265 = vector.multi_reduction <add>, %264, %cst_98 [1] : vector<64x32xf32> to vector<64xf32>
    %266 = vector.shape_cast %265 : vector<64xf32> to vector<64x1xf32>
    %cst_99 = arith.constant 3.200000e+01 : f32
    %267 = vector.broadcast %cst_99 : f32 to vector<64x1xf32>
    %268 = arith.divf %266, %267 : vector<64x1xf32>
    %269 = vector.broadcast %268 : vector<64x1xf32> to vector<64x32xf32>
    %270 = arith.subf %264, %269 : vector<64x32xf32>
    %271 = arith.mulf %270, %270 : vector<64x32xf32>
    %cst_100 = arith.constant dense<0.000000e+00> : vector<64xf32>
    %272 = vector.multi_reduction <add>, %271, %cst_100 [1] : vector<64x32xf32> to vector<64xf32>
    %273 = vector.shape_cast %272 : vector<64xf32> to vector<64x1xf32>
    %cst_101 = arith.constant 3.200000e+01 : f32
    %274 = vector.broadcast %cst_101 : f32 to vector<64x1xf32>
    %275 = arith.divf %273, %274 : vector<64x1xf32>
    %cst_102 = arith.constant 9.99999974E-6 : f32
    %276 = vector.broadcast %cst_102 : f32 to vector<64x1xf32>
    %277 = arith.addf %275, %276 : vector<64x1xf32>
    %278 = math.rsqrt %277 : vector<64x1xf32>
    %279 = vector.broadcast %278 : vector<64x1xf32> to vector<64x32xf32>
    %280 = arith.mulf %270, %279 : vector<64x32xf32>
    %281 = vector.extract_strided_slice %246 {offsets = [0, 64], sizes = [64, 32], strides = [1, 1]} : vector<64x128xf32> to vector<64x32xf32>
    %cst_103 = arith.constant dense<0.000000e+00> : vector<64xf32>
    %282 = vector.multi_reduction <add>, %281, %cst_103 [1] : vector<64x32xf32> to vector<64xf32>
    %283 = vector.shape_cast %282 : vector<64xf32> to vector<64x1xf32>
    %cst_104 = arith.constant 3.200000e+01 : f32
    %284 = vector.broadcast %cst_104 : f32 to vector<64x1xf32>
    %285 = arith.divf %283, %284 : vector<64x1xf32>
    %286 = vector.broadcast %285 : vector<64x1xf32> to vector<64x32xf32>
    %287 = arith.subf %281, %286 : vector<64x32xf32>
    %288 = arith.mulf %287, %287 : vector<64x32xf32>
    %cst_105 = arith.constant dense<0.000000e+00> : vector<64xf32>
    %289 = vector.multi_reduction <add>, %288, %cst_105 [1] : vector<64x32xf32> to vector<64xf32>
    %290 = vector.shape_cast %289 : vector<64xf32> to vector<64x1xf32>
    %cst_106 = arith.constant 3.200000e+01 : f32
    %291 = vector.broadcast %cst_106 : f32 to vector<64x1xf32>
    %292 = arith.divf %290, %291 : vector<64x1xf32>
    %cst_107 = arith.constant 9.99999974E-6 : f32
    %293 = vector.broadcast %cst_107 : f32 to vector<64x1xf32>
    %294 = arith.addf %292, %293 : vector<64x1xf32>
    %295 = math.rsqrt %294 : vector<64x1xf32>
    %296 = vector.broadcast %295 : vector<64x1xf32> to vector<64x32xf32>
    %297 = arith.mulf %287, %296 : vector<64x32xf32>
    %298 = vector.extract_strided_slice %246 {offsets = [0, 96], sizes = [64, 32], strides = [1, 1]} : vector<64x128xf32> to vector<64x32xf32>
    %cst_108 = arith.constant dense<0.000000e+00> : vector<64xf32>
    %299 = vector.multi_reduction <add>, %298, %cst_108 [1] : vector<64x32xf32> to vector<64xf32>
    %300 = vector.shape_cast %299 : vector<64xf32> to vector<64x1xf32>
    %cst_109 = arith.constant 3.200000e+01 : f32
    %301 = vector.broadcast %cst_109 : f32 to vector<64x1xf32>
    %302 = arith.divf %300, %301 : vector<64x1xf32>
    %303 = vector.broadcast %302 : vector<64x1xf32> to vector<64x32xf32>
    %304 = arith.subf %298, %303 : vector<64x32xf32>
    %305 = arith.mulf %304, %304 : vector<64x32xf32>
    %cst_110 = arith.constant dense<0.000000e+00> : vector<64xf32>
    %306 = vector.multi_reduction <add>, %305, %cst_110 [1] : vector<64x32xf32> to vector<64xf32>
    %307 = vector.shape_cast %306 : vector<64xf32> to vector<64x1xf32>
    %cst_111 = arith.constant 3.200000e+01 : f32
    %308 = vector.broadcast %cst_111 : f32 to vector<64x1xf32>
    %309 = arith.divf %307, %308 : vector<64x1xf32>
    %cst_112 = arith.constant 9.99999974E-6 : f32
    %310 = vector.broadcast %cst_112 : f32 to vector<64x1xf32>
    %311 = arith.addf %309, %310 : vector<64x1xf32>
    %312 = math.rsqrt %311 : vector<64x1xf32>
    %313 = vector.broadcast %312 : vector<64x1xf32> to vector<64x32xf32>
    %314 = arith.mulf %304, %313 : vector<64x32xf32>
    %315 = tpu.concatenate %263, %280, %297, %314 in 1 : vector<64x32xf32>, vector<64x32xf32>, vector<64x32xf32>, vector<64x32xf32> -> vector<64x128xf32>
    %316 = vector.broadcast %2 : vector<1x128xf32> to vector<64x128xf32>
    %317 = arith.mulf %315, %316 : vector<64x128xf32>
    %318 = vector.broadcast %3 : vector<1x128xf32> to vector<64x128xf32>
    %319 = arith.addf %317, %318 : vector<64x128xf32>
    %320 = vector.shape_cast %319 : vector<64x128xf32> to vector<8x8x128xf32>
    %c0_113 = arith.constant 0 : index
    %c0_114 = arith.constant 0 : index
    %c3_115 = arith.constant 3 : index
    %c0_116 = arith.constant 0 : index
    %c0_117 = arith.constant 0 : index
    %321 = vector.load %arg6[%c0_113, %c0_114, %c3_115, %c0_116, %c0_117] : memref<1x8x4x8x128xf32, #tpu.memory_space<vmem>>, vector<1x8x1x8x128xf32>
    %322 = vector.shape_cast %321 : vector<1x8x1x8x128xf32> to vector<8x8x128xf32>
    %323 = vector.shape_cast %320 : vector<8x8x128xf32> to vector<1x8x1x8x128xf32>
    tpu.vector_store %arg6[%c0_113, %c0_114, %c3_115, %c0_116, %c0_117], %323 {strides = array<i32>} : memref<1x8x4x8x128xf32, #tpu.memory_space<vmem>>, vector<1x8x1x8x128xf32>,
    return
  }
  func.func @transform_0(%arg0: i32, %arg1: i32) -> (i32, i32, i32) {
    %c0_i32 = arith.constant 0 : i32
    %c0_i32_0 = arith.constant 0 : i32
    return %arg0, %arg1, %c0_i32 : i32, i32, i32
  }
  func.func @transform_1(%arg0: i32, %arg1: i32) -> (i32, i32, i32) {
    %c0_i32 = arith.constant 0 : i32
    %c0_i32_0 = arith.constant 0 : i32
    %c0_i32_1 = arith.constant 0 : i32
    %c0_i32_2 = arith.constant 0 : i32
    return %c0_i32, %c0_i32_0, %c0_i32_1 : i32, i32, i32
  }
  func.func @transform_2(%arg0: i32, %arg1: i32) -> (i32, i32) {
    %c0_i32 = arith.constant 0 : i32
    %c0_i32_0 = arith.constant 0 : i32
    %c0_i32_1 = arith.constant 0 : i32
    return %c0_i32, %c0_i32_0 : i32, i32
  }
  func.func @transform_3(%arg0: i32, %arg1: i32) -> (i32, i32) {
    %c0_i32 = arith.constant 0 : i32
    %c0_i32_0 = arith.constant 0 : i32
    %c0_i32_1 = arith.constant 0 : i32
    return %c0_i32, %c0_i32_0 : i32, i32
  }
  func.func @transform_4(%arg0: i32, %arg1: i32) -> (i32, i32, i32, i32, i32) {
    %c0_i32 = arith.constant 0 : i32
    %c0_i32_0 = arith.constant 0 : i32
    %c0_i32_1 = arith.constant 0 : i32
    %c0_i32_2 = arith.constant 0 : i32
    return %arg0, %arg1, %c0_i32, %c0_i32_0, %c0_i32_1 : i32, i32, i32, i32, i32
  }
}

module attributes {stable_mosaic.version = 11 : i64} {
  func.func @_expand_ln_kernel(%arg0: i32, %arg1: i32, %arg2: memref<1x64x32xf32, #tpu.memory_space<vmem>>, %arg3: memref<4x32x128xf32, #tpu.memory_space<vmem>>, %arg4: memref<1x128xf32, #tpu.memory_space<vmem>>, %arg5: memref<1x128xf32, #tpu.memory_space<vmem>>, %arg6: memref<1x8x4x8x128xf32, #tpu.memory_space<vmem>>) attributes {dimension_semantics = [#tpu.dimension_semantics<parallel>, #tpu.dimension_semantics<parallel>], iteration_bounds = array<i64: 2, 1>, scalar_prefetch = 0 : i64, scratch_operands = 0 : i64, tpu.core_type = #tpu.core_type<tc>, window_params = [{transform_indices = @transform_0, window_bounds = array<i64: 1, 64, 32>}, {pipeline_mode = #tpu.pipeline_mode<synchronous>, transform_indices = @transform_1, window_bounds = array<i64: 4, 32, 128>}, {pipeline_mode = #tpu.pipeline_mode<synchronous>, transform_indices = @transform_2, window_bounds = array<i64: 1, 128>}, {pipeline_mode = #tpu.pipeline_mode<synchronous>, transform_indices = @transform_3, window_bounds = array<i64: 1, 128>}, {transform_indices = @transform_4, window_bounds = array<i64: 1, 8, 4, 8, 128>}]} {
    %c0 = arith.constant 0 : index
    %c0_0 = arith.constant 0 : index
    %c0_1 = arith.constant 0 : index
    %0 = vector.load %arg2[%c0, %c0_0, %c0_1] : memref<1x64x32xf32, #tpu.memory_space<vmem>>, vector<1x64x32xf32>
    %1 = vector.shape_cast %0 : vector<1x64x32xf32> to vector<64x32xf32>
    %c0_2 = arith.constant 0 : index
    %c0_3 = arith.constant 0 : index
    %2 = vector.load %arg4[%c0_2, %c0_3] : memref<1x128xf32, #tpu.memory_space<vmem>>, vector<1x128xf32>
    %c0_4 = arith.constant 0 : index
    %c0_5 = arith.constant 0 : index
    %3 = vector.load %arg5[%c0_4, %c0_5] : memref<1x128xf32, #tpu.memory_space<vmem>>, vector<1x128xf32>
    %c0_6 = arith.constant 0 : index
    %c0_7 = arith.constant 0 : index
    %c0_8 = arith.constant 0 : index
    %4 = vector.load %arg3[%c0_6, %c0_7, %c0_8] : memref<4x32x128xf32, #tpu.memory_space<vmem>>, vector<1x32x128xf32>
    %5 = vector.shape_cast %4 : vector<1x32x128xf32> to vector<32x128xf32>
    %cst = arith.constant dense<0.000000e+00> : vector<64x128xf32>
    %6 = tpu.matmul %1, %5, %cst {dimension_numbers = #tpu.dot_dimension_numbers<[1], [0], [0], [1], [0, 0, 1, 1], [], []>} : vector<64x32xf32>, vector<32x128xf32>, vector<64x128xf32> -> vector<64x128xf32>
    %7 = vector.extract_strided_slice %6 {offsets = [0, 0], sizes = [64, 32], strides = [1, 1]} : vector<64x128xf32> to vector<64x32xf32>
    %cst_9 = arith.constant dense<0.000000e+00> : vector<64xf32>
    %8 = vector.multi_reduction <add>, %7, %cst_9 [1] : vector<64x32xf32> to vector<64xf32>
    %9 = vector.shape_cast %8 : vector<64xf32> to vector<64x1xf32>
    %cst_10 = arith.constant 3.200000e+01 : f32
    %10 = vector.broadcast %cst_10 : f32 to vector<64x1xf32>
    %11 = arith.divf %9, %10 : vector<64x1xf32>
    %12 = vector.broadcast %11 : vector<64x1xf32> to vector<64x32xf32>
    %13 = arith.subf %7, %12 : vector<64x32xf32>
    %14 = arith.mulf %13, %13 : vector<64x32xf32>
    %cst_11 = arith.constant dense<0.000000e+00> : vector<64xf32>
    %15 = vector.multi_reduction <add>, %14, %cst_11 [1] : vector<64x32xf32> to vector<64xf32>
    %16 = vector.shape_cast %15 : vector<64xf32> to vector<64x1xf32>
    %cst_12 = arith.constant 3.200000e+01 : f32
    %17 = vector.broadcast %cst_12 : f32 to vector<64x1xf32>
    %18 = arith.divf %16, %17 : vector<64x1xf32>
    %cst_13 = arith.constant 9.99999974E-6 : f32
    %19 = vector.broadcast %cst_13 : f32 to vector<64x1xf32>
    %20 = arith.addf %18, %19 : vector<64x1xf32>
    %21 = math.rsqrt %20 : vector<64x1xf32>
    %22 = vector.broadcast %21 : vector<64x1xf32> to vector<64x32xf32>
    %23 = arith.mulf %13, %22 : vector<64x32xf32>
    %24 = vector.extract_strided_slice %6 {offsets = [0, 32], sizes = [64, 32], strides = [1, 1]} : vector<64x128xf32> to vector<64x32xf32>
    %cst_14 = arith.constant dense<0.000000e+00> : vector<64xf32>
    %25 = vector.multi_reduction <add>, %24, %cst_14 [1] : vector<64x32xf32> to vector<64xf32>
    %26 = vector.shape_cast %25 : vector<64xf32> to vector<64x1xf32>
    %cst_15 = arith.constant 3.200000e+01 : f32
    %27 = vector.broadcast %cst_15 : f32 to vector<64x1xf32>
    %28 = arith.divf %26, %27 : vector<64x1xf32>
    %29 = vector.broadcast %28 : vector<64x1xf32> to vector<64x32xf32>
    %30 = arith.subf %24, %29 : vector<64x32xf32>
    %31 = arith.mulf %30, %30 : vector<64x32xf32>
    %cst_16 = arith.constant dense<0.000000e+00> : vector<64xf32>
    %32 = vector.multi_reduction <add>, %31, %cst_16 [1] : vector<64x32xf32> to vector<64xf32>
    %33 = vector.shape_cast %32 : vector<64xf32> to vector<64x1xf32>
    %cst_17 = arith.constant 3.200000e+01 : f32
    %34 = vector.broadcast %cst_17 : f32 to vector<64x1xf32>
    %35 = arith.divf %33, %34 : vector<64x1xf32>
    %cst_18 = arith.constant 9.99999974E-6 : f32
    %36 = vector.broadcast %cst_18 : f32 to vector<64x1xf32>
    %37 = arith.addf %35, %36 : vector<64x1xf32>
    %38 = math.rsqrt %37 : vector<64x1xf32>
    %39 = vector.broadcast %38 : vector<64x1xf32> to vector<64x32xf32>
    %40 = arith.mulf %30, %39 : vector<64x32xf32>
    %41 = vector.extract_strided_slice %6 {offsets = [0, 64], sizes = [64, 32], strides = [1, 1]} : vector<64x128xf32> to vector<64x32xf32>
    %cst_19 = arith.constant dense<0.000000e+00> : vector<64xf32>
    %42 = vector.multi_reduction <add>, %41, %cst_19 [1] : vector<64x32xf32> to vector<64xf32>
    %43 = vector.shape_cast %42 : vector<64xf32> to vector<64x1xf32>
    %cst_20 = arith.constant 3.200000e+01 : f32
    %44 = vector.broadcast %cst_20 : f32 to vector<64x1xf32>
    %45 = arith.divf %43, %44 : vector<64x1xf32>
    %46 = vector.broadcast %45 : vector<64x1xf32> to vector<64x32xf32>
    %47 = arith.subf %41, %46 : vector<64x32xf32>
    %48 = arith.mulf %47, %47 : vector<64x32xf32>
    %cst_21 = arith.constant dense<0.000000e+00> : vector<64xf32>
    %49 = vector.multi_reduction <add>, %48, %cst_21 [1] : vector<64x32xf32> to vector<64xf32>
    %50 = vector.shape_cast %49 : vector<64xf32> to vector<64x1xf32>
    %cst_22 = arith.constant 3.200000e+01 : f32
    %51 = vector.broadcast %cst_22 : f32 to vector<64x1xf32>
    %52 = arith.divf %50, %51 : vector<64x1xf32>
    %cst_23 = arith.constant 9.99999974E-6 : f32
    %53 = vector.broadcast %cst_23 : f32 to vector<64x1xf32>
    %54 = arith.addf %52, %53 : vector<64x1xf32>
    %55 = math.rsqrt %54 : vector<64x1xf32>
    %56 = vector.broadcast %55 : vector<64x1xf32> to vector<64x32xf32>
    %57 = arith.mulf %47, %56 : vector<64x32xf32>
    %58 = vector.extract_strided_slice %6 {offsets = [0, 96], sizes = [64, 32], strides = [1, 1]} : vector<64x128xf32> to vector<64x32xf32>
    %cst_24 = arith.constant dense<0.000000e+00> : vector<64xf32>
    %59 = vector.multi_reduction <add>, %58, %cst_24 [1] : vector<64x32xf32> to vector<64xf32>
    %60 = vector.shape_cast %59 : vector<64xf32> to vector<64x1xf32>
    %cst_25 = arith.constant 3.200000e+01 : f32
    %61 = vector.broadcast %cst_25 : f32 to vector<64x1xf32>
    %62 = arith.divf %60, %61 : vector<64x1xf32>
    %63 = vector.broadcast %62 : vector<64x1xf32> to vector<64x32xf32>
    %64 = arith.subf %58, %63 : vector<64x32xf32>
    %65 = arith.mulf %64, %64 : vector<64x32xf32>
    %cst_26 = arith.constant dense<0.000000e+00> : vector<64xf32>
    %66 = vector.multi_reduction <add>, %65, %cst_26 [1] : vector<64x32xf32> to vector<64xf32>
    %67 = vector.shape_cast %66 : vector<64xf32> to vector<64x1xf32>
    %cst_27 = arith.constant 3.200000e+01 : f32
    %68 = vector.broadcast %cst_27 : f32 to vector<64x1xf32>
    %69 = arith.divf %67, %68 : vector<64x1xf32>
    %cst_28 = arith.constant 9.99999974E-6 : f32
    %70 = vector.broadcast %cst_28 : f32 to vector<64x1xf32>
    %71 = arith.addf %69, %70 : vector<64x1xf32>
    %72 = math.rsqrt %71 : vector<64x1xf32>
    %73 = vector.broadcast %72 : vector<64x1xf32> to vector<64x32xf32>
    %74 = arith.mulf %64, %73 : vector<64x32xf32>
    %75 = tpu.concatenate %23, %40, %57, %74 in 1 : vector<64x32xf32>, vector<64x32xf32>, vector<64x32xf32>, vector<64x32xf32> -> vector<64x128xf32>
    %76 = vector.broadcast %2 : vector<1x128xf32> to vector<64x128xf32>
    %77 = arith.mulf %75, %76 : vector<64x128xf32>
    %78 = vector.broadcast %3 : vector<1x128xf32> to vector<64x128xf32>
    %79 = arith.addf %77, %78 : vector<64x128xf32>
    %80 = vector.shape_cast %79 : vector<64x128xf32> to vector<8x8x128xf32>
    %c0_29 = arith.constant 0 : index
    %c0_30 = arith.constant 0 : index
    %c0_31 = arith.constant 0 : index
    %c0_32 = arith.constant 0 : index
    %c0_33 = arith.constant 0 : index
    %81 = vector.load %arg6[%c0_29, %c0_30, %c0_31, %c0_32, %c0_33] : memref<1x8x4x8x128xf32, #tpu.memory_space<vmem>>, vector<1x8x1x8x128xf32>
    %82 = vector.shape_cast %81 : vector<1x8x1x8x128xf32> to vector<8x8x128xf32>
    %83 = vector.shape_cast %80 : vector<8x8x128xf32> to vector<1x8x1x8x128xf32>
    tpu.vector_store %arg6[%c0_29, %c0_30, %c0_31, %c0_32, %c0_33], %83 {strides = array<i32>} : memref<1x8x4x8x128xf32, #tpu.memory_space<vmem>>, vector<1x8x1x8x128xf32>,
    %c1 = arith.constant 1 : index
    %c0_34 = arith.constant 0 : index
    %c0_35 = arith.constant 0 : index
    %84 = vector.load %arg3[%c1, %c0_34, %c0_35] : memref<4x32x128xf32, #tpu.memory_space<vmem>>, vector<1x32x128xf32>
    %85 = vector.shape_cast %84 : vector<1x32x128xf32> to vector<32x128xf32>
    %cst_36 = arith.constant dense<0.000000e+00> : vector<64x128xf32>
    %86 = tpu.matmul %1, %85, %cst_36 {dimension_numbers = #tpu.dot_dimension_numbers<[1], [0], [0], [1], [0, 0, 1, 1], [], []>} : vector<64x32xf32>, vector<32x128xf32>, vector<64x128xf32> -> vector<64x128xf32>
    %87 = vector.extract_strided_slice %86 {offsets = [0, 0], sizes = [64, 32], strides = [1, 1]} : vector<64x128xf32> to vector<64x32xf32>
    %cst_37 = arith.constant dense<0.000000e+00> : vector<64xf32>
    %88 = vector.multi_reduction <add>, %87, %cst_37 [1] : vector<64x32xf32> to vector<64xf32>
    %89 = vector.shape_cast %88 : vector<64xf32> to vector<64x1xf32>
    %cst_38 = arith.constant 3.200000e+01 : f32
    %90 = vector.broadcast %cst_38 : f32 to vector<64x1xf32>
    %91 = arith.divf %89, %90 : vector<64x1xf32>
    %92 = vector.broadcast %91 : vector<64x1xf32> to vector<64x32xf32>
    %93 = arith.subf %87, %92 : vector<64x32xf32>
    %94 = arith.mulf %93, %93 : vector<64x32xf32>
    %cst_39 = arith.constant dense<0.000000e+00> : vector<64xf32>
    %95 = vector.multi_reduction <add>, %94, %cst_39 [1] : vector<64x32xf32> to vector<64xf32>
    %96 = vector.shape_cast %95 : vector<64xf32> to vector<64x1xf32>
    %cst_40 = arith.constant 3.200000e+01 : f32
    %97 = vector.broadcast %cst_40 : f32 to vector<64x1xf32>
    %98 = arith.divf %96, %97 : vector<64x1xf32>
    %cst_41 = arith.constant 9.99999974E-6 : f32
    %99 = vector.broadcast %cst_41 : f32 to vector<64x1xf32>
    %100 = arith.addf %98, %99 : vector<64x1xf32>
    %101 = math.rsqrt %100 : vector<64x1xf32>
    %102 = vector.broadcast %101 : vector<64x1xf32> to vector<64x32xf32>
    %103 = arith.mulf %93, %102 : vector<64x32xf32>
    %104 = vector.extract_strided_slice %86 {offsets = [0, 32], sizes = [64, 32], strides = [1, 1]} : vector<64x128xf32> to vector<64x32xf32>
    %cst_42 = arith.constant dense<0.000000e+00> : vector<64xf32>
    %105 = vector.multi_reduction <add>, %104, %cst_42 [1] : vector<64x32xf32> to vector<64xf32>
    %106 = vector.shape_cast %105 : vector<64xf32> to vector<64x1xf32>
    %cst_43 = arith.constant 3.200000e+01 : f32
    %107 = vector.broadcast %cst_43 : f32 to vector<64x1xf32>
    %108 = arith.divf %106, %107 : vector<64x1xf32>
    %109 = vector.broadcast %108 : vector<64x1xf32> to vector<64x32xf32>
    %110 = arith.subf %104, %109 : vector<64x32xf32>
    %111 = arith.mulf %110, %110 : vector<64x32xf32>
    %cst_44 = arith.constant dense<0.000000e+00> : vector<64xf32>
    %112 = vector.multi_reduction <add>, %111, %cst_44 [1] : vector<64x32xf32> to vector<64xf32>
    %113 = vector.shape_cast %112 : vector<64xf32> to vector<64x1xf32>
    %cst_45 = arith.constant 3.200000e+01 : f32
    %114 = vector.broadcast %cst_45 : f32 to vector<64x1xf32>
    %115 = arith.divf %113, %114 : vector<64x1xf32>
    %cst_46 = arith.constant 9.99999974E-6 : f32
    %116 = vector.broadcast %cst_46 : f32 to vector<64x1xf32>
    %117 = arith.addf %115, %116 : vector<64x1xf32>
    %118 = math.rsqrt %117 : vector<64x1xf32>
    %119 = vector.broadcast %118 : vector<64x1xf32> to vector<64x32xf32>
    %120 = arith.mulf %110, %119 : vector<64x32xf32>
    %121 = vector.extract_strided_slice %86 {offsets = [0, 64], sizes = [64, 32], strides = [1, 1]} : vector<64x128xf32> to vector<64x32xf32>
    %cst_47 = arith.constant dense<0.000000e+00> : vector<64xf32>
    %122 = vector.multi_reduction <add>, %121, %cst_47 [1] : vector<64x32xf32> to vector<64xf32>
    %123 = vector.shape_cast %122 : vector<64xf32> to vector<64x1xf32>
    %cst_48 = arith.constant 3.200000e+01 : f32
    %124 = vector.broadcast %cst_48 : f32 to vector<64x1xf32>
    %125 = arith.divf %123, %124 : vector<64x1xf32>
    %126 = vector.broadcast %125 : vector<64x1xf32> to vector<64x32xf32>
    %127 = arith.subf %121, %126 : vector<64x32xf32>
    %128 = arith.mulf %127, %127 : vector<64x32xf32>
    %cst_49 = arith.constant dense<0.000000e+00> : vector<64xf32>
    %129 = vector.multi_reduction <add>, %128, %cst_49 [1] : vector<64x32xf32> to vector<64xf32>
    %130 = vector.shape_cast %129 : vector<64xf32> to vector<64x1xf32>
    %cst_50 = arith.constant 3.200000e+01 : f32
    %131 = vector.broadcast %cst_50 : f32 to vector<64x1xf32>
    %132 = arith.divf %130, %131 : vector<64x1xf32>
    %cst_51 = arith.constant 9.99999974E-6 : f32
    %133 = vector.broadcast %cst_51 : f32 to vector<64x1xf32>
    %134 = arith.addf %132, %133 : vector<64x1xf32>
    %135 = math.rsqrt %134 : vector<64x1xf32>
    %136 = vector.broadcast %135 : vector<64x1xf32> to vector<64x32xf32>
    %137 = arith.mulf %127, %136 : vector<64x32xf32>
    %138 = vector.extract_strided_slice %86 {offsets = [0, 96], sizes = [64, 32], strides = [1, 1]} : vector<64x128xf32> to vector<64x32xf32>
    %cst_52 = arith.constant dense<0.000000e+00> : vector<64xf32>
    %139 = vector.multi_reduction <add>, %138, %cst_52 [1] : vector<64x32xf32> to vector<64xf32>
    %140 = vector.shape_cast %139 : vector<64xf32> to vector<64x1xf32>
    %cst_53 = arith.constant 3.200000e+01 : f32
    %141 = vector.broadcast %cst_53 : f32 to vector<64x1xf32>
    %142 = arith.divf %140, %141 : vector<64x1xf32>
    %143 = vector.broadcast %142 : vector<64x1xf32> to vector<64x32xf32>
    %144 = arith.subf %138, %143 : vector<64x32xf32>
    %145 = arith.mulf %144, %144 : vector<64x32xf32>
    %cst_54 = arith.constant dense<0.000000e+00> : vector<64xf32>
    %146 = vector.multi_reduction <add>, %145, %cst_54 [1] : vector<64x32xf32> to vector<64xf32>
    %147 = vector.shape_cast %146 : vector<64xf32> to vector<64x1xf32>
    %cst_55 = arith.constant 3.200000e+01 : f32
    %148 = vector.broadcast %cst_55 : f32 to vector<64x1xf32>
    %149 = arith.divf %147, %148 : vector<64x1xf32>
    %cst_56 = arith.constant 9.99999974E-6 : f32
    %150 = vector.broadcast %cst_56 : f32 to vector<64x1xf32>
    %151 = arith.addf %149, %150 : vector<64x1xf32>
    %152 = math.rsqrt %151 : vector<64x1xf32>
    %153 = vector.broadcast %152 : vector<64x1xf32> to vector<64x32xf32>
    %154 = arith.mulf %144, %153 : vector<64x32xf32>
    %155 = tpu.concatenate %103, %120, %137, %154 in 1 : vector<64x32xf32>, vector<64x32xf32>, vector<64x32xf32>, vector<64x32xf32> -> vector<64x128xf32>
    %156 = vector.broadcast %2 : vector<1x128xf32> to vector<64x128xf32>
    %157 = arith.mulf %155, %156 : vector<64x128xf32>
    %158 = vector.broadcast %3 : vector<1x128xf32> to vector<64x128xf32>
    %159 = arith.addf %157, %158 : vector<64x128xf32>
    %160 = vector.shape_cast %159 : vector<64x128xf32> to vector<8x8x128xf32>
    %c0_57 = arith.constant 0 : index
    %c0_58 = arith.constant 0 : index
    %c1_59 = arith.constant 1 : index
    %c0_60 = arith.constant 0 : index
    %c0_61 = arith.constant 0 : index
    %161 = vector.load %arg6[%c0_57, %c0_58, %c1_59, %c0_60, %c0_61] : memref<1x8x4x8x128xf32, #tpu.memory_space<vmem>>, vector<1x8x1x8x128xf32>
    %162 = vector.shape_cast %161 : vector<1x8x1x8x128xf32> to vector<8x8x128xf32>
    %163 = vector.shape_cast %160 : vector<8x8x128xf32> to vector<1x8x1x8x128xf32>
    tpu.vector_store %arg6[%c0_57, %c0_58, %c1_59, %c0_60, %c0_61], %163 {strides = array<i32>} : memref<1x8x4x8x128xf32, #tpu.memory_space<vmem>>, vector<1x8x1x8x128xf32>,
    %c2 = arith.constant 2 : index
    %c0_62 = arith.constant 0 : index
    %c0_63 = arith.constant 0 : index
    %164 = vector.load %arg3[%c2, %c0_62, %c0_63] : memref<4x32x128xf32, #tpu.memory_space<vmem>>, vector<1x32x128xf32>
    %165 = vector.shape_cast %164 : vector<1x32x128xf32> to vector<32x128xf32>
    %cst_64 = arith.constant dense<0.000000e+00> : vector<64x128xf32>
    %166 = tpu.matmul %1, %165, %cst_64 {dimension_numbers = #tpu.dot_dimension_numbers<[1], [0], [0], [1], [0, 0, 1, 1], [], []>} : vector<64x32xf32>, vector<32x128xf32>, vector<64x128xf32> -> vector<64x128xf32>
    %167 = vector.extract_strided_slice %166 {offsets = [0, 0], sizes = [64, 32], strides = [1, 1]} : vector<64x128xf32> to vector<64x32xf32>
    %cst_65 = arith.constant dense<0.000000e+00> : vector<64xf32>
    %168 = vector.multi_reduction <add>, %167, %cst_65 [1] : vector<64x32xf32> to vector<64xf32>
    %169 = vector.shape_cast %168 : vector<64xf32> to vector<64x1xf32>
    %cst_66 = arith.constant 3.200000e+01 : f32
    %170 = vector.broadcast %cst_66 : f32 to vector<64x1xf32>
    %171 = arith.divf %169, %170 : vector<64x1xf32>
    %172 = vector.broadcast %171 : vector<64x1xf32> to vector<64x32xf32>
    %173 = arith.subf %167, %172 : vector<64x32xf32>
    %174 = arith.mulf %173, %173 : vector<64x32xf32>
    %cst_67 = arith.constant dense<0.000000e+00> : vector<64xf32>
    %175 = vector.multi_reduction <add>, %174, %cst_67 [1] : vector<64x32xf32> to vector<64xf32>
    %176 = vector.shape_cast %175 : vector<64xf32> to vector<64x1xf32>
    %cst_68 = arith.constant 3.200000e+01 : f32
    %177 = vector.broadcast %cst_68 : f32 to vector<64x1xf32>
    %178 = arith.divf %176, %177 : vector<64x1xf32>
    %cst_69 = arith.constant 9.99999974E-6 : f32
    %179 = vector.broadcast %cst_69 : f32 to vector<64x1xf32>
    %180 = arith.addf %178, %179 : vector<64x1xf32>
    %181 = math.rsqrt %180 : vector<64x1xf32>
    %182 = vector.broadcast %181 : vector<64x1xf32> to vector<64x32xf32>
    %183 = arith.mulf %173, %182 : vector<64x32xf32>
    %184 = vector.extract_strided_slice %166 {offsets = [0, 32], sizes = [64, 32], strides = [1, 1]} : vector<64x128xf32> to vector<64x32xf32>
    %cst_70 = arith.constant dense<0.000000e+00> : vector<64xf32>
    %185 = vector.multi_reduction <add>, %184, %cst_70 [1] : vector<64x32xf32> to vector<64xf32>
    %186 = vector.shape_cast %185 : vector<64xf32> to vector<64x1xf32>
    %cst_71 = arith.constant 3.200000e+01 : f32
    %187 = vector.broadcast %cst_71 : f32 to vector<64x1xf32>
    %188 = arith.divf %186, %187 : vector<64x1xf32>
    %189 = vector.broadcast %188 : vector<64x1xf32> to vector<64x32xf32>
    %190 = arith.subf %184, %189 : vector<64x32xf32>
    %191 = arith.mulf %190, %190 : vector<64x32xf32>
    %cst_72 = arith.constant dense<0.000000e+00> : vector<64xf32>
    %192 = vector.multi_reduction <add>, %191, %cst_72 [1] : vector<64x32xf32> to vector<64xf32>
    %193 = vector.shape_cast %192 : vector<64xf32> to vector<64x1xf32>
    %cst_73 = arith.constant 3.200000e+01 : f32
    %194 = vector.broadcast %cst_73 : f32 to vector<64x1xf32>
    %195 = arith.divf %193, %194 : vector<64x1xf32>
    %cst_74 = arith.constant 9.99999974E-6 : f32
    %196 = vector.broadcast %cst_74 : f32 to vector<64x1xf32>
    %197 = arith.addf %195, %196 : vector<64x1xf32>
    %198 = math.rsqrt %197 : vector<64x1xf32>
    %199 = vector.broadcast %198 : vector<64x1xf32> to vector<64x32xf32>
    %200 = arith.mulf %190, %199 : vector<64x32xf32>
    %201 = vector.extract_strided_slice %166 {offsets = [0, 64], sizes = [64, 32], strides = [1, 1]} : vector<64x128xf32> to vector<64x32xf32>
    %cst_75 = arith.constant dense<0.000000e+00> : vector<64xf32>
    %202 = vector.multi_reduction <add>, %201, %cst_75 [1] : vector<64x32xf32> to vector<64xf32>
    %203 = vector.shape_cast %202 : vector<64xf32> to vector<64x1xf32>
    %cst_76 = arith.constant 3.200000e+01 : f32
    %204 = vector.broadcast %cst_76 : f32 to vector<64x1xf32>
    %205 = arith.divf %203, %204 : vector<64x1xf32>
    %206 = vector.broadcast %205 : vector<64x1xf32> to vector<64x32xf32>
    %207 = arith.subf %201, %206 : vector<64x32xf32>
    %208 = arith.mulf %207, %207 : vector<64x32xf32>
    %cst_77 = arith.constant dense<0.000000e+00> : vector<64xf32>
    %209 = vector.multi_reduction <add>, %208, %cst_77 [1] : vector<64x32xf32> to vector<64xf32>
    %210 = vector.shape_cast %209 : vector<64xf32> to vector<64x1xf32>
    %cst_78 = arith.constant 3.200000e+01 : f32
    %211 = vector.broadcast %cst_78 : f32 to vector<64x1xf32>
    %212 = arith.divf %210, %211 : vector<64x1xf32>
    %cst_79 = arith.constant 9.99999974E-6 : f32
    %213 = vector.broadcast %cst_79 : f32 to vector<64x1xf32>
    %214 = arith.addf %212, %213 : vector<64x1xf32>
    %215 = math.rsqrt %214 : vector<64x1xf32>
    %216 = vector.broadcast %215 : vector<64x1xf32> to vector<64x32xf32>
    %217 = arith.mulf %207, %216 : vector<64x32xf32>
    %218 = vector.extract_strided_slice %166 {offsets = [0, 96], sizes = [64, 32], strides = [1, 1]} : vector<64x128xf32> to vector<64x32xf32>
    %cst_80 = arith.constant dense<0.000000e+00> : vector<64xf32>
    %219 = vector.multi_reduction <add>, %218, %cst_80 [1] : vector<64x32xf32> to vector<64xf32>
    %220 = vector.shape_cast %219 : vector<64xf32> to vector<64x1xf32>
    %cst_81 = arith.constant 3.200000e+01 : f32
    %221 = vector.broadcast %cst_81 : f32 to vector<64x1xf32>
    %222 = arith.divf %220, %221 : vector<64x1xf32>
    %223 = vector.broadcast %222 : vector<64x1xf32> to vector<64x32xf32>
    %224 = arith.subf %218, %223 : vector<64x32xf32>
    %225 = arith.mulf %224, %224 : vector<64x32xf32>
    %cst_82 = arith.constant dense<0.000000e+00> : vector<64xf32>
    %226 = vector.multi_reduction <add>, %225, %cst_82 [1] : vector<64x32xf32> to vector<64xf32>
    %227 = vector.shape_cast %226 : vector<64xf32> to vector<64x1xf32>
    %cst_83 = arith.constant 3.200000e+01 : f32
    %228 = vector.broadcast %cst_83 : f32 to vector<64x1xf32>
    %229 = arith.divf %227, %228 : vector<64x1xf32>
    %cst_84 = arith.constant 9.99999974E-6 : f32
    %230 = vector.broadcast %cst_84 : f32 to vector<64x1xf32>
    %231 = arith.addf %229, %230 : vector<64x1xf32>
    %232 = math.rsqrt %231 : vector<64x1xf32>
    %233 = vector.broadcast %232 : vector<64x1xf32> to vector<64x32xf32>
    %234 = arith.mulf %224, %233 : vector<64x32xf32>
    %235 = tpu.concatenate %183, %200, %217, %234 in 1 : vector<64x32xf32>, vector<64x32xf32>, vector<64x32xf32>, vector<64x32xf32> -> vector<64x128xf32>
    %236 = vector.broadcast %2 : vector<1x128xf32> to vector<64x128xf32>
    %237 = arith.mulf %235, %236 : vector<64x128xf32>
    %238 = vector.broadcast %3 : vector<1x128xf32> to vector<64x128xf32>
    %239 = arith.addf %237, %238 : vector<64x128xf32>
    %240 = vector.shape_cast %239 : vector<64x128xf32> to vector<8x8x128xf32>
    %c0_85 = arith.constant 0 : index
    %c0_86 = arith.constant 0 : index
    %c2_87 = arith.constant 2 : index
    %c0_88 = arith.constant 0 : index
    %c0_89 = arith.constant 0 : index
    %241 = vector.load %arg6[%c0_85, %c0_86, %c2_87, %c0_88, %c0_89] : memref<1x8x4x8x128xf32, #tpu.memory_space<vmem>>, vector<1x8x1x8x128xf32>
    %242 = vector.shape_cast %241 : vector<1x8x1x8x128xf32> to vector<8x8x128xf32>
    %243 = vector.shape_cast %240 : vector<8x8x128xf32> to vector<1x8x1x8x128xf32>
    tpu.vector_store %arg6[%c0_85, %c0_86, %c2_87, %c0_88, %c0_89], %243 {strides = array<i32>} : memref<1x8x4x8x128xf32, #tpu.memory_space<vmem>>, vector<1x8x1x8x128xf32>,
    %c3 = arith.constant 3 : index
    %c0_90 = arith.constant 0 : index
    %c0_91 = arith.constant 0 : index
    %244 = vector.load %arg3[%c3, %c0_90, %c0_91] : memref<4x32x128xf32, #tpu.memory_space<vmem>>, vector<1x32x128xf32>
    %245 = vector.shape_cast %244 : vector<1x32x128xf32> to vector<32x128xf32>
    %cst_92 = arith.constant dense<0.000000e+00> : vector<64x128xf32>
    %246 = tpu.matmul %1, %245, %cst_92 {dimension_numbers = #tpu.dot_dimension_numbers<[1], [0], [0], [1], [0, 0, 1, 1], [], []>} : vector<64x32xf32>, vector<32x128xf32>, vector<64x128xf32> -> vector<64x128xf32>
    %247 = vector.extract_strided_slice %246 {offsets = [0, 0], sizes = [64, 32], strides = [1, 1]} : vector<64x128xf32> to vector<64x32xf32>
    %cst_93 = arith.constant dense<0.000000e+00> : vector<64xf32>
    %248 = vector.multi_reduction <add>, %247, %cst_93 [1] : vector<64x32xf32> to vector<64xf32>
    %249 = vector.shape_cast %248 : vector<64xf32> to vector<64x1xf32>
    %cst_94 = arith.constant 3.200000e+01 : f32
    %250 = vector.broadcast %cst_94 : f32 to vector<64x1xf32>
    %251 = arith.divf %249, %250 : vector<64x1xf32>
    %252 = vector.broadcast %251 : vector<64x1xf32> to vector<64x32xf32>
    %253 = arith.subf %247, %252 : vector<64x32xf32>
    %254 = arith.mulf %253, %253 : vector<64x32xf32>
    %cst_95 = arith.constant dense<0.000000e+00> : vector<64xf32>
    %255 = vector.multi_reduction <add>, %254, %cst_95 [1] : vector<64x32xf32> to vector<64xf32>
    %256 = vector.shape_cast %255 : vector<64xf32> to vector<64x1xf32>
    %cst_96 = arith.constant 3.200000e+01 : f32
    %257 = vector.broadcast %cst_96 : f32 to vector<64x1xf32>
    %258 = arith.divf %256, %257 : vector<64x1xf32>
    %cst_97 = arith.constant 9.99999974E-6 : f32
    %259 = vector.broadcast %cst_97 : f32 to vector<64x1xf32>
    %260 = arith.addf %258, %259 : vector<64x1xf32>
    %261 = math.rsqrt %260 : vector<64x1xf32>
    %262 = vector.broadcast %261 : vector<64x1xf32> to vector<64x32xf32>
    %263 = arith.mulf %253, %262 : vector<64x32xf32>
    %264 = vector.extract_strided_slice %246 {offsets = [0, 32], sizes = [64, 32], strides = [1, 1]} : vector<64x128xf32> to vector<64x32xf32>
    %cst_98 = arith.constant dense<0.000000e+00> : vector<64xf32>
    %265 = vector.multi_reduction <add>, %264, %cst_98 [1] : vector<64x32xf32> to vector<64xf32>
    %266 = vector.shape_cast %265 : vector<64xf32> to vector<64x1xf32>
    %cst_99 = arith.constant 3.200000e+01 : f32
    %267 = vector.broadcast %cst_99 : f32 to vector<64x1xf32>
    %268 = arith.divf %266, %267 : vector<64x1xf32>
    %269 = vector.broadcast %268 : vector<64x1xf32> to vector<64x32xf32>
    %270 = arith.subf %264, %269 : vector<64x32xf32>
    %271 = arith.mulf %270, %270 : vector<64x32xf32>
    %cst_100 = arith.constant dense<0.000000e+00> : vector<64xf32>
    %272 = vector.multi_reduction <add>, %271, %cst_100 [1] : vector<64x32xf32> to vector<64xf32>
    %273 = vector.shape_cast %272 : vector<64xf32> to vector<64x1xf32>
    %cst_101 = arith.constant 3.200000e+01 : f32
    %274 = vector.broadcast %cst_101 : f32 to vector<64x1xf32>
    %275 = arith.divf %273, %274 : vector<64x1xf32>
    %cst_102 = arith.constant 9.99999974E-6 : f32
    %276 = vector.broadcast %cst_102 : f32 to vector<64x1xf32>
    %277 = arith.addf %275, %276 : vector<64x1xf32>
    %278 = math.rsqrt %277 : vector<64x1xf32>
    %279 = vector.broadcast %278 : vector<64x1xf32> to vector<64x32xf32>
    %280 = arith.mulf %270, %279 : vector<64x32xf32>
    %281 = vector.extract_strided_slice %246 {offsets = [0, 64], sizes = [64, 32], strides = [1, 1]} : vector<64x128xf32> to vector<64x32xf32>
    %cst_103 = arith.constant dense<0.000000e+00> : vector<64xf32>
    %282 = vector.multi_reduction <add>, %281, %cst_103 [1] : vector<64x32xf32> to vector<64xf32>
    %283 = vector.shape_cast %282 : vector<64xf32> to vector<64x1xf32>
    %cst_104 = arith.constant 3.200000e+01 : f32
    %284 = vector.broadcast %cst_104 : f32 to vector<64x1xf32>
    %285 = arith.divf %283, %284 : vector<64x1xf32>
    %286 = vector.broadcast %285 : vector<64x1xf32> to vector<64x32xf32>
    %287 = arith.subf %281, %286 : vector<64x32xf32>
    %288 = arith.mulf %287, %287 : vector<64x32xf32>
    %cst_105 = arith.constant dense<0.000000e+00> : vector<64xf32>
    %289 = vector.multi_reduction <add>, %288, %cst_105 [1] : vector<64x32xf32> to vector<64xf32>
    %290 = vector.shape_cast %289 : vector<64xf32> to vector<64x1xf32>
    %cst_106 = arith.constant 3.200000e+01 : f32
    %291 = vector.broadcast %cst_106 : f32 to vector<64x1xf32>
    %292 = arith.divf %290, %291 : vector<64x1xf32>
    %cst_107 = arith.constant 9.99999974E-6 : f32
    %293 = vector.broadcast %cst_107 : f32 to vector<64x1xf32>
    %294 = arith.addf %292, %293 : vector<64x1xf32>
    %295 = math.rsqrt %294 : vector<64x1xf32>
    %296 = vector.broadcast %295 : vector<64x1xf32> to vector<64x32xf32>
    %297 = arith.mulf %287, %296 : vector<64x32xf32>
    %298 = vector.extract_strided_slice %246 {offsets = [0, 96], sizes = [64, 32], strides = [1, 1]} : vector<64x128xf32> to vector<64x32xf32>
    %cst_108 = arith.constant dense<0.000000e+00> : vector<64xf32>
    %299 = vector.multi_reduction <add>, %298, %cst_108 [1] : vector<64x32xf32> to vector<64xf32>
    %300 = vector.shape_cast %299 : vector<64xf32> to vector<64x1xf32>
    %cst_109 = arith.constant 3.200000e+01 : f32
    %301 = vector.broadcast %cst_109 : f32 to vector<64x1xf32>
    %302 = arith.divf %300, %301 : vector<64x1xf32>
    %303 = vector.broadcast %302 : vector<64x1xf32> to vector<64x32xf32>
    %304 = arith.subf %298, %303 : vector<64x32xf32>
    %305 = arith.mulf %304, %304 : vector<64x32xf32>
    %cst_110 = arith.constant dense<0.000000e+00> : vector<64xf32>
    %306 = vector.multi_reduction <add>, %305, %cst_110 [1] : vector<64x32xf32> to vector<64xf32>
    %307 = vector.shape_cast %306 : vector<64xf32> to vector<64x1xf32>
    %cst_111 = arith.constant 3.200000e+01 : f32
    %308 = vector.broadcast %cst_111 : f32 to vector<64x1xf32>
    %309 = arith.divf %307, %308 : vector<64x1xf32>
    %cst_112 = arith.constant 9.99999974E-6 : f32
    %310 = vector.broadcast %cst_112 : f32 to vector<64x1xf32>
    %311 = arith.addf %309, %310 : vector<64x1xf32>
    %312 = math.rsqrt %311 : vector<64x1xf32>
    %313 = vector.broadcast %312 : vector<64x1xf32> to vector<64x32xf32>
    %314 = arith.mulf %304, %313 : vector<64x32xf32>
    %315 = tpu.concatenate %263, %280, %297, %314 in 1 : vector<64x32xf32>, vector<64x32xf32>, vector<64x32xf32>, vector<64x32xf32> -> vector<64x128xf32>
    %316 = vector.broadcast %2 : vector<1x128xf32> to vector<64x128xf32>
    %317 = arith.mulf %315, %316 : vector<64x128xf32>
    %318 = vector.broadcast %3 : vector<1x128xf32> to vector<64x128xf32>
    %319 = arith.addf %317, %318 : vector<64x128xf32>
    %320 = vector.shape_cast %319 : vector<64x128xf32> to vector<8x8x128xf32>
    %c0_113 = arith.constant 0 : index
    %c0_114 = arith.constant 0 : index
    %c3_115 = arith.constant 3 : index
    %c0_116 = arith.constant 0 : index
    %c0_117 = arith.constant 0 : index
    %321 = vector.load %arg6[%c0_113, %c0_114, %c3_115, %c0_116, %c0_117] : memref<1x8x4x8x128xf32, #tpu.memory_space<vmem>>, vector<1x8x1x8x128xf32>
    %322 = vector.shape_cast %321 : vector<1x8x1x8x128xf32> to vector<8x8x128xf32>
    %323 = vector.shape_cast %320 : vector<8x8x128xf32> to vector<1x8x1x8x128xf32>
    tpu.vector_store %arg6[%c0_113, %c0_114, %c3_115, %c0_116, %c0_117], %323 {strides = array<i32>} : memref<1x8x4x8x128xf32, #tpu.memory_space<vmem>>, vector<1x8x1x8x128xf32>,
    return
  }
  func.func @transform_0(%arg0: i32, %arg1: i32) -> (i32, i32, i32) {
    %c0_i32 = arith.constant 0 : i32
    %c0_i32_0 = arith.constant 0 : i32
    return %arg0, %arg1, %c0_i32 : i32, i32, i32
  }
  func.func @transform_1(%arg0: i32, %arg1: i32) -> (i32, i32, i32) {
    %c0_i32 = arith.constant 0 : i32
    %c0_i32_0 = arith.constant 0 : i32
    %c0_i32_1 = arith.constant 0 : i32
    %c0_i32_2 = arith.constant 0 : i32
    return %c0_i32, %c0_i32_0, %c0_i32_1 : i32, i32, i32
  }
  func.func @transform_2(%arg0: i32, %arg1: i32) -> (i32, i32) {
    %c0_i32 = arith.constant 0 : i32
    %c0_i32_0 = arith.constant 0 : i32
    %c0_i32_1 = arith.constant 0 : i32
    return %c0_i32, %c0_i32_0 : i32, i32
  }
  func.func @transform_3(%arg0: i32, %arg1: i32) -> (i32, i32) {
    %c0_i32 = arith.constant 0 : i32
    %c0_i32_0 = arith.constant 0 : i32
    %c0_i32_1 = arith.constant 0 : i32
    return %c0_i32, %c0_i32_0 : i32, i32
  }
  func.func @transform_4(%arg0: i32, %arg1: i32) -> (i32, i32, i32, i32, i32) {
    %c0_i32 = arith.constant 0 : i32
    %c0_i32_0 = arith.constant 0 : i32
    %c0_i32_1 = arith.constant 0 : i32
    %c0_i32_2 = arith.constant 0 : i32
    return %arg0, %arg1, %c0_i32, %c0_i32_0, %c0_i32_1 : i32, i32, i32, i32, i32
  }
}

</mosaic_0001>

<llo_original>
// kernel: tpu_custom_call.1
$region0: #{tpu_custom_call.1}
  #allocation0 [shape = 'u32[]', space=smem, size = 0x4, offset = 0x4, fixed_abs, tag = 'smem constant byte address 0x4 - core index']
  #allocation1 [shape = 'u32[144,128]{1,0:T(1,128)}', space=vmem, size = 0x12000, scoped, tag = 'internal scratch']
  %s0 = inlined_call_operand.vmem [shape: f32[2,64,32], index: 0, kind: input, shape index: {}]
  %s1 = inlined_call_operand.vmem [shape: f32[4,32,128], index: 1, kind: input, shape index: {}]
  %s2 = inlined_call_operand.vmem [shape: f32[1,128], index: 2, kind: input, shape index: {}]
  %s3 = inlined_call_operand.vmem [shape: f32[1,128], index: 3, kind: input, shape index: {}]
  %s4 = inlined_call_operand.hbm [shape: f32[2,8,4,8,128], index: 4, kind: output, shape index: {}]
  %s5 = sld [smem:[#allocation0]]
  $region49: #{tpu_custom_call.1} parent=0
    _
  %s7 = ssub.s32 1, %s5
  %s8 = scalar_select 0, %s7, %s5
  $region1: #{tpu_custom_call.1} parent=0
    #allocation2 [shape = 'u8[262144]{0}', space=vmem, size = 0x40000, scoped, tag = 'output window, operand 0']
    #allocation3 [shape = 's32[2]{0}', space=sflag, size = 0x8, scoped, tag = 'scoped memory for tpu_custom_call.1']
    %9 = vsyncpa [#allocation3], 0
    %s10 = scalar_lea.sflag [#allocation3], 1
    %11 = vsyncpa %s10, 0
    loop: start=0, step=1, limit=4
    $region2: #{tpu_custom_call.1} parent=1 // loop_pre_header
      _
    $region3: #{tpu_custom_call.1} parent=1 // loop_header
      %s13 = sphi 0, %s17
      %p14 = scmp.ge.s32.totalorder %s13, 4
      %s20 = sphi 0, %s32
      %s21 = sphi 0, %s28
      %s22 = sphi 0, %s20
      %s23 = sphi 0, %s21
      %s24 = sphi 0, %s22
      %s25 = sphi 0, %s23
      %s37 = sphi 0, %s39
      %s40 = sphi 0, %s37
      %s41 = sphi 0, %s40
      %s57 = sphi 0, %s41
      %s61 = sphi 0, %s61
      %s63 = sphi 0, %s61
      %s64 = sphi 0, %s63
      %s78 = sphi 0, %s64
      %s82 = sphi 0, %s82
      %s84 = sphi 0, %s82
      %s85 = sphi 0, %s84
      %s99 = sphi 0, %s85
      %s103 = sphi 0, %s103
      %s105 = sphi 0, %s103
      %s106 = sphi 0, %s105
      %s120 = sphi 0, %s106
      %s128 = sphi 0, %s130
      %s131 = sphi 0, %s128
      %s132 = sphi 0, %s131
      %s148 = sphi 0, %s132
    $region4: #{tpu_custom_call.1} parent=1 // loop_header_branch
      %16 = sbr.rel (%p14) target = $region8
    $region5: #{tpu_custom_call.1} parent=1 // loop_body
      %s18 = ssub.s32 %s13, 1
      %s19 = ssub.s32 %s13, 2
      %s26 = sadd.s32 1, %s21
      %p27 = scmp.ge.s32.totalorder %s26, 1
      %s28 = scalar_select %p27, 0, %s26
      %s29 = sadd.s32 1, %s20
      %s30 = scalar_select %p27, %s29, %s20
      %p31 = scmp.ge.s32.totalorder %s30, 2
      %s32 = scalar_select %p31, 0, %s30
      %s33 = ssub.s32 %s20, %s32
      %s34 = ssub.s32 %s21, %s28
      %s35 = sor.u32 %s33, %s34
      %p36 = scmp.eq.s32.totalorder %s35, 0
      %s38 = sadd.s32 %s37, 1
      %s39 = scalar_select %p36, %s37, %s38
      %p42 = pneg %p36
      %p43 = scmp.eq.s32.totalorder %s13, 1
      %p44 = por %p42, %p43
      %p45 = scmp.ne.s32.totalorder %s37, %s40
      %p46 = scmp.eq.s32.totalorder %s13, 0
      %p47 = por %p45, %p46
      %p48 = scmp.ne.s32.totalorder %s37, %s40
      %p49 = scmp.eq.s32.totalorder %s18, 1
      %p50 = por %p48, %p49
      %p51 = scmp.ne.s32.totalorder %s40, %s41
      %p52 = scmp.eq.s32.totalorder %s18, 0
      %p53 = por %p51, %p52
      %p54 = scmp.ne.s32.totalorder %s40, %s41
      %p55 = scmp.eq.s32.totalorder %s19, 1
      %p56 = por %p54, %p55
      %p58 = scmp.ne.s32.totalorder %s41, %s57
      %p59 = scmp.eq.s32.totalorder %s19, 0
      %p60 = por %p58, %p59
      %s62 = sadd.s32 %s61, 1
      %p65 = scmp.eq.s32.totalorder %s13, 1
      %p66 = scmp.ne.s32.totalorder %s61, %s63
      %p67 = scmp.eq.s32.totalorder %s13, 0
      %p68 = por %p66, %p67
      %p69 = scmp.ne.s32.totalorder %s61, %s63
      %p70 = scmp.eq.s32.totalorder %s18, 1
      %p71 = por %p69, %p70
      %p72 = scmp.ne.s32.totalorder %s63, %s64
      %p73 = scmp.eq.s32.totalorder %s18, 0
      %p74 = por %p72, %p73
      %p75 = scmp.ne.s32.totalorder %s63, %s64
      %p76 = scmp.eq.s32.totalorder %s19, 1
      %p77 = por %p75, %p76
      %p79 = scmp.ne.s32.totalorder %s64, %s78
      %p80 = scmp.eq.s32.totalorder %s19, 0
      %p81 = por %p79, %p80
      %s83 = sadd.s32 %s82, 1
      %p86 = scmp.eq.s32.totalorder %s13, 1
      %p87 = scmp.ne.s32.totalorder %s82, %s84
      %p88 = scmp.eq.s32.totalorder %s13, 0
      %p89 = por %p87, %p88
      %p90 = scmp.ne.s32.totalorder %s82, %s84
      %p91 = scmp.eq.s32.totalorder %s18, 1
      %p92 = por %p90, %p91
      %p93 = scmp.ne.s32.totalorder %s84, %s85
      %p94 = scmp.eq.s32.totalorder %s18, 0
      %p95 = por %p93, %p94
      %p96 = scmp.ne.s32.totalorder %s84, %s85
      %p97 = scmp.eq.s32.totalorder %s19, 1
      %p98 = por %p96, %p97
      %p100 = scmp.ne.s32.totalorder %s85, %s99
      %p101 = scmp.eq.s32.totalorder %s19, 0
      %p102 = por %p100, %p101
      %s104 = sadd.s32 %s103, 1
      %p107 = scmp.eq.s32.totalorder %s13, 1
      %p108 = scmp.ne.s32.totalorder %s103, %s105
      %p109 = scmp.eq.s32.totalorder %s13, 0
      %p110 = por %p108, %p109
      %p111 = scmp.ne.s32.totalorder %s103, %s105
      %p112 = scmp.eq.s32.totalorder %s18, 1
      %p113 = por %p111, %p112
      %p114 = scmp.ne.s32.totalorder %s105, %s106
      %p115 = scmp.eq.s32.totalorder %s18, 0
      %p116 = por %p114, %p115
      %p117 = scmp.ne.s32.totalorder %s105, %s106
      %p118 = scmp.eq.s32.totalorder %s19, 1
      %p119 = por %p117, %p118
      %p121 = scmp.ne.s32.totalorder %s106, %s120
      %p122 = scmp.eq.s32.totalorder %s19, 0
      %p123 = por %p121, %p122
      %s124 = ssub.s32 %s20, %s32
      %s125 = ssub.s32 %s21, %s28
      %s126 = sor.u32 %s124, %s125
      %p127 = scmp.eq.s32.totalorder %s126, 0
      %s129 = sadd.s32 %s128, 1
      %s130 = scalar_select %p127, %s128, %s129
      %p133 = pneg %p127
      %p134 = scmp.eq.s32.totalorder %s13, 1
      %p135 = por %p133, %p134
      %p136 = scmp.ne.s32.totalorder %s128, %s131
      %p137 = scmp.eq.s32.totalorder %s13, 0
      %p138 = por %p136, %p137
      %p139 = scmp.ne.s32.totalorder %s128, %s131
      %p140 = scmp.eq.s32.totalorder %s18, 1
      %p141 = por %p139, %p140
      %p142 = scmp.ne.s32.totalorder %s131, %s132
      %p143 = scmp.eq.s32.totalorder %s18, 0
      %p144 = por %p142, %p143
      %p145 = scmp.ne.s32.totalorder %s131, %s132
      %p146 = scmp.eq.s32.totalorder %s19, 1
      %p147 = por %p145, %p146
      %p149 = scmp.ne.s32.totalorder %s132, %s148
      %p150 = scmp.eq.s32.totalorder %s19, 0
      %p151 = por %p149, %p150
      %p152 = scmp.le.s32.totalorder 1, %s13
      %p153 = scmp.lt.s32.totalorder %s13, 3
      %p154 = pnand %p152, %p153
      %p155 = pneg %p154
      // Predicated region
      $region9: #{tpu_custom_call.1} parent=5 // pred_check
        _
      $region10: #{tpu_custom_call.1} parent=5 // pred_check_branch
        %157 = sbr.rel (%p154) target = $region12
      $region11: #{tpu_custom_call.1} parent=5 // pred_region
        %s158 = ssub.s32 %s13, 1
        // Predicated region
        $region13: #{tpu_custom_call.1} parent=11 // pred_check
          %p159 = pneg %p74
        $region14: #{tpu_custom_call.1} parent=11 // pred_check_branch
          %161 = sbr.rel (%p159) target = $region16
        $region15: #{tpu_custom_call.1} parent=11 // pred_region
          _
        $region16: #{tpu_custom_call.1} parent=11 // pred_fallthru
          _
        // Predicated region
        $region17: #{tpu_custom_call.1} parent=11 // pred_check
          %p162 = pneg %p95
        $region18: #{tpu_custom_call.1} parent=11 // pred_check_branch
          %164 = sbr.rel (%p162) target = $region20
        $region19: #{tpu_custom_call.1} parent=11 // pred_region
          _
        $region20: #{tpu_custom_call.1} parent=11 // pred_fallthru
          _
        // Predicated region
        $region21: #{tpu_custom_call.1} parent=11 // pred_check
          %p165 = pneg %p116
        $region22: #{tpu_custom_call.1} parent=11 // pred_check_branch
          %167 = sbr.rel (%p165) target = $region24
        $region23: #{tpu_custom_call.1} parent=11 // pred_region
          _
        $region24: #{tpu_custom_call.1} parent=11 // pred_fallthru
          _
      $region12: #{tpu_custom_call.1} parent=5 // pred_fallthru
        _
      %p168 = scmp.lt.s32.totalorder %s13, 2
      // Predicated region
      $region25: #{tpu_custom_call.1} parent=5 // pred_check
        %p169 = pneg %p168
      $region26: #{tpu_custom_call.1} parent=5 // pred_check_branch
        %171 = sbr.rel (%p169) target = $region28
      $region27: #{tpu_custom_call.1} parent=5 // pred_region
        // Predicated region
        $region29: #{tpu_custom_call.1} parent=27 // pred_check
          %p172 = pneg %p47
        $region30: #{tpu_custom_call.1} parent=27 // pred_check_branch
          %174 = sbr.rel (%p172) target = $region32
        $region31: #{tpu_custom_call.1} parent=27 // pred_region
          %s175 = smul.u32 8, %s21
          %p176 = scmp.lt.s32.totalorder %s20, 1
          %s177 = scalar_select %p176, %s20, 1
          %p178 = scmp.lt.s32.totalorder %s175, 7
          %s179 = scalar_select %p178, %s175, 7
          %s180 = smul.addr %s177, 8
          %s181 = sadd.s32 %s179, %s180
          %s182 = smul.addr %s181, 8
          %s183 = scalar_lea.vmem %s0, %s182
          %s184 = smul.u32 8, %s21
        $region32: #{tpu_custom_call.1} parent=27 // pred_fallthru
          _
      $region28: #{tpu_custom_call.1} parent=5 // pred_fallthru
        _
      %p185 = scmp.le.s32.totalorder 1, %s13
      %p186 = scmp.lt.s32.totalorder %s13, 3
      %p187 = pnand %p185, %p186
      %p188 = pneg %p187
      // Predicated region
      $region33: #{tpu_custom_call.1} parent=5 // pred_check
        _
      $region34: #{tpu_custom_call.1} parent=5 // pred_check_branch
        %190 = sbr.rel (%p187) target = $region36
      $region35: #{tpu_custom_call.1} parent=5 // pred_region
        %s191 = ssub.s32 %s13, 1
        %s192 = smul.u32 8, %s23
        %p193 = scmp.lt.s32.totalorder %s22, 1
        %s194 = scalar_select %p193, %s22, 1
        %p195 = scmp.lt.s32.totalorder %s192, 7
        %s196 = scalar_select %p195, %s192, 7
        %s197 = smul.addr %s194, 8
        %s198 = sadd.s32 %s196, %s197
        %s199 = smul.addr %s198, 8
        %s200 = scalar_lea.vmem %s0, %s199
        %p201 = pneg %p53
        %p202 = pneg %p50
        %p203 = pneg %p74
        %p204 = pneg %p71
        %p205 = pneg %p95
        %p206 = pneg %p92
        %p207 = pneg %p116
        %p208 = pneg %p113
        %p209 = pneg %p144
        %p210 = pneg %p141
        %s211 = sand.u32 %s131, 1
        %s212 = scalar_lea.sflag [#allocation3], %s211
        %s213 = sand.u32 %s131, 1
        %s214 = smul.addr %s213, 256
        %s215 = scalar_lea.vmem [#allocation2], %s214
        %s216 = smul.u32 8, %s23
        %p217 = scmp.lt.s32.totalorder %s22, 1
        %s218 = scalar_select %p217, %s22, 1
        %p219 = scmp.lt.s32.totalorder %s216, 7
        %s220 = scalar_select %p219, %s216, 7
        %s221 = smul.addr %s218, 8
        %s222 = sadd.s32 %s220, %s221
        %s223 = smul.addr %s222, 8
        %s224 = scalar_lea.vmem %s0, %s223
        %s225 = smul.u32 8, %s23
        %s226 = smul.u32 8, %s23
        %v227 = vld [vmem:[%s224] sm:$0xff]
        %v228 = vld [vmem:[%s224 + $0x8] sm:$0xff]
        %v229 = vld [vmem:[%s224 + $0x10] sm:$0xff]
        %v230 = vld [vmem:[%s224 + $0x18] sm:$0xff]
        %v231 = vld [vmem:[%s224 + $0x20] sm:$0xff]
        %v232 = vld [vmem:[%s224 + $0x28] sm:$0xff]
        %v233 = vld [vmem:[%s224 + $0x30] sm:$0xff]
        %v234 = vld [vmem:[%s224 + $0x38] sm:$0xff]
        %v235 = vld [vmem:[%s2] sm:$0x1]
        %v236 = vld [vmem:[%s3] sm:$0x1]
        %v237 = vld [vmem:[%s1] sm:$0xff]
        %v238 = vld [vmem:[%s1 + $0x8] sm:$0xff]
        %v239 = vld [vmem:[%s1 + $0x10] sm:$0xff]
        %v240 = vld [vmem:[%s1 + $0x18] sm:$0xff]
        %vm241 = vcmask 261120
        %v243 = vsel %vm241, %v227, 0
        %v246 = vsel %vm241, %v228, 0
        %v249 = vsel %vm241, %v229, 0
        %v252 = vsel %vm241, %v230, 0
        %v255 = vsel %vm241, %v231, 0
        %v258 = vsel %vm241, %v232, 0
        %v261 = vsel %vm241, %v233, 0
        %v264 = vsel %vm241, %v234, 0
        %266 = vmatprep.subr.mxu0 0.0
        %267 = vmatpush1.msra.mxu0 %v237
        %268 = vmatprep.subr.mxu0 0.0
        %269 = vmatpush1.msra.mxu0 %v238
        %270 = vmatprep.subr.mxu0 0.0
        %271 = vmatpush1.msra.mxu0 %v239
        %272 = vmatprep.subr.mxu0 0.0
        %273 = vmatpush1.msra.mxu0 %v240
        %274 = vmatprep.subr.mxu0 0.0
        %275 = vmatpush1.msra.mxu0 0.0
        %276 = vmatprep.subr.mxu0 0.0
        %277 = vmatpush1.msra.mxu0 0.0
        %278 = vmatprep.subr.mxu0 0.0
        %279 = vmatpush1.msra.mxu0 0.0
        %280 = vmatprep.subr.mxu0 0.0
        %281 = vmatpush1.msra.mxu0 0.0
        %282 = vmatprep.subr.mxu0 0.0
        %283 = vmatpush1.msra.mxu0 0.0
        %284 = vmatprep.subr.mxu0 0.0
        %285 = vmatpush1.msra.mxu0 0.0
        %286 = vmatprep.subr.mxu0 0.0
        %287 = vmatpush1.msra.mxu0 0.0
        %288 = vmatprep.subr.mxu0 0.0
        %289 = vmatpush1.msra.mxu0 0.0
        %290 = vmatprep.subr.mxu0 0.0
        %291 = vmatpush1.msra.mxu0 0.0
        %292 = vmatprep.subr.mxu0 0.0
        %293 = vmatpush1.msra.mxu0 0.0
        %294 = vmatprep.subr.mxu0 0.0
        %295 = vmatpush1.msra.mxu0 0.0
        %296 = vmatprep.subr.mxu0 0.0
        %297 = vmatpush1.msra.mxu0 0.0
        %298 = vmatprep.subr.mxu0 0.0
        %299 = vmatpush1.msra.mxu0 0.0
        %300 = vmatprep.subr.mxu0 0.0
        %301 = vmatpush1.msra.mxu0 0.0
        %302 = vmatprep.subr.mxu0 0.0
        %303 = vmatpush1.msra.mxu0 0.0
        %304 = vmatprep.subr.mxu0 0.0
        %305 = vmatpush1.msra.mxu0 0.0
        %306 = vmatprep.subr.mxu0 0.0
        %307 = vmatpush1.msra.mxu0 0.0
        %308 = vmatprep.subr.mxu0 0.0
        %309 = vmatpush1.msra.mxu0 0.0
        %310 = vmatprep.subr.mxu0 0.0
        %311 = vmatpush1.msra.mxu0 0.0
        %312 = vmatprep.subr.mxu0 0.0
        %313 = vmatpush1.msra.mxu0 0.0
        %314 = vmatprep.subr.mxu0 0.0
        %315 = vmatpush1.msra.mxu0 0.0
        %316 = vmatprep.subr.mxu0 0.0
        %317 = vmatpush1.msra.mxu0 0.0
        %318 = vmatprep.subr.mxu0 0.0
        %319 = vmatpush1.msra.mxu0 0.0
        %320 = vmatprep.subr.mxu0 0.0
        %321 = vmatpush1.msra.mxu0 0.0
        %322 = vmatprep.subr.mxu0 0.0
        %323 = vmatpush1.msra.mxu0 0.0
        %324 = vmatprep.subr.mxu0 0.0
        %325 = vmatpush1.msra.mxu0 0.0
        %326 = vmatprep.subr.mxu0 0.0
        %327 = vmatpush1.msra.mxu0 0.0
        %328 = vmatprep.subr.mxu0 0.0
        %329 = vmatpush1.msra.mxu0 0.0
        %330 = vmatprep.mubr.f32.mxu0 0.0
        %331 = vmatmul.mubr.f32.gmra.mrb[0].mxu0 %v243
        %v332 = vpop.f32.mrb[0].mxu0
        %v333 = vadd.f32 0.0, %v332
        %v334 = vpop.f32.mrb[0].mxu0
        %335 = vmatprep.mubr.f32.mxu0 0.0
        %336 = vmatmul.mubr.f32.gmra.mrb[0].mxu0 %v246
        %v337 = vpop.f32.mrb[0].mxu0
        %v338 = vadd.f32 0.0, %v337
        %v339 = vpop.f32.mrb[0].mxu0
        %340 = vmatprep.mubr.f32.mxu0 0.0
        %341 = vmatmul.mubr.f32.gmra.mrb[0].mxu0 %v249
        %v342 = vpop.f32.mrb[0].mxu0
        %v343 = vadd.f32 0.0, %v342
        %v344 = vpop.f32.mrb[0].mxu0
        %345 = vmatprep.mubr.f32.mxu0 0.0
        %346 = vmatmul.mubr.f32.gmra.mrb[0].mxu0 %v252
        %v347 = vpop.f32.mrb[0].mxu0
        %v348 = vadd.f32 0.0, %v347
        %v349 = vpop.f32.mrb[0].mxu0
        %350 = vmatprep.mubr.f32.mxu0 0.0
        %351 = vmatmul.mubr.f32.gmra.mrb[0].mxu0 %v255
        %v352 = vpop.f32.mrb[0].mxu0
        %v353 = vadd.f32 0.0, %v352
        %v354 = vpop.f32.mrb[0].mxu0
        %355 = vmatprep.mubr.f32.mxu0 0.0
        %356 = vmatmul.mubr.f32.gmra.mrb[0].mxu0 %v258
        %v357 = vpop.f32.mrb[0].mxu0
        %v358 = vadd.f32 0.0, %v357
        %v359 = vpop.f32.mrb[0].mxu0
        %360 = vmatprep.mubr.f32.mxu0 0.0
        %361 = vmatmul.mubr.f32.gmra.mrb[0].mxu0 %v261
        %v362 = vpop.f32.mrb[0].mxu0
        %v363 = vadd.f32 0.0, %v362
        %v364 = vpop.f32.mrb[0].mxu0
        %365 = vmatprep.mubr.f32.mxu0 0.0
        %366 = vmatmul.mubr.f32.gmra.mrb[0].mxu0 %v264
        %v367 = vpop.f32.mrb[0].mxu0
        %v368 = vadd.f32 0.0, %v367
        %v369 = vpop.f32.mrb[0].mxu0
        %370 = vdwg.mxu0
        %v371 = vsel %vm241, %v333, 0.0
        %372 = vadd.xlane.f32.xlu0 %v371
        %v373 = vpop.xlane.xlu0 %372
        %v374 = vsel %vm241, %v338, 0.0
        %375 = vadd.xlane.f32.xlu0 %v374
        %v376 = vpop.xlane.xlu0 %375
        %v377 = vsel %vm241, %v343, 0.0
        %378 = vadd.xlane.f32.xlu0 %v377
        %v379 = vpop.xlane.xlu0 %378
        %v380 = vsel %vm241, %v348, 0.0
        %381 = vadd.xlane.f32.xlu0 %v380
        %v382 = vpop.xlane.xlu0 %381
        %v383 = vsel %vm241, %v353, 0.0
        %384 = vadd.xlane.f32.xlu0 %v383
        %v385 = vpop.xlane.xlu0 %384
        %v386 = vsel %vm241, %v358, 0.0
        %387 = vadd.xlane.f32.xlu0 %v386
        %v388 = vpop.xlane.xlu0 %387
        %v389 = vsel %vm241, %v363, 0.0
        %390 = vadd.xlane.f32.xlu0 %v389
        %v391 = vpop.xlane.xlu0 %390
        %v392 = vsel %vm241, %v368, 0.0
        %393 = vadd.xlane.f32.xlu0 %v392
        %v394 = vpop.xlane.xlu0 %393
        %v395 = vrcp.pop 32.0
        %v396 = vmul.f32 %v373, %v395
        %v397 = vmul.f32 %v376, %v395
        %v398 = vmul.f32 %v379, %v395
        %v399 = vmul.f32 %v382, %v395
        %v400 = vmul.f32 %v385, %v395
        %v401 = vmul.f32 %v388, %v395
        %v402 = vmul.f32 %v391, %v395
        %v403 = vmul.f32 %v394, %v395
        %v404 = vsub.f32 %v333, %v396
        %v405 = vsub.f32 %v338, %v397
        %v406 = vsub.f32 %v343, %v398
        %v407 = vsub.f32 %v348, %v399
        %v408 = vsub.f32 %v353, %v400
        %v409 = vsub.f32 %v358, %v401
        %v410 = vsub.f32 %v363, %v402
        %v411 = vsub.f32 %v368, %v403
        %v412 = vmul.f32 %v404, %v404
        %v413 = vmul.f32 %v405, %v405
        %v414 = vmul.f32 %v406, %v406
        %v415 = vmul.f32 %v407, %v407
        %v416 = vmul.f32 %v408, %v408
        %v417 = vmul.f32 %v409, %v409
        %v418 = vmul.f32 %v410, %v410
        %v419 = vmul.f32 %v411, %v411
        %v420 = vsel %vm241, %v412, 0.0
        %421 = vadd.xlane.f32.xlu0 %v420
        %v422 = vpop.xlane.xlu0 %421
        %v423 = vsel %vm241, %v413, 0.0
        %424 = vadd.xlane.f32.xlu0 %v423
        %v425 = vpop.xlane.xlu0 %424
        %v426 = vsel %vm241, %v414, 0.0
        %427 = vadd.xlane.f32.xlu0 %v426
        %v428 = vpop.xlane.xlu0 %427
        %v429 = vsel %vm241, %v415, 0.0
        %430 = vadd.xlane.f32.xlu0 %v429
        %v431 = vpop.xlane.xlu0 %430
        %v432 = vsel %vm241, %v416, 0.0
        %433 = vadd.xlane.f32.xlu0 %v432
        %v434 = vpop.xlane.xlu0 %433
        %v435 = vsel %vm241, %v417, 0.0
        %436 = vadd.xlane.f32.xlu0 %v435
        %v437 = vpop.xlane.xlu0 %436
        %v438 = vsel %vm241, %v418, 0.0
        %439 = vadd.xlane.f32.xlu0 %v438
        %v440 = vpop.xlane.xlu0 %439
        %v441 = vsel %vm241, %v419, 0.0
        %442 = vadd.xlane.f32.xlu0 %v441
        %v443 = vpop.xlane.xlu0 %442
        %v444 = vmul.f32 %v422, %v395
        %v445 = vmul.f32 %v425, %v395
        %v446 = vmul.f32 %v428, %v395
        %v447 = vmul.f32 %v431, %v395
        %v448 = vmul.f32 %v434, %v395
        %v449 = vmul.f32 %v437, %v395
        %v450 = vmul.f32 %v440, %v395
        %v451 = vmul.f32 %v443, %v395
        %v452 = vadd.f32 %v444, 1e-05
        %v453 = vadd.f32 %v445, 1e-05
        %v454 = vadd.f32 %v446, 1e-05
        %v455 = vadd.f32 %v447, 1e-05
        %v456 = vadd.f32 %v448, 1e-05
        %v457 = vadd.f32 %v449, 1e-05
        %v458 = vadd.f32 %v450, 1e-05
        %v459 = vadd.f32 %v451, 1e-05
        %v460 = vrsqrt.pop %v452
        %v461 = vrsqrt.pop %v453
        %v462 = vrsqrt.pop %v454
        %v463 = vrsqrt.pop %v455
        %v464 = vrsqrt.pop %v456
        %v465 = vrsqrt.pop %v457
        %v466 = vrsqrt.pop %v458
        %v467 = vrsqrt.pop %v459
        %v468 = vmul.f32 %v404, %v460
        %v469 = vmul.f32 %v405, %v461
        %v470 = vmul.f32 %v406, %v462
        %v471 = vmul.f32 %v407, %v463
        %v472 = vmul.f32 %v408, %v464
        %v473 = vmul.f32 %v409, %v465
        %v474 = vmul.f32 %v410, %v466
        %v475 = vmul.f32 %v411, %v467
        %484 = vrot.lane.b32.xlu0 %v333, 96
        %v485 = vpop.permute.xlu0 %484
        %486 = vrot.lane.b32.xlu0 %v338, 96
        %v487 = vpop.permute.xlu0 %486
        %488 = vrot.lane.b32.xlu0 %v343, 96
        %v489 = vpop.permute.xlu0 %488
        %490 = vrot.lane.b32.xlu0 %v348, 96
        %v491 = vpop.permute.xlu0 %490
        %492 = vrot.lane.b32.xlu0 %v353, 96
        %v493 = vpop.permute.xlu0 %492
        %494 = vrot.lane.b32.xlu0 %v358, 96
        %v495 = vpop.permute.xlu0 %494
        %496 = vrot.lane.b32.xlu0 %v363, 96
        %v497 = vpop.permute.xlu0 %496
        %498 = vrot.lane.b32.xlu0 %v368, 96
        %v499 = vpop.permute.xlu0 %498
        %v508 = vsel %vm241, %v485, 0.0
        %509 = vadd.xlane.f32.xlu0 %v508
        %v510 = vpop.xlane.xlu0 %509
        %v511 = vsel %vm241, %v487, 0.0
        %512 = vadd.xlane.f32.xlu0 %v511
        %v513 = vpop.xlane.xlu0 %512
        %v514 = vsel %vm241, %v489, 0.0
        %515 = vadd.xlane.f32.xlu0 %v514
        %v516 = vpop.xlane.xlu0 %515
        %v517 = vsel %vm241, %v491, 0.0
        %518 = vadd.xlane.f32.xlu0 %v517
        %v519 = vpop.xlane.xlu0 %518
        %v520 = vsel %vm241, %v493, 0.0
        %521 = vadd.xlane.f32.xlu0 %v520
        %v522 = vpop.xlane.xlu0 %521
        %v523 = vsel %vm241, %v495, 0.0
        %524 = vadd.xlane.f32.xlu0 %v523
        %v525 = vpop.xlane.xlu0 %524
        %v526 = vsel %vm241, %v497, 0.0
        %527 = vadd.xlane.f32.xlu0 %v526
        %v528 = vpop.xlane.xlu0 %527
        %v529 = vsel %vm241, %v499, 0.0
        %530 = vadd.xlane.f32.xlu0 %v529
        %v531 = vpop.xlane.xlu0 %530
        %v532 = vmul.f32 %v510, %v395
        %v533 = vmul.f32 %v513, %v395
        %v534 = vmul.f32 %v516, %v395
        %v535 = vmul.f32 %v519, %v395
        %v536 = vmul.f32 %v522, %v395
        %v537 = vmul.f32 %v525, %v395
        %v538 = vmul.f32 %v528, %v395
        %v539 = vmul.f32 %v531, %v395
        %v540 = vsub.f32 %v333, %v532
        %v541 = vsub.f32 %v338, %v533
        %v542 = vsub.f32 %v343, %v534
        %v543 = vsub.f32 %v348, %v535
        %v544 = vsub.f32 %v353, %v536
        %v545 = vsub.f32 %v358, %v537
        %v546 = vsub.f32 %v363, %v538
        %v547 = vsub.f32 %v368, %v539
        %v548 = vmul.f32 %v540, %v540
        %v549 = vmul.f32 %v541, %v541
        %v550 = vmul.f32 %v542, %v542
        %v551 = vmul.f32 %v543, %v543
        %v552 = vmul.f32 %v544, %v544
        %v553 = vmul.f32 %v545, %v545
        %v554 = vmul.f32 %v546, %v546
        %v555 = vmul.f32 %v547, %v547
        %564 = vrot.lane.b32.xlu0 %v548, 96
        %v565 = vpop.permute.xlu0 %564
        %566 = vrot.lane.b32.xlu0 %v549, 96
        %v567 = vpop.permute.xlu0 %566
        %568 = vrot.lane.b32.xlu0 %v550, 96
        %v569 = vpop.permute.xlu0 %568
        %570 = vrot.lane.b32.xlu0 %v551, 96
        %v571 = vpop.permute.xlu0 %570
        %572 = vrot.lane.b32.xlu0 %v552, 96
        %v573 = vpop.permute.xlu0 %572
        %574 = vrot.lane.b32.xlu0 %v553, 96
        %v575 = vpop.permute.xlu0 %574
        %576 = vrot.lane.b32.xlu0 %v554, 96
        %v577 = vpop.permute.xlu0 %576
        %578 = vrot.lane.b32.xlu0 %v555, 96
        %v579 = vpop.permute.xlu0 %578
        %v588 = vsel %vm241, %v565, 0.0
        %589 = vadd.xlane.f32.xlu0 %v588
        %v590 = vpop.xlane.xlu0 %589
        %v591 = vsel %vm241, %v567, 0.0
        %592 = vadd.xlane.f32.xlu0 %v591
        %v593 = vpop.xlane.xlu0 %592
        %v594 = vsel %vm241, %v569, 0.0
        %595 = vadd.xlane.f32.xlu0 %v594
        %v596 = vpop.xlane.xlu0 %595
        %v597 = vsel %vm241, %v571, 0.0
        %598 = vadd.xlane.f32.xlu0 %v597
        %v599 = vpop.xlane.xlu0 %598
        %v600 = vsel %vm241, %v573, 0.0
        %601 = vadd.xlane.f32.xlu0 %v600
        %v602 = vpop.xlane.xlu0 %601
        %v603 = vsel %vm241, %v575, 0.0
        %604 = vadd.xlane.f32.xlu0 %v603
        %v605 = vpop.xlane.xlu0 %604
        %v606 = vsel %vm241, %v577, 0.0
        %607 = vadd.xlane.f32.xlu0 %v606
        %v608 = vpop.xlane.xlu0 %607
        %v609 = vsel %vm241, %v579, 0.0
        %610 = vadd.xlane.f32.xlu0 %v609
        %v611 = vpop.xlane.xlu0 %610
        %v612 = vmul.f32 %v590, %v395
        %v613 = vmul.f32 %v593, %v395
        %v614 = vmul.f32 %v596, %v395
        %v615 = vmul.f32 %v599, %v395
        %v616 = vmul.f32 %v602, %v395
        %v617 = vmul.f32 %v605, %v395
        %v618 = vmul.f32 %v608, %v395
        %v619 = vmul.f32 %v611, %v395
        %v620 = vadd.f32 %v612, 1e-05
        %v621 = vadd.f32 %v613, 1e-05
        %v622 = vadd.f32 %v614, 1e-05
        %v623 = vadd.f32 %v615, 1e-05
        %v624 = vadd.f32 %v616, 1e-05
        %v625 = vadd.f32 %v617, 1e-05
        %v626 = vadd.f32 %v618, 1e-05
        %v627 = vadd.f32 %v619, 1e-05
        %v628 = vrsqrt.pop %v620
        %v629 = vrsqrt.pop %v621
        %v630 = vrsqrt.pop %v622
        %v631 = vrsqrt.pop %v623
        %v632 = vrsqrt.pop %v624
        %v633 = vrsqrt.pop %v625
        %v634 = vrsqrt.pop %v626
        %v635 = vrsqrt.pop %v627
        %v636 = vmul.f32 %v540, %v628
        %v637 = vmul.f32 %v541, %v629
        %v638 = vmul.f32 %v542, %v630
        %v639 = vmul.f32 %v543, %v631
        %v640 = vmul.f32 %v544, %v632
        %v641 = vmul.f32 %v545, %v633
        %v642 = vmul.f32 %v546, %v634
        %v643 = vmul.f32 %v547, %v635
        %644 = vrot.lane.b32.xlu0 %v333, 64
        %v645 = vpop.permute.xlu0 %644
        %646 = vrot.lane.b32.xlu0 %v338, 64
        %v647 = vpop.permute.xlu0 %646
        %648 = vrot.lane.b32.xlu0 %v343, 64
        %v649 = vpop.permute.xlu0 %648
        %650 = vrot.lane.b32.xlu0 %v348, 64
        %v651 = vpop.permute.xlu0 %650
        %652 = vrot.lane.b32.xlu0 %v353, 64
        %v653 = vpop.permute.xlu0 %652
        %654 = vrot.lane.b32.xlu0 %v358, 64
        %v655 = vpop.permute.xlu0 %654
        %656 = vrot.lane.b32.xlu0 %v363, 64
        %v657 = vpop.permute.xlu0 %656
        %658 = vrot.lane.b32.xlu0 %v368, 64
        %v659 = vpop.permute.xlu0 %658
        %v668 = vsel %vm241, %v645, 0.0
        %669 = vadd.xlane.f32.xlu0 %v668
        %v670 = vpop.xlane.xlu0 %669
        %v671 = vsel %vm241, %v647, 0.0
        %672 = vadd.xlane.f32.xlu0 %v671
        %v673 = vpop.xlane.xlu0 %672
        %v674 = vsel %vm241, %v649, 0.0
        %675 = vadd.xlane.f32.xlu0 %v674
        %v676 = vpop.xlane.xlu0 %675
        %v677 = vsel %vm241, %v651, 0.0
        %678 = vadd.xlane.f32.xlu0 %v677
        %v679 = vpop.xlane.xlu0 %678
        %v680 = vsel %vm241, %v653, 0.0
        %681 = vadd.xlane.f32.xlu0 %v680
        %v682 = vpop.xlane.xlu0 %681
        %v683 = vsel %vm241, %v655, 0.0
        %684 = vadd.xlane.f32.xlu0 %v683
        %v685 = vpop.xlane.xlu0 %684
        %v686 = vsel %vm241, %v657, 0.0
        %687 = vadd.xlane.f32.xlu0 %v686
        %v688 = vpop.xlane.xlu0 %687
        %v689 = vsel %vm241, %v659, 0.0
        %690 = vadd.xlane.f32.xlu0 %v689
        %v691 = vpop.xlane.xlu0 %690
        %v692 = vmul.f32 %v670, %v395
        %v693 = vmul.f32 %v673, %v395
        %v694 = vmul.f32 %v676, %v395
        %v695 = vmul.f32 %v679, %v395
        %v696 = vmul.f32 %v682, %v395
        %v697 = vmul.f32 %v685, %v395
        %v698 = vmul.f32 %v688, %v395
        %v699 = vmul.f32 %v691, %v395
        %v700 = vsub.f32 %v333, %v692
        %v701 = vsub.f32 %v338, %v693
        %v702 = vsub.f32 %v343, %v694
        %v703 = vsub.f32 %v348, %v695
        %v704 = vsub.f32 %v353, %v696
        %v705 = vsub.f32 %v358, %v697
        %v706 = vsub.f32 %v363, %v698
        %v707 = vsub.f32 %v368, %v699
        %v708 = vmul.f32 %v700, %v700
        %v709 = vmul.f32 %v701, %v701
        %v710 = vmul.f32 %v702, %v702
        %v711 = vmul.f32 %v703, %v703
        %v712 = vmul.f32 %v704, %v704
        %v713 = vmul.f32 %v705, %v705
        %v714 = vmul.f32 %v706, %v706
        %v715 = vmul.f32 %v707, %v707
        %724 = vrot.lane.b32.xlu0 %v708, 64
        %v725 = vpop.permute.xlu0 %724
        %726 = vrot.lane.b32.xlu0 %v709, 64
        %v727 = vpop.permute.xlu0 %726
        %728 = vrot.lane.b32.xlu0 %v710, 64
        %v729 = vpop.permute.xlu0 %728
        %730 = vrot.lane.b32.xlu0 %v711, 64
        %v731 = vpop.permute.xlu0 %730
        %732 = vrot.lane.b32.xlu0 %v712, 64
        %v733 = vpop.permute.xlu0 %732
        %734 = vrot.lane.b32.xlu0 %v713, 64
        %v735 = vpop.permute.xlu0 %734
        %736 = vrot.lane.b32.xlu0 %v714, 64
        %v737 = vpop.permute.xlu0 %736
        %738 = vrot.lane.b32.xlu0 %v715, 64
        %v739 = vpop.permute.xlu0 %738
        %v748 = vsel %vm241, %v725, 0.0
        %749 = vadd.xlane.f32.xlu0 %v748
        %v750 = vpop.xlane.xlu0 %749
        %v751 = vsel %vm241, %v727, 0.0
        %752 = vadd.xlane.f32.xlu0 %v751
        %v753 = vpop.xlane.xlu0 %752
        %v754 = vsel %vm241, %v729, 0.0
        %755 = vadd.xlane.f32.xlu0 %v754
        %v756 = vpop.xlane.xlu0 %755
        %v757 = vsel %vm241, %v731, 0.0
        %758 = vadd.xlane.f32.xlu0 %v757
        %v759 = vpop.xlane.xlu0 %758
        %v760 = vsel %vm241, %v733, 0.0
        %761 = vadd.xlane.f32.xlu0 %v760
        %v762 = vpop.xlane.xlu0 %761
        %v763 = vsel %vm241, %v735, 0.0
        %764 = vadd.xlane.f32.xlu0 %v763
        %v765 = vpop.xlane.xlu0 %764
        %v766 = vsel %vm241, %v737, 0.0
        %767 = vadd.xlane.f32.xlu0 %v766
        %v768 = vpop.xlane.xlu0 %767
        %v769 = vsel %vm241, %v739, 0.0
        %770 = vadd.xlane.f32.xlu0 %v769
        %v771 = vpop.xlane.xlu0 %770
        %v772 = vmul.f32 %v750, %v395
        %v773 = vmul.f32 %v753, %v395
        %v774 = vmul.f32 %v756, %v395
        %v775 = vmul.f32 %v759, %v395
        %v776 = vmul.f32 %v762, %v395
        %v777 = vmul.f32 %v765, %v395
        %v778 = vmul.f32 %v768, %v395
        %v779 = vmul.f32 %v771, %v395
        %v780 = vadd.f32 %v772, 1e-05
        %v781 = vadd.f32 %v773, 1e-05
        %v782 = vadd.f32 %v774, 1e-05
        %v783 = vadd.f32 %v775, 1e-05
        %v784 = vadd.f32 %v776, 1e-05
        %v785 = vadd.f32 %v777, 1e-05
        %v786 = vadd.f32 %v778, 1e-05
        %v787 = vadd.f32 %v779, 1e-05
        %v788 = vrsqrt.pop %v780
        %v789 = vrsqrt.pop %v781
        %v790 = vrsqrt.pop %v782
        %v791 = vrsqrt.pop %v783
        %v792 = vrsqrt.pop %v784
        %v793 = vrsqrt.pop %v785
        %v794 = vrsqrt.pop %v786
        %v795 = vrsqrt.pop %v787
        %v796 = vmul.f32 %v700, %v788
        %v797 = vmul.f32 %v701, %v789
        %v798 = vmul.f32 %v702, %v790
        %v799 = vmul.f32 %v703, %v791
        %v800 = vmul.f32 %v704, %v792
        %v801 = vmul.f32 %v705, %v793
        %v802 = vmul.f32 %v706, %v794
        %v803 = vmul.f32 %v707, %v795
        %804 = vrot.lane.b32.xlu0 %v333, 32
        %v805 = vpop.permute.xlu0 %804
        %806 = vrot.lane.b32.xlu0 %v338, 32
        %v807 = vpop.permute.xlu0 %806
        %808 = vrot.lane.b32.xlu0 %v343, 32
        %v809 = vpop.permute.xlu0 %808
        %810 = vrot.lane.b32.xlu0 %v348, 32
        %v811 = vpop.permute.xlu0 %810
        %812 = vrot.lane.b32.xlu0 %v353, 32
        %v813 = vpop.permute.xlu0 %812
        %814 = vrot.lane.b32.xlu0 %v358, 32
        %v815 = vpop.permute.xlu0 %814
        %816 = vrot.lane.b32.xlu0 %v363, 32
        %v817 = vpop.permute.xlu0 %816
        %818 = vrot.lane.b32.xlu0 %v368, 32
        %v819 = vpop.permute.xlu0 %818
        %v828 = vsel %vm241, %v805, 0.0
        %829 = vadd.xlane.f32.xlu0 %v828
        %v830 = vpop.xlane.xlu0 %829
        %v831 = vsel %vm241, %v807, 0.0
        %832 = vadd.xlane.f32.xlu0 %v831
        %v833 = vpop.xlane.xlu0 %832
        %v834 = vsel %vm241, %v809, 0.0
        %835 = vadd.xlane.f32.xlu0 %v834
        %v836 = vpop.xlane.xlu0 %835
        %v837 = vsel %vm241, %v811, 0.0
        %838 = vadd.xlane.f32.xlu0 %v837
        %v839 = vpop.xlane.xlu0 %838
        %v840 = vsel %vm241, %v813, 0.0
        %841 = vadd.xlane.f32.xlu0 %v840
        %v842 = vpop.xlane.xlu0 %841
        %v843 = vsel %vm241, %v815, 0.0
        %844 = vadd.xlane.f32.xlu0 %v843
        %v845 = vpop.xlane.xlu0 %844
        %v846 = vsel %vm241, %v817, 0.0
        %847 = vadd.xlane.f32.xlu0 %v846
        %v848 = vpop.xlane.xlu0 %847
        %v849 = vsel %vm241, %v819, 0.0
        %850 = vadd.xlane.f32.xlu0 %v849
        %v851 = vpop.xlane.xlu0 %850
        %v852 = vmul.f32 %v830, %v395
        %v853 = vmul.f32 %v833, %v395
        %v854 = vmul.f32 %v836, %v395
        %v855 = vmul.f32 %v839, %v395
        %v856 = vmul.f32 %v842, %v395
        %v857 = vmul.f32 %v845, %v395
        %v858 = vmul.f32 %v848, %v395
        %v859 = vmul.f32 %v851, %v395
        %v860 = vsub.f32 %v333, %v852
        %v861 = vsub.f32 %v338, %v853
        %v862 = vsub.f32 %v343, %v854
        %v863 = vsub.f32 %v348, %v855
        %v864 = vsub.f32 %v353, %v856
        %v865 = vsub.f32 %v358, %v857
        %v866 = vsub.f32 %v363, %v858
        %v867 = vsub.f32 %v368, %v859
        %v868 = vmul.f32 %v860, %v860
        %v869 = vmul.f32 %v861, %v861
        %v870 = vmul.f32 %v862, %v862
        %v871 = vmul.f32 %v863, %v863
        %v872 = vmul.f32 %v864, %v864
        %v873 = vmul.f32 %v865, %v865
        %v874 = vmul.f32 %v866, %v866
        %v875 = vmul.f32 %v867, %v867
        %884 = vrot.lane.b32.xlu0 %v868, 32
        %v885 = vpop.permute.xlu0 %884
        %886 = vrot.lane.b32.xlu0 %v869, 32
        %v887 = vpop.permute.xlu0 %886
        %888 = vrot.lane.b32.xlu0 %v870, 32
        %v889 = vpop.permute.xlu0 %888
        %890 = vrot.lane.b32.xlu0 %v871, 32
        %v891 = vpop.permute.xlu0 %890
        %892 = vrot.lane.b32.xlu0 %v872, 32
        %v893 = vpop.permute.xlu0 %892
        %894 = vrot.lane.b32.xlu0 %v873, 32
        %v895 = vpop.permute.xlu0 %894
        %896 = vrot.lane.b32.xlu0 %v874, 32
        %v897 = vpop.permute.xlu0 %896
        %898 = vrot.lane.b32.xlu0 %v875, 32
        %v899 = vpop.permute.xlu0 %898
        %v908 = vsel %vm241, %v885, 0.0
        %909 = vadd.xlane.f32.xlu0 %v908
        %v910 = vpop.xlane.xlu0 %909
        %v911 = vsel %vm241, %v887, 0.0
        %912 = vadd.xlane.f32.xlu0 %v911
        %v913 = vpop.xlane.xlu0 %912
        %v914 = vsel %vm241, %v889, 0.0
        %915 = vadd.xlane.f32.xlu0 %v914
        %v916 = vpop.xlane.xlu0 %915
        %v917 = vsel %vm241, %v891, 0.0
        %918 = vadd.xlane.f32.xlu0 %v917
        %v919 = vpop.xlane.xlu0 %918
        %v920 = vsel %vm241, %v893, 0.0
        %921 = vadd.xlane.f32.xlu0 %v920
        %v922 = vpop.xlane.xlu0 %921
        %v923 = vsel %vm241, %v895, 0.0
        %924 = vadd.xlane.f32.xlu0 %v923
        %v925 = vpop.xlane.xlu0 %924
        %v926 = vsel %vm241, %v897, 0.0
        %927 = vadd.xlane.f32.xlu0 %v926
        %v928 = vpop.xlane.xlu0 %927
        %v929 = vsel %vm241, %v899, 0.0
        %930 = vadd.xlane.f32.xlu0 %v929
        %v931 = vpop.xlane.xlu0 %930
        %v932 = vmul.f32 %v910, %v395
        %v933 = vmul.f32 %v913, %v395
        %v934 = vmul.f32 %v916, %v395
        %v935 = vmul.f32 %v919, %v395
        %v936 = vmul.f32 %v922, %v395
        %v937 = vmul.f32 %v925, %v395
        %v938 = vmul.f32 %v928, %v395
        %v939 = vmul.f32 %v931, %v395
        %v940 = vadd.f32 %v932, 1e-05
        %v941 = vadd.f32 %v933, 1e-05
        %v942 = vadd.f32 %v934, 1e-05
        %v943 = vadd.f32 %v935, 1e-05
        %v944 = vadd.f32 %v936, 1e-05
        %v945 = vadd.f32 %v937, 1e-05
        %v946 = vadd.f32 %v938, 1e-05
        %v947 = vadd.f32 %v939, 1e-05
        %v948 = vrsqrt.pop %v940
        %v949 = vrsqrt.pop %v941
        %v950 = vrsqrt.pop %v942
        %v951 = vrsqrt.pop %v943
        %v952 = vrsqrt.pop %v944
        %v953 = vrsqrt.pop %v945
        %v954 = vrsqrt.pop %v946
        %v955 = vrsqrt.pop %v947
        %v956 = vmul.f32 %v860, %v948
        %v957 = vmul.f32 %v861, %v949
        %v958 = vmul.f32 %v862, %v950
        %v959 = vmul.f32 %v863, %v951
        %v960 = vmul.f32 %v864, %v952
        %v961 = vmul.f32 %v865, %v953
        %v962 = vmul.f32 %v866, %v954
        %v963 = vmul.f32 %v867, %v955
        %v964 = vsel %vm241, %v468, %v636
        %v965 = vsel %vm241, %v469, %v637
        %v966 = vsel %vm241, %v470, %v638
        %v967 = vsel %vm241, %v471, %v639
        %v968 = vsel %vm241, %v472, %v640
        %v969 = vsel %vm241, %v473, %v641
        %v970 = vsel %vm241, %v474, %v642
        %v971 = vsel %vm241, %v475, %v643
        %vm972 = vcmask 523264
        %v973 = vsel %vm972, %v964, %v796
        %v974 = vsel %vm972, %v965, %v797
        %v975 = vsel %vm972, %v966, %v798
        %v976 = vsel %vm972, %v967, %v799
        %v977 = vsel %vm972, %v968, %v800
        %v978 = vsel %vm972, %v969, %v801
        %v979 = vsel %vm972, %v970, %v802
        %v980 = vsel %vm972, %v971, %v803
        %vm981 = vcmask 785408
        %v982 = vsel %vm981, %v973, %v956
        %v983 = vsel %vm981, %v974, %v957
        %v984 = vsel %vm981, %v975, %v958
        %v985 = vsel %vm981, %v976, %v959
        %v986 = vsel %vm981, %v977, %v960
        %v987 = vsel %vm981, %v978, %v961
        %v988 = vsel %vm981, %v979, %v962
        %v989 = vsel %vm981, %v980, %v963
        %v991 = vlaneseq
        %v992 = vshrl.u32 %v991, 7
        %v993 = vsub.s32 0, %v992
        %v994 = vrot.slane %v235, %v993
        %v996 = vmul.f32 %v982, %v994
        %v997 = vmul.f32 %v983, %v994
        %v998 = vmul.f32 %v984, %v994
        %v999 = vmul.f32 %v985, %v994
        %v1000 = vmul.f32 %v986, %v994
        %v1001 = vmul.f32 %v987, %v994
        %v1002 = vmul.f32 %v988, %v994
        %v1003 = vmul.f32 %v989, %v994
        %v1005 = vlaneseq
        %v1006 = vshrl.u32 %v1005, 7
        %v1007 = vsub.s32 0, %v1006
        %v1008 = vrot.slane %v236, %v1007
        %v1010 = vadd.f32 %v996, %v1008
        %v1011 = vadd.f32 %v997, %v1008
        %v1012 = vadd.f32 %v998, %v1008
        %v1013 = vadd.f32 %v999, %v1008
        %v1014 = vadd.f32 %v1000, %v1008
        %v1015 = vadd.f32 %v1001, %v1008
        %v1016 = vadd.f32 %v1002, %v1008
        %v1017 = vadd.f32 %v1003, %v1008
        %1018 = vst [vmem:[%s215] sm:$0xff] %v1010
        %1019 = vst [vmem:[%s215 + $0x20] sm:$0xff] %v1011
        %1020 = vst [vmem:[%s215 + $0x40] sm:$0xff] %v1012
        %1021 = vst [vmem:[%s215 + $0x60] sm:$0xff] %v1013
        %1022 = vst [vmem:[%s215 + $0x80] sm:$0xff] %v1014
        %1023 = vst [vmem:[%s215 + $0xa0] sm:$0xff] %v1015
        %1024 = vst [vmem:[%s215 + $0xc0] sm:$0xff] %v1016
        %1025 = vst [vmem:[%s215 + $0xe0] sm:$0xff] %v1017
        %s1026 = scalar_lea.vmem %s1, 32
        %v1027 = vld [vmem:[%s1026] sm:$0xff]
        %v1028 = vld [vmem:[%s1026 + $0x8] sm:$0xff]
        %v1029 = vld [vmem:[%s1026 + $0x10] sm:$0xff]
        %v1030 = vld [vmem:[%s1026 + $0x18] sm:$0xff]
        %1031 = vmatprep.subr.mxu0 0.0
        %1032 = vmatpush1.msra.mxu0 %v1027
        %1033 = vmatprep.subr.mxu0 0.0
        %1034 = vmatpush1.msra.mxu0 %v1028
        %1035 = vmatprep.subr.mxu0 0.0
        %1036 = vmatpush1.msra.mxu0 %v1029
        %1037 = vmatprep.subr.mxu0 0.0
        %1038 = vmatpush1.msra.mxu0 %v1030
        %1039 = vmatprep.subr.mxu0 0.0
        %1040 = vmatpush1.msra.mxu0 0.0
        %1041 = vmatprep.subr.mxu0 0.0
        %1042 = vmatpush1.msra.mxu0 0.0
        %1043 = vmatprep.subr.mxu0 0.0
        %1044 = vmatpush1.msra.mxu0 0.0
        %1045 = vmatprep.subr.mxu0 0.0
        %1046 = vmatpush1.msra.mxu0 0.0
        %1047 = vmatprep.subr.mxu0 0.0
        %1048 = vmatpush1.msra.mxu0 0.0
        %1049 = vmatprep.subr.mxu0 0.0
        %1050 = vmatpush1.msra.mxu0 0.0
        %1051 = vmatprep.subr.mxu0 0.0
        %1052 = vmatpush1.msra.mxu0 0.0
        %1053 = vmatprep.subr.mxu0 0.0
        %1054 = vmatpush1.msra.mxu0 0.0
        %1055 = vmatprep.subr.mxu0 0.0
        %1056 = vmatpush1.msra.mxu0 0.0
        %1057 = vmatprep.subr.mxu0 0.0
        %1058 = vmatpush1.msra.mxu0 0.0
        %1059 = vmatprep.subr.mxu0 0.0
        %1060 = vmatpush1.msra.mxu0 0.0
        %1061 = vmatprep.subr.mxu0 0.0
        %1062 = vmatpush1.msra.mxu0 0.0
        %1063 = vmatprep.subr.mxu0 0.0
        %1064 = vmatpush1.msra.mxu0 0.0
        %1065 = vmatprep.subr.mxu0 0.0
        %1066 = vmatpush1.msra.mxu0 0.0
        %1067 = vmatprep.subr.mxu0 0.0
        %1068 = vmatpush1.msra.mxu0 0.0
        %1069 = vmatprep.subr.mxu0 0.0
        %1070 = vmatpush1.msra.mxu0 0.0
        %1071 = vmatprep.subr.mxu0 0.0
        %1072 = vmatpush1.msra.mxu0 0.0
        %1073 = vmatprep.subr.mxu0 0.0
        %1074 = vmatpush1.msra.mxu0 0.0
        %1075 = vmatprep.subr.mxu0 0.0
        %1076 = vmatpush1.msra.mxu0 0.0
        %1077 = vmatprep.subr.mxu0 0.0
        %1078 = vmatpush1.msra.mxu0 0.0
        %1079 = vmatprep.subr.mxu0 0.0
        %1080 = vmatpush1.msra.mxu0 0.0
        %1081 = vmatprep.subr.mxu0 0.0
        %1082 = vmatpush1.msra.mxu0 0.0
        %1083 = vmatprep.subr.mxu0 0.0
        %1084 = vmatpush1.msra.mxu0 0.0
        %1085 = vmatprep.subr.mxu0 0.0
        %1086 = vmatpush1.msra.mxu0 0.0
        %1087 = vmatprep.subr.mxu0 0.0
        %1088 = vmatpush1.msra.mxu0 0.0
        %1089 = vmatprep.subr.mxu0 0.0
        %1090 = vmatpush1.msra.mxu0 0.0
        %1091 = vmatprep.subr.mxu0 0.0
        %1092 = vmatpush1.msra.mxu0 0.0
        %1093 = vmatprep.subr.mxu0 0.0
        %1094 = vmatpush1.msra.mxu0 0.0
        %1095 = vmatprep.mubr.f32.mxu0 0.0
        %1096 = vmatmul.mubr.f32.gmra.mrb[0].mxu0 %v243
        %v1097 = vpop.f32.mrb[0].mxu0
        %v1098 = vadd.f32 0.0, %v1097
        %v1099 = vpop.f32.mrb[0].mxu0
        %1100 = vmatprep.mubr.f32.mxu0 0.0
        %1101 = vmatmul.mubr.f32.gmra.mrb[0].mxu0 %v246
        %v1102 = vpop.f32.mrb[0].mxu0
        %v1103 = vadd.f32 0.0, %v1102
        %v1104 = vpop.f32.mrb[0].mxu0
        %1105 = vmatprep.mubr.f32.mxu0 0.0
        %1106 = vmatmul.mubr.f32.gmra.mrb[0].mxu0 %v249
        %v1107 = vpop.f32.mrb[0].mxu0
        %v1108 = vadd.f32 0.0, %v1107
        %v1109 = vpop.f32.mrb[0].mxu0
        %1110 = vmatprep.mubr.f32.mxu0 0.0
        %1111 = vmatmul.mubr.f32.gmra.mrb[0].mxu0 %v252
        %v1112 = vpop.f32.mrb[0].mxu0
        %v1113 = vadd.f32 0.0, %v1112
        %v1114 = vpop.f32.mrb[0].mxu0
        %1115 = vmatprep.mubr.f32.mxu0 0.0
        %1116 = vmatmul.mubr.f32.gmra.mrb[0].mxu0 %v255
        %v1117 = vpop.f32.mrb[0].mxu0
        %v1118 = vadd.f32 0.0, %v1117
        %v1119 = vpop.f32.mrb[0].mxu0
        %1120 = vmatprep.mubr.f32.mxu0 0.0
        %1121 = vmatmul.mubr.f32.gmra.mrb[0].mxu0 %v258
        %v1122 = vpop.f32.mrb[0].mxu0
        %v1123 = vadd.f32 0.0, %v1122
        %v1124 = vpop.f32.mrb[0].mxu0
        %1125 = vmatprep.mubr.f32.mxu0 0.0
        %1126 = vmatmul.mubr.f32.gmra.mrb[0].mxu0 %v261
        %v1127 = vpop.f32.mrb[0].mxu0
        %v1128 = vadd.f32 0.0, %v1127
        %v1129 = vpop.f32.mrb[0].mxu0
        %1130 = vmatprep.mubr.f32.mxu0 0.0
        %1131 = vmatmul.mubr.f32.gmra.mrb[0].mxu0 %v264
        %v1132 = vpop.f32.mrb[0].mxu0
        %v1133 = vadd.f32 0.0, %v1132
        %v1134 = vpop.f32.mrb[0].mxu0
        %1135 = vdwg.mxu0
        %v1136 = vsel %vm241, %v1098, 0.0
        %1137 = vadd.xlane.f32.xlu0 %v1136
        %v1138 = vpop.xlane.xlu0 %1137
        %v1139 = vsel %vm241, %v1103, 0.0
        %1140 = vadd.xlane.f32.xlu0 %v1139
        %v1141 = vpop.xlane.xlu0 %1140
        %v1142 = vsel %vm241, %v1108, 0.0
        %1143 = vadd.xlane.f32.xlu0 %v1142
        %v1144 = vpop.xlane.xlu0 %1143
        %v1145 = vsel %vm241, %v1113, 0.0
        %1146 = vadd.xlane.f32.xlu0 %v1145
        %v1147 = vpop.xlane.xlu0 %1146
        %v1148 = vsel %vm241, %v1118, 0.0
        %1149 = vadd.xlane.f32.xlu0 %v1148
        %v1150 = vpop.xlane.xlu0 %1149
        %v1151 = vsel %vm241, %v1123, 0.0
        %1152 = vadd.xlane.f32.xlu0 %v1151
        %v1153 = vpop.xlane.xlu0 %1152
        %v1154 = vsel %vm241, %v1128, 0.0
        %1155 = vadd.xlane.f32.xlu0 %v1154
        %v1156 = vpop.xlane.xlu0 %1155
        %v1157 = vsel %vm241, %v1133, 0.0
        %1158 = vadd.xlane.f32.xlu0 %v1157
        %v1159 = vpop.xlane.xlu0 %1158
        %v1160 = vmul.f32 %v1138, %v395
        %v1161 = vmul.f32 %v1141, %v395
        %v1162 = vmul.f32 %v1144, %v395
        %v1163 = vmul.f32 %v1147, %v395
        %v1164 = vmul.f32 %v1150, %v395
        %v1165 = vmul.f32 %v1153, %v395
        %v1166 = vmul.f32 %v1156, %v395
        %v1167 = vmul.f32 %v1159, %v395
        %v1168 = vsub.f32 %v1098, %v1160
        %v1169 = vsub.f32 %v1103, %v1161
        %v1170 = vsub.f32 %v1108, %v1162
        %v1171 = vsub.f32 %v1113, %v1163
        %v1172 = vsub.f32 %v1118, %v1164
        %v1173 = vsub.f32 %v1123, %v1165
        %v1174 = vsub.f32 %v1128, %v1166
        %v1175 = vsub.f32 %v1133, %v1167
        %v1176 = vmul.f32 %v1168, %v1168
        %v1177 = vmul.f32 %v1169, %v1169
        %v1178 = vmul.f32 %v1170, %v1170
        %v1179 = vmul.f32 %v1171, %v1171
        %v1180 = vmul.f32 %v1172, %v1172
        %v1181 = vmul.f32 %v1173, %v1173
        %v1182 = vmul.f32 %v1174, %v1174
        %v1183 = vmul.f32 %v1175, %v1175
        %v1184 = vsel %vm241, %v1176, 0.0
        %1185 = vadd.xlane.f32.xlu0 %v1184
        %v1186 = vpop.xlane.xlu0 %1185
        %v1187 = vsel %vm241, %v1177, 0.0
        %1188 = vadd.xlane.f32.xlu0 %v1187
        %v1189 = vpop.xlane.xlu0 %1188
        %v1190 = vsel %vm241, %v1178, 0.0
        %1191 = vadd.xlane.f32.xlu0 %v1190
        %v1192 = vpop.xlane.xlu0 %1191
        %v1193 = vsel %vm241, %v1179, 0.0
        %1194 = vadd.xlane.f32.xlu0 %v1193
        %v1195 = vpop.xlane.xlu0 %1194
        %v1196 = vsel %vm241, %v1180, 0.0
        %1197 = vadd.xlane.f32.xlu0 %v1196
        %v1198 = vpop.xlane.xlu0 %1197
        %v1199 = vsel %vm241, %v1181, 0.0
        %1200 = vadd.xlane.f32.xlu0 %v1199
        %v1201 = vpop.xlane.xlu0 %1200
        %v1202 = vsel %vm241, %v1182, 0.0
        %1203 = vadd.xlane.f32.xlu0 %v1202
        %v1204 = vpop.xlane.xlu0 %1203
        %v1205 = vsel %vm241, %v1183, 0.0
        %1206 = vadd.xlane.f32.xlu0 %v1205
        %v1207 = vpop.xlane.xlu0 %1206
        %v1208 = vmul.f32 %v1186, %v395
        %v1209 = vmul.f32 %v1189, %v395
        %v1210 = vmul.f32 %v1192, %v395
        %v1211 = vmul.f32 %v1195, %v395
        %v1212 = vmul.f32 %v1198, %v395
        %v1213 = vmul.f32 %v1201, %v395
        %v1214 = vmul.f32 %v1204, %v395
        %v1215 = vmul.f32 %v1207, %v395
        %v1216 = vadd.f32 %v1208, 1e-05
        %v1217 = vadd.f32 %v1209, 1e-05
        %v1218 = vadd.f32 %v1210, 1e-05
        %v1219 = vadd.f32 %v1211, 1e-05
        %v1220 = vadd.f32 %v1212, 1e-05
        %v1221 = vadd.f32 %v1213, 1e-05
        %v1222 = vadd.f32 %v1214, 1e-05
        %v1223 = vadd.f32 %v1215, 1e-05
        %v1224 = vrsqrt.pop %v1216
        %v1225 = vrsqrt.pop %v1217
        %v1226 = vrsqrt.pop %v1218
        %v1227 = vrsqrt.pop %v1219
        %v1228 = vrsqrt.pop %v1220
        %v1229 = vrsqrt.pop %v1221
        %v1230 = vrsqrt.pop %v1222
        %v1231 = vrsqrt.pop %v1223
        %v1232 = vmul.f32 %v1168, %v1224
        %v1233 = vmul.f32 %v1169, %v1225
        %v1234 = vmul.f32 %v1170, %v1226
        %v1235 = vmul.f32 %v1171, %v1227
        %v1236 = vmul.f32 %v1172, %v1228
        %v1237 = vmul.f32 %v1173, %v1229
        %v1238 = vmul.f32 %v1174, %v1230
        %v1239 = vmul.f32 %v1175, %v1231
        %1248 = vrot.lane.b32.xlu0 %v1098, 96
        %v1249 = vpop.permute.xlu0 %1248
        %1250 = vrot.lane.b32.xlu0 %v1103, 96
        %v1251 = vpop.permute.xlu0 %1250
        %1252 = vrot.lane.b32.xlu0 %v1108, 96
        %v1253 = vpop.permute.xlu0 %1252
        %1254 = vrot.lane.b32.xlu0 %v1113, 96
        %v1255 = vpop.permute.xlu0 %1254
        %1256 = vrot.lane.b32.xlu0 %v1118, 96
        %v1257 = vpop.permute.xlu0 %1256
        %1258 = vrot.lane.b32.xlu0 %v1123, 96
        %v1259 = vpop.permute.xlu0 %1258
        %1260 = vrot.lane.b32.xlu0 %v1128, 96
        %v1261 = vpop.permute.xlu0 %1260
        %1262 = vrot.lane.b32.xlu0 %v1133, 96
        %v1263 = vpop.permute.xlu0 %1262
        %v1272 = vsel %vm241, %v1249, 0.0
        %1273 = vadd.xlane.f32.xlu0 %v1272
        %v1274 = vpop.xlane.xlu0 %1273
        %v1275 = vsel %vm241, %v1251, 0.0
        %1276 = vadd.xlane.f32.xlu0 %v1275
        %v1277 = vpop.xlane.xlu0 %1276
        %v1278 = vsel %vm241, %v1253, 0.0
        %1279 = vadd.xlane.f32.xlu0 %v1278
        %v1280 = vpop.xlane.xlu0 %1279
        %v1281 = vsel %vm241, %v1255, 0.0
        %1282 = vadd.xlane.f32.xlu0 %v1281
        %v1283 = vpop.xlane.xlu0 %1282
        %v1284 = vsel %vm241, %v1257, 0.0
        %1285 = vadd.xlane.f32.xlu0 %v1284
        %v1286 = vpop.xlane.xlu0 %1285
        %v1287 = vsel %vm241, %v1259, 0.0
        %1288 = vadd.xlane.f32.xlu0 %v1287
        %v1289 = vpop.xlane.xlu0 %1288
        %v1290 = vsel %vm241, %v1261, 0.0
        %1291 = vadd.xlane.f32.xlu0 %v1290
        %v1292 = vpop.xlane.xlu0 %1291
        %v1293 = vsel %vm241, %v1263, 0.0
        %1294 = vadd.xlane.f32.xlu0 %v1293
        %v1295 = vpop.xlane.xlu0 %1294
        %v1296 = vmul.f32 %v1274, %v395
        %v1297 = vmul.f32 %v1277, %v395
        %v1298 = vmul.f32 %v1280, %v395
        %v1299 = vmul.f32 %v1283, %v395
        %v1300 = vmul.f32 %v1286, %v395
        %v1301 = vmul.f32 %v1289, %v395
        %v1302 = vmul.f32 %v1292, %v395
        %v1303 = vmul.f32 %v1295, %v395
        %v1304 = vsub.f32 %v1098, %v1296
        %v1305 = vsub.f32 %v1103, %v1297
        %v1306 = vsub.f32 %v1108, %v1298
        %v1307 = vsub.f32 %v1113, %v1299
        %v1308 = vsub.f32 %v1118, %v1300
        %v1309 = vsub.f32 %v1123, %v1301
        %v1310 = vsub.f32 %v1128, %v1302
        %v1311 = vsub.f32 %v1133, %v1303
        %v1312 = vmul.f32 %v1304, %v1304
        %v1313 = vmul.f32 %v1305, %v1305
        %v1314 = vmul.f32 %v1306, %v1306
        %v1315 = vmul.f32 %v1307, %v1307
        %v1316 = vmul.f32 %v1308, %v1308
        %v1317 = vmul.f32 %v1309, %v1309
        %v1318 = vmul.f32 %v1310, %v1310
        %v1319 = vmul.f32 %v1311, %v1311
        %1328 = vrot.lane.b32.xlu0 %v1312, 96
        %v1329 = vpop.permute.xlu0 %1328
        %1330 = vrot.lane.b32.xlu0 %v1313, 96
        %v1331 = vpop.permute.xlu0 %1330
        %1332 = vrot.lane.b32.xlu0 %v1314, 96
        %v1333 = vpop.permute.xlu0 %1332
        %1334 = vrot.lane.b32.xlu0 %v1315, 96
        %v1335 = vpop.permute.xlu0 %1334
        %1336 = vrot.lane.b32.xlu0 %v1316, 96
        %v1337 = vpop.permute.xlu0 %1336
        %1338 = vrot.lane.b32.xlu0 %v1317, 96
        %v1339 = vpop.permute.xlu0 %1338
        %1340 = vrot.lane.b32.xlu0 %v1318, 96
        %v1341 = vpop.permute.xlu0 %1340
        %1342 = vrot.lane.b32.xlu0 %v1319, 96
        %v1343 = vpop.permute.xlu0 %1342
        %v1352 = vsel %vm241, %v1329, 0.0
        %1353 = vadd.xlane.f32.xlu0 %v1352
        %v1354 = vpop.xlane.xlu0 %1353
        %v1355 = vsel %vm241, %v1331, 0.0
        %1356 = vadd.xlane.f32.xlu0 %v1355
        %v1357 = vpop.xlane.xlu0 %1356
        %v1358 = vsel %vm241, %v1333, 0.0
        %1359 = vadd.xlane.f32.xlu0 %v1358
        %v1360 = vpop.xlane.xlu0 %1359
        %v1361 = vsel %vm241, %v1335, 0.0
        %1362 = vadd.xlane.f32.xlu0 %v1361
        %v1363 = vpop.xlane.xlu0 %1362
        %v1364 = vsel %vm241, %v1337, 0.0
        %1365 = vadd.xlane.f32.xlu0 %v1364
        %v1366 = vpop.xlane.xlu0 %1365
        %v1367 = vsel %vm241, %v1339, 0.0
        %1368 = vadd.xlane.f32.xlu0 %v1367
        %v1369 = vpop.xlane.xlu0 %1368
        %v1370 = vsel %vm241, %v1341, 0.0
        %1371 = vadd.xlane.f32.xlu0 %v1370
        %v1372 = vpop.xlane.xlu0 %1371
        %v1373 = vsel %vm241, %v1343, 0.0
        %1374 = vadd.xlane.f32.xlu0 %v1373
        %v1375 = vpop.xlane.xlu0 %1374
        %v1376 = vmul.f32 %v1354, %v395
        %v1377 = vmul.f32 %v1357, %v395
        %v1378 = vmul.f32 %v1360, %v395
        %v1379 = vmul.f32 %v1363, %v395
        %v1380 = vmul.f32 %v1366, %v395
        %v1381 = vmul.f32 %v1369, %v395
        %v1382 = vmul.f32 %v1372, %v395
        %v1383 = vmul.f32 %v1375, %v395
        %v1384 = vadd.f32 %v1376, 1e-05
        %v1385 = vadd.f32 %v1377, 1e-05
        %v1386 = vadd.f32 %v1378, 1e-05
        %v1387 = vadd.f32 %v1379, 1e-05
        %v1388 = vadd.f32 %v1380, 1e-05
        %v1389 = vadd.f32 %v1381, 1e-05
        %v1390 = vadd.f32 %v1382, 1e-05
        %v1391 = vadd.f32 %v1383, 1e-05
        %v1392 = vrsqrt.pop %v1384
        %v1393 = vrsqrt.pop %v1385
        %v1394 = vrsqrt.pop %v1386
        %v1395 = vrsqrt.pop %v1387
        %v1396 = vrsqrt.pop %v1388
        %v1397 = vrsqrt.pop %v1389
        %v1398 = vrsqrt.pop %v1390
        %v1399 = vrsqrt.pop %v1391
        %v1400 = vmul.f32 %v1304, %v1392
        %v1401 = vmul.f32 %v1305, %v1393
        %v1402 = vmul.f32 %v1306, %v1394
        %v1403 = vmul.f32 %v1307, %v1395
        %v1404 = vmul.f32 %v1308, %v1396
        %v1405 = vmul.f32 %v1309, %v1397
        %v1406 = vmul.f32 %v1310, %v1398
        %v1407 = vmul.f32 %v1311, %v1399
        %1408 = vrot.lane.b32.xlu0 %v1098, 64
        %v1409 = vpop.permute.xlu0 %1408
        %1410 = vrot.lane.b32.xlu0 %v1103, 64
        %v1411 = vpop.permute.xlu0 %1410
        %1412 = vrot.lane.b32.xlu0 %v1108, 64
        %v1413 = vpop.permute.xlu0 %1412
        %1414 = vrot.lane.b32.xlu0 %v1113, 64
        %v1415 = vpop.permute.xlu0 %1414
        %1416 = vrot.lane.b32.xlu0 %v1118, 64
        %v1417 = vpop.permute.xlu0 %1416
        %1418 = vrot.lane.b32.xlu0 %v1123, 64
        %v1419 = vpop.permute.xlu0 %1418
        %1420 = vrot.lane.b32.xlu0 %v1128, 64
        %v1421 = vpop.permute.xlu0 %1420
        %1422 = vrot.lane.b32.xlu0 %v1133, 64
        %v1423 = vpop.permute.xlu0 %1422
        %v1432 = vsel %vm241, %v1409, 0.0
        %1433 = vadd.xlane.f32.xlu0 %v1432
        %v1434 = vpop.xlane.xlu0 %1433
        %v1435 = vsel %vm241, %v1411, 0.0
        %1436 = vadd.xlane.f32.xlu0 %v1435
        %v1437 = vpop.xlane.xlu0 %1436
        %v1438 = vsel %vm241, %v1413, 0.0
        %1439 = vadd.xlane.f32.xlu0 %v1438
        %v1440 = vpop.xlane.xlu0 %1439
        %v1441 = vsel %vm241, %v1415, 0.0
        %1442 = vadd.xlane.f32.xlu0 %v1441
        %v1443 = vpop.xlane.xlu0 %1442
        %v1444 = vsel %vm241, %v1417, 0.0
        %1445 = vadd.xlane.f32.xlu0 %v1444
        %v1446 = vpop.xlane.xlu0 %1445
        %v1447 = vsel %vm241, %v1419, 0.0
        %1448 = vadd.xlane.f32.xlu0 %v1447
        %v1449 = vpop.xlane.xlu0 %1448
        %v1450 = vsel %vm241, %v1421, 0.0
        %1451 = vadd.xlane.f32.xlu0 %v1450
        %v1452 = vpop.xlane.xlu0 %1451
        %v1453 = vsel %vm241, %v1423, 0.0
        %1454 = vadd.xlane.f32.xlu0 %v1453
        %v1455 = vpop.xlane.xlu0 %1454
        %v1456 = vmul.f32 %v1434, %v395
        %v1457 = vmul.f32 %v1437, %v395
        %v1458 = vmul.f32 %v1440, %v395
        %v1459 = vmul.f32 %v1443, %v395
        %v1460 = vmul.f32 %v1446, %v395
        %v1461 = vmul.f32 %v1449, %v395
        %v1462 = vmul.f32 %v1452, %v395
        %v1463 = vmul.f32 %v1455, %v395
        %v1464 = vsub.f32 %v1098, %v1456
        %v1465 = vsub.f32 %v1103, %v1457
        %v1466 = vsub.f32 %v1108, %v1458
        %v1467 = vsub.f32 %v1113, %v1459
        %v1468 = vsub.f32 %v1118, %v1460
        %v1469 = vsub.f32 %v1123, %v1461
        %v1470 = vsub.f32 %v1128, %v1462
        %v1471 = vsub.f32 %v1133, %v1463
        %v1472 = vmul.f32 %v1464, %v1464
        %v1473 = vmul.f32 %v1465, %v1465
        %v1474 = vmul.f32 %v1466, %v1466
        %v1475 = vmul.f32 %v1467, %v1467
        %v1476 = vmul.f32 %v1468, %v1468
        %v1477 = vmul.f32 %v1469, %v1469
        %v1478 = vmul.f32 %v1470, %v1470
        %v1479 = vmul.f32 %v1471, %v1471
        %1488 = vrot.lane.b32.xlu0 %v1472, 64
        %v1489 = vpop.permute.xlu0 %1488
        %1490 = vrot.lane.b32.xlu0 %v1473, 64
        %v1491 = vpop.permute.xlu0 %1490
        %1492 = vrot.lane.b32.xlu0 %v1474, 64
        %v1493 = vpop.permute.xlu0 %1492
        %1494 = vrot.lane.b32.xlu0 %v1475, 64
        %v1495 = vpop.permute.xlu0 %1494
        %1496 = vrot.lane.b32.xlu0 %v1476, 64
        %v1497 = vpop.permute.xlu0 %1496
        %1498 = vrot.lane.b32.xlu0 %v1477, 64
        %v1499 = vpop.permute.xlu0 %1498
        %1500 = vrot.lane.b32.xlu0 %v1478, 64
        %v1501 = vpop.permute.xlu0 %1500
        %1502 = vrot.lane.b32.xlu0 %v1479, 64
        %v1503 = vpop.permute.xlu0 %1502
        %v1512 = vsel %vm241, %v1489, 0.0
        %1513 = vadd.xlane.f32.xlu0 %v1512
        %v1514 = vpop.xlane.xlu0 %1513
        %v1515 = vsel %vm241, %v1491, 0.0
        %1516 = vadd.xlane.f32.xlu0 %v1515
        %v1517 = vpop.xlane.xlu0 %1516
        %v1518 = vsel %vm241, %v1493, 0.0
        %1519 = vadd.xlane.f32.xlu0 %v1518
        %v1520 = vpop.xlane.xlu0 %1519
        %v1521 = vsel %vm241, %v1495, 0.0
        %1522 = vadd.xlane.f32.xlu0 %v1521
        %v1523 = vpop.xlane.xlu0 %1522
        %v1524 = vsel %vm241, %v1497, 0.0
        %1525 = vadd.xlane.f32.xlu0 %v1524
        %v1526 = vpop.xlane.xlu0 %1525
        %v1527 = vsel %vm241, %v1499, 0.0
        %1528 = vadd.xlane.f32.xlu0 %v1527
        %v1529 = vpop.xlane.xlu0 %1528
        %v1530 = vsel %vm241, %v1501, 0.0
        %1531 = vadd.xlane.f32.xlu0 %v1530
        %v1532 = vpop.xlane.xlu0 %1531
        %v1533 = vsel %vm241, %v1503, 0.0
        %1534 = vadd.xlane.f32.xlu0 %v1533
        %v1535 = vpop.xlane.xlu0 %1534
        %v1536 = vmul.f32 %v1514, %v395
        %v1537 = vmul.f32 %v1517, %v395
        %v1538 = vmul.f32 %v1520, %v395
        %v1539 = vmul.f32 %v1523, %v395
        %v1540 = vmul.f32 %v1526, %v395
        %v1541 = vmul.f32 %v1529, %v395
        %v1542 = vmul.f32 %v1532, %v395
        %v1543 = vmul.f32 %v1535, %v395
        %v1544 = vadd.f32 %v1536, 1e-05
        %v1545 = vadd.f32 %v1537, 1e-05
        %v1546 = vadd.f32 %v1538, 1e-05
        %v1547 = vadd.f32 %v1539, 1e-05
        %v1548 = vadd.f32 %v1540, 1e-05
        %v1549 = vadd.f32 %v1541, 1e-05
        %v1550 = vadd.f32 %v1542, 1e-05
        %v1551 = vadd.f32 %v1543, 1e-05
        %v1552 = vrsqrt.pop %v1544
        %v1553 = vrsqrt.pop %v1545
        %v1554 = vrsqrt.pop %v1546
        %v1555 = vrsqrt.pop %v1547
        %v1556 = vrsqrt.pop %v1548
        %v1557 = vrsqrt.pop %v1549
        %v1558 = vrsqrt.pop %v1550
        %v1559 = vrsqrt.pop %v1551
        %v1560 = vmul.f32 %v1464, %v1552
        %v1561 = vmul.f32 %v1465, %v1553
        %v1562 = vmul.f32 %v1466, %v1554
        %v1563 = vmul.f32 %v1467, %v1555
        %v1564 = vmul.f32 %v1468, %v1556
        %v1565 = vmul.f32 %v1469, %v1557
        %v1566 = vmul.f32 %v1470, %v1558
        %v1567 = vmul.f32 %v1471, %v1559
        %1568 = vrot.lane.b32.xlu0 %v1098, 32
        %v1569 = vpop.permute.xlu0 %1568
        %1570 = vrot.lane.b32.xlu0 %v1103, 32
        %v1571 = vpop.permute.xlu0 %1570
        %1572 = vrot.lane.b32.xlu0 %v1108, 32
        %v1573 = vpop.permute.xlu0 %1572
        %1574 = vrot.lane.b32.xlu0 %v1113, 32
        %v1575 = vpop.permute.xlu0 %1574
        %1576 = vrot.lane.b32.xlu0 %v1118, 32
        %v1577 = vpop.permute.xlu0 %1576
        %1578 = vrot.lane.b32.xlu0 %v1123, 32
        %v1579 = vpop.permute.xlu0 %1578
        %1580 = vrot.lane.b32.xlu0 %v1128, 32
        %v1581 = vpop.permute.xlu0 %1580
        %1582 = vrot.lane.b32.xlu0 %v1133, 32
        %v1583 = vpop.permute.xlu0 %1582
        %v1592 = vsel %vm241, %v1569, 0.0
        %1593 = vadd.xlane.f32.xlu0 %v1592
        %v1594 = vpop.xlane.xlu0 %1593
        %v1595 = vsel %vm241, %v1571, 0.0
        %1596 = vadd.xlane.f32.xlu0 %v1595
        %v1597 = vpop.xlane.xlu0 %1596
        %v1598 = vsel %vm241, %v1573, 0.0
        %1599 = vadd.xlane.f32.xlu0 %v1598
        %v1600 = vpop.xlane.xlu0 %1599
        %v1601 = vsel %vm241, %v1575, 0.0
        %1602 = vadd.xlane.f32.xlu0 %v1601
        %v1603 = vpop.xlane.xlu0 %1602
        %v1604 = vsel %vm241, %v1577, 0.0
        %1605 = vadd.xlane.f32.xlu0 %v1604
        %v1606 = vpop.xlane.xlu0 %1605
        %v1607 = vsel %vm241, %v1579, 0.0
        %1608 = vadd.xlane.f32.xlu0 %v1607
        %v1609 = vpop.xlane.xlu0 %1608
        %v1610 = vsel %vm241, %v1581, 0.0
        %1611 = vadd.xlane.f32.xlu0 %v1610
        %v1612 = vpop.xlane.xlu0 %1611
        %v1613 = vsel %vm241, %v1583, 0.0
        %1614 = vadd.xlane.f32.xlu0 %v1613
        %v1615 = vpop.xlane.xlu0 %1614
        %v1616 = vmul.f32 %v1594, %v395
        %v1617 = vmul.f32 %v1597, %v395
        %v1618 = vmul.f32 %v1600, %v395
        %v1619 = vmul.f32 %v1603, %v395
        %v1620 = vmul.f32 %v1606, %v395
        %v1621 = vmul.f32 %v1609, %v395
        %v1622 = vmul.f32 %v1612, %v395
        %v1623 = vmul.f32 %v1615, %v395
        %v1624 = vsub.f32 %v1098, %v1616
        %v1625 = vsub.f32 %v1103, %v1617
        %v1626 = vsub.f32 %v1108, %v1618
        %v1627 = vsub.f32 %v1113, %v1619
        %v1628 = vsub.f32 %v1118, %v1620
        %v1629 = vsub.f32 %v1123, %v1621
        %v1630 = vsub.f32 %v1128, %v1622
        %v1631 = vsub.f32 %v1133, %v1623
        %v1632 = vmul.f32 %v1624, %v1624
        %v1633 = vmul.f32 %v1625, %v1625
        %v1634 = vmul.f32 %v1626, %v1626
        %v1635 = vmul.f32 %v1627, %v1627
        %v1636 = vmul.f32 %v1628, %v1628
        %v1637 = vmul.f32 %v1629, %v1629
        %v1638 = vmul.f32 %v1630, %v1630
        %v1639 = vmul.f32 %v1631, %v1631
        %1648 = vrot.lane.b32.xlu0 %v1632, 32
        %v1649 = vpop.permute.xlu0 %1648
        %1650 = vrot.lane.b32.xlu0 %v1633, 32
        %v1651 = vpop.permute.xlu0 %1650
        %1652 = vrot.lane.b32.xlu0 %v1634, 32
        %v1653 = vpop.permute.xlu0 %1652
        %1654 = vrot.lane.b32.xlu0 %v1635, 32
        %v1655 = vpop.permute.xlu0 %1654
        %1656 = vrot.lane.b32.xlu0 %v1636, 32
        %v1657 = vpop.permute.xlu0 %1656
        %1658 = vrot.lane.b32.xlu0 %v1637, 32
        %v1659 = vpop.permute.xlu0 %1658
        %1660 = vrot.lane.b32.xlu0 %v1638, 32
        %v1661 = vpop.permute.xlu0 %1660
        %1662 = vrot.lane.b32.xlu0 %v1639, 32
        %v1663 = vpop.permute.xlu0 %1662
        %v1672 = vsel %vm241, %v1649, 0.0
        %1673 = vadd.xlane.f32.xlu0 %v1672
        %v1674 = vpop.xlane.xlu0 %1673
        %v1675 = vsel %vm241, %v1651, 0.0
        %1676 = vadd.xlane.f32.xlu0 %v1675
        %v1677 = vpop.xlane.xlu0 %1676
        %v1678 = vsel %vm241, %v1653, 0.0
        %1679 = vadd.xlane.f32.xlu0 %v1678
        %v1680 = vpop.xlane.xlu0 %1679
        %v1681 = vsel %vm241, %v1655, 0.0
        %1682 = vadd.xlane.f32.xlu0 %v1681
        %v1683 = vpop.xlane.xlu0 %1682
        %v1684 = vsel %vm241, %v1657, 0.0
        %1685 = vadd.xlane.f32.xlu0 %v1684
        %v1686 = vpop.xlane.xlu0 %1685
        %v1687 = vsel %vm241, %v1659, 0.0
        %1688 = vadd.xlane.f32.xlu0 %v1687
        %v1689 = vpop.xlane.xlu0 %1688
        %v1690 = vsel %vm241, %v1661, 0.0
        %1691 = vadd.xlane.f32.xlu0 %v1690
        %v1692 = vpop.xlane.xlu0 %1691
        %v1693 = vsel %vm241, %v1663, 0.0
        %1694 = vadd.xlane.f32.xlu0 %v1693
        %v1695 = vpop.xlane.xlu0 %1694
        %v1696 = vmul.f32 %v1674, %v395
        %v1697 = vmul.f32 %v1677, %v395
        %v1698 = vmul.f32 %v1680, %v395
        %v1699 = vmul.f32 %v1683, %v395
        %v1700 = vmul.f32 %v1686, %v395
        %v1701 = vmul.f32 %v1689, %v395
        %v1702 = vmul.f32 %v1692, %v395
        %v1703 = vmul.f32 %v1695, %v395
        %v1704 = vadd.f32 %v1696, 1e-05
        %v1705 = vadd.f32 %v1697, 1e-05
        %v1706 = vadd.f32 %v1698, 1e-05
        %v1707 = vadd.f32 %v1699, 1e-05
        %v1708 = vadd.f32 %v1700, 1e-05
        %v1709 = vadd.f32 %v1701, 1e-05
        %v1710 = vadd.f32 %v1702, 1e-05
        %v1711 = vadd.f32 %v1703, 1e-05
        %v1712 = vrsqrt.pop %v1704
        %v1713 = vrsqrt.pop %v1705
        %v1714 = vrsqrt.pop %v1706
        %v1715 = vrsqrt.pop %v1707
        %v1716 = vrsqrt.pop %v1708
        %v1717 = vrsqrt.pop %v1709
        %v1718 = vrsqrt.pop %v1710
        %v1719 = vrsqrt.pop %v1711
        %v1720 = vmul.f32 %v1624, %v1712
        %v1721 = vmul.f32 %v1625, %v1713
        %v1722 = vmul.f32 %v1626, %v1714
        %v1723 = vmul.f32 %v1627, %v1715
        %v1724 = vmul.f32 %v1628, %v1716
        %v1725 = vmul.f32 %v1629, %v1717
        %v1726 = vmul.f32 %v1630, %v1718
        %v1727 = vmul.f32 %v1631, %v1719
        %v1728 = vsel %vm241, %v1232, %v1400
        %v1729 = vsel %vm241, %v1233, %v1401
        %v1730 = vsel %vm241, %v1234, %v1402
        %v1731 = vsel %vm241, %v1235, %v1403
        %v1732 = vsel %vm241, %v1236, %v1404
        %v1733 = vsel %vm241, %v1237, %v1405
        %v1734 = vsel %vm241, %v1238, %v1406
        %v1735 = vsel %vm241, %v1239, %v1407
        %v1736 = vsel %vm972, %v1728, %v1560
        %v1737 = vsel %vm972, %v1729, %v1561
        %v1738 = vsel %vm972, %v1730, %v1562
        %v1739 = vsel %vm972, %v1731, %v1563
        %v1740 = vsel %vm972, %v1732, %v1564
        %v1741 = vsel %vm972, %v1733, %v1565
        %v1742 = vsel %vm972, %v1734, %v1566
        %v1743 = vsel %vm972, %v1735, %v1567
        %v1744 = vsel %vm981, %v1736, %v1720
        %v1745 = vsel %vm981, %v1737, %v1721
        %v1746 = vsel %vm981, %v1738, %v1722
        %v1747 = vsel %vm981, %v1739, %v1723
        %v1748 = vsel %vm981, %v1740, %v1724
        %v1749 = vsel %vm981, %v1741, %v1725
        %v1750 = vsel %vm981, %v1742, %v1726
        %v1751 = vsel %vm981, %v1743, %v1727
        %v1752 = vmul.f32 %v1744, %v994
        %v1753 = vmul.f32 %v1745, %v994
        %v1754 = vmul.f32 %v1746, %v994
        %v1755 = vmul.f32 %v1747, %v994
        %v1756 = vmul.f32 %v1748, %v994
        %v1757 = vmul.f32 %v1749, %v994
        %v1758 = vmul.f32 %v1750, %v994
        %v1759 = vmul.f32 %v1751, %v994
        %v1760 = vadd.f32 %v1752, %v1008
        %v1761 = vadd.f32 %v1753, %v1008
        %v1762 = vadd.f32 %v1754, %v1008
        %v1763 = vadd.f32 %v1755, %v1008
        %v1764 = vadd.f32 %v1756, %v1008
        %v1765 = vadd.f32 %v1757, %v1008
        %v1766 = vadd.f32 %v1758, %v1008
        %v1767 = vadd.f32 %v1759, %v1008
        %s1768 = scalar_lea.vmem %s215, 8 [#allocation2]
        %1769 = vst [vmem:[%s1768] sm:$0xff] %v1760
        %1770 = vst [vmem:[%s1768 + $0x20] sm:$0xff] %v1761
        %1771 = vst [vmem:[%s1768 + $0x40] sm:$0xff] %v1762
        %1772 = vst [vmem:[%s1768 + $0x60] sm:$0xff] %v1763
        %1773 = vst [vmem:[%s1768 + $0x80] sm:$0xff] %v1764
        %1774 = vst [vmem:[%s1768 + $0xa0] sm:$0xff] %v1765
        %1775 = vst [vmem:[%s1768 + $0xc0] sm:$0xff] %v1766
        %1776 = vst [vmem:[%s1768 + $0xe0] sm:$0xff] %v1767
        %s1777 = scalar_lea.vmem %s1, 64
        %v1778 = vld [vmem:[%s1777] sm:$0xff]
        %v1779 = vld [vmem:[%s1777 + $0x8] sm:$0xff]
        %v1780 = vld [vmem:[%s1777 + $0x10] sm:$0xff]
        %v1781 = vld [vmem:[%s1777 + $0x18] sm:$0xff]
        %1782 = vmatprep.subr.mxu0 0.0
        %1783 = vmatpush1.msra.mxu0 %v1778
        %1784 = vmatprep.subr.mxu0 0.0
        %1785 = vmatpush1.msra.mxu0 %v1779
        %1786 = vmatprep.subr.mxu0 0.0
        %1787 = vmatpush1.msra.mxu0 %v1780
        %1788 = vmatprep.subr.mxu0 0.0
        %1789 = vmatpush1.msra.mxu0 %v1781
        %1790 = vmatprep.subr.mxu0 0.0
        %1791 = vmatpush1.msra.mxu0 0.0
        %1792 = vmatprep.subr.mxu0 0.0
        %1793 = vmatpush1.msra.mxu0 0.0
        %1794 = vmatprep.subr.mxu0 0.0
        %1795 = vmatpush1.msra.mxu0 0.0
        %1796 = vmatprep.subr.mxu0 0.0
        %1797 = vmatpush1.msra.mxu0 0.0
        %1798 = vmatprep.subr.mxu0 0.0
        %1799 = vmatpush1.msra.mxu0 0.0
        %1800 = vmatprep.subr.mxu0 0.0
        %1801 = vmatpush1.msra.mxu0 0.0
        %1802 = vmatprep.subr.mxu0 0.0
        %1803 = vmatpush1.msra.mxu0 0.0
        %1804 = vmatprep.subr.mxu0 0.0
        %1805 = vmatpush1.msra.mxu0 0.0
        %1806 = vmatprep.subr.mxu0 0.0
        %1807 = vmatpush1.msra.mxu0 0.0
        %1808 = vmatprep.subr.mxu0 0.0
        %1809 = vmatpush1.msra.mxu0 0.0
        %1810 = vmatprep.subr.mxu0 0.0
        %1811 = vmatpush1.msra.mxu0 0.0
        %1812 = vmatprep.subr.mxu0 0.0
        %1813 = vmatpush1.msra.mxu0 0.0
        %1814 = vmatprep.subr.mxu0 0.0
        %1815 = vmatpush1.msra.mxu0 0.0
        %1816 = vmatprep.subr.mxu0 0.0
        %1817 = vmatpush1.msra.mxu0 0.0
        %1818 = vmatprep.subr.mxu0 0.0
        %1819 = vmatpush1.msra.mxu0 0.0
        %1820 = vmatprep.subr.mxu0 0.0
        %1821 = vmatpush1.msra.mxu0 0.0
        %1822 = vmatprep.subr.mxu0 0.0
        %1823 = vmatpush1.msra.mxu0 0.0
        %1824 = vmatprep.subr.mxu0 0.0
        %1825 = vmatpush1.msra.mxu0 0.0
        %1826 = vmatprep.subr.mxu0 0.0
        %1827 = vmatpush1.msra.mxu0 0.0
        %1828 = vmatprep.subr.mxu0 0.0
        %1829 = vmatpush1.msra.mxu0 0.0
        %1830 = vmatprep.subr.mxu0 0.0
        %1831 = vmatpush1.msra.mxu0 0.0
        %1832 = vmatprep.subr.mxu0 0.0
        %1833 = vmatpush1.msra.mxu0 0.0
        %1834 = vmatprep.subr.mxu0 0.0
        %1835 = vmatpush1.msra.mxu0 0.0
        %1836 = vmatprep.subr.mxu0 0.0
        %1837 = vmatpush1.msra.mxu0 0.0
        %1838 = vmatprep.subr.mxu0 0.0
        %1839 = vmatpush1.msra.mxu0 0.0
        %1840 = vmatprep.subr.mxu0 0.0
        %1841 = vmatpush1.msra.mxu0 0.0
        %1842 = vmatprep.subr.mxu0 0.0
        %1843 = vmatpush1.msra.mxu0 0.0
        %1844 = vmatprep.subr.mxu0 0.0
        %1845 = vmatpush1.msra.mxu0 0.0
        %1846 = vmatprep.mubr.f32.mxu0 0.0
        %1847 = vmatmul.mubr.f32.gmra.mrb[0].mxu0 %v243
        %v1848 = vpop.f32.mrb[0].mxu0
        %v1849 = vadd.f32 0.0, %v1848
        %v1850 = vpop.f32.mrb[0].mxu0
        %1851 = vmatprep.mubr.f32.mxu0 0.0
        %1852 = vmatmul.mubr.f32.gmra.mrb[0].mxu0 %v246
        %v1853 = vpop.f32.mrb[0].mxu0
        %v1854 = vadd.f32 0.0, %v1853
        %v1855 = vpop.f32.mrb[0].mxu0
        %1856 = vmatprep.mubr.f32.mxu0 0.0
        %1857 = vmatmul.mubr.f32.gmra.mrb[0].mxu0 %v249
        %v1858 = vpop.f32.mrb[0].mxu0
        %v1859 = vadd.f32 0.0, %v1858
        %v1860 = vpop.f32.mrb[0].mxu0
        %1861 = vmatprep.mubr.f32.mxu0 0.0
        %1862 = vmatmul.mubr.f32.gmra.mrb[0].mxu0 %v252
        %v1863 = vpop.f32.mrb[0].mxu0
        %v1864 = vadd.f32 0.0, %v1863
        %v1865 = vpop.f32.mrb[0].mxu0
        %1866 = vmatprep.mubr.f32.mxu0 0.0
        %1867 = vmatmul.mubr.f32.gmra.mrb[0].mxu0 %v255
        %v1868 = vpop.f32.mrb[0].mxu0
        %v1869 = vadd.f32 0.0, %v1868
        %v1870 = vpop.f32.mrb[0].mxu0
        %1871 = vmatprep.mubr.f32.mxu0 0.0
        %1872 = vmatmul.mubr.f32.gmra.mrb[0].mxu0 %v258
        %v1873 = vpop.f32.mrb[0].mxu0
        %v1874 = vadd.f32 0.0, %v1873
        %v1875 = vpop.f32.mrb[0].mxu0
        %1876 = vmatprep.mubr.f32.mxu0 0.0
        %1877 = vmatmul.mubr.f32.gmra.mrb[0].mxu0 %v261
        %v1878 = vpop.f32.mrb[0].mxu0
        %v1879 = vadd.f32 0.0, %v1878
        %v1880 = vpop.f32.mrb[0].mxu0
        %1881 = vmatprep.mubr.f32.mxu0 0.0
        %1882 = vmatmul.mubr.f32.gmra.mrb[0].mxu0 %v264
        %v1883 = vpop.f32.mrb[0].mxu0
        %v1884 = vadd.f32 0.0, %v1883
        %v1885 = vpop.f32.mrb[0].mxu0
        %1886 = vdwg.mxu0
        %v1887 = vsel %vm241, %v1849, 0.0
        %1888 = vadd.xlane.f32.xlu0 %v1887
        %v1889 = vpop.xlane.xlu0 %1888
        %v1890 = vsel %vm241, %v1854, 0.0
        %1891 = vadd.xlane.f32.xlu0 %v1890
        %v1892 = vpop.xlane.xlu0 %1891
        %v1893 = vsel %vm241, %v1859, 0.0
        %1894 = vadd.xlane.f32.xlu0 %v1893
        %v1895 = vpop.xlane.xlu0 %1894
        %v1896 = vsel %vm241, %v1864, 0.0
        %1897 = vadd.xlane.f32.xlu0 %v1896
        %v1898 = vpop.xlane.xlu0 %1897
        %v1899 = vsel %vm241, %v1869, 0.0
        %1900 = vadd.xlane.f32.xlu0 %v1899
        %v1901 = vpop.xlane.xlu0 %1900
        %v1902 = vsel %vm241, %v1874, 0.0
        %1903 = vadd.xlane.f32.xlu0 %v1902
        %v1904 = vpop.xlane.xlu0 %1903
        %v1905 = vsel %vm241, %v1879, 0.0
        %1906 = vadd.xlane.f32.xlu0 %v1905
        %v1907 = vpop.xlane.xlu0 %1906
        %v1908 = vsel %vm241, %v1884, 0.0
        %1909 = vadd.xlane.f32.xlu0 %v1908
        %v1910 = vpop.xlane.xlu0 %1909
        %v1911 = vmul.f32 %v1889, %v395
        %v1912 = vmul.f32 %v1892, %v395
        %v1913 = vmul.f32 %v1895, %v395
        %v1914 = vmul.f32 %v1898, %v395
        %v1915 = vmul.f32 %v1901, %v395
        %v1916 = vmul.f32 %v1904, %v395
        %v1917 = vmul.f32 %v1907, %v395
        %v1918 = vmul.f32 %v1910, %v395
        %v1919 = vsub.f32 %v1849, %v1911
        %v1920 = vsub.f32 %v1854, %v1912
        %v1921 = vsub.f32 %v1859, %v1913
        %v1922 = vsub.f32 %v1864, %v1914
        %v1923 = vsub.f32 %v1869, %v1915
        %v1924 = vsub.f32 %v1874, %v1916
        %v1925 = vsub.f32 %v1879, %v1917
        %v1926 = vsub.f32 %v1884, %v1918
        %v1927 = vmul.f32 %v1919, %v1919
        %v1928 = vmul.f32 %v1920, %v1920
        %v1929 = vmul.f32 %v1921, %v1921
        %v1930 = vmul.f32 %v1922, %v1922
        %v1931 = vmul.f32 %v1923, %v1923
        %v1932 = vmul.f32 %v1924, %v1924
        %v1933 = vmul.f32 %v1925, %v1925
        %v1934 = vmul.f32 %v1926, %v1926
        %v1935 = vsel %vm241, %v1927, 0.0
        %1936 = vadd.xlane.f32.xlu0 %v1935
        %v1937 = vpop.xlane.xlu0 %1936
        %v1938 = vsel %vm241, %v1928, 0.0
        %1939 = vadd.xlane.f32.xlu0 %v1938
        %v1940 = vpop.xlane.xlu0 %1939
        %v1941 = vsel %vm241, %v1929, 0.0
        %1942 = vadd.xlane.f32.xlu0 %v1941
        %v1943 = vpop.xlane.xlu0 %1942
        %v1944 = vsel %vm241, %v1930, 0.0
        %1945 = vadd.xlane.f32.xlu0 %v1944
        %v1946 = vpop.xlane.xlu0 %1945
        %v1947 = vsel %vm241, %v1931, 0.0
        %1948 = vadd.xlane.f32.xlu0 %v1947
        %v1949 = vpop.xlane.xlu0 %1948
        %v1950 = vsel %vm241, %v1932, 0.0
        %1951 = vadd.xlane.f32.xlu0 %v1950
        %v1952 = vpop.xlane.xlu0 %1951
        %v1953 = vsel %vm241, %v1933, 0.0
        %1954 = vadd.xlane.f32.xlu0 %v1953
        %v1955 = vpop.xlane.xlu0 %1954
        %v1956 = vsel %vm241, %v1934, 0.0
        %1957 = vadd.xlane.f32.xlu0 %v1956
        %v1958 = vpop.xlane.xlu0 %1957
        %v1959 = vmul.f32 %v1937, %v395
        %v1960 = vmul.f32 %v1940, %v395
        %v1961 = vmul.f32 %v1943, %v395
        %v1962 = vmul.f32 %v1946, %v395
        %v1963 = vmul.f32 %v1949, %v395
        %v1964 = vmul.f32 %v1952, %v395
        %v1965 = vmul.f32 %v1955, %v395
        %v1966 = vmul.f32 %v1958, %v395
        %v1967 = vadd.f32 %v1959, 1e-05
        %v1968 = vadd.f32 %v1960, 1e-05
        %v1969 = vadd.f32 %v1961, 1e-05
        %v1970 = vadd.f32 %v1962, 1e-05
        %v1971 = vadd.f32 %v1963, 1e-05
        %v1972 = vadd.f32 %v1964, 1e-05
        %v1973 = vadd.f32 %v1965, 1e-05
        %v1974 = vadd.f32 %v1966, 1e-05
        %v1975 = vrsqrt.pop %v1967
        %v1976 = vrsqrt.pop %v1968
        %v1977 = vrsqrt.pop %v1969
        %v1978 = vrsqrt.pop %v1970
        %v1979 = vrsqrt.pop %v1971
        %v1980 = vrsqrt.pop %v1972
        %v1981 = vrsqrt.pop %v1973
        %v1982 = vrsqrt.pop %v1974
        %v1983 = vmul.f32 %v1919, %v1975
        %v1984 = vmul.f32 %v1920, %v1976
        %v1985 = vmul.f32 %v1921, %v1977
        %v1986 = vmul.f32 %v1922, %v1978
        %v1987 = vmul.f32 %v1923, %v1979
        %v1988 = vmul.f32 %v1924, %v1980
        %v1989 = vmul.f32 %v1925, %v1981
        %v1990 = vmul.f32 %v1926, %v1982
        %1999 = vrot.lane.b32.xlu0 %v1849, 96
        %v2000 = vpop.permute.xlu0 %1999
        %2001 = vrot.lane.b32.xlu0 %v1854, 96
        %v2002 = vpop.permute.xlu0 %2001
        %2003 = vrot.lane.b32.xlu0 %v1859, 96
        %v2004 = vpop.permute.xlu0 %2003
        %2005 = vrot.lane.b32.xlu0 %v1864, 96
        %v2006 = vpop.permute.xlu0 %2005
        %2007 = vrot.lane.b32.xlu0 %v1869, 96
        %v2008 = vpop.permute.xlu0 %2007
        %2009 = vrot.lane.b32.xlu0 %v1874, 96
        %v2010 = vpop.permute.xlu0 %2009
        %2011 = vrot.lane.b32.xlu0 %v1879, 96
        %v2012 = vpop.permute.xlu0 %2011
        %2013 = vrot.lane.b32.xlu0 %v1884, 96
        %v2014 = vpop.permute.xlu0 %2013
        %v2023 = vsel %vm241, %v2000, 0.0
        %2024 = vadd.xlane.f32.xlu0 %v2023
        %v2025 = vpop.xlane.xlu0 %2024
        %v2026 = vsel %vm241, %v2002, 0.0
        %2027 = vadd.xlane.f32.xlu0 %v2026
        %v2028 = vpop.xlane.xlu0 %2027
        %v2029 = vsel %vm241, %v2004, 0.0
        %2030 = vadd.xlane.f32.xlu0 %v2029
        %v2031 = vpop.xlane.xlu0 %2030
        %v2032 = vsel %vm241, %v2006, 0.0
        %2033 = vadd.xlane.f32.xlu0 %v2032
        %v2034 = vpop.xlane.xlu0 %2033
        %v2035 = vsel %vm241, %v2008, 0.0
        %2036 = vadd.xlane.f32.xlu0 %v2035
        %v2037 = vpop.xlane.xlu0 %2036
        %v2038 = vsel %vm241, %v2010, 0.0
        %2039 = vadd.xlane.f32.xlu0 %v2038
        %v2040 = vpop.xlane.xlu0 %2039
        %v2041 = vsel %vm241, %v2012, 0.0
        %2042 = vadd.xlane.f32.xlu0 %v2041
        %v2043 = vpop.xlane.xlu0 %2042
        %v2044 = vsel %vm241, %v2014, 0.0
        %2045 = vadd.xlane.f32.xlu0 %v2044
        %v2046 = vpop.xlane.xlu0 %2045
        %v2047 = vmul.f32 %v2025, %v395
        %v2048 = vmul.f32 %v2028, %v395
        %v2049 = vmul.f32 %v2031, %v395
        %v2050 = vmul.f32 %v2034, %v395
        %v2051 = vmul.f32 %v2037, %v395
        %v2052 = vmul.f32 %v2040, %v395
        %v2053 = vmul.f32 %v2043, %v395
        %v2054 = vmul.f32 %v2046, %v395
        %v2055 = vsub.f32 %v1849, %v2047
        %v2056 = vsub.f32 %v1854, %v2048
        %v2057 = vsub.f32 %v1859, %v2049
        %v2058 = vsub.f32 %v1864, %v2050
        %v2059 = vsub.f32 %v1869, %v2051
        %v2060 = vsub.f32 %v1874, %v2052
        %v2061 = vsub.f32 %v1879, %v2053
        %v2062 = vsub.f32 %v1884, %v2054
        %v2063 = vmul.f32 %v2055, %v2055
        %v2064 = vmul.f32 %v2056, %v2056
        %v2065 = vmul.f32 %v2057, %v2057
        %v2066 = vmul.f32 %v2058, %v2058
        %v2067 = vmul.f32 %v2059, %v2059
        %v2068 = vmul.f32 %v2060, %v2060
        %v2069 = vmul.f32 %v2061, %v2061
        %v2070 = vmul.f32 %v2062, %v2062
        %2079 = vrot.lane.b32.xlu0 %v2063, 96
        %v2080 = vpop.permute.xlu0 %2079
        %2081 = vrot.lane.b32.xlu0 %v2064, 96
        %v2082 = vpop.permute.xlu0 %2081
        %2083 = vrot.lane.b32.xlu0 %v2065, 96
        %v2084 = vpop.permute.xlu0 %2083
        %2085 = vrot.lane.b32.xlu0 %v2066, 96
        %v2086 = vpop.permute.xlu0 %2085
        %2087 = vrot.lane.b32.xlu0 %v2067, 96
        %v2088 = vpop.permute.xlu0 %2087
        %2089 = vrot.lane.b32.xlu0 %v2068, 96
        %v2090 = vpop.permute.xlu0 %2089
        %2091 = vrot.lane.b32.xlu0 %v2069, 96
        %v2092 = vpop.permute.xlu0 %2091
        %2093 = vrot.lane.b32.xlu0 %v2070, 96
        %v2094 = vpop.permute.xlu0 %2093
        %v2103 = vsel %vm241, %v2080, 0.0
        %2104 = vadd.xlane.f32.xlu0 %v2103
        %v2105 = vpop.xlane.xlu0 %2104
        %v2106 = vsel %vm241, %v2082, 0.0
        %2107 = vadd.xlane.f32.xlu0 %v2106
        %v2108 = vpop.xlane.xlu0 %2107
        %v2109 = vsel %vm241, %v2084, 0.0
        %2110 = vadd.xlane.f32.xlu0 %v2109
        %v2111 = vpop.xlane.xlu0 %2110
        %v2112 = vsel %vm241, %v2086, 0.0
        %2113 = vadd.xlane.f32.xlu0 %v2112
        %v2114 = vpop.xlane.xlu0 %2113
        %v2115 = vsel %vm241, %v2088, 0.0
        %2116 = vadd.xlane.f32.xlu0 %v2115
        %v2117 = vpop.xlane.xlu0 %2116
        %v2118 = vsel %vm241, %v2090, 0.0
        %2119 = vadd.xlane.f32.xlu0 %v2118
        %v2120 = vpop.xlane.xlu0 %2119
        %v2121 = vsel %vm241, %v2092, 0.0
        %2122 = vadd.xlane.f32.xlu0 %v2121
        %v2123 = vpop.xlane.xlu0 %2122
        %v2124 = vsel %vm241, %v2094, 0.0
        %2125 = vadd.xlane.f32.xlu0 %v2124
        %v2126 = vpop.xlane.xlu0 %2125
        %v2127 = vmul.f32 %v2105, %v395
        %v2128 = vmul.f32 %v2108, %v395
        %v2129 = vmul.f32 %v2111, %v395
        %v2130 = vmul.f32 %v2114, %v395
        %v2131 = vmul.f32 %v2117, %v395
        %v2132 = vmul.f32 %v2120, %v395
        %v2133 = vmul.f32 %v2123, %v395
        %v2134 = vmul.f32 %v2126, %v395
        %v2135 = vadd.f32 %v2127, 1e-05
        %v2136 = vadd.f32 %v2128, 1e-05
        %v2137 = vadd.f32 %v2129, 1e-05
        %v2138 = vadd.f32 %v2130, 1e-05
        %v2139 = vadd.f32 %v2131, 1e-05
        %v2140 = vadd.f32 %v2132, 1e-05
        %v2141 = vadd.f32 %v2133, 1e-05
        %v2142 = vadd.f32 %v2134, 1e-05
        %v2143 = vrsqrt.pop %v2135
        %v2144 = vrsqrt.pop %v2136
        %v2145 = vrsqrt.pop %v2137
        %v2146 = vrsqrt.pop %v2138
        %v2147 = vrsqrt.pop %v2139
        %v2148 = vrsqrt.pop %v2140
        %v2149 = vrsqrt.pop %v2141
        %v2150 = vrsqrt.pop %v2142
        %v2151 = vmul.f32 %v2055, %v2143
        %v2152 = vmul.f32 %v2056, %v2144
        %v2153 = vmul.f32 %v2057, %v2145
        %v2154 = vmul.f32 %v2058, %v2146
        %v2155 = vmul.f32 %v2059, %v2147
        %v2156 = vmul.f32 %v2060, %v2148
        %v2157 = vmul.f32 %v2061, %v2149
        %v2158 = vmul.f32 %v2062, %v2150
        %2159 = vrot.lane.b32.xlu0 %v1849, 64
        %v2160 = vpop.permute.xlu0 %2159
        %2161 = vrot.lane.b32.xlu0 %v1854, 64
        %v2162 = vpop.permute.xlu0 %2161
        %2163 = vrot.lane.b32.xlu0 %v1859, 64
        %v2164 = vpop.permute.xlu0 %2163
        %2165 = vrot.lane.b32.xlu0 %v1864, 64
        %v2166 = vpop.permute.xlu0 %2165
        %2167 = vrot.lane.b32.xlu0 %v1869, 64
        %v2168 = vpop.permute.xlu0 %2167
        %2169 = vrot.lane.b32.xlu0 %v1874, 64
        %v2170 = vpop.permute.xlu0 %2169
        %2171 = vrot.lane.b32.xlu0 %v1879, 64
        %v2172 = vpop.permute.xlu0 %2171
        %2173 = vrot.lane.b32.xlu0 %v1884, 64
        %v2174 = vpop.permute.xlu0 %2173
        %v2183 = vsel %vm241, %v2160, 0.0
        %2184 = vadd.xlane.f32.xlu0 %v2183
        %v2185 = vpop.xlane.xlu0 %2184
        %v2186 = vsel %vm241, %v2162, 0.0
        %2187 = vadd.xlane.f32.xlu0 %v2186
        %v2188 = vpop.xlane.xlu0 %2187
        %v2189 = vsel %vm241, %v2164, 0.0
        %2190 = vadd.xlane.f32.xlu0 %v2189
        %v2191 = vpop.xlane.xlu0 %2190
        %v2192 = vsel %vm241, %v2166, 0.0
        %2193 = vadd.xlane.f32.xlu0 %v2192
        %v2194 = vpop.xlane.xlu0 %2193
        %v2195 = vsel %vm241, %v2168, 0.0
        %2196 = vadd.xlane.f32.xlu0 %v2195
        %v2197 = vpop.xlane.xlu0 %2196
        %v2198 = vsel %vm241, %v2170, 0.0
        %2199 = vadd.xlane.f32.xlu0 %v2198
        %v2200 = vpop.xlane.xlu0 %2199
        %v2201 = vsel %vm241, %v2172, 0.0
        %2202 = vadd.xlane.f32.xlu0 %v2201
        %v2203 = vpop.xlane.xlu0 %2202
        %v2204 = vsel %vm241, %v2174, 0.0
        %2205 = vadd.xlane.f32.xlu0 %v2204
        %v2206 = vpop.xlane.xlu0 %2205
        %v2207 = vmul.f32 %v2185, %v395
        %v2208 = vmul.f32 %v2188, %v395
        %v2209 = vmul.f32 %v2191, %v395
        %v2210 = vmul.f32 %v2194, %v395
        %v2211 = vmul.f32 %v2197, %v395
        %v2212 = vmul.f32 %v2200, %v395
        %v2213 = vmul.f32 %v2203, %v395
        %v2214 = vmul.f32 %v2206, %v395
        %v2215 = vsub.f32 %v1849, %v2207
        %v2216 = vsub.f32 %v1854, %v2208
        %v2217 = vsub.f32 %v1859, %v2209
        %v2218 = vsub.f32 %v1864, %v2210
        %v2219 = vsub.f32 %v1869, %v2211
        %v2220 = vsub.f32 %v1874, %v2212
        %v2221 = vsub.f32 %v1879, %v2213
        %v2222 = vsub.f32 %v1884, %v2214
        %v2223 = vmul.f32 %v2215, %v2215
        %v2224 = vmul.f32 %v2216, %v2216
        %v2225 = vmul.f32 %v2217, %v2217
        %v2226 = vmul.f32 %v2218, %v2218
        %v2227 = vmul.f32 %v2219, %v2219
        %v2228 = vmul.f32 %v2220, %v2220
        %v2229 = vmul.f32 %v2221, %v2221
        %v2230 = vmul.f32 %v2222, %v2222
        %2239 = vrot.lane.b32.xlu0 %v2223, 64
        %v2240 = vpop.permute.xlu0 %2239
        %2241 = vrot.lane.b32.xlu0 %v2224, 64
        %v2242 = vpop.permute.xlu0 %2241
        %2243 = vrot.lane.b32.xlu0 %v2225, 64
        %v2244 = vpop.permute.xlu0 %2243
        %2245 = vrot.lane.b32.xlu0 %v2226, 64
        %v2246 = vpop.permute.xlu0 %2245
        %2247 = vrot.lane.b32.xlu0 %v2227, 64
        %v2248 = vpop.permute.xlu0 %2247
        %2249 = vrot.lane.b32.xlu0 %v2228, 64
        %v2250 = vpop.permute.xlu0 %2249
        %2251 = vrot.lane.b32.xlu0 %v2229, 64
        %v2252 = vpop.permute.xlu0 %2251
        %2253 = vrot.lane.b32.xlu0 %v2230, 64
        %v2254 = vpop.permute.xlu0 %2253
        %v2263 = vsel %vm241, %v2240, 0.0
        %2264 = vadd.xlane.f32.xlu0 %v2263
        %v2265 = vpop.xlane.xlu0 %2264
        %v2266 = vsel %vm241, %v2242, 0.0
        %2267 = vadd.xlane.f32.xlu0 %v2266
        %v2268 = vpop.xlane.xlu0 %2267
        %v2269 = vsel %vm241, %v2244, 0.0
        %2270 = vadd.xlane.f32.xlu0 %v2269
        %v2271 = vpop.xlane.xlu0 %2270
        %v2272 = vsel %vm241, %v2246, 0.0
        %2273 = vadd.xlane.f32.xlu0 %v2272
        %v2274 = vpop.xlane.xlu0 %2273
        %v2275 = vsel %vm241, %v2248, 0.0
        %2276 = vadd.xlane.f32.xlu0 %v2275
        %v2277 = vpop.xlane.xlu0 %2276
        %v2278 = vsel %vm241, %v2250, 0.0
        %2279 = vadd.xlane.f32.xlu0 %v2278
        %v2280 = vpop.xlane.xlu0 %2279
        %v2281 = vsel %vm241, %v2252, 0.0
        %2282 = vadd.xlane.f32.xlu0 %v2281
        %v2283 = vpop.xlane.xlu0 %2282
        %v2284 = vsel %vm241, %v2254, 0.0
        %2285 = vadd.xlane.f32.xlu0 %v2284
        %v2286 = vpop.xlane.xlu0 %2285
        %v2287 = vmul.f32 %v2265, %v395
        %v2288 = vmul.f32 %v2268, %v395
        %v2289 = vmul.f32 %v2271, %v395
        %v2290 = vmul.f32 %v2274, %v395
        %v2291 = vmul.f32 %v2277, %v395
        %v2292 = vmul.f32 %v2280, %v395
        %v2293 = vmul.f32 %v2283, %v395
        %v2294 = vmul.f32 %v2286, %v395
        %v2295 = vadd.f32 %v2287, 1e-05
        %v2296 = vadd.f32 %v2288, 1e-05
        %v2297 = vadd.f32 %v2289, 1e-05
        %v2298 = vadd.f32 %v2290, 1e-05
        %v2299 = vadd.f32 %v2291, 1e-05
        %v2300 = vadd.f32 %v2292, 1e-05
        %v2301 = vadd.f32 %v2293, 1e-05
        %v2302 = vadd.f32 %v2294, 1e-05
        %v2303 = vrsqrt.pop %v2295
        %v2304 = vrsqrt.pop %v2296
        %v2305 = vrsqrt.pop %v2297
        %v2306 = vrsqrt.pop %v2298
        %v2307 = vrsqrt.pop %v2299
        %v2308 = vrsqrt.pop %v2300
        %v2309 = vrsqrt.pop %v2301
        %v2310 = vrsqrt.pop %v2302
        %v2311 = vmul.f32 %v2215, %v2303
        %v2312 = vmul.f32 %v2216, %v2304
        %v2313 = vmul.f32 %v2217, %v2305
        %v2314 = vmul.f32 %v2218, %v2306
        %v2315 = vmul.f32 %v2219, %v2307
        %v2316 = vmul.f32 %v2220, %v2308
        %v2317 = vmul.f32 %v2221, %v2309
        %v2318 = vmul.f32 %v2222, %v2310
        %2319 = vrot.lane.b32.xlu0 %v1849, 32
        %v2320 = vpop.permute.xlu0 %2319
        %2321 = vrot.lane.b32.xlu0 %v1854, 32
        %v2322 = vpop.permute.xlu0 %2321
        %2323 = vrot.lane.b32.xlu0 %v1859, 32
        %v2324 = vpop.permute.xlu0 %2323
        %2325 = vrot.lane.b32.xlu0 %v1864, 32
        %v2326 = vpop.permute.xlu0 %2325
        %2327 = vrot.lane.b32.xlu0 %v1869, 32
        %v2328 = vpop.permute.xlu0 %2327
        %2329 = vrot.lane.b32.xlu0 %v1874, 32
        %v2330 = vpop.permute.xlu0 %2329
        %2331 = vrot.lane.b32.xlu0 %v1879, 32
        %v2332 = vpop.permute.xlu0 %2331
        %2333 = vrot.lane.b32.xlu0 %v1884, 32
        %v2334 = vpop.permute.xlu0 %2333
        %v2343 = vsel %vm241, %v2320, 0.0
        %2344 = vadd.xlane.f32.xlu0 %v2343
        %v2345 = vpop.xlane.xlu0 %2344
        %v2346 = vsel %vm241, %v2322, 0.0
        %2347 = vadd.xlane.f32.xlu0 %v2346
        %v2348 = vpop.xlane.xlu0 %2347
        %v2349 = vsel %vm241, %v2324, 0.0
        %2350 = vadd.xlane.f32.xlu0 %v2349
        %v2351 = vpop.xlane.xlu0 %2350
        %v2352 = vsel %vm241, %v2326, 0.0
        %2353 = vadd.xlane.f32.xlu0 %v2352
        %v2354 = vpop.xlane.xlu0 %2353
        %v2355 = vsel %vm241, %v2328, 0.0
        %2356 = vadd.xlane.f32.xlu0 %v2355
        %v2357 = vpop.xlane.xlu0 %2356
        %v2358 = vsel %vm241, %v2330, 0.0
        %2359 = vadd.xlane.f32.xlu0 %v2358
        %v2360 = vpop.xlane.xlu0 %2359
        %v2361 = vsel %vm241, %v2332, 0.0
        %2362 = vadd.xlane.f32.xlu0 %v2361
        %v2363 = vpop.xlane.xlu0 %2362
        %v2364 = vsel %vm241, %v2334, 0.0
        %2365 = vadd.xlane.f32.xlu0 %v2364
        %v2366 = vpop.xlane.xlu0 %2365
        %v2367 = vmul.f32 %v2345, %v395
        %v2368 = vmul.f32 %v2348, %v395
        %v2369 = vmul.f32 %v2351, %v395
        %v2370 = vmul.f32 %v2354, %v395
        %v2371 = vmul.f32 %v2357, %v395
        %v2372 = vmul.f32 %v2360, %v395
        %v2373 = vmul.f32 %v2363, %v395
        %v2374 = vmul.f32 %v2366, %v395
        %v2375 = vsub.f32 %v1849, %v2367
        %v2376 = vsub.f32 %v1854, %v2368
        %v2377 = vsub.f32 %v1859, %v2369
        %v2378 = vsub.f32 %v1864, %v2370
        %v2379 = vsub.f32 %v1869, %v2371
        %v2380 = vsub.f32 %v1874, %v2372
        %v2381 = vsub.f32 %v1879, %v2373
        %v2382 = vsub.f32 %v1884, %v2374
        %v2383 = vmul.f32 %v2375, %v2375
        %v2384 = vmul.f32 %v2376, %v2376
        %v2385 = vmul.f32 %v2377, %v2377
        %v2386 = vmul.f32 %v2378, %v2378
        %v2387 = vmul.f32 %v2379, %v2379
        %v2388 = vmul.f32 %v2380, %v2380
        %v2389 = vmul.f32 %v2381, %v2381
        %v2390 = vmul.f32 %v2382, %v2382
        %2399 = vrot.lane.b32.xlu0 %v2383, 32
        %v2400 = vpop.permute.xlu0 %2399
        %2401 = vrot.lane.b32.xlu0 %v2384, 32
        %v2402 = vpop.permute.xlu0 %2401
        %2403 = vrot.lane.b32.xlu0 %v2385, 32
        %v2404 = vpop.permute.xlu0 %2403
        %2405 = vrot.lane.b32.xlu0 %v2386, 32
        %v2406 = vpop.permute.xlu0 %2405
        %2407 = vrot.lane.b32.xlu0 %v2387, 32
        %v2408 = vpop.permute.xlu0 %2407
        %2409 = vrot.lane.b32.xlu0 %v2388, 32
        %v2410 = vpop.permute.xlu0 %2409
        %2411 = vrot.lane.b32.xlu0 %v2389, 32
        %v2412 = vpop.permute.xlu0 %2411
        %2413 = vrot.lane.b32.xlu0 %v2390, 32
        %v2414 = vpop.permute.xlu0 %2413
        %v2423 = vsel %vm241, %v2400, 0.0
        %2424 = vadd.xlane.f32.xlu0 %v2423
        %v2425 = vpop.xlane.xlu0 %2424
        %v2426 = vsel %vm241, %v2402, 0.0
        %2427 = vadd.xlane.f32.xlu0 %v2426
        %v2428 = vpop.xlane.xlu0 %2427
        %v2429 = vsel %vm241, %v2404, 0.0
        %2430 = vadd.xlane.f32.xlu0 %v2429
        %v2431 = vpop.xlane.xlu0 %2430
        %v2432 = vsel %vm241, %v2406, 0.0
        %2433 = vadd.xlane.f32.xlu0 %v2432
        %v2434 = vpop.xlane.xlu0 %2433
        %v2435 = vsel %vm241, %v2408, 0.0
        %2436 = vadd.xlane.f32.xlu0 %v2435
        %v2437 = vpop.xlane.xlu0 %2436
        %v2438 = vsel %vm241, %v2410, 0.0
        %2439 = vadd.xlane.f32.xlu0 %v2438
        %v2440 = vpop.xlane.xlu0 %2439
        %v2441 = vsel %vm241, %v2412, 0.0
        %2442 = vadd.xlane.f32.xlu0 %v2441
        %v2443 = vpop.xlane.xlu0 %2442
        %v2444 = vsel %vm241, %v2414, 0.0
        %2445 = vadd.xlane.f32.xlu0 %v2444
        %v2446 = vpop.xlane.xlu0 %2445
        %v2447 = vmul.f32 %v2425, %v395
        %v2448 = vmul.f32 %v2428, %v395
        %v2449 = vmul.f32 %v2431, %v395
        %v2450 = vmul.f32 %v2434, %v395
        %v2451 = vmul.f32 %v2437, %v395
        %v2452 = vmul.f32 %v2440, %v395
        %v2453 = vmul.f32 %v2443, %v395
        %v2454 = vmul.f32 %v2446, %v395
        %v2455 = vadd.f32 %v2447, 1e-05
        %v2456 = vadd.f32 %v2448, 1e-05
        %v2457 = vadd.f32 %v2449, 1e-05
        %v2458 = vadd.f32 %v2450, 1e-05
        %v2459 = vadd.f32 %v2451, 1e-05
        %v2460 = vadd.f32 %v2452, 1e-05
        %v2461 = vadd.f32 %v2453, 1e-05
        %v2462 = vadd.f32 %v2454, 1e-05
        %v2463 = vrsqrt.pop %v2455
        %v2464 = vrsqrt.pop %v2456
        %v2465 = vrsqrt.pop %v2457
        %v2466 = vrsqrt.pop %v2458
        %v2467 = vrsqrt.pop %v2459
        %v2468 = vrsqrt.pop %v2460
        %v2469 = vrsqrt.pop %v2461
        %v2470 = vrsqrt.pop %v2462
        %v2471 = vmul.f32 %v2375, %v2463
        %v2472 = vmul.f32 %v2376, %v2464
        %v2473 = vmul.f32 %v2377, %v2465
        %v2474 = vmul.f32 %v2378, %v2466
        %v2475 = vmul.f32 %v2379, %v2467
        %v2476 = vmul.f32 %v2380, %v2468
        %v2477 = vmul.f32 %v2381, %v2469
        %v2478 = vmul.f32 %v2382, %v2470
        %v2479 = vsel %vm241, %v1983, %v2151
        %v2480 = vsel %vm241, %v1984, %v2152
        %v2481 = vsel %vm241, %v1985, %v2153
        %v2482 = vsel %vm241, %v1986, %v2154
        %v2483 = vsel %vm241, %v1987, %v2155
        %v2484 = vsel %vm241, %v1988, %v2156
        %v2485 = vsel %vm241, %v1989, %v2157
        %v2486 = vsel %vm241, %v1990, %v2158
        %v2487 = vsel %vm972, %v2479, %v2311
        %v2488 = vsel %vm972, %v2480, %v2312
        %v2489 = vsel %vm972, %v2481, %v2313
        %v2490 = vsel %vm972, %v2482, %v2314
        %v2491 = vsel %vm972, %v2483, %v2315
        %v2492 = vsel %vm972, %v2484, %v2316
        %v2493 = vsel %vm972, %v2485, %v2317
        %v2494 = vsel %vm972, %v2486, %v2318
        %v2495 = vsel %vm981, %v2487, %v2471
        %v2496 = vsel %vm981, %v2488, %v2472
        %v2497 = vsel %vm981, %v2489, %v2473
        %v2498 = vsel %vm981, %v2490, %v2474
        %v2499 = vsel %vm981, %v2491, %v2475
        %v2500 = vsel %vm981, %v2492, %v2476
        %v2501 = vsel %vm981, %v2493, %v2477
        %v2502 = vsel %vm981, %v2494, %v2478
        %v2503 = vmul.f32 %v2495, %v994
        %v2504 = vmul.f32 %v2496, %v994
        %v2505 = vmul.f32 %v2497, %v994
        %v2506 = vmul.f32 %v2498, %v994
        %v2507 = vmul.f32 %v2499, %v994
        %v2508 = vmul.f32 %v2500, %v994
        %v2509 = vmul.f32 %v2501, %v994
        %v2510 = vmul.f32 %v2502, %v994
        %v2511 = vadd.f32 %v2503, %v1008
        %v2512 = vadd.f32 %v2504, %v1008
        %v2513 = vadd.f32 %v2505, %v1008
        %v2514 = vadd.f32 %v2506, %v1008
        %v2515 = vadd.f32 %v2507, %v1008
        %v2516 = vadd.f32 %v2508, %v1008
        %v2517 = vadd.f32 %v2509, %v1008
        %v2518 = vadd.f32 %v2510, %v1008
        %s2519 = scalar_lea.vmem %s215, 16 [#allocation2]
        %2520 = vst [vmem:[%s2519] sm:$0xff] %v2511
        %2521 = vst [vmem:[%s2519 + $0x20] sm:$0xff] %v2512
        %2522 = vst [vmem:[%s2519 + $0x40] sm:$0xff] %v2513
        %2523 = vst [vmem:[%s2519 + $0x60] sm:$0xff] %v2514
        %2524 = vst [vmem:[%s2519 + $0x80] sm:$0xff] %v2515
        %2525 = vst [vmem:[%s2519 + $0xa0] sm:$0xff] %v2516
        %2526 = vst [vmem:[%s2519 + $0xc0] sm:$0xff] %v2517
        %2527 = vst [vmem:[%s2519 + $0xe0] sm:$0xff] %v2518
        %s2528 = scalar_lea.vmem %s1, 96
        %v2529 = vld [vmem:[%s2528] sm:$0xff]
        %v2530 = vld [vmem:[%s2528 + $0x8] sm:$0xff]
        %v2531 = vld [vmem:[%s2528 + $0x10] sm:$0xff]
        %v2532 = vld [vmem:[%s2528 + $0x18] sm:$0xff]
        %2533 = vmatprep.subr.mxu0 0.0
        %2534 = vmatpush1.msra.mxu0 %v2529
        %2535 = vmatprep.subr.mxu0 0.0
        %2536 = vmatpush1.msra.mxu0 %v2530
        %2537 = vmatprep.subr.mxu0 0.0
        %2538 = vmatpush1.msra.mxu0 %v2531
        %2539 = vmatprep.subr.mxu0 0.0
        %2540 = vmatpush1.msra.mxu0 %v2532
        %2541 = vmatprep.subr.mxu0 0.0
        %2542 = vmatpush1.msra.mxu0 0.0
        %2543 = vmatprep.subr.mxu0 0.0
        %2544 = vmatpush1.msra.mxu0 0.0
        %2545 = vmatprep.subr.mxu0 0.0
        %2546 = vmatpush1.msra.mxu0 0.0
        %2547 = vmatprep.subr.mxu0 0.0
        %2548 = vmatpush1.msra.mxu0 0.0
        %2549 = vmatprep.subr.mxu0 0.0
        %2550 = vmatpush1.msra.mxu0 0.0
        %2551 = vmatprep.subr.mxu0 0.0
        %2552 = vmatpush1.msra.mxu0 0.0
        %2553 = vmatprep.subr.mxu0 0.0
        %2554 = vmatpush1.msra.mxu0 0.0
        %2555 = vmatprep.subr.mxu0 0.0
        %2556 = vmatpush1.msra.mxu0 0.0
        %2557 = vmatprep.subr.mxu0 0.0
        %2558 = vmatpush1.msra.mxu0 0.0
        %2559 = vmatprep.subr.mxu0 0.0
        %2560 = vmatpush1.msra.mxu0 0.0
        %2561 = vmatprep.subr.mxu0 0.0
        %2562 = vmatpush1.msra.mxu0 0.0
        %2563 = vmatprep.subr.mxu0 0.0
        %2564 = vmatpush1.msra.mxu0 0.0
        %2565 = vmatprep.subr.mxu0 0.0
        %2566 = vmatpush1.msra.mxu0 0.0
        %2567 = vmatprep.subr.mxu0 0.0
        %2568 = vmatpush1.msra.mxu0 0.0
        %2569 = vmatprep.subr.mxu0 0.0
        %2570 = vmatpush1.msra.mxu0 0.0
        %2571 = vmatprep.subr.mxu0 0.0
        %2572 = vmatpush1.msra.mxu0 0.0
        %2573 = vmatprep.subr.mxu0 0.0
        %2574 = vmatpush1.msra.mxu0 0.0
        %2575 = vmatprep.subr.mxu0 0.0
        %2576 = vmatpush1.msra.mxu0 0.0
        %2577 = vmatprep.subr.mxu0 0.0
        %2578 = vmatpush1.msra.mxu0 0.0
        %2579 = vmatprep.subr.mxu0 0.0
        %2580 = vmatpush1.msra.mxu0 0.0
        %2581 = vmatprep.subr.mxu0 0.0
        %2582 = vmatpush1.msra.mxu0 0.0
        %2583 = vmatprep.subr.mxu0 0.0
        %2584 = vmatpush1.msra.mxu0 0.0
        %2585 = vmatprep.subr.mxu0 0.0
        %2586 = vmatpush1.msra.mxu0 0.0
        %2587 = vmatprep.subr.mxu0 0.0
        %2588 = vmatpush1.msra.mxu0 0.0
        %2589 = vmatprep.subr.mxu0 0.0
        %2590 = vmatpush1.msra.mxu0 0.0
        %2591 = vmatprep.subr.mxu0 0.0
        %2592 = vmatpush1.msra.mxu0 0.0
        %2593 = vmatprep.subr.mxu0 0.0
        %2594 = vmatpush1.msra.mxu0 0.0
        %2595 = vmatprep.subr.mxu0 0.0
        %2596 = vmatpush1.msra.mxu0 0.0
        %2597 = vmatprep.mubr.f32.mxu0 0.0
        %2598 = vmatmul.mubr.f32.gmra.mrb[0].mxu0 %v243
        %v2599 = vpop.f32.mrb[0].mxu0
        %v2600 = vadd.f32 0.0, %v2599
        %v2601 = vpop.f32.mrb[0].mxu0
        %2602 = vmatprep.mubr.f32.mxu0 0.0
        %2603 = vmatmul.mubr.f32.gmra.mrb[0].mxu0 %v246
        %v2604 = vpop.f32.mrb[0].mxu0
        %v2605 = vadd.f32 0.0, %v2604
        %v2606 = vpop.f32.mrb[0].mxu0
        %2607 = vmatprep.mubr.f32.mxu0 0.0
        %2608 = vmatmul.mubr.f32.gmra.mrb[0].mxu0 %v249
        %v2609 = vpop.f32.mrb[0].mxu0
        %v2610 = vadd.f32 0.0, %v2609
        %v2611 = vpop.f32.mrb[0].mxu0
        %2612 = vmatprep.mubr.f32.mxu0 0.0
        %2613 = vmatmul.mubr.f32.gmra.mrb[0].mxu0 %v252
        %v2614 = vpop.f32.mrb[0].mxu0
        %v2615 = vadd.f32 0.0, %v2614
        %v2616 = vpop.f32.mrb[0].mxu0
        %2617 = vmatprep.mubr.f32.mxu0 0.0
        %2618 = vmatmul.mubr.f32.gmra.mrb[0].mxu0 %v255
        %v2619 = vpop.f32.mrb[0].mxu0
        %v2620 = vadd.f32 0.0, %v2619
        %v2621 = vpop.f32.mrb[0].mxu0
        %2622 = vmatprep.mubr.f32.mxu0 0.0
        %2623 = vmatmul.mubr.f32.gmra.mrb[0].mxu0 %v258
        %v2624 = vpop.f32.mrb[0].mxu0
        %v2625 = vadd.f32 0.0, %v2624
        %v2626 = vpop.f32.mrb[0].mxu0
        %2627 = vmatprep.mubr.f32.mxu0 0.0
        %2628 = vmatmul.mubr.f32.gmra.mrb[0].mxu0 %v261
        %v2629 = vpop.f32.mrb[0].mxu0
        %v2630 = vadd.f32 0.0, %v2629
        %v2631 = vpop.f32.mrb[0].mxu0
        %2632 = vmatprep.mubr.f32.mxu0 0.0
        %2633 = vmatmul.mubr.f32.gmra.mrb[0].mxu0 %v264
        %v2634 = vpop.f32.mrb[0].mxu0
        %v2635 = vadd.f32 0.0, %v2634
        %v2636 = vpop.f32.mrb[0].mxu0
        %2637 = vdwg.mxu0
        %v2638 = vsel %vm241, %v2600, 0.0
        %2639 = vadd.xlane.f32.xlu0 %v2638
        %v2640 = vpop.xlane.xlu0 %2639
        %v2641 = vsel %vm241, %v2605, 0.0
        %2642 = vadd.xlane.f32.xlu0 %v2641
        %v2643 = vpop.xlane.xlu0 %2642
        %v2644 = vsel %vm241, %v2610, 0.0
        %2645 = vadd.xlane.f32.xlu0 %v2644
        %v2646 = vpop.xlane.xlu0 %2645
        %v2647 = vsel %vm241, %v2615, 0.0
        %2648 = vadd.xlane.f32.xlu0 %v2647
        %v2649 = vpop.xlane.xlu0 %2648
        %v2650 = vsel %vm241, %v2620, 0.0
        %2651 = vadd.xlane.f32.xlu0 %v2650
        %v2652 = vpop.xlane.xlu0 %2651
        %v2653 = vsel %vm241, %v2625, 0.0
        %2654 = vadd.xlane.f32.xlu0 %v2653
        %v2655 = vpop.xlane.xlu0 %2654
        %v2656 = vsel %vm241, %v2630, 0.0
        %2657 = vadd.xlane.f32.xlu0 %v2656
        %v2658 = vpop.xlane.xlu0 %2657
        %v2659 = vsel %vm241, %v2635, 0.0
        %2660 = vadd.xlane.f32.xlu0 %v2659
        %v2661 = vpop.xlane.xlu0 %2660
        %v2662 = vmul.f32 %v2640, %v395
        %v2663 = vmul.f32 %v2643, %v395
        %v2664 = vmul.f32 %v2646, %v395
        %v2665 = vmul.f32 %v2649, %v395
        %v2666 = vmul.f32 %v2652, %v395
        %v2667 = vmul.f32 %v2655, %v395
        %v2668 = vmul.f32 %v2658, %v395
        %v2669 = vmul.f32 %v2661, %v395
        %v2670 = vsub.f32 %v2600, %v2662
        %v2671 = vsub.f32 %v2605, %v2663
        %v2672 = vsub.f32 %v2610, %v2664
        %v2673 = vsub.f32 %v2615, %v2665
        %v2674 = vsub.f32 %v2620, %v2666
        %v2675 = vsub.f32 %v2625, %v2667
        %v2676 = vsub.f32 %v2630, %v2668
        %v2677 = vsub.f32 %v2635, %v2669
        %v2678 = vmul.f32 %v2670, %v2670
        %v2679 = vmul.f32 %v2671, %v2671
        %v2680 = vmul.f32 %v2672, %v2672
        %v2681 = vmul.f32 %v2673, %v2673
        %v2682 = vmul.f32 %v2674, %v2674
        %v2683 = vmul.f32 %v2675, %v2675
        %v2684 = vmul.f32 %v2676, %v2676
        %v2685 = vmul.f32 %v2677, %v2677
        %v2686 = vsel %vm241, %v2678, 0.0
        %2687 = vadd.xlane.f32.xlu0 %v2686
        %v2688 = vpop.xlane.xlu0 %2687
        %v2689 = vsel %vm241, %v2679, 0.0
        %2690 = vadd.xlane.f32.xlu0 %v2689
        %v2691 = vpop.xlane.xlu0 %2690
        %v2692 = vsel %vm241, %v2680, 0.0
        %2693 = vadd.xlane.f32.xlu0 %v2692
        %v2694 = vpop.xlane.xlu0 %2693
        %v2695 = vsel %vm241, %v2681, 0.0
        %2696 = vadd.xlane.f32.xlu0 %v2695
        %v2697 = vpop.xlane.xlu0 %2696
        %v2698 = vsel %vm241, %v2682, 0.0
        %2699 = vadd.xlane.f32.xlu0 %v2698
        %v2700 = vpop.xlane.xlu0 %2699
        %v2701 = vsel %vm241, %v2683, 0.0
        %2702 = vadd.xlane.f32.xlu0 %v2701
        %v2703 = vpop.xlane.xlu0 %2702
        %v2704 = vsel %vm241, %v2684, 0.0
        %2705 = vadd.xlane.f32.xlu0 %v2704
        %v2706 = vpop.xlane.xlu0 %2705
        %v2707 = vsel %vm241, %v2685, 0.0
        %2708 = vadd.xlane.f32.xlu0 %v2707
        %v2709 = vpop.xlane.xlu0 %2708
        %v2710 = vmul.f32 %v2688, %v395
        %v2711 = vmul.f32 %v2691, %v395
        %v2712 = vmul.f32 %v2694, %v395
        %v2713 = vmul.f32 %v2697, %v395
        %v2714 = vmul.f32 %v2700, %v395
        %v2715 = vmul.f32 %v2703, %v395
        %v2716 = vmul.f32 %v2706, %v395
        %v2717 = vmul.f32 %v2709, %v395
        %v2718 = vadd.f32 %v2710, 1e-05
        %v2719 = vadd.f32 %v2711, 1e-05
        %v2720 = vadd.f32 %v2712, 1e-05
        %v2721 = vadd.f32 %v2713, 1e-05
        %v2722 = vadd.f32 %v2714, 1e-05
        %v2723 = vadd.f32 %v2715, 1e-05
        %v2724 = vadd.f32 %v2716, 1e-05
        %v2725 = vadd.f32 %v2717, 1e-05
        %v2726 = vrsqrt.pop %v2718
        %v2727 = vrsqrt.pop %v2719
        %v2728 = vrsqrt.pop %v2720
        %v2729 = vrsqrt.pop %v2721
        %v2730 = vrsqrt.pop %v2722
        %v2731 = vrsqrt.pop %v2723
        %v2732 = vrsqrt.pop %v2724
        %v2733 = vrsqrt.pop %v2725
        %v2734 = vmul.f32 %v2670, %v2726
        %v2735 = vmul.f32 %v2671, %v2727
        %v2736 = vmul.f32 %v2672, %v2728
        %v2737 = vmul.f32 %v2673, %v2729
        %v2738 = vmul.f32 %v2674, %v2730
        %v2739 = vmul.f32 %v2675, %v2731
        %v2740 = vmul.f32 %v2676, %v2732
        %v2741 = vmul.f32 %v2677, %v2733
        %2750 = vrot.lane.b32.xlu0 %v2600, 96
        %v2751 = vpop.permute.xlu0 %2750
        %2752 = vrot.lane.b32.xlu0 %v2605, 96
        %v2753 = vpop.permute.xlu0 %2752
        %2754 = vrot.lane.b32.xlu0 %v2610, 96
        %v2755 = vpop.permute.xlu0 %2754
        %2756 = vrot.lane.b32.xlu0 %v2615, 96
        %v2757 = vpop.permute.xlu0 %2756
        %2758 = vrot.lane.b32.xlu0 %v2620, 96
        %v2759 = vpop.permute.xlu0 %2758
        %2760 = vrot.lane.b32.xlu0 %v2625, 96
        %v2761 = vpop.permute.xlu0 %2760
        %2762 = vrot.lane.b32.xlu0 %v2630, 96
        %v2763 = vpop.permute.xlu0 %2762
        %2764 = vrot.lane.b32.xlu0 %v2635, 96
        %v2765 = vpop.permute.xlu0 %2764
        %v2774 = vsel %vm241, %v2751, 0.0
        %2775 = vadd.xlane.f32.xlu0 %v2774
        %v2776 = vpop.xlane.xlu0 %2775
        %v2777 = vsel %vm241, %v2753, 0.0
        %2778 = vadd.xlane.f32.xlu0 %v2777
        %v2779 = vpop.xlane.xlu0 %2778
        %v2780 = vsel %vm241, %v2755, 0.0
        %2781 = vadd.xlane.f32.xlu0 %v2780
        %v2782 = vpop.xlane.xlu0 %2781
        %v2783 = vsel %vm241, %v2757, 0.0
        %2784 = vadd.xlane.f32.xlu0 %v2783
        %v2785 = vpop.xlane.xlu0 %2784
        %v2786 = vsel %vm241, %v2759, 0.0
        %2787 = vadd.xlane.f32.xlu0 %v2786
        %v2788 = vpop.xlane.xlu0 %2787
        %v2789 = vsel %vm241, %v2761, 0.0
        %2790 = vadd.xlane.f32.xlu0 %v2789
        %v2791 = vpop.xlane.xlu0 %2790
        %v2792 = vsel %vm241, %v2763, 0.0
        %2793 = vadd.xlane.f32.xlu0 %v2792
        %v2794 = vpop.xlane.xlu0 %2793
        %v2795 = vsel %vm241, %v2765, 0.0
        %2796 = vadd.xlane.f32.xlu0 %v2795
        %v2797 = vpop.xlane.xlu0 %2796
        %v2798 = vmul.f32 %v2776, %v395
        %v2799 = vmul.f32 %v2779, %v395
        %v2800 = vmul.f32 %v2782, %v395
        %v2801 = vmul.f32 %v2785, %v395
        %v2802 = vmul.f32 %v2788, %v395
        %v2803 = vmul.f32 %v2791, %v395
        %v2804 = vmul.f32 %v2794, %v395
        %v2805 = vmul.f32 %v2797, %v395
        %v2806 = vsub.f32 %v2600, %v2798
        %v2807 = vsub.f32 %v2605, %v2799
        %v2808 = vsub.f32 %v2610, %v2800
        %v2809 = vsub.f32 %v2615, %v2801
        %v2810 = vsub.f32 %v2620, %v2802
        %v2811 = vsub.f32 %v2625, %v2803
        %v2812 = vsub.f32 %v2630, %v2804
        %v2813 = vsub.f32 %v2635, %v2805
        %v2814 = vmul.f32 %v2806, %v2806
        %v2815 = vmul.f32 %v2807, %v2807
        %v2816 = vmul.f32 %v2808, %v2808
        %v2817 = vmul.f32 %v2809, %v2809
        %v2818 = vmul.f32 %v2810, %v2810
        %v2819 = vmul.f32 %v2811, %v2811
        %v2820 = vmul.f32 %v2812, %v2812
        %v2821 = vmul.f32 %v2813, %v2813
        %2830 = vrot.lane.b32.xlu0 %v2814, 96
        %v2831 = vpop.permute.xlu0 %2830
        %2832 = vrot.lane.b32.xlu0 %v2815, 96
        %v2833 = vpop.permute.xlu0 %2832
        %2834 = vrot.lane.b32.xlu0 %v2816, 96
        %v2835 = vpop.permute.xlu0 %2834
        %2836 = vrot.lane.b32.xlu0 %v2817, 96
        %v2837 = vpop.permute.xlu0 %2836
        %2838 = vrot.lane.b32.xlu0 %v2818, 96
        %v2839 = vpop.permute.xlu0 %2838
        %2840 = vrot.lane.b32.xlu0 %v2819, 96
        %v2841 = vpop.permute.xlu0 %2840
        %2842 = vrot.lane.b32.xlu0 %v2820, 96
        %v2843 = vpop.permute.xlu0 %2842
        %2844 = vrot.lane.b32.xlu0 %v2821, 96
        %v2845 = vpop.permute.xlu0 %2844
        %v2854 = vsel %vm241, %v2831, 0.0
        %2855 = vadd.xlane.f32.xlu0 %v2854
        %v2856 = vpop.xlane.xlu0 %2855
        %v2857 = vsel %vm241, %v2833, 0.0
        %2858 = vadd.xlane.f32.xlu0 %v2857
        %v2859 = vpop.xlane.xlu0 %2858
        %v2860 = vsel %vm241, %v2835, 0.0
        %2861 = vadd.xlane.f32.xlu0 %v2860
        %v2862 = vpop.xlane.xlu0 %2861
        %v2863 = vsel %vm241, %v2837, 0.0
        %2864 = vadd.xlane.f32.xlu0 %v2863
        %v2865 = vpop.xlane.xlu0 %2864
        %v2866 = vsel %vm241, %v2839, 0.0
        %2867 = vadd.xlane.f32.xlu0 %v2866
        %v2868 = vpop.xlane.xlu0 %2867
        %v2869 = vsel %vm241, %v2841, 0.0
        %2870 = vadd.xlane.f32.xlu0 %v2869
        %v2871 = vpop.xlane.xlu0 %2870
        %v2872 = vsel %vm241, %v2843, 0.0
        %2873 = vadd.xlane.f32.xlu0 %v2872
        %v2874 = vpop.xlane.xlu0 %2873
        %v2875 = vsel %vm241, %v2845, 0.0
        %2876 = vadd.xlane.f32.xlu0 %v2875
        %v2877 = vpop.xlane.xlu0 %2876
        %v2878 = vmul.f32 %v2856, %v395
        %v2879 = vmul.f32 %v2859, %v395
        %v2880 = vmul.f32 %v2862, %v395
        %v2881 = vmul.f32 %v2865, %v395
        %v2882 = vmul.f32 %v2868, %v395
        %v2883 = vmul.f32 %v2871, %v395
        %v2884 = vmul.f32 %v2874, %v395
        %v2885 = vmul.f32 %v2877, %v395
        %v2886 = vadd.f32 %v2878, 1e-05
        %v2887 = vadd.f32 %v2879, 1e-05
        %v2888 = vadd.f32 %v2880, 1e-05
        %v2889 = vadd.f32 %v2881, 1e-05
        %v2890 = vadd.f32 %v2882, 1e-05
        %v2891 = vadd.f32 %v2883, 1e-05
        %v2892 = vadd.f32 %v2884, 1e-05
        %v2893 = vadd.f32 %v2885, 1e-05
        %v2894 = vrsqrt.pop %v2886
        %v2895 = vrsqrt.pop %v2887
        %v2896 = vrsqrt.pop %v2888
        %v2897 = vrsqrt.pop %v2889
        %v2898 = vrsqrt.pop %v2890
        %v2899 = vrsqrt.pop %v2891
        %v2900 = vrsqrt.pop %v2892
        %v2901 = vrsqrt.pop %v2893
        %v2902 = vmul.f32 %v2806, %v2894
        %v2903 = vmul.f32 %v2807, %v2895
        %v2904 = vmul.f32 %v2808, %v2896
        %v2905 = vmul.f32 %v2809, %v2897
        %v2906 = vmul.f32 %v2810, %v2898
        %v2907 = vmul.f32 %v2811, %v2899
        %v2908 = vmul.f32 %v2812, %v2900
        %v2909 = vmul.f32 %v2813, %v2901
        %2910 = vrot.lane.b32.xlu0 %v2600, 64
        %v2911 = vpop.permute.xlu0 %2910
        %2912 = vrot.lane.b32.xlu0 %v2605, 64
        %v2913 = vpop.permute.xlu0 %2912
        %2914 = vrot.lane.b32.xlu0 %v2610, 64
        %v2915 = vpop.permute.xlu0 %2914
        %2916 = vrot.lane.b32.xlu0 %v2615, 64
        %v2917 = vpop.permute.xlu0 %2916
        %2918 = vrot.lane.b32.xlu0 %v2620, 64
        %v2919 = vpop.permute.xlu0 %2918
        %2920 = vrot.lane.b32.xlu0 %v2625, 64
        %v2921 = vpop.permute.xlu0 %2920
        %2922 = vrot.lane.b32.xlu0 %v2630, 64
        %v2923 = vpop.permute.xlu0 %2922
        %2924 = vrot.lane.b32.xlu0 %v2635, 64
        %v2925 = vpop.permute.xlu0 %2924
        %v2934 = vsel %vm241, %v2911, 0.0
        %2935 = vadd.xlane.f32.xlu0 %v2934
        %v2936 = vpop.xlane.xlu0 %2935
        %v2937 = vsel %vm241, %v2913, 0.0
        %2938 = vadd.xlane.f32.xlu0 %v2937
        %v2939 = vpop.xlane.xlu0 %2938
        %v2940 = vsel %vm241, %v2915, 0.0
        %2941 = vadd.xlane.f32.xlu0 %v2940
        %v2942 = vpop.xlane.xlu0 %2941
        %v2943 = vsel %vm241, %v2917, 0.0
        %2944 = vadd.xlane.f32.xlu0 %v2943
        %v2945 = vpop.xlane.xlu0 %2944
        %v2946 = vsel %vm241, %v2919, 0.0
        %2947 = vadd.xlane.f32.xlu0 %v2946
        %v2948 = vpop.xlane.xlu0 %2947
        %v2949 = vsel %vm241, %v2921, 0.0
        %2950 = vadd.xlane.f32.xlu0 %v2949
        %v2951 = vpop.xlane.xlu0 %2950
        %v2952 = vsel %vm241, %v2923, 0.0
        %2953 = vadd.xlane.f32.xlu0 %v2952
        %v2954 = vpop.xlane.xlu0 %2953
        %v2955 = vsel %vm241, %v2925, 0.0
        %2956 = vadd.xlane.f32.xlu0 %v2955
        %v2957 = vpop.xlane.xlu0 %2956
        %v2958 = vmul.f32 %v2936, %v395
        %v2959 = vmul.f32 %v2939, %v395
        %v2960 = vmul.f32 %v2942, %v395
        %v2961 = vmul.f32 %v2945, %v395
        %v2962 = vmul.f32 %v2948, %v395
        %v2963 = vmul.f32 %v2951, %v395
        %v2964 = vmul.f32 %v2954, %v395
        %v2965 = vmul.f32 %v2957, %v395
        %v2966 = vsub.f32 %v2600, %v2958
        %v2967 = vsub.f32 %v2605, %v2959
        %v2968 = vsub.f32 %v2610, %v2960
        %v2969 = vsub.f32 %v2615, %v2961
        %v2970 = vsub.f32 %v2620, %v2962
        %v2971 = vsub.f32 %v2625, %v2963
        %v2972 = vsub.f32 %v2630, %v2964
        %v2973 = vsub.f32 %v2635, %v2965
        %v2974 = vmul.f32 %v2966, %v2966
        %v2975 = vmul.f32 %v2967, %v2967
        %v2976 = vmul.f32 %v2968, %v2968
        %v2977 = vmul.f32 %v2969, %v2969
        %v2978 = vmul.f32 %v2970, %v2970
        %v2979 = vmul.f32 %v2971, %v2971
        %v2980 = vmul.f32 %v2972, %v2972
        %v2981 = vmul.f32 %v2973, %v2973
        %2990 = vrot.lane.b32.xlu0 %v2974, 64
        %v2991 = vpop.permute.xlu0 %2990
        %2992 = vrot.lane.b32.xlu0 %v2975, 64
        %v2993 = vpop.permute.xlu0 %2992
        %2994 = vrot.lane.b32.xlu0 %v2976, 64
        %v2995 = vpop.permute.xlu0 %2994
        %2996 = vrot.lane.b32.xlu0 %v2977, 64
        %v2997 = vpop.permute.xlu0 %2996
        %2998 = vrot.lane.b32.xlu0 %v2978, 64
        %v2999 = vpop.permute.xlu0 %2998
        %3000 = vrot.lane.b32.xlu0 %v2979, 64
        %v3001 = vpop.permute.xlu0 %3000
        %3002 = vrot.lane.b32.xlu0 %v2980, 64
        %v3003 = vpop.permute.xlu0 %3002
        %3004 = vrot.lane.b32.xlu0 %v2981, 64
        %v3005 = vpop.permute.xlu0 %3004
        %v3014 = vsel %vm241, %v2991, 0.0
        %3015 = vadd.xlane.f32.xlu0 %v3014
        %v3016 = vpop.xlane.xlu0 %3015
        %v3017 = vsel %vm241, %v2993, 0.0
        %3018 = vadd.xlane.f32.xlu0 %v3017
        %v3019 = vpop.xlane.xlu0 %3018
        %v3020 = vsel %vm241, %v2995, 0.0
        %3021 = vadd.xlane.f32.xlu0 %v3020
        %v3022 = vpop.xlane.xlu0 %3021
        %v3023 = vsel %vm241, %v2997, 0.0
        %3024 = vadd.xlane.f32.xlu0 %v3023
        %v3025 = vpop.xlane.xlu0 %3024
        %v3026 = vsel %vm241, %v2999, 0.0
        %3027 = vadd.xlane.f32.xlu0 %v3026
        %v3028 = vpop.xlane.xlu0 %3027
        %v3029 = vsel %vm241, %v3001, 0.0
        %3030 = vadd.xlane.f32.xlu0 %v3029
        %v3031 = vpop.xlane.xlu0 %3030
        %v3032 = vsel %vm241, %v3003, 0.0
        %3033 = vadd.xlane.f32.xlu0 %v3032
        %v3034 = vpop.xlane.xlu0 %3033
        %v3035 = vsel %vm241, %v3005, 0.0
        %3036 = vadd.xlane.f32.xlu0 %v3035
        %v3037 = vpop.xlane.xlu0 %3036
        %v3038 = vmul.f32 %v3016, %v395
        %v3039 = vmul.f32 %v3019, %v395
        %v3040 = vmul.f32 %v3022, %v395
        %v3041 = vmul.f32 %v3025, %v395
        %v3042 = vmul.f32 %v3028, %v395
        %v3043 = vmul.f32 %v3031, %v395
        %v3044 = vmul.f32 %v3034, %v395
        %v3045 = vmul.f32 %v3037, %v395
        %v3046 = vadd.f32 %v3038, 1e-05
        %v3047 = vadd.f32 %v3039, 1e-05
        %v3048 = vadd.f32 %v3040, 1e-05
        %v3049 = vadd.f32 %v3041, 1e-05
        %v3050 = vadd.f32 %v3042, 1e-05
        %v3051 = vadd.f32 %v3043, 1e-05
        %v3052 = vadd.f32 %v3044, 1e-05
        %v3053 = vadd.f32 %v3045, 1e-05
        %v3054 = vrsqrt.pop %v3046
        %v3055 = vrsqrt.pop %v3047
        %v3056 = vrsqrt.pop %v3048
        %v3057 = vrsqrt.pop %v3049
        %v3058 = vrsqrt.pop %v3050
        %v3059 = vrsqrt.pop %v3051
        %v3060 = vrsqrt.pop %v3052
        %v3061 = vrsqrt.pop %v3053
        %v3062 = vmul.f32 %v2966, %v3054
        %v3063 = vmul.f32 %v2967, %v3055
        %v3064 = vmul.f32 %v2968, %v3056
        %v3065 = vmul.f32 %v2969, %v3057
        %v3066 = vmul.f32 %v2970, %v3058
        %v3067 = vmul.f32 %v2971, %v3059
        %v3068 = vmul.f32 %v2972, %v3060
        %v3069 = vmul.f32 %v2973, %v3061
        %3070 = vrot.lane.b32.xlu0 %v2600, 32
        %v3071 = vpop.permute.xlu0 %3070
        %3072 = vrot.lane.b32.xlu0 %v2605, 32
        %v3073 = vpop.permute.xlu0 %3072
        %3074 = vrot.lane.b32.xlu0 %v2610, 32
        %v3075 = vpop.permute.xlu0 %3074
        %3076 = vrot.lane.b32.xlu0 %v2615, 32
        %v3077 = vpop.permute.xlu0 %3076
        %3078 = vrot.lane.b32.xlu0 %v2620, 32
        %v3079 = vpop.permute.xlu0 %3078
        %3080 = vrot.lane.b32.xlu0 %v2625, 32
        %v3081 = vpop.permute.xlu0 %3080
        %3082 = vrot.lane.b32.xlu0 %v2630, 32
        %v3083 = vpop.permute.xlu0 %3082
        %3084 = vrot.lane.b32.xlu0 %v2635, 32
        %v3085 = vpop.permute.xlu0 %3084
        %v3094 = vsel %vm241, %v3071, 0.0
        %3095 = vadd.xlane.f32.xlu0 %v3094
        %v3096 = vpop.xlane.xlu0 %3095
        %v3097 = vsel %vm241, %v3073, 0.0
        %3098 = vadd.xlane.f32.xlu0 %v3097
        %v3099 = vpop.xlane.xlu0 %3098
        %v3100 = vsel %vm241, %v3075, 0.0
        %3101 = vadd.xlane.f32.xlu0 %v3100
        %v3102 = vpop.xlane.xlu0 %3101
        %v3103 = vsel %vm241, %v3077, 0.0
        %3104 = vadd.xlane.f32.xlu0 %v3103
        %v3105 = vpop.xlane.xlu0 %3104
        %v3106 = vsel %vm241, %v3079, 0.0
        %3107 = vadd.xlane.f32.xlu0 %v3106
        %v3108 = vpop.xlane.xlu0 %3107
        %v3109 = vsel %vm241, %v3081, 0.0
        %3110 = vadd.xlane.f32.xlu0 %v3109
        %v3111 = vpop.xlane.xlu0 %3110
        %v3112 = vsel %vm241, %v3083, 0.0
        %3113 = vadd.xlane.f32.xlu0 %v3112
        %v3114 = vpop.xlane.xlu0 %3113
        %v3115 = vsel %vm241, %v3085, 0.0
        %3116 = vadd.xlane.f32.xlu0 %v3115
        %v3117 = vpop.xlane.xlu0 %3116
        %v3118 = vmul.f32 %v3096, %v395
        %v3119 = vmul.f32 %v3099, %v395
        %v3120 = vmul.f32 %v3102, %v395
        %v3121 = vmul.f32 %v3105, %v395
        %v3122 = vmul.f32 %v3108, %v395
        %v3123 = vmul.f32 %v3111, %v395
        %v3124 = vmul.f32 %v3114, %v395
        %v3125 = vmul.f32 %v3117, %v395
        %v3126 = vsub.f32 %v2600, %v3118
        %v3127 = vsub.f32 %v2605, %v3119
        %v3128 = vsub.f32 %v2610, %v3120
        %v3129 = vsub.f32 %v2615, %v3121
        %v3130 = vsub.f32 %v2620, %v3122
        %v3131 = vsub.f32 %v2625, %v3123
        %v3132 = vsub.f32 %v2630, %v3124
        %v3133 = vsub.f32 %v2635, %v3125
        %v3134 = vmul.f32 %v3126, %v3126
        %v3135 = vmul.f32 %v3127, %v3127
        %v3136 = vmul.f32 %v3128, %v3128
        %v3137 = vmul.f32 %v3129, %v3129
        %v3138 = vmul.f32 %v3130, %v3130
        %v3139 = vmul.f32 %v3131, %v3131
        %v3140 = vmul.f32 %v3132, %v3132
        %v3141 = vmul.f32 %v3133, %v3133
        %3150 = vrot.lane.b32.xlu0 %v3134, 32
        %v3151 = vpop.permute.xlu0 %3150
        %3152 = vrot.lane.b32.xlu0 %v3135, 32
        %v3153 = vpop.permute.xlu0 %3152
        %3154 = vrot.lane.b32.xlu0 %v3136, 32
        %v3155 = vpop.permute.xlu0 %3154
        %3156 = vrot.lane.b32.xlu0 %v3137, 32
        %v3157 = vpop.permute.xlu0 %3156
        %3158 = vrot.lane.b32.xlu0 %v3138, 32
        %v3159 = vpop.permute.xlu0 %3158
        %3160 = vrot.lane.b32.xlu0 %v3139, 32
        %v3161 = vpop.permute.xlu0 %3160
        %3162 = vrot.lane.b32.xlu0 %v3140, 32
        %v3163 = vpop.permute.xlu0 %3162
        %3164 = vrot.lane.b32.xlu0 %v3141, 32
        %v3165 = vpop.permute.xlu0 %3164
        %v3174 = vsel %vm241, %v3151, 0.0
        %3175 = vadd.xlane.f32.xlu0 %v3174
        %v3176 = vpop.xlane.xlu0 %3175
        %v3177 = vsel %vm241, %v3153, 0.0
        %3178 = vadd.xlane.f32.xlu0 %v3177
        %v3179 = vpop.xlane.xlu0 %3178
        %v3180 = vsel %vm241, %v3155, 0.0
        %3181 = vadd.xlane.f32.xlu0 %v3180
        %v3182 = vpop.xlane.xlu0 %3181
        %v3183 = vsel %vm241, %v3157, 0.0
        %3184 = vadd.xlane.f32.xlu0 %v3183
        %v3185 = vpop.xlane.xlu0 %3184
        %v3186 = vsel %vm241, %v3159, 0.0
        %3187 = vadd.xlane.f32.xlu0 %v3186
        %v3188 = vpop.xlane.xlu0 %3187
        %v3189 = vsel %vm241, %v3161, 0.0
        %3190 = vadd.xlane.f32.xlu0 %v3189
        %v3191 = vpop.xlane.xlu0 %3190
        %v3192 = vsel %vm241, %v3163, 0.0
        %3193 = vadd.xlane.f32.xlu0 %v3192
        %v3194 = vpop.xlane.xlu0 %3193
        %v3195 = vsel %vm241, %v3165, 0.0
        %3196 = vadd.xlane.f32.xlu0 %v3195
        %v3197 = vpop.xlane.xlu0 %3196
        %v3198 = vmul.f32 %v3176, %v395
        %v3199 = vmul.f32 %v3179, %v395
        %v3200 = vmul.f32 %v3182, %v395
        %v3201 = vmul.f32 %v3185, %v395
        %v3202 = vmul.f32 %v3188, %v395
        %v3203 = vmul.f32 %v3191, %v395
        %v3204 = vmul.f32 %v3194, %v395
        %v3205 = vmul.f32 %v3197, %v395
        %v3206 = vadd.f32 %v3198, 1e-05
        %v3207 = vadd.f32 %v3199, 1e-05
        %v3208 = vadd.f32 %v3200, 1e-05
        %v3209 = vadd.f32 %v3201, 1e-05
        %v3210 = vadd.f32 %v3202, 1e-05
        %v3211 = vadd.f32 %v3203, 1e-05
        %v3212 = vadd.f32 %v3204, 1e-05
        %v3213 = vadd.f32 %v3205, 1e-05
        %v3214 = vrsqrt.pop %v3206
        %v3215 = vrsqrt.pop %v3207
        %v3216 = vrsqrt.pop %v3208
        %v3217 = vrsqrt.pop %v3209
        %v3218 = vrsqrt.pop %v3210
        %v3219 = vrsqrt.pop %v3211
        %v3220 = vrsqrt.pop %v3212
        %v3221 = vrsqrt.pop %v3213
        %v3222 = vmul.f32 %v3126, %v3214
        %v3223 = vmul.f32 %v3127, %v3215
        %v3224 = vmul.f32 %v3128, %v3216
        %v3225 = vmul.f32 %v3129, %v3217
        %v3226 = vmul.f32 %v3130, %v3218
        %v3227 = vmul.f32 %v3131, %v3219
        %v3228 = vmul.f32 %v3132, %v3220
        %v3229 = vmul.f32 %v3133, %v3221
        %v3230 = vsel %vm241, %v2734, %v2902
        %v3231 = vsel %vm241, %v2735, %v2903
        %v3232 = vsel %vm241, %v2736, %v2904
        %v3233 = vsel %vm241, %v2737, %v2905
        %v3234 = vsel %vm241, %v2738, %v2906
        %v3235 = vsel %vm241, %v2739, %v2907
        %v3236 = vsel %vm241, %v2740, %v2908
        %v3237 = vsel %vm241, %v2741, %v2909
        %v3238 = vsel %vm972, %v3230, %v3062
        %v3239 = vsel %vm972, %v3231, %v3063
        %v3240 = vsel %vm972, %v3232, %v3064
        %v3241 = vsel %vm972, %v3233, %v3065
        %v3242 = vsel %vm972, %v3234, %v3066
        %v3243 = vsel %vm972, %v3235, %v3067
        %v3244 = vsel %vm972, %v3236, %v3068
        %v3245 = vsel %vm972, %v3237, %v3069
        %v3246 = vsel %vm981, %v3238, %v3222
        %v3247 = vsel %vm981, %v3239, %v3223
        %v3248 = vsel %vm981, %v3240, %v3224
        %v3249 = vsel %vm981, %v3241, %v3225
        %v3250 = vsel %vm981, %v3242, %v3226
        %v3251 = vsel %vm981, %v3243, %v3227
        %v3252 = vsel %vm981, %v3244, %v3228
        %v3253 = vsel %vm981, %v3245, %v3229
        %v3254 = vmul.f32 %v3246, %v994
        %v3255 = vmul.f32 %v3247, %v994
        %v3256 = vmul.f32 %v3248, %v994
        %v3257 = vmul.f32 %v3249, %v994
        %v3258 = vmul.f32 %v3250, %v994
        %v3259 = vmul.f32 %v3251, %v994
        %v3260 = vmul.f32 %v3252, %v994
        %v3261 = vmul.f32 %v3253, %v994
        %v3262 = vadd.f32 %v3254, %v1008
        %v3263 = vadd.f32 %v3255, %v1008
        %v3264 = vadd.f32 %v3256, %v1008
        %v3265 = vadd.f32 %v3257, %v1008
        %v3266 = vadd.f32 %v3258, %v1008
        %v3267 = vadd.f32 %v3259, %v1008
        %v3268 = vadd.f32 %v3260, %v1008
        %v3269 = vadd.f32 %v3261, %v1008
        %s3270 = scalar_lea.vmem %s215, 24 [#allocation2]
        %3271 = vst [vmem:[%s3270] sm:$0xff] %v3262
        %3272 = vst [vmem:[%s3270 + $0x20] sm:$0xff] %v3263
        %3273 = vst [vmem:[%s3270 + $0x40] sm:$0xff] %v3264
        %3274 = vst [vmem:[%s3270 + $0x60] sm:$0xff] %v3265
        %3275 = vst [vmem:[%s3270 + $0x80] sm:$0xff] %v3266
        %3276 = vst [vmem:[%s3270 + $0xa0] sm:$0xff] %v3267
        %3277 = vst [vmem:[%s3270 + $0xc0] sm:$0xff] %v3268
        %3278 = vst [vmem:[%s3270 + $0xe0] sm:$0xff] %v3269
        %s3279 = sand.u32 %s131, 1
        %s3280 = scalar_lea.sflag [#allocation3], %s3279
        %s3281 = sand.u32 %s131, 1
        %s3282 = smul.addr %s3281, 256
        %s3283 = scalar_lea.vmem [#allocation2], %s3282
        // Predicated region
        $region37: #{tpu_custom_call.1} parent=35 // pred_check
          %p3284 = pneg %p141
        $region38: #{tpu_custom_call.1} parent=35 // pred_check_branch
          %3286 = sbr.rel (%p3284) target = $region40
        $region39: #{tpu_custom_call.1} parent=35 // pred_region
          %s3287 = smul.u32 8, %s23
          %s3289 = ssub.s32 4096, 4096
          %3290 = vsyncadd %s3280, %s3289
          %s3291 = smul.addr %s3287, 4
          %s3292 = smul.addr %s22, 32
          %s3293 = sadd.s32 %s3291, %s3292
          %s3294 = smul.addr %s3293, 128
          %s3295 = scalar_lea.hbm %s4, %s3294
          %s3296 = sshll.u32 %s3283, 4
          %s3297 = int_to_ptr.vmem [resolvable:$true] %s3296
          %3302 = dma.vmem_to_hbm [thread:$0]  %s3297, 4096, %s3295, %s3280, 128, 128, 8
        $region40: #{tpu_custom_call.1} parent=35 // pred_fallthru
          _
      $region36: #{tpu_custom_call.1} parent=5 // pred_fallthru
        _
      %p3303 = scmp.le.s32.totalorder 2, %s13
      // Predicated region
      $region41: #{tpu_custom_call.1} parent=5 // pred_check
        %p3304 = pneg %p3303
      $region42: #{tpu_custom_call.1} parent=5 // pred_check_branch
        %3306 = sbr.rel (%p3304) target = $region44
      $region43: #{tpu_custom_call.1} parent=5 // pred_region
        %s3307 = ssub.s32 %s13, 2
        // Predicated region
        $region45: #{tpu_custom_call.1} parent=43 // pred_check
          %p3308 = pneg %p147
        $region46: #{tpu_custom_call.1} parent=43 // pred_check_branch
          %3310 = sbr.rel (%p3308) target = $region48
        $region47: #{tpu_custom_call.1} parent=43 // pred_region
          %s3311 = sand.u32 %s132, 1
          %s3312 = scalar_lea.sflag [#allocation3], %s3311
          %s3313 = sand.u32 %s132, 1
          %s3314 = smul.addr %s3313, 256
          %s3315 = scalar_lea.vmem [#allocation2], %s3314
          %3316 = dma.done %s3312, 4096
        $region48: #{tpu_custom_call.1} parent=43 // pred_fallthru
          _
      $region44: #{tpu_custom_call.1} parent=5 // pred_fallthru
        _
    $region6: #{tpu_custom_call.1} parent=1 // loop_footer
      %s17 = sadd.s32 1, %s13
    $region7: #{tpu_custom_call.1} parent=1 // loop_footer_branch
      %12 = sbr.rel target = $region3
    $region8: #{tpu_custom_call.1} parent=1 // loop_exit
      _
    %3317 = vsyncpa [#allocation3], 1
    %s3318 = scalar_lea.sflag [#allocation3], 1
    %3319 = vsyncpa %s3318, 1

// kernel: tpu_custom_call.1
$region0: #{tpu_custom_call.1}
  #allocation0 [shape = 'u32[]', space=smem, size = 0x4, offset = 0x4, fixed_abs, tag = 'smem constant byte address 0x4 - core index']
  #allocation1 [shape = 'u32[144,128]{1,0:T(1,128)}', space=vmem, size = 0x12000, scoped, tag = 'internal scratch']
  %s0 = inlined_call_operand.vmem [shape: f32[2,64,32], index: 0, kind: input, shape index: {}]
  %s1 = inlined_call_operand.vmem [shape: f32[4,32,128], index: 1, kind: input, shape index: {}]
  %s2 = inlined_call_operand.vmem [shape: f32[1,128], index: 2, kind: input, shape index: {}]
  %s3 = inlined_call_operand.vmem [shape: f32[1,128], index: 3, kind: input, shape index: {}]
  %s4 = inlined_call_operand.hbm [shape: f32[2,8,4,8,128], index: 4, kind: output, shape index: {}]
  %s5 = sld [smem:[#allocation0]]
  $region49: #{tpu_custom_call.1} parent=0
    _
  %s7 = ssub.s32 1, %s5
  %s8 = scalar_select 0, %s7, %s5
  $region1: #{tpu_custom_call.1} parent=0
    #allocation2 [shape = 'u8[262144]{0}', space=vmem, size = 0x40000, scoped, tag = 'output window, operand 0']
    #allocation3 [shape = 's32[2]{0}', space=sflag, size = 0x8, scoped, tag = 'scoped memory for tpu_custom_call.1']
    %9 = vsyncpa [#allocation3], 0
    %s10 = scalar_lea.sflag [#allocation3], 1
    %11 = vsyncpa %s10, 0
    loop: start=0, step=1, limit=4
    $region2: #{tpu_custom_call.1} parent=1 // loop_pre_header
      _
    $region3: #{tpu_custom_call.1} parent=1 // loop_header
      %s13 = sphi 0, %s17
      %p14 = scmp.ge.s32.totalorder %s13, 4
      %s20 = sphi 0, %s32
      %s21 = sphi 0, %s28
      %s22 = sphi 0, %s20
      %s23 = sphi 0, %s21
      %s24 = sphi 0, %s22
      %s25 = sphi 0, %s23
      %s37 = sphi 0, %s39
      %s40 = sphi 0, %s37
      %s41 = sphi 0, %s40
      %s57 = sphi 0, %s41
      %s61 = sphi 0, %s61
      %s63 = sphi 0, %s61
      %s64 = sphi 0, %s63
      %s78 = sphi 0, %s64
      %s82 = sphi 0, %s82
      %s84 = sphi 0, %s82
      %s85 = sphi 0, %s84
      %s99 = sphi 0, %s85
      %s103 = sphi 0, %s103
      %s105 = sphi 0, %s103
      %s106 = sphi 0, %s105
      %s120 = sphi 0, %s106
      %s128 = sphi 0, %s130
      %s131 = sphi 0, %s128
      %s132 = sphi 0, %s131
      %s148 = sphi 0, %s132
    $region4: #{tpu_custom_call.1} parent=1 // loop_header_branch
      %16 = sbr.rel (%p14) target = $region8
    $region5: #{tpu_custom_call.1} parent=1 // loop_body
      %s18 = ssub.s32 %s13, 1
      %s19 = ssub.s32 %s13, 2
      %s26 = sadd.s32 1, %s21
      %p27 = scmp.ge.s32.totalorder %s26, 1
      %s28 = scalar_select %p27, 0, %s26
      %s29 = sadd.s32 1, %s20
      %s30 = scalar_select %p27, %s29, %s20
      %p31 = scmp.ge.s32.totalorder %s30, 2
      %s32 = scalar_select %p31, 0, %s30
      %s33 = ssub.s32 %s20, %s32
      %s34 = ssub.s32 %s21, %s28
      %s35 = sor.u32 %s33, %s34
      %p36 = scmp.eq.s32.totalorder %s35, 0
      %s38 = sadd.s32 %s37, 1
      %s39 = scalar_select %p36, %s37, %s38
      %p42 = pneg %p36
      %p43 = scmp.eq.s32.totalorder %s13, 1
      %p44 = por %p42, %p43
      %p45 = scmp.ne.s32.totalorder %s37, %s40
      %p46 = scmp.eq.s32.totalorder %s13, 0
      %p47 = por %p45, %p46
      %p48 = scmp.ne.s32.totalorder %s37, %s40
      %p49 = scmp.eq.s32.totalorder %s18, 1
      %p50 = por %p48, %p49
      %p51 = scmp.ne.s32.totalorder %s40, %s41
      %p52 = scmp.eq.s32.totalorder %s18, 0
      %p53 = por %p51, %p52
      %p54 = scmp.ne.s32.totalorder %s40, %s41
      %p55 = scmp.eq.s32.totalorder %s19, 1
      %p56 = por %p54, %p55
      %p58 = scmp.ne.s32.totalorder %s41, %s57
      %p59 = scmp.eq.s32.totalorder %s19, 0
      %p60 = por %p58, %p59
      %s62 = sadd.s32 %s61, 1
      %p65 = scmp.eq.s32.totalorder %s13, 1
      %p66 = scmp.ne.s32.totalorder %s61, %s63
      %p67 = scmp.eq.s32.totalorder %s13, 0
      %p68 = por %p66, %p67
      %p69 = scmp.ne.s32.totalorder %s61, %s63
      %p70 = scmp.eq.s32.totalorder %s18, 1
      %p71 = por %p69, %p70
      %p72 = scmp.ne.s32.totalorder %s63, %s64
      %p73 = scmp.eq.s32.totalorder %s18, 0
      %p74 = por %p72, %p73
      %p75 = scmp.ne.s32.totalorder %s63, %s64
      %p76 = scmp.eq.s32.totalorder %s19, 1
      %p77 = por %p75, %p76
      %p79 = scmp.ne.s32.totalorder %s64, %s78
      %p80 = scmp.eq.s32.totalorder %s19, 0
      %p81 = por %p79, %p80
      %s83 = sadd.s32 %s82, 1
      %p86 = scmp.eq.s32.totalorder %s13, 1
      %p87 = scmp.ne.s32.totalorder %s82, %s84
      %p88 = scmp.eq.s32.totalorder %s13, 0
      %p89 = por %p87, %p88
      %p90 = scmp.ne.s32.totalorder %s82, %s84
      %p91 = scmp.eq.s32.totalorder %s18, 1
      %p92 = por %p90, %p91
      %p93 = scmp.ne.s32.totalorder %s84, %s85
      %p94 = scmp.eq.s32.totalorder %s18, 0
      %p95 = por %p93, %p94
      %p96 = scmp.ne.s32.totalorder %s84, %s85
      %p97 = scmp.eq.s32.totalorder %s19, 1
      %p98 = por %p96, %p97
      %p100 = scmp.ne.s32.totalorder %s85, %s99
      %p101 = scmp.eq.s32.totalorder %s19, 0
      %p102 = por %p100, %p101
      %s104 = sadd.s32 %s103, 1
      %p107 = scmp.eq.s32.totalorder %s13, 1
      %p108 = scmp.ne.s32.totalorder %s103, %s105
      %p109 = scmp.eq.s32.totalorder %s13, 0
      %p110 = por %p108, %p109
      %p111 = scmp.ne.s32.totalorder %s103, %s105
      %p112 = scmp.eq.s32.totalorder %s18, 1
      %p113 = por %p111, %p112
      %p114 = scmp.ne.s32.totalorder %s105, %s106
      %p115 = scmp.eq.s32.totalorder %s18, 0
      %p116 = por %p114, %p115
      %p117 = scmp.ne.s32.totalorder %s105, %s106
      %p118 = scmp.eq.s32.totalorder %s19, 1
      %p119 = por %p117, %p118
      %p121 = scmp.ne.s32.totalorder %s106, %s120
      %p122 = scmp.eq.s32.totalorder %s19, 0
      %p123 = por %p121, %p122
      %s124 = ssub.s32 %s20, %s32
      %s125 = ssub.s32 %s21, %s28
      %s126 = sor.u32 %s124, %s125
      %p127 = scmp.eq.s32.totalorder %s126, 0
      %s129 = sadd.s32 %s128, 1
      %s130 = scalar_select %p127, %s128, %s129
      %p133 = pneg %p127
      %p134 = scmp.eq.s32.totalorder %s13, 1
      %p135 = por %p133, %p134
      %p136 = scmp.ne.s32.totalorder %s128, %s131
      %p137 = scmp.eq.s32.totalorder %s13, 0
      %p138 = por %p136, %p137
      %p139 = scmp.ne.s32.totalorder %s128, %s131
      %p140 = scmp.eq.s32.totalorder %s18, 1
      %p141 = por %p139, %p140
      %p142 = scmp.ne.s32.totalorder %s131, %s132
      %p143 = scmp.eq.s32.totalorder %s18, 0
      %p144 = por %p142, %p143
      %p145 = scmp.ne.s32.totalorder %s131, %s132
      %p146 = scmp.eq.s32.totalorder %s19, 1
      %p147 = por %p145, %p146
      %p149 = scmp.ne.s32.totalorder %s132, %s148
      %p150 = scmp.eq.s32.totalorder %s19, 0
      %p151 = por %p149, %p150
      %p152 = scmp.le.s32.totalorder 1, %s13
      %p153 = scmp.lt.s32.totalorder %s13, 3
      %p154 = pnand %p152, %p153
      %p155 = pneg %p154
      // Predicated region
      $region9: #{tpu_custom_call.1} parent=5 // pred_check
        _
      $region10: #{tpu_custom_call.1} parent=5 // pred_check_branch
        %157 = sbr.rel (%p154) target = $region12
      $region11: #{tpu_custom_call.1} parent=5 // pred_region
        %s158 = ssub.s32 %s13, 1
        // Predicated region
        $region13: #{tpu_custom_call.1} parent=11 // pred_check
          %p159 = pneg %p74
        $region14: #{tpu_custom_call.1} parent=11 // pred_check_branch
          %161 = sbr.rel (%p159) target = $region16
        $region15: #{tpu_custom_call.1} parent=11 // pred_region
          _
        $region16: #{tpu_custom_call.1} parent=11 // pred_fallthru
          _
        // Predicated region
        $region17: #{tpu_custom_call.1} parent=11 // pred_check
          %p162 = pneg %p95
        $region18: #{tpu_custom_call.1} parent=11 // pred_check_branch
          %164 = sbr.rel (%p162) target = $region20
        $region19: #{tpu_custom_call.1} parent=11 // pred_region
          _
        $region20: #{tpu_custom_call.1} parent=11 // pred_fallthru
          _
        // Predicated region
        $region21: #{tpu_custom_call.1} parent=11 // pred_check
          %p165 = pneg %p116
        $region22: #{tpu_custom_call.1} parent=11 // pred_check_branch
          %167 = sbr.rel (%p165) target = $region24
        $region23: #{tpu_custom_call.1} parent=11 // pred_region
          _
        $region24: #{tpu_custom_call.1} parent=11 // pred_fallthru
          _
      $region12: #{tpu_custom_call.1} parent=5 // pred_fallthru
        _
      %p168 = scmp.lt.s32.totalorder %s13, 2
      // Predicated region
      $region25: #{tpu_custom_call.1} parent=5 // pred_check
        %p169 = pneg %p168
      $region26: #{tpu_custom_call.1} parent=5 // pred_check_branch
        %171 = sbr.rel (%p169) target = $region28
      $region27: #{tpu_custom_call.1} parent=5 // pred_region
        // Predicated region
        $region29: #{tpu_custom_call.1} parent=27 // pred_check
          %p172 = pneg %p47
        $region30: #{tpu_custom_call.1} parent=27 // pred_check_branch
          %174 = sbr.rel (%p172) target = $region32
        $region31: #{tpu_custom_call.1} parent=27 // pred_region
          %s175 = smul.u32 8, %s21
          %p176 = scmp.lt.s32.totalorder %s20, 1
          %s177 = scalar_select %p176, %s20, 1
          %p178 = scmp.lt.s32.totalorder %s175, 7
          %s179 = scalar_select %p178, %s175, 7
          %s180 = smul.addr %s177, 8
          %s181 = sadd.s32 %s179, %s180
          %s182 = smul.addr %s181, 8
          %s183 = scalar_lea.vmem %s0, %s182
          %s184 = smul.u32 8, %s21
        $region32: #{tpu_custom_call.1} parent=27 // pred_fallthru
          _
      $region28: #{tpu_custom_call.1} parent=5 // pred_fallthru
        _
      %p185 = scmp.le.s32.totalorder 1, %s13
      %p186 = scmp.lt.s32.totalorder %s13, 3
      %p187 = pnand %p185, %p186
      %p188 = pneg %p187
      // Predicated region
      $region33: #{tpu_custom_call.1} parent=5 // pred_check
        _
      $region34: #{tpu_custom_call.1} parent=5 // pred_check_branch
        %190 = sbr.rel (%p187) target = $region36
      $region35: #{tpu_custom_call.1} parent=5 // pred_region
        %s191 = ssub.s32 %s13, 1
        %s192 = smul.u32 8, %s23
        %p193 = scmp.lt.s32.totalorder %s22, 1
        %s194 = scalar_select %p193, %s22, 1
        %p195 = scmp.lt.s32.totalorder %s192, 7
        %s196 = scalar_select %p195, %s192, 7
        %s197 = smul.addr %s194, 8
        %s198 = sadd.s32 %s196, %s197
        %s199 = smul.addr %s198, 8
        %s200 = scalar_lea.vmem %s0, %s199
        %p201 = pneg %p53
        %p202 = pneg %p50
        %p203 = pneg %p74
        %p204 = pneg %p71
        %p205 = pneg %p95
        %p206 = pneg %p92
        %p207 = pneg %p116
        %p208 = pneg %p113
        %p209 = pneg %p144
        %p210 = pneg %p141
        %s211 = sand.u32 %s131, 1
        %s212 = scalar_lea.sflag [#allocation3], %s211
        %s213 = sand.u32 %s131, 1
        %s214 = smul.addr %s213, 256
        %s215 = scalar_lea.vmem [#allocation2], %s214
        %s216 = smul.u32 8, %s23
        %p217 = scmp.lt.s32.totalorder %s22, 1
        %s218 = scalar_select %p217, %s22, 1
        %p219 = scmp.lt.s32.totalorder %s216, 7
        %s220 = scalar_select %p219, %s216, 7
        %s221 = smul.addr %s218, 8
        %s222 = sadd.s32 %s220, %s221
        %s223 = smul.addr %s222, 8
        %s224 = scalar_lea.vmem %s0, %s223
        %s225 = smul.u32 8, %s23
        %s226 = smul.u32 8, %s23
        %v227 = vld [vmem:[%s224] sm:$0xff]
        %v228 = vld [vmem:[%s224 + $0x8] sm:$0xff]
        %v229 = vld [vmem:[%s224 + $0x10] sm:$0xff]
        %v230 = vld [vmem:[%s224 + $0x18] sm:$0xff]
        %v231 = vld [vmem:[%s224 + $0x20] sm:$0xff]
        %v232 = vld [vmem:[%s224 + $0x28] sm:$0xff]
        %v233 = vld [vmem:[%s224 + $0x30] sm:$0xff]
        %v234 = vld [vmem:[%s224 + $0x38] sm:$0xff]
        %v235 = vld [vmem:[%s2] sm:$0x1]
        %v236 = vld [vmem:[%s3] sm:$0x1]
        %v237 = vld [vmem:[%s1] sm:$0xff]
        %v238 = vld [vmem:[%s1 + $0x8] sm:$0xff]
        %v239 = vld [vmem:[%s1 + $0x10] sm:$0xff]
        %v240 = vld [vmem:[%s1 + $0x18] sm:$0xff]
        %vm241 = vcmask 261120
        %v243 = vsel %vm241, %v227, 0
        %v246 = vsel %vm241, %v228, 0
        %v249 = vsel %vm241, %v229, 0
        %v252 = vsel %vm241, %v230, 0
        %v255 = vsel %vm241, %v231, 0
        %v258 = vsel %vm241, %v232, 0
        %v261 = vsel %vm241, %v233, 0
        %v264 = vsel %vm241, %v234, 0
        %266 = vmatprep.subr.mxu0 0.0
        %267 = vmatpush1.msra.mxu0 %v237
        %268 = vmatprep.subr.mxu0 0.0
        %269 = vmatpush1.msra.mxu0 %v238
        %270 = vmatprep.subr.mxu0 0.0
        %271 = vmatpush1.msra.mxu0 %v239
        %272 = vmatprep.subr.mxu0 0.0
        %273 = vmatpush1.msra.mxu0 %v240
        %274 = vmatprep.subr.mxu0 0.0
        %275 = vmatpush1.msra.mxu0 0.0
        %276 = vmatprep.subr.mxu0 0.0
        %277 = vmatpush1.msra.mxu0 0.0
        %278 = vmatprep.subr.mxu0 0.0
        %279 = vmatpush1.msra.mxu0 0.0
        %280 = vmatprep.subr.mxu0 0.0
        %281 = vmatpush1.msra.mxu0 0.0
        %282 = vmatprep.subr.mxu0 0.0
        %283 = vmatpush1.msra.mxu0 0.0
        %284 = vmatprep.subr.mxu0 0.0
        %285 = vmatpush1.msra.mxu0 0.0
        %286 = vmatprep.subr.mxu0 0.0
        %287 = vmatpush1.msra.mxu0 0.0
        %288 = vmatprep.subr.mxu0 0.0
        %289 = vmatpush1.msra.mxu0 0.0
        %290 = vmatprep.subr.mxu0 0.0
        %291 = vmatpush1.msra.mxu0 0.0
        %292 = vmatprep.subr.mxu0 0.0
        %293 = vmatpush1.msra.mxu0 0.0
        %294 = vmatprep.subr.mxu0 0.0
        %295 = vmatpush1.msra.mxu0 0.0
        %296 = vmatprep.subr.mxu0 0.0
        %297 = vmatpush1.msra.mxu0 0.0
        %298 = vmatprep.subr.mxu0 0.0
        %299 = vmatpush1.msra.mxu0 0.0
        %300 = vmatprep.subr.mxu0 0.0
        %301 = vmatpush1.msra.mxu0 0.0
        %302 = vmatprep.subr.mxu0 0.0
        %303 = vmatpush1.msra.mxu0 0.0
        %304 = vmatprep.subr.mxu0 0.0
        %305 = vmatpush1.msra.mxu0 0.0
        %306 = vmatprep.subr.mxu0 0.0
        %307 = vmatpush1.msra.mxu0 0.0
        %308 = vmatprep.subr.mxu0 0.0
        %309 = vmatpush1.msra.mxu0 0.0
        %310 = vmatprep.subr.mxu0 0.0
        %311 = vmatpush1.msra.mxu0 0.0
        %312 = vmatprep.subr.mxu0 0.0
        %313 = vmatpush1.msra.mxu0 0.0
        %314 = vmatprep.subr.mxu0 0.0
        %315 = vmatpush1.msra.mxu0 0.0
        %316 = vmatprep.subr.mxu0 0.0
        %317 = vmatpush1.msra.mxu0 0.0
        %318 = vmatprep.subr.mxu0 0.0
        %319 = vmatpush1.msra.mxu0 0.0
        %320 = vmatprep.subr.mxu0 0.0
        %321 = vmatpush1.msra.mxu0 0.0
        %322 = vmatprep.subr.mxu0 0.0
        %323 = vmatpush1.msra.mxu0 0.0
        %324 = vmatprep.subr.mxu0 0.0
        %325 = vmatpush1.msra.mxu0 0.0
        %326 = vmatprep.subr.mxu0 0.0
        %327 = vmatpush1.msra.mxu0 0.0
        %328 = vmatprep.subr.mxu0 0.0
        %329 = vmatpush1.msra.mxu0 0.0
        %330 = vmatprep.mubr.f32.mxu0 0.0
        %331 = vmatmul.mubr.f32.gmra.mrb[0].mxu0 %v243
        %v332 = vpop.f32.mrb[0].mxu0
        %v333 = vadd.f32 0.0, %v332
        %v334 = vpop.f32.mrb[0].mxu0
        %335 = vmatprep.mubr.f32.mxu0 0.0
        %336 = vmatmul.mubr.f32.gmra.mrb[0].mxu0 %v246
        %v337 = vpop.f32.mrb[0].mxu0
        %v338 = vadd.f32 0.0, %v337
        %v339 = vpop.f32.mrb[0].mxu0
        %340 = vmatprep.mubr.f32.mxu0 0.0
        %341 = vmatmul.mubr.f32.gmra.mrb[0].mxu0 %v249
        %v342 = vpop.f32.mrb[0].mxu0
        %v343 = vadd.f32 0.0, %v342
        %v344 = vpop.f32.mrb[0].mxu0
        %345 = vmatprep.mubr.f32.mxu0 0.0
        %346 = vmatmul.mubr.f32.gmra.mrb[0].mxu0 %v252
        %v347 = vpop.f32.mrb[0].mxu0
        %v348 = vadd.f32 0.0, %v347
        %v349 = vpop.f32.mrb[0].mxu0
        %350 = vmatprep.mubr.f32.mxu0 0.0
        %351 = vmatmul.mubr.f32.gmra.mrb[0].mxu0 %v255
        %v352 = vpop.f32.mrb[0].mxu0
        %v353 = vadd.f32 0.0, %v352
        %v354 = vpop.f32.mrb[0].mxu0
        %355 = vmatprep.mubr.f32.mxu0 0.0
        %356 = vmatmul.mubr.f32.gmra.mrb[0].mxu0 %v258
        %v357 = vpop.f32.mrb[0].mxu0
        %v358 = vadd.f32 0.0, %v357
        %v359 = vpop.f32.mrb[0].mxu0
        %360 = vmatprep.mubr.f32.mxu0 0.0
        %361 = vmatmul.mubr.f32.gmra.mrb[0].mxu0 %v261
        %v362 = vpop.f32.mrb[0].mxu0
        %v363 = vadd.f32 0.0, %v362
        %v364 = vpop.f32.mrb[0].mxu0
        %365 = vmatprep.mubr.f32.mxu0 0.0
        %366 = vmatmul.mubr.f32.gmra.mrb[0].mxu0 %v264
        %v367 = vpop.f32.mrb[0].mxu0
        %v368 = vadd.f32 0.0, %v367
        %v369 = vpop.f32.mrb[0].mxu0
        %370 = vdwg.mxu0
        %v371 = vsel %vm241, %v333, 0.0
        %372 = vadd.xlane.f32.xlu0 %v371
        %v373 = vpop.xlane.xlu0 %372
        %v374 = vsel %vm241, %v338, 0.0
        %375 = vadd.xlane.f32.xlu0 %v374
        %v376 = vpop.xlane.xlu0 %375
        %v377 = vsel %vm241, %v343, 0.0
        %378 = vadd.xlane.f32.xlu0 %v377
        %v379 = vpop.xlane.xlu0 %378
        %v380 = vsel %vm241, %v348, 0.0
        %381 = vadd.xlane.f32.xlu0 %v380
        %v382 = vpop.xlane.xlu0 %381
        %v383 = vsel %vm241, %v353, 0.0
        %384 = vadd.xlane.f32.xlu0 %v383
        %v385 = vpop.xlane.xlu0 %384
        %v386 = vsel %vm241, %v358, 0.0
        %387 = vadd.xlane.f32.xlu0 %v386
        %v388 = vpop.xlane.xlu0 %387
        %v389 = vsel %vm241, %v363, 0.0
        %390 = vadd.xlane.f32.xlu0 %v389
        %v391 = vpop.xlane.xlu0 %390
        %v392 = vsel %vm241, %v368, 0.0
        %393 = vadd.xlane.f32.xlu0 %v392
        %v394 = vpop.xlane.xlu0 %393
        %v395 = vrcp.pop 32.0
        %v396 = vmul.f32 %v373, %v395
        %v397 = vmul.f32 %v376, %v395
        %v398 = vmul.f32 %v379, %v395
        %v399 = vmul.f32 %v382, %v395
        %v400 = vmul.f32 %v385, %v395
        %v401 = vmul.f32 %v388, %v395
        %v402 = vmul.f32 %v391, %v395
        %v403 = vmul.f32 %v394, %v395
        %v404 = vsub.f32 %v333, %v396
        %v405 = vsub.f32 %v338, %v397
        %v406 = vsub.f32 %v343, %v398
        %v407 = vsub.f32 %v348, %v399
        %v408 = vsub.f32 %v353, %v400
        %v409 = vsub.f32 %v358, %v401
        %v410 = vsub.f32 %v363, %v402
        %v411 = vsub.f32 %v368, %v403
        %v412 = vmul.f32 %v404, %v404
        %v413 = vmul.f32 %v405, %v405
        %v414 = vmul.f32 %v406, %v406
        %v415 = vmul.f32 %v407, %v407
        %v416 = vmul.f32 %v408, %v408
        %v417 = vmul.f32 %v409, %v409
        %v418 = vmul.f32 %v410, %v410
        %v419 = vmul.f32 %v411, %v411
        %v420 = vsel %vm241, %v412, 0.0
        %421 = vadd.xlane.f32.xlu0 %v420
        %v422 = vpop.xlane.xlu0 %421
        %v423 = vsel %vm241, %v413, 0.0
        %424 = vadd.xlane.f32.xlu0 %v423
        %v425 = vpop.xlane.xlu0 %424
        %v426 = vsel %vm241, %v414, 0.0
        %427 = vadd.xlane.f32.xlu0 %v426
        %v428 = vpop.xlane.xlu0 %427
        %v429 = vsel %vm241, %v415, 0.0
        %430 = vadd.xlane.f32.xlu0 %v429
        %v431 = vpop.xlane.xlu0 %430
        %v432 = vsel %vm241, %v416, 0.0
        %433 = vadd.xlane.f32.xlu0 %v432
        %v434 = vpop.xlane.xlu0 %433
        %v435 = vsel %vm241, %v417, 0.0
        %436 = vadd.xlane.f32.xlu0 %v435
        %v437 = vpop.xlane.xlu0 %436
        %v438 = vsel %vm241, %v418, 0.0
        %439 = vadd.xlane.f32.xlu0 %v438
        %v440 = vpop.xlane.xlu0 %439
        %v441 = vsel %vm241, %v419, 0.0
        %442 = vadd.xlane.f32.xlu0 %v441
        %v443 = vpop.xlane.xlu0 %442
        %v444 = vmul.f32 %v422, %v395
        %v445 = vmul.f32 %v425, %v395
        %v446 = vmul.f32 %v428, %v395
        %v447 = vmul.f32 %v431, %v395
        %v448 = vmul.f32 %v434, %v395
        %v449 = vmul.f32 %v437, %v395
        %v450 = vmul.f32 %v440, %v395
        %v451 = vmul.f32 %v443, %v395
        %v452 = vadd.f32 %v444, 1e-05
        %v453 = vadd.f32 %v445, 1e-05
        %v454 = vadd.f32 %v446, 1e-05
        %v455 = vadd.f32 %v447, 1e-05
        %v456 = vadd.f32 %v448, 1e-05
        %v457 = vadd.f32 %v449, 1e-05
        %v458 = vadd.f32 %v450, 1e-05
        %v459 = vadd.f32 %v451, 1e-05
        %v460 = vrsqrt.pop %v452
        %v461 = vrsqrt.pop %v453
        %v462 = vrsqrt.pop %v454
        %v463 = vrsqrt.pop %v455
        %v464 = vrsqrt.pop %v456
        %v465 = vrsqrt.pop %v457
        %v466 = vrsqrt.pop %v458
        %v467 = vrsqrt.pop %v459
        %v468 = vmul.f32 %v404, %v460
        %v469 = vmul.f32 %v405, %v461
        %v470 = vmul.f32 %v406, %v462
        %v471 = vmul.f32 %v407, %v463
        %v472 = vmul.f32 %v408, %v464
        %v473 = vmul.f32 %v409, %v465
        %v474 = vmul.f32 %v410, %v466
        %v475 = vmul.f32 %v411, %v467
        %484 = vrot.lane.b32.xlu0 %v333, 96
        %v485 = vpop.permute.xlu0 %484
        %486 = vrot.lane.b32.xlu0 %v338, 96
        %v487 = vpop.permute.xlu0 %486
        %488 = vrot.lane.b32.xlu0 %v343, 96
        %v489 = vpop.permute.xlu0 %488
        %490 = vrot.lane.b32.xlu0 %v348, 96
        %v491 = vpop.permute.xlu0 %490
        %492 = vrot.lane.b32.xlu0 %v353, 96
        %v493 = vpop.permute.xlu0 %492
        %494 = vrot.lane.b32.xlu0 %v358, 96
        %v495 = vpop.permute.xlu0 %494
        %496 = vrot.lane.b32.xlu0 %v363, 96
        %v497 = vpop.permute.xlu0 %496
        %498 = vrot.lane.b32.xlu0 %v368, 96
        %v499 = vpop.permute.xlu0 %498
        %v508 = vsel %vm241, %v485, 0.0
        %509 = vadd.xlane.f32.xlu0 %v508
        %v510 = vpop.xlane.xlu0 %509
        %v511 = vsel %vm241, %v487, 0.0
        %512 = vadd.xlane.f32.xlu0 %v511
        %v513 = vpop.xlane.xlu0 %512
        %v514 = vsel %vm241, %v489, 0.0
        %515 = vadd.xlane.f32.xlu0 %v514
        %v516 = vpop.xlane.xlu0 %515
        %v517 = vsel %vm241, %v491, 0.0
        %518 = vadd.xlane.f32.xlu0 %v517
        %v519 = vpop.xlane.xlu0 %518
        %v520 = vsel %vm241, %v493, 0.0
        %521 = vadd.xlane.f32.xlu0 %v520
        %v522 = vpop.xlane.xlu0 %521
        %v523 = vsel %vm241, %v495, 0.0
        %524 = vadd.xlane.f32.xlu0 %v523
        %v525 = vpop.xlane.xlu0 %524
        %v526 = vsel %vm241, %v497, 0.0
        %527 = vadd.xlane.f32.xlu0 %v526
        %v528 = vpop.xlane.xlu0 %527
        %v529 = vsel %vm241, %v499, 0.0
        %530 = vadd.xlane.f32.xlu0 %v529
        %v531 = vpop.xlane.xlu0 %530
        %v532 = vmul.f32 %v510, %v395
        %v533 = vmul.f32 %v513, %v395
        %v534 = vmul.f32 %v516, %v395
        %v535 = vmul.f32 %v519, %v395
        %v536 = vmul.f32 %v522, %v395
        %v537 = vmul.f32 %v525, %v395
        %v538 = vmul.f32 %v528, %v395
        %v539 = vmul.f32 %v531, %v395
        %v540 = vsub.f32 %v333, %v532
        %v541 = vsub.f32 %v338, %v533
        %v542 = vsub.f32 %v343, %v534
        %v543 = vsub.f32 %v348, %v535
        %v544 = vsub.f32 %v353, %v536
        %v545 = vsub.f32 %v358, %v537
        %v546 = vsub.f32 %v363, %v538
        %v547 = vsub.f32 %v368, %v539
        %v548 = vmul.f32 %v540, %v540
        %v549 = vmul.f32 %v541, %v541
        %v550 = vmul.f32 %v542, %v542
        %v551 = vmul.f32 %v543, %v543
        %v552 = vmul.f32 %v544, %v544
        %v553 = vmul.f32 %v545, %v545
        %v554 = vmul.f32 %v546, %v546
        %v555 = vmul.f32 %v547, %v547
        %564 = vrot.lane.b32.xlu0 %v548, 96
        %v565 = vpop.permute.xlu0 %564
        %566 = vrot.lane.b32.xlu0 %v549, 96
        %v567 = vpop.permute.xlu0 %566
        %568 = vrot.lane.b32.xlu0 %v550, 96
        %v569 = vpop.permute.xlu0 %568
        %570 = vrot.lane.b32.xlu0 %v551, 96
        %v571 = vpop.permute.xlu0 %570
        %572 = vrot.lane.b32.xlu0 %v552, 96
        %v573 = vpop.permute.xlu0 %572
        %574 = vrot.lane.b32.xlu0 %v553, 96
        %v575 = vpop.permute.xlu0 %574
        %576 = vrot.lane.b32.xlu0 %v554, 96
        %v577 = vpop.permute.xlu0 %576
        %578 = vrot.lane.b32.xlu0 %v555, 96
        %v579 = vpop.permute.xlu0 %578
        %v588 = vsel %vm241, %v565, 0.0
        %589 = vadd.xlane.f32.xlu0 %v588
        %v590 = vpop.xlane.xlu0 %589
        %v591 = vsel %vm241, %v567, 0.0
        %592 = vadd.xlane.f32.xlu0 %v591
        %v593 = vpop.xlane.xlu0 %592
        %v594 = vsel %vm241, %v569, 0.0
        %595 = vadd.xlane.f32.xlu0 %v594
        %v596 = vpop.xlane.xlu0 %595
        %v597 = vsel %vm241, %v571, 0.0
        %598 = vadd.xlane.f32.xlu0 %v597
        %v599 = vpop.xlane.xlu0 %598
        %v600 = vsel %vm241, %v573, 0.0
        %601 = vadd.xlane.f32.xlu0 %v600
        %v602 = vpop.xlane.xlu0 %601
        %v603 = vsel %vm241, %v575, 0.0
        %604 = vadd.xlane.f32.xlu0 %v603
        %v605 = vpop.xlane.xlu0 %604
        %v606 = vsel %vm241, %v577, 0.0
        %607 = vadd.xlane.f32.xlu0 %v606
        %v608 = vpop.xlane.xlu0 %607
        %v609 = vsel %vm241, %v579, 0.0
        %610 = vadd.xlane.f32.xlu0 %v609
        %v611 = vpop.xlane.xlu0 %610
        %v612 = vmul.f32 %v590, %v395
        %v613 = vmul.f32 %v593, %v395
        %v614 = vmul.f32 %v596, %v395
        %v615 = vmul.f32 %v599, %v395
        %v616 = vmul.f32 %v602, %v395
        %v617 = vmul.f32 %v605, %v395
        %v618 = vmul.f32 %v608, %v395
        %v619 = vmul.f32 %v611, %v395
        %v620 = vadd.f32 %v612, 1e-05
        %v621 = vadd.f32 %v613, 1e-05
        %v622 = vadd.f32 %v614, 1e-05
        %v623 = vadd.f32 %v615, 1e-05
        %v624 = vadd.f32 %v616, 1e-05
        %v625 = vadd.f32 %v617, 1e-05
        %v626 = vadd.f32 %v618, 1e-05
        %v627 = vadd.f32 %v619, 1e-05
        %v628 = vrsqrt.pop %v620
        %v629 = vrsqrt.pop %v621
        %v630 = vrsqrt.pop %v622
        %v631 = vrsqrt.pop %v623
        %v632 = vrsqrt.pop %v624
        %v633 = vrsqrt.pop %v625
        %v634 = vrsqrt.pop %v626
        %v635 = vrsqrt.pop %v627
        %v636 = vmul.f32 %v540, %v628
        %v637 = vmul.f32 %v541, %v629
        %v638 = vmul.f32 %v542, %v630
        %v639 = vmul.f32 %v543, %v631
        %v640 = vmul.f32 %v544, %v632
        %v641 = vmul.f32 %v545, %v633
        %v642 = vmul.f32 %v546, %v634
        %v643 = vmul.f32 %v547, %v635
        %644 = vrot.lane.b32.xlu0 %v333, 64
        %v645 = vpop.permute.xlu0 %644
        %646 = vrot.lane.b32.xlu0 %v338, 64
        %v647 = vpop.permute.xlu0 %646
        %648 = vrot.lane.b32.xlu0 %v343, 64
        %v649 = vpop.permute.xlu0 %648
        %650 = vrot.lane.b32.xlu0 %v348, 64
        %v651 = vpop.permute.xlu0 %650
        %652 = vrot.lane.b32.xlu0 %v353, 64
        %v653 = vpop.permute.xlu0 %652
        %654 = vrot.lane.b32.xlu0 %v358, 64
        %v655 = vpop.permute.xlu0 %654
        %656 = vrot.lane.b32.xlu0 %v363, 64
        %v657 = vpop.permute.xlu0 %656
        %658 = vrot.lane.b32.xlu0 %v368, 64
        %v659 = vpop.permute.xlu0 %658
        %v668 = vsel %vm241, %v645, 0.0
        %669 = vadd.xlane.f32.xlu0 %v668
        %v670 = vpop.xlane.xlu0 %669
        %v671 = vsel %vm241, %v647, 0.0
        %672 = vadd.xlane.f32.xlu0 %v671
        %v673 = vpop.xlane.xlu0 %672
        %v674 = vsel %vm241, %v649, 0.0
        %675 = vadd.xlane.f32.xlu0 %v674
        %v676 = vpop.xlane.xlu0 %675
        %v677 = vsel %vm241, %v651, 0.0
        %678 = vadd.xlane.f32.xlu0 %v677
        %v679 = vpop.xlane.xlu0 %678
        %v680 = vsel %vm241, %v653, 0.0
        %681 = vadd.xlane.f32.xlu0 %v680
        %v682 = vpop.xlane.xlu0 %681
        %v683 = vsel %vm241, %v655, 0.0
        %684 = vadd.xlane.f32.xlu0 %v683
        %v685 = vpop.xlane.xlu0 %684
        %v686 = vsel %vm241, %v657, 0.0
        %687 = vadd.xlane.f32.xlu0 %v686
        %v688 = vpop.xlane.xlu0 %687
        %v689 = vsel %vm241, %v659, 0.0
        %690 = vadd.xlane.f32.xlu0 %v689
        %v691 = vpop.xlane.xlu0 %690
        %v692 = vmul.f32 %v670, %v395
        %v693 = vmul.f32 %v673, %v395
        %v694 = vmul.f32 %v676, %v395
        %v695 = vmul.f32 %v679, %v395
        %v696 = vmul.f32 %v682, %v395
        %v697 = vmul.f32 %v685, %v395
        %v698 = vmul.f32 %v688, %v395
        %v699 = vmul.f32 %v691, %v395
        %v700 = vsub.f32 %v333, %v692
        %v701 = vsub.f32 %v338, %v693
        %v702 = vsub.f32 %v343, %v694
        %v703 = vsub.f32 %v348, %v695
        %v704 = vsub.f32 %v353, %v696
        %v705 = vsub.f32 %v358, %v697
        %v706 = vsub.f32 %v363, %v698
        %v707 = vsub.f32 %v368, %v699
        %v708 = vmul.f32 %v700, %v700
        %v709 = vmul.f32 %v701, %v701
        %v710 = vmul.f32 %v702, %v702
        %v711 = vmul.f32 %v703, %v703
        %v712 = vmul.f32 %v704, %v704
        %v713 = vmul.f32 %v705, %v705
        %v714 = vmul.f32 %v706, %v706
        %v715 = vmul.f32 %v707, %v707
        %724 = vrot.lane.b32.xlu0 %v708, 64
        %v725 = vpop.permute.xlu0 %724
        %726 = vrot.lane.b32.xlu0 %v709, 64
        %v727 = vpop.permute.xlu0 %726
        %728 = vrot.lane.b32.xlu0 %v710, 64
        %v729 = vpop.permute.xlu0 %728
        %730 = vrot.lane.b32.xlu0 %v711, 64
        %v731 = vpop.permute.xlu0 %730
        %732 = vrot.lane.b32.xlu0 %v712, 64
        %v733 = vpop.permute.xlu0 %732
        %734 = vrot.lane.b32.xlu0 %v713, 64
        %v735 = vpop.permute.xlu0 %734
        %736 = vrot.lane.b32.xlu0 %v714, 64
        %v737 = vpop.permute.xlu0 %736
        %738 = vrot.lane.b32.xlu0 %v715, 64
        %v739 = vpop.permute.xlu0 %738
        %v748 = vsel %vm241, %v725, 0.0
        %749 = vadd.xlane.f32.xlu0 %v748
        %v750 = vpop.xlane.xlu0 %749
        %v751 = vsel %vm241, %v727, 0.0
        %752 = vadd.xlane.f32.xlu0 %v751
        %v753 = vpop.xlane.xlu0 %752
        %v754 = vsel %vm241, %v729, 0.0
        %755 = vadd.xlane.f32.xlu0 %v754
        %v756 = vpop.xlane.xlu0 %755
        %v757 = vsel %vm241, %v731, 0.0
        %758 = vadd.xlane.f32.xlu0 %v757
        %v759 = vpop.xlane.xlu0 %758
        %v760 = vsel %vm241, %v733, 0.0
        %761 = vadd.xlane.f32.xlu0 %v760
        %v762 = vpop.xlane.xlu0 %761
        %v763 = vsel %vm241, %v735, 0.0
        %764 = vadd.xlane.f32.xlu0 %v763
        %v765 = vpop.xlane.xlu0 %764
        %v766 = vsel %vm241, %v737, 0.0
        %767 = vadd.xlane.f32.xlu0 %v766
        %v768 = vpop.xlane.xlu0 %767
        %v769 = vsel %vm241, %v739, 0.0
        %770 = vadd.xlane.f32.xlu0 %v769
        %v771 = vpop.xlane.xlu0 %770
        %v772 = vmul.f32 %v750, %v395
        %v773 = vmul.f32 %v753, %v395
        %v774 = vmul.f32 %v756, %v395
        %v775 = vmul.f32 %v759, %v395
        %v776 = vmul.f32 %v762, %v395
        %v777 = vmul.f32 %v765, %v395
        %v778 = vmul.f32 %v768, %v395
        %v779 = vmul.f32 %v771, %v395
        %v780 = vadd.f32 %v772, 1e-05
        %v781 = vadd.f32 %v773, 1e-05
        %v782 = vadd.f32 %v774, 1e-05
        %v783 = vadd.f32 %v775, 1e-05
        %v784 = vadd.f32 %v776, 1e-05
        %v785 = vadd.f32 %v777, 1e-05
        %v786 = vadd.f32 %v778, 1e-05
        %v787 = vadd.f32 %v779, 1e-05
        %v788 = vrsqrt.pop %v780
        %v789 = vrsqrt.pop %v781
        %v790 = vrsqrt.pop %v782
        %v791 = vrsqrt.pop %v783
        %v792 = vrsqrt.pop %v784
        %v793 = vrsqrt.pop %v785
        %v794 = vrsqrt.pop %v786
        %v795 = vrsqrt.pop %v787
        %v796 = vmul.f32 %v700, %v788
        %v797 = vmul.f32 %v701, %v789
        %v798 = vmul.f32 %v702, %v790
        %v799 = vmul.f32 %v703, %v791
        %v800 = vmul.f32 %v704, %v792
        %v801 = vmul.f32 %v705, %v793
        %v802 = vmul.f32 %v706, %v794
        %v803 = vmul.f32 %v707, %v795
        %804 = vrot.lane.b32.xlu0 %v333, 32
        %v805 = vpop.permute.xlu0 %804
        %806 = vrot.lane.b32.xlu0 %v338, 32
        %v807 = vpop.permute.xlu0 %806
        %808 = vrot.lane.b32.xlu0 %v343, 32
        %v809 = vpop.permute.xlu0 %808
        %810 = vrot.lane.b32.xlu0 %v348, 32
        %v811 = vpop.permute.xlu0 %810
        %812 = vrot.lane.b32.xlu0 %v353, 32
        %v813 = vpop.permute.xlu0 %812
        %814 = vrot.lane.b32.xlu0 %v358, 32
        %v815 = vpop.permute.xlu0 %814
        %816 = vrot.lane.b32.xlu0 %v363, 32
        %v817 = vpop.permute.xlu0 %816
        %818 = vrot.lane.b32.xlu0 %v368, 32
        %v819 = vpop.permute.xlu0 %818
        %v828 = vsel %vm241, %v805, 0.0
        %829 = vadd.xlane.f32.xlu0 %v828
        %v830 = vpop.xlane.xlu0 %829
        %v831 = vsel %vm241, %v807, 0.0
        %832 = vadd.xlane.f32.xlu0 %v831
        %v833 = vpop.xlane.xlu0 %832
        %v834 = vsel %vm241, %v809, 0.0
        %835 = vadd.xlane.f32.xlu0 %v834
        %v836 = vpop.xlane.xlu0 %835
        %v837 = vsel %vm241, %v811, 0.0
        %838 = vadd.xlane.f32.xlu0 %v837
        %v839 = vpop.xlane.xlu0 %838
        %v840 = vsel %vm241, %v813, 0.0
        %841 = vadd.xlane.f32.xlu0 %v840
        %v842 = vpop.xlane.xlu0 %841
        %v843 = vsel %vm241, %v815, 0.0
        %844 = vadd.xlane.f32.xlu0 %v843
        %v845 = vpop.xlane.xlu0 %844
        %v846 = vsel %vm241, %v817, 0.0
        %847 = vadd.xlane.f32.xlu0 %v846
        %v848 = vpop.xlane.xlu0 %847
        %v849 = vsel %vm241, %v819, 0.0
        %850 = vadd.xlane.f32.xlu0 %v849
        %v851 = vpop.xlane.xlu0 %850
        %v852 = vmul.f32 %v830, %v395
        %v853 = vmul.f32 %v833, %v395
        %v854 = vmul.f32 %v836, %v395
        %v855 = vmul.f32 %v839, %v395
        %v856 = vmul.f32 %v842, %v395
        %v857 = vmul.f32 %v845, %v395
        %v858 = vmul.f32 %v848, %v395
        %v859 = vmul.f32 %v851, %v395
        %v860 = vsub.f32 %v333, %v852
        %v861 = vsub.f32 %v338, %v853
        %v862 = vsub.f32 %v343, %v854
        %v863 = vsub.f32 %v348, %v855
        %v864 = vsub.f32 %v353, %v856
        %v865 = vsub.f32 %v358, %v857
        %v866 = vsub.f32 %v363, %v858
        %v867 = vsub.f32 %v368, %v859
        %v868 = vmul.f32 %v860, %v860
        %v869 = vmul.f32 %v861, %v861
        %v870 = vmul.f32 %v862, %v862
        %v871 = vmul.f32 %v863, %v863
        %v872 = vmul.f32 %v864, %v864
        %v873 = vmul.f32 %v865, %v865
        %v874 = vmul.f32 %v866, %v866
        %v875 = vmul.f32 %v867, %v867
        %884 = vrot.lane.b32.xlu0 %v868, 32
        %v885 = vpop.permute.xlu0 %884
        %886 = vrot.lane.b32.xlu0 %v869, 32
        %v887 = vpop.permute.xlu0 %886
        %888 = vrot.lane.b32.xlu0 %v870, 32
        %v889 = vpop.permute.xlu0 %888
        %890 = vrot.lane.b32.xlu0 %v871, 32
        %v891 = vpop.permute.xlu0 %890
        %892 = vrot.lane.b32.xlu0 %v872, 32
        %v893 = vpop.permute.xlu0 %892
        %894 = vrot.lane.b32.xlu0 %v873, 32
        %v895 = vpop.permute.xlu0 %894
        %896 = vrot.lane.b32.xlu0 %v874, 32
        %v897 = vpop.permute.xlu0 %896
        %898 = vrot.lane.b32.xlu0 %v875, 32
        %v899 = vpop.permute.xlu0 %898
        %v908 = vsel %vm241, %v885, 0.0
        %909 = vadd.xlane.f32.xlu0 %v908
        %v910 = vpop.xlane.xlu0 %909
        %v911 = vsel %vm241, %v887, 0.0
        %912 = vadd.xlane.f32.xlu0 %v911
        %v913 = vpop.xlane.xlu0 %912
        %v914 = vsel %vm241, %v889, 0.0
        %915 = vadd.xlane.f32.xlu0 %v914
        %v916 = vpop.xlane.xlu0 %915
        %v917 = vsel %vm241, %v891, 0.0
        %918 = vadd.xlane.f32.xlu0 %v917
        %v919 = vpop.xlane.xlu0 %918
        %v920 = vsel %vm241, %v893, 0.0
        %921 = vadd.xlane.f32.xlu0 %v920
        %v922 = vpop.xlane.xlu0 %921
        %v923 = vsel %vm241, %v895, 0.0
        %924 = vadd.xlane.f32.xlu0 %v923
        %v925 = vpop.xlane.xlu0 %924
        %v926 = vsel %vm241, %v897, 0.0
        %927 = vadd.xlane.f32.xlu0 %v926
        %v928 = vpop.xlane.xlu0 %927
        %v929 = vsel %vm241, %v899, 0.0
        %930 = vadd.xlane.f32.xlu0 %v929
        %v931 = vpop.xlane.xlu0 %930
        %v932 = vmul.f32 %v910, %v395
        %v933 = vmul.f32 %v913, %v395
        %v934 = vmul.f32 %v916, %v395
        %v935 = vmul.f32 %v919, %v395
        %v936 = vmul.f32 %v922, %v395
        %v937 = vmul.f32 %v925, %v395
        %v938 = vmul.f32 %v928, %v395
        %v939 = vmul.f32 %v931, %v395
        %v940 = vadd.f32 %v932, 1e-05
        %v941 = vadd.f32 %v933, 1e-05
        %v942 = vadd.f32 %v934, 1e-05
        %v943 = vadd.f32 %v935, 1e-05
        %v944 = vadd.f32 %v936, 1e-05
        %v945 = vadd.f32 %v937, 1e-05
        %v946 = vadd.f32 %v938, 1e-05
        %v947 = vadd.f32 %v939, 1e-05
        %v948 = vrsqrt.pop %v940
        %v949 = vrsqrt.pop %v941
        %v950 = vrsqrt.pop %v942
        %v951 = vrsqrt.pop %v943
        %v952 = vrsqrt.pop %v944
        %v953 = vrsqrt.pop %v945
        %v954 = vrsqrt.pop %v946
        %v955 = vrsqrt.pop %v947
        %v956 = vmul.f32 %v860, %v948
        %v957 = vmul.f32 %v861, %v949
        %v958 = vmul.f32 %v862, %v950
        %v959 = vmul.f32 %v863, %v951
        %v960 = vmul.f32 %v864, %v952
        %v961 = vmul.f32 %v865, %v953
        %v962 = vmul.f32 %v866, %v954
        %v963 = vmul.f32 %v867, %v955
        %v964 = vsel %vm241, %v468, %v636
        %v965 = vsel %vm241, %v469, %v637
        %v966 = vsel %vm241, %v470, %v638
        %v967 = vsel %vm241, %v471, %v639
        %v968 = vsel %vm241, %v472, %v640
        %v969 = vsel %vm241, %v473, %v641
        %v970 = vsel %vm241, %v474, %v642
        %v971 = vsel %vm241, %v475, %v643
        %vm972 = vcmask 523264
        %v973 = vsel %vm972, %v964, %v796
        %v974 = vsel %vm972, %v965, %v797
        %v975 = vsel %vm972, %v966, %v798
        %v976 = vsel %vm972, %v967, %v799
        %v977 = vsel %vm972, %v968, %v800
        %v978 = vsel %vm972, %v969, %v801
        %v979 = vsel %vm972, %v970, %v802
        %v980 = vsel %vm972, %v971, %v803
        %vm981 = vcmask 785408
        %v982 = vsel %vm981, %v973, %v956
        %v983 = vsel %vm981, %v974, %v957
        %v984 = vsel %vm981, %v975, %v958
        %v985 = vsel %vm981, %v976, %v959
        %v986 = vsel %vm981, %v977, %v960
        %v987 = vsel %vm981, %v978, %v961
        %v988 = vsel %vm981, %v979, %v962
        %v989 = vsel %vm981, %v980, %v963
        %v991 = vlaneseq
        %v992 = vshrl.u32 %v991, 7
        %v993 = vsub.s32 0, %v992
        %v994 = vrot.slane %v235, %v993
        %v996 = vmul.f32 %v982, %v994
        %v997 = vmul.f32 %v983, %v994
        %v998 = vmul.f32 %v984, %v994
        %v999 = vmul.f32 %v985, %v994
        %v1000 = vmul.f32 %v986, %v994
        %v1001 = vmul.f32 %v987, %v994
        %v1002 = vmul.f32 %v988, %v994
        %v1003 = vmul.f32 %v989, %v994
        %v1005 = vlaneseq
        %v1006 = vshrl.u32 %v1005, 7
        %v1007 = vsub.s32 0, %v1006
        %v1008 = vrot.slane %v236, %v1007
        %v1010 = vadd.f32 %v996, %v1008
        %v1011 = vadd.f32 %v997, %v1008
        %v1012 = vadd.f32 %v998, %v1008
        %v1013 = vadd.f32 %v999, %v1008
        %v1014 = vadd.f32 %v1000, %v1008
        %v1015 = vadd.f32 %v1001, %v1008
        %v1016 = vadd.f32 %v1002, %v1008
        %v1017 = vadd.f32 %v1003, %v1008
        %1018 = vst [vmem:[%s215] sm:$0xff] %v1010
        %1019 = vst [vmem:[%s215 + $0x20] sm:$0xff] %v1011
        %1020 = vst [vmem:[%s215 + $0x40] sm:$0xff] %v1012
        %1021 = vst [vmem:[%s215 + $0x60] sm:$0xff] %v1013
        %1022 = vst [vmem:[%s215 + $0x80] sm:$0xff] %v1014
        %1023 = vst [vmem:[%s215 + $0xa0] sm:$0xff] %v1015
        %1024 = vst [vmem:[%s215 + $0xc0] sm:$0xff] %v1016
        %1025 = vst [vmem:[%s215 + $0xe0] sm:$0xff] %v1017
        %s1026 = scalar_lea.vmem %s1, 32
        %v1027 = vld [vmem:[%s1026] sm:$0xff]
        %v1028 = vld [vmem:[%s1026 + $0x8] sm:$0xff]
        %v1029 = vld [vmem:[%s1026 + $0x10] sm:$0xff]
        %v1030 = vld [vmem:[%s1026 + $0x18] sm:$0xff]
        %1031 = vmatprep.subr.mxu0 0.0
        %1032 = vmatpush1.msra.mxu0 %v1027
        %1033 = vmatprep.subr.mxu0 0.0
        %1034 = vmatpush1.msra.mxu0 %v1028
        %1035 = vmatprep.subr.mxu0 0.0
        %1036 = vmatpush1.msra.mxu0 %v1029
        %1037 = vmatprep.subr.mxu0 0.0
        %1038 = vmatpush1.msra.mxu0 %v1030
        %1039 = vmatprep.subr.mxu0 0.0
        %1040 = vmatpush1.msra.mxu0 0.0
        %1041 = vmatprep.subr.mxu0 0.0
        %1042 = vmatpush1.msra.mxu0 0.0
        %1043 = vmatprep.subr.mxu0 0.0
        %1044 = vmatpush1.msra.mxu0 0.0
        %1045 = vmatprep.subr.mxu0 0.0
        %1046 = vmatpush1.msra.mxu0 0.0
        %1047 = vmatprep.subr.mxu0 0.0
        %1048 = vmatpush1.msra.mxu0 0.0
        %1049 = vmatprep.subr.mxu0 0.0
        %1050 = vmatpush1.msra.mxu0 0.0
        %1051 = vmatprep.subr.mxu0 0.0
        %1052 = vmatpush1.msra.mxu0 0.0
        %1053 = vmatprep.subr.mxu0 0.0
        %1054 = vmatpush1.msra.mxu0 0.0
        %1055 = vmatprep.subr.mxu0 0.0
        %1056 = vmatpush1.msra.mxu0 0.0
        %1057 = vmatprep.subr.mxu0 0.0
        %1058 = vmatpush1.msra.mxu0 0.0
        %1059 = vmatprep.subr.mxu0 0.0
        %1060 = vmatpush1.msra.mxu0 0.0
        %1061 = vmatprep.subr.mxu0 0.0
        %1062 = vmatpush1.msra.mxu0 0.0
        %1063 = vmatprep.subr.mxu0 0.0
        %1064 = vmatpush1.msra.mxu0 0.0
        %1065 = vmatprep.subr.mxu0 0.0
        %1066 = vmatpush1.msra.mxu0 0.0
        %1067 = vmatprep.subr.mxu0 0.0
        %1068 = vmatpush1.msra.mxu0 0.0
        %1069 = vmatprep.subr.mxu0 0.0
        %1070 = vmatpush1.msra.mxu0 0.0
        %1071 = vmatprep.subr.mxu0 0.0
        %1072 = vmatpush1.msra.mxu0 0.0
        %1073 = vmatprep.subr.mxu0 0.0
        %1074 = vmatpush1.msra.mxu0 0.0
        %1075 = vmatprep.subr.mxu0 0.0
        %1076 = vmatpush1.msra.mxu0 0.0
        %1077 = vmatprep.subr.mxu0 0.0
        %1078 = vmatpush1.msra.mxu0 0.0
        %1079 = vmatprep.subr.mxu0 0.0
        %1080 = vmatpush1.msra.mxu0 0.0
        %1081 = vmatprep.subr.mxu0 0.0
        %1082 = vmatpush1.msra.mxu0 0.0
        %1083 = vmatprep.subr.mxu0 0.0
        %1084 = vmatpush1.msra.mxu0 0.0
        %1085 = vmatprep.subr.mxu0 0.0
        %1086 = vmatpush1.msra.mxu0 0.0
        %1087 = vmatprep.subr.mxu0 0.0
        %1088 = vmatpush1.msra.mxu0 0.0
        %1089 = vmatprep.subr.mxu0 0.0
        %1090 = vmatpush1.msra.mxu0 0.0
        %1091 = vmatprep.subr.mxu0 0.0
        %1092 = vmatpush1.msra.mxu0 0.0
        %1093 = vmatprep.subr.mxu0 0.0
        %1094 = vmatpush1.msra.mxu0 0.0
        %1095 = vmatprep.mubr.f32.mxu0 0.0
        %1096 = vmatmul.mubr.f32.gmra.mrb[0].mxu0 %v243
        %v1097 = vpop.f32.mrb[0].mxu0
        %v1098 = vadd.f32 0.0, %v1097
        %v1099 = vpop.f32.mrb[0].mxu0
        %1100 = vmatprep.mubr.f32.mxu0 0.0
        %1101 = vmatmul.mubr.f32.gmra.mrb[0].mxu0 %v246
        %v1102 = vpop.f32.mrb[0].mxu0
        %v1103 = vadd.f32 0.0, %v1102
        %v1104 = vpop.f32.mrb[0].mxu0
        %1105 = vmatprep.mubr.f32.mxu0 0.0
        %1106 = vmatmul.mubr.f32.gmra.mrb[0].mxu0 %v249
        %v1107 = vpop.f32.mrb[0].mxu0
        %v1108 = vadd.f32 0.0, %v1107
        %v1109 = vpop.f32.mrb[0].mxu0
        %1110 = vmatprep.mubr.f32.mxu0 0.0
        %1111 = vmatmul.mubr.f32.gmra.mrb[0].mxu0 %v252
        %v1112 = vpop.f32.mrb[0].mxu0
        %v1113 = vadd.f32 0.0, %v1112
        %v1114 = vpop.f32.mrb[0].mxu0
        %1115 = vmatprep.mubr.f32.mxu0 0.0
        %1116 = vmatmul.mubr.f32.gmra.mrb[0].mxu0 %v255
        %v1117 = vpop.f32.mrb[0].mxu0
        %v1118 = vadd.f32 0.0, %v1117
        %v1119 = vpop.f32.mrb[0].mxu0
        %1120 = vmatprep.mubr.f32.mxu0 0.0
        %1121 = vmatmul.mubr.f32.gmra.mrb[0].mxu0 %v258
        %v1122 = vpop.f32.mrb[0].mxu0
        %v1123 = vadd.f32 0.0, %v1122
        %v1124 = vpop.f32.mrb[0].mxu0
        %1125 = vmatprep.mubr.f32.mxu0 0.0
        %1126 = vmatmul.mubr.f32.gmra.mrb[0].mxu0 %v261
        %v1127 = vpop.f32.mrb[0].mxu0
        %v1128 = vadd.f32 0.0, %v1127
        %v1129 = vpop.f32.mrb[0].mxu0
        %1130 = vmatprep.mubr.f32.mxu0 0.0
        %1131 = vmatmul.mubr.f32.gmra.mrb[0].mxu0 %v264
        %v1132 = vpop.f32.mrb[0].mxu0
        %v1133 = vadd.f32 0.0, %v1132
        %v1134 = vpop.f32.mrb[0].mxu0
        %1135 = vdwg.mxu0
        %v1136 = vsel %vm241, %v1098, 0.0
        %1137 = vadd.xlane.f32.xlu0 %v1136
        %v1138 = vpop.xlane.xlu0 %1137
        %v1139 = vsel %vm241, %v1103, 0.0
        %1140 = vadd.xlane.f32.xlu0 %v1139
        %v1141 = vpop.xlane.xlu0 %1140
        %v1142 = vsel %vm241, %v1108, 0.0
        %1143 = vadd.xlane.f32.xlu0 %v1142
        %v1144 = vpop.xlane.xlu0 %1143
        %v1145 = vsel %vm241, %v1113, 0.0
        %1146 = vadd.xlane.f32.xlu0 %v1145
        %v1147 = vpop.xlane.xlu0 %1146
        %v1148 = vsel %vm241, %v1118, 0.0
        %1149 = vadd.xlane.f32.xlu0 %v1148
        %v1150 = vpop.xlane.xlu0 %1149
        %v1151 = vsel %vm241, %v1123, 0.0
        %1152 = vadd.xlane.f32.xlu0 %v1151
        %v1153 = vpop.xlane.xlu0 %1152
        %v1154 = vsel %vm241, %v1128, 0.0
        %1155 = vadd.xlane.f32.xlu0 %v1154
        %v1156 = vpop.xlane.xlu0 %1155
        %v1157 = vsel %vm241, %v1133, 0.0
        %1158 = vadd.xlane.f32.xlu0 %v1157
        %v1159 = vpop.xlane.xlu0 %1158
        %v1160 = vmul.f32 %v1138, %v395
        %v1161 = vmul.f32 %v1141, %v395
        %v1162 = vmul.f32 %v1144, %v395
        %v1163 = vmul.f32 %v1147, %v395
        %v1164 = vmul.f32 %v1150, %v395
        %v1165 = vmul.f32 %v1153, %v395
        %v1166 = vmul.f32 %v1156, %v395
        %v1167 = vmul.f32 %v1159, %v395
        %v1168 = vsub.f32 %v1098, %v1160
        %v1169 = vsub.f32 %v1103, %v1161
        %v1170 = vsub.f32 %v1108, %v1162
        %v1171 = vsub.f32 %v1113, %v1163
        %v1172 = vsub.f32 %v1118, %v1164
        %v1173 = vsub.f32 %v1123, %v1165
        %v1174 = vsub.f32 %v1128, %v1166
        %v1175 = vsub.f32 %v1133, %v1167
        %v1176 = vmul.f32 %v1168, %v1168
        %v1177 = vmul.f32 %v1169, %v1169
        %v1178 = vmul.f32 %v1170, %v1170
        %v1179 = vmul.f32 %v1171, %v1171
        %v1180 = vmul.f32 %v1172, %v1172
        %v1181 = vmul.f32 %v1173, %v1173
        %v1182 = vmul.f32 %v1174, %v1174
        %v1183 = vmul.f32 %v1175, %v1175
        %v1184 = vsel %vm241, %v1176, 0.0
        %1185 = vadd.xlane.f32.xlu0 %v1184
        %v1186 = vpop.xlane.xlu0 %1185
        %v1187 = vsel %vm241, %v1177, 0.0
        %1188 = vadd.xlane.f32.xlu0 %v1187
        %v1189 = vpop.xlane.xlu0 %1188
        %v1190 = vsel %vm241, %v1178, 0.0
        %1191 = vadd.xlane.f32.xlu0 %v1190
        %v1192 = vpop.xlane.xlu0 %1191
        %v1193 = vsel %vm241, %v1179, 0.0
        %1194 = vadd.xlane.f32.xlu0 %v1193
        %v1195 = vpop.xlane.xlu0 %1194
        %v1196 = vsel %vm241, %v1180, 0.0
        %1197 = vadd.xlane.f32.xlu0 %v1196
        %v1198 = vpop.xlane.xlu0 %1197
        %v1199 = vsel %vm241, %v1181, 0.0
        %1200 = vadd.xlane.f32.xlu0 %v1199
        %v1201 = vpop.xlane.xlu0 %1200
        %v1202 = vsel %vm241, %v1182, 0.0
        %1203 = vadd.xlane.f32.xlu0 %v1202
        %v1204 = vpop.xlane.xlu0 %1203
        %v1205 = vsel %vm241, %v1183, 0.0
        %1206 = vadd.xlane.f32.xlu0 %v1205
        %v1207 = vpop.xlane.xlu0 %1206
        %v1208 = vmul.f32 %v1186, %v395
        %v1209 = vmul.f32 %v1189, %v395
        %v1210 = vmul.f32 %v1192, %v395
        %v1211 = vmul.f32 %v1195, %v395
        %v1212 = vmul.f32 %v1198, %v395
        %v1213 = vmul.f32 %v1201, %v395
        %v1214 = vmul.f32 %v1204, %v395
        %v1215 = vmul.f32 %v1207, %v395
        %v1216 = vadd.f32 %v1208, 1e-05
        %v1217 = vadd.f32 %v1209, 1e-05
        %v1218 = vadd.f32 %v1210, 1e-05
        %v1219 = vadd.f32 %v1211, 1e-05
        %v1220 = vadd.f32 %v1212, 1e-05
        %v1221 = vadd.f32 %v1213, 1e-05
        %v1222 = vadd.f32 %v1214, 1e-05
        %v1223 = vadd.f32 %v1215, 1e-05
        %v1224 = vrsqrt.pop %v1216
        %v1225 = vrsqrt.pop %v1217
        %v1226 = vrsqrt.pop %v1218
        %v1227 = vrsqrt.pop %v1219
        %v1228 = vrsqrt.pop %v1220
        %v1229 = vrsqrt.pop %v1221
        %v1230 = vrsqrt.pop %v1222
        %v1231 = vrsqrt.pop %v1223
        %v1232 = vmul.f32 %v1168, %v1224
        %v1233 = vmul.f32 %v1169, %v1225
        %v1234 = vmul.f32 %v1170, %v1226
        %v1235 = vmul.f32 %v1171, %v1227
        %v1236 = vmul.f32 %v1172, %v1228
        %v1237 = vmul.f32 %v1173, %v1229
        %v1238 = vmul.f32 %v1174, %v1230
        %v1239 = vmul.f32 %v1175, %v1231
        %1248 = vrot.lane.b32.xlu0 %v1098, 96
        %v1249 = vpop.permute.xlu0 %1248
        %1250 = vrot.lane.b32.xlu0 %v1103, 96
        %v1251 = vpop.permute.xlu0 %1250
        %1252 = vrot.lane.b32.xlu0 %v1108, 96
        %v1253 = vpop.permute.xlu0 %1252
        %1254 = vrot.lane.b32.xlu0 %v1113, 96
        %v1255 = vpop.permute.xlu0 %1254
        %1256 = vrot.lane.b32.xlu0 %v1118, 96
        %v1257 = vpop.permute.xlu0 %1256
        %1258 = vrot.lane.b32.xlu0 %v1123, 96
        %v1259 = vpop.permute.xlu0 %1258
        %1260 = vrot.lane.b32.xlu0 %v1128, 96
        %v1261 = vpop.permute.xlu0 %1260
        %1262 = vrot.lane.b32.xlu0 %v1133, 96
        %v1263 = vpop.permute.xlu0 %1262
        %v1272 = vsel %vm241, %v1249, 0.0
        %1273 = vadd.xlane.f32.xlu0 %v1272
        %v1274 = vpop.xlane.xlu0 %1273
        %v1275 = vsel %vm241, %v1251, 0.0
        %1276 = vadd.xlane.f32.xlu0 %v1275
        %v1277 = vpop.xlane.xlu0 %1276
        %v1278 = vsel %vm241, %v1253, 0.0
        %1279 = vadd.xlane.f32.xlu0 %v1278
        %v1280 = vpop.xlane.xlu0 %1279
        %v1281 = vsel %vm241, %v1255, 0.0
        %1282 = vadd.xlane.f32.xlu0 %v1281
        %v1283 = vpop.xlane.xlu0 %1282
        %v1284 = vsel %vm241, %v1257, 0.0
        %1285 = vadd.xlane.f32.xlu0 %v1284
        %v1286 = vpop.xlane.xlu0 %1285
        %v1287 = vsel %vm241, %v1259, 0.0
        %1288 = vadd.xlane.f32.xlu0 %v1287
        %v1289 = vpop.xlane.xlu0 %1288
        %v1290 = vsel %vm241, %v1261, 0.0
        %1291 = vadd.xlane.f32.xlu0 %v1290
        %v1292 = vpop.xlane.xlu0 %1291
        %v1293 = vsel %vm241, %v1263, 0.0
        %1294 = vadd.xlane.f32.xlu0 %v1293
        %v1295 = vpop.xlane.xlu0 %1294
        %v1296 = vmul.f32 %v1274, %v395
        %v1297 = vmul.f32 %v1277, %v395
        %v1298 = vmul.f32 %v1280, %v395
        %v1299 = vmul.f32 %v1283, %v395
        %v1300 = vmul.f32 %v1286, %v395
        %v1301 = vmul.f32 %v1289, %v395
        %v1302 = vmul.f32 %v1292, %v395
        %v1303 = vmul.f32 %v1295, %v395
        %v1304 = vsub.f32 %v1098, %v1296
        %v1305 = vsub.f32 %v1103, %v1297
        %v1306 = vsub.f32 %v1108, %v1298
        %v1307 = vsub.f32 %v1113, %v1299
        %v1308 = vsub.f32 %v1118, %v1300
        %v1309 = vsub.f32 %v1123, %v1301
        %v1310 = vsub.f32 %v1128, %v1302
        %v1311 = vsub.f32 %v1133, %v1303
        %v1312 = vmul.f32 %v1304, %v1304
        %v1313 = vmul.f32 %v1305, %v1305
        %v1314 = vmul.f32 %v1306, %v1306
        %v1315 = vmul.f32 %v1307, %v1307
        %v1316 = vmul.f32 %v1308, %v1308
        %v1317 = vmul.f32 %v1309, %v1309
        %v1318 = vmul.f32 %v1310, %v1310
        %v1319 = vmul.f32 %v1311, %v1311
        %1328 = vrot.lane.b32.xlu0 %v1312, 96
        %v1329 = vpop.permute.xlu0 %1328
        %1330 = vrot.lane.b32.xlu0 %v1313, 96
        %v1331 = vpop.permute.xlu0 %1330
        %1332 = vrot.lane.b32.xlu0 %v1314, 96
        %v1333 = vpop.permute.xlu0 %1332
        %1334 = vrot.lane.b32.xlu0 %v1315, 96
        %v1335 = vpop.permute.xlu0 %1334
        %1336 = vrot.lane.b32.xlu0 %v1316, 96
        %v1337 = vpop.permute.xlu0 %1336
        %1338 = vrot.lane.b32.xlu0 %v1317, 96
        %v1339 = vpop.permute.xlu0 %1338
        %1340 = vrot.lane.b32.xlu0 %v1318, 96
        %v1341 = vpop.permute.xlu0 %1340
        %1342 = vrot.lane.b32.xlu0 %v1319, 96
        %v1343 = vpop.permute.xlu0 %1342
        %v1352 = vsel %vm241, %v1329, 0.0
        %1353 = vadd.xlane.f32.xlu0 %v1352
        %v1354 = vpop.xlane.xlu0 %1353
        %v1355 = vsel %vm241, %v1331, 0.0
        %1356 = vadd.xlane.f32.xlu0 %v1355
        %v1357 = vpop.xlane.xlu0 %1356
        %v1358 = vsel %vm241, %v1333, 0.0
        %1359 = vadd.xlane.f32.xlu0 %v1358
        %v1360 = vpop.xlane.xlu0 %1359
        %v1361 = vsel %vm241, %v1335, 0.0
        %1362 = vadd.xlane.f32.xlu0 %v1361
        %v1363 = vpop.xlane.xlu0 %1362
        %v1364 = vsel %vm241, %v1337, 0.0
        %1365 = vadd.xlane.f32.xlu0 %v1364
        %v1366 = vpop.xlane.xlu0 %1365
        %v1367 = vsel %vm241, %v1339, 0.0
        %1368 = vadd.xlane.f32.xlu0 %v1367
        %v1369 = vpop.xlane.xlu0 %1368
        %v1370 = vsel %vm241, %v1341, 0.0
        %1371 = vadd.xlane.f32.xlu0 %v1370
        %v1372 = vpop.xlane.xlu0 %1371
        %v1373 = vsel %vm241, %v1343, 0.0
        %1374 = vadd.xlane.f32.xlu0 %v1373
        %v1375 = vpop.xlane.xlu0 %1374
        %v1376 = vmul.f32 %v1354, %v395
        %v1377 = vmul.f32 %v1357, %v395
        %v1378 = vmul.f32 %v1360, %v395
        %v1379 = vmul.f32 %v1363, %v395
        %v1380 = vmul.f32 %v1366, %v395
        %v1381 = vmul.f32 %v1369, %v395
        %v1382 = vmul.f32 %v1372, %v395
        %v1383 = vmul.f32 %v1375, %v395
        %v1384 = vadd.f32 %v1376, 1e-05
        %v1385 = vadd.f32 %v1377, 1e-05
        %v1386 = vadd.f32 %v1378, 1e-05
        %v1387 = vadd.f32 %v1379, 1e-05
        %v1388 = vadd.f32 %v1380, 1e-05
        %v1389 = vadd.f32 %v1381, 1e-05
        %v1390 = vadd.f32 %v1382, 1e-05
        %v1391 = vadd.f32 %v1383, 1e-05
        %v1392 = vrsqrt.pop %v1384
        %v1393 = vrsqrt.pop %v1385
        %v1394 = vrsqrt.pop %v1386
        %v1395 = vrsqrt.pop %v1387
        %v1396 = vrsqrt.pop %v1388
        %v1397 = vrsqrt.pop %v1389
        %v1398 = vrsqrt.pop %v1390
        %v1399 = vrsqrt.pop %v1391
        %v1400 = vmul.f32 %v1304, %v1392
        %v1401 = vmul.f32 %v1305, %v1393
        %v1402 = vmul.f32 %v1306, %v1394
        %v1403 = vmul.f32 %v1307, %v1395
        %v1404 = vmul.f32 %v1308, %v1396
        %v1405 = vmul.f32 %v1309, %v1397
        %v1406 = vmul.f32 %v1310, %v1398
        %v1407 = vmul.f32 %v1311, %v1399
        %1408 = vrot.lane.b32.xlu0 %v1098, 64
        %v1409 = vpop.permute.xlu0 %1408
        %1410 = vrot.lane.b32.xlu0 %v1103, 64
        %v1411 = vpop.permute.xlu0 %1410
        %1412 = vrot.lane.b32.xlu0 %v1108, 64
        %v1413 = vpop.permute.xlu0 %1412
        %1414 = vrot.lane.b32.xlu0 %v1113, 64
        %v1415 = vpop.permute.xlu0 %1414
        %1416 = vrot.lane.b32.xlu0 %v1118, 64
        %v1417 = vpop.permute.xlu0 %1416
        %1418 = vrot.lane.b32.xlu0 %v1123, 64
        %v1419 = vpop.permute.xlu0 %1418
        %1420 = vrot.lane.b32.xlu0 %v1128, 64
        %v1421 = vpop.permute.xlu0 %1420
        %1422 = vrot.lane.b32.xlu0 %v1133, 64
        %v1423 = vpop.permute.xlu0 %1422
        %v1432 = vsel %vm241, %v1409, 0.0
        %1433 = vadd.xlane.f32.xlu0 %v1432
        %v1434 = vpop.xlane.xlu0 %1433
        %v1435 = vsel %vm241, %v1411, 0.0
        %1436 = vadd.xlane.f32.xlu0 %v1435
        %v1437 = vpop.xlane.xlu0 %1436
        %v1438 = vsel %vm241, %v1413, 0.0
        %1439 = vadd.xlane.f32.xlu0 %v1438
        %v1440 = vpop.xlane.xlu0 %1439
        %v1441 = vsel %vm241, %v1415, 0.0
        %1442 = vadd.xlane.f32.xlu0 %v1441
        %v1443 = vpop.xlane.xlu0 %1442
        %v1444 = vsel %vm241, %v1417, 0.0
        %1445 = vadd.xlane.f32.xlu0 %v1444
        %v1446 = vpop.xlane.xlu0 %1445
        %v1447 = vsel %vm241, %v1419, 0.0
        %1448 = vadd.xlane.f32.xlu0 %v1447
        %v1449 = vpop.xlane.xlu0 %1448
        %v1450 = vsel %vm241, %v1421, 0.0
        %1451 = vadd.xlane.f32.xlu0 %v1450
        %v1452 = vpop.xlane.xlu0 %1451
        %v1453 = vsel %vm241, %v1423, 0.0
        %1454 = vadd.xlane.f32.xlu0 %v1453
        %v1455 = vpop.xlane.xlu0 %1454
        %v1456 = vmul.f32 %v1434, %v395
        %v1457 = vmul.f32 %v1437, %v395
        %v1458 = vmul.f32 %v1440, %v395
        %v1459 = vmul.f32 %v1443, %v395
        %v1460 = vmul.f32 %v1446, %v395
        %v1461 = vmul.f32 %v1449, %v395
        %v1462 = vmul.f32 %v1452, %v395
        %v1463 = vmul.f32 %v1455, %v395
        %v1464 = vsub.f32 %v1098, %v1456
        %v1465 = vsub.f32 %v1103, %v1457
        %v1466 = vsub.f32 %v1108, %v1458
        %v1467 = vsub.f32 %v1113, %v1459
        %v1468 = vsub.f32 %v1118, %v1460
        %v1469 = vsub.f32 %v1123, %v1461
        %v1470 = vsub.f32 %v1128, %v1462
        %v1471 = vsub.f32 %v1133, %v1463
        %v1472 = vmul.f32 %v1464, %v1464
        %v1473 = vmul.f32 %v1465, %v1465
        %v1474 = vmul.f32 %v1466, %v1466
        %v1475 = vmul.f32 %v1467, %v1467
        %v1476 = vmul.f32 %v1468, %v1468
        %v1477 = vmul.f32 %v1469, %v1469
        %v1478 = vmul.f32 %v1470, %v1470
        %v1479 = vmul.f32 %v1471, %v1471
        %1488 = vrot.lane.b32.xlu0 %v1472, 64
        %v1489 = vpop.permute.xlu0 %1488
        %1490 = vrot.lane.b32.xlu0 %v1473, 64
        %v1491 = vpop.permute.xlu0 %1490
        %1492 = vrot.lane.b32.xlu0 %v1474, 64
        %v1493 = vpop.permute.xlu0 %1492
        %1494 = vrot.lane.b32.xlu0 %v1475, 64
        %v1495 = vpop.permute.xlu0 %1494
        %1496 = vrot.lane.b32.xlu0 %v1476, 64
        %v1497 = vpop.permute.xlu0 %1496
        %1498 = vrot.lane.b32.xlu0 %v1477, 64
        %v1499 = vpop.permute.xlu0 %1498
        %1500 = vrot.lane.b32.xlu0 %v1478, 64
        %v1501 = vpop.permute.xlu0 %1500
        %1502 = vrot.lane.b32.xlu0 %v1479, 64
        %v1503 = vpop.permute.xlu0 %1502
        %v1512 = vsel %vm241, %v1489, 0.0
        %1513 = vadd.xlane.f32.xlu0 %v1512
        %v1514 = vpop.xlane.xlu0 %1513
        %v1515 = vsel %vm241, %v1491, 0.0
        %1516 = vadd.xlane.f32.xlu0 %v1515
        %v1517 = vpop.xlane.xlu0 %1516
        %v1518 = vsel %vm241, %v1493, 0.0
        %1519 = vadd.xlane.f32.xlu0 %v1518
        %v1520 = vpop.xlane.xlu0 %1519
        %v1521 = vsel %vm241, %v1495, 0.0
        %1522 = vadd.xlane.f32.xlu0 %v1521
        %v1523 = vpop.xlane.xlu0 %1522
        %v1524 = vsel %vm241, %v1497, 0.0
        %1525 = vadd.xlane.f32.xlu0 %v1524
        %v1526 = vpop.xlane.xlu0 %1525
        %v1527 = vsel %vm241, %v1499, 0.0
        %1528 = vadd.xlane.f32.xlu0 %v1527
        %v1529 = vpop.xlane.xlu0 %1528
        %v1530 = vsel %vm241, %v1501, 0.0
        %1531 = vadd.xlane.f32.xlu0 %v1530
        %v1532 = vpop.xlane.xlu0 %1531
        %v1533 = vsel %vm241, %v1503, 0.0
        %1534 = vadd.xlane.f32.xlu0 %v1533
        %v1535 = vpop.xlane.xlu0 %1534
        %v1536 = vmul.f32 %v1514, %v395
        %v1537 = vmul.f32 %v1517, %v395
        %v1538 = vmul.f32 %v1520, %v395
        %v1539 = vmul.f32 %v1523, %v395
        %v1540 = vmul.f32 %v1526, %v395
        %v1541 = vmul.f32 %v1529, %v395
        %v1542 = vmul.f32 %v1532, %v395
        %v1543 = vmul.f32 %v1535, %v395
        %v1544 = vadd.f32 %v1536, 1e-05
        %v1545 = vadd.f32 %v1537, 1e-05
        %v1546 = vadd.f32 %v1538, 1e-05
        %v1547 = vadd.f32 %v1539, 1e-05
        %v1548 = vadd.f32 %v1540, 1e-05
        %v1549 = vadd.f32 %v1541, 1e-05
        %v1550 = vadd.f32 %v1542, 1e-05
        %v1551 = vadd.f32 %v1543, 1e-05
        %v1552 = vrsqrt.pop %v1544
        %v1553 = vrsqrt.pop %v1545
        %v1554 = vrsqrt.pop %v1546
        %v1555 = vrsqrt.pop %v1547
        %v1556 = vrsqrt.pop %v1548
        %v1557 = vrsqrt.pop %v1549
        %v1558 = vrsqrt.pop %v1550
        %v1559 = vrsqrt.pop %v1551
        %v1560 = vmul.f32 %v1464, %v1552
        %v1561 = vmul.f32 %v1465, %v1553
        %v1562 = vmul.f32 %v1466, %v1554
        %v1563 = vmul.f32 %v1467, %v1555
        %v1564 = vmul.f32 %v1468, %v1556
        %v1565 = vmul.f32 %v1469, %v1557
        %v1566 = vmul.f32 %v1470, %v1558
        %v1567 = vmul.f32 %v1471, %v1559
        %1568 = vrot.lane.b32.xlu0 %v1098, 32
        %v1569 = vpop.permute.xlu0 %1568
        %1570 = vrot.lane.b32.xlu0 %v1103, 32
        %v1571 = vpop.permute.xlu0 %1570
        %1572 = vrot.lane.b32.xlu0 %v1108, 32
        %v1573 = vpop.permute.xlu0 %1572
        %1574 = vrot.lane.b32.xlu0 %v1113, 32
        %v1575 = vpop.permute.xlu0 %1574
        %1576 = vrot.lane.b32.xlu0 %v1118, 32
        %v1577 = vpop.permute.xlu0 %1576
        %1578 = vrot.lane.b32.xlu0 %v1123, 32
        %v1579 = vpop.permute.xlu0 %1578
        %1580 = vrot.lane.b32.xlu0 %v1128, 32
        %v1581 = vpop.permute.xlu0 %1580
        %1582 = vrot.lane.b32.xlu0 %v1133, 32
        %v1583 = vpop.permute.xlu0 %1582
        %v1592 = vsel %vm241, %v1569, 0.0
        %1593 = vadd.xlane.f32.xlu0 %v1592
        %v1594 = vpop.xlane.xlu0 %1593
        %v1595 = vsel %vm241, %v1571, 0.0
        %1596 = vadd.xlane.f32.xlu0 %v1595
        %v1597 = vpop.xlane.xlu0 %1596
        %v1598 = vsel %vm241, %v1573, 0.0
        %1599 = vadd.xlane.f32.xlu0 %v1598
        %v1600 = vpop.xlane.xlu0 %1599
        %v1601 = vsel %vm241, %v1575, 0.0
        %1602 = vadd.xlane.f32.xlu0 %v1601
        %v1603 = vpop.xlane.xlu0 %1602
        %v1604 = vsel %vm241, %v1577, 0.0
        %1605 = vadd.xlane.f32.xlu0 %v1604
        %v1606 = vpop.xlane.xlu0 %1605
        %v1607 = vsel %vm241, %v1579, 0.0
        %1608 = vadd.xlane.f32.xlu0 %v1607
        %v1609 = vpop.xlane.xlu0 %1608
        %v1610 = vsel %vm241, %v1581, 0.0
        %1611 = vadd.xlane.f32.xlu0 %v1610
        %v1612 = vpop.xlane.xlu0 %1611
        %v1613 = vsel %vm241, %v1583, 0.0
        %1614 = vadd.xlane.f32.xlu0 %v1613
        %v1615 = vpop.xlane.xlu0 %1614
        %v1616 = vmul.f32 %v1594, %v395
        %v1617 = vmul.f32 %v1597, %v395
        %v1618 = vmul.f32 %v1600, %v395
        %v1619 = vmul.f32 %v1603, %v395
        %v1620 = vmul.f32 %v1606, %v395
        %v1621 = vmul.f32 %v1609, %v395
        %v1622 = vmul.f32 %v1612, %v395
        %v1623 = vmul.f32 %v1615, %v395
        %v1624 = vsub.f32 %v1098, %v1616
        %v1625 = vsub.f32 %v1103, %v1617
        %v1626 = vsub.f32 %v1108, %v1618
        %v1627 = vsub.f32 %v1113, %v1619
        %v1628 = vsub.f32 %v1118, %v1620
        %v1629 = vsub.f32 %v1123, %v1621
        %v1630 = vsub.f32 %v1128, %v1622
        %v1631 = vsub.f32 %v1133, %v1623
        %v1632 = vmul.f32 %v1624, %v1624
        %v1633 = vmul.f32 %v1625, %v1625
        %v1634 = vmul.f32 %v1626, %v1626
        %v1635 = vmul.f32 %v1627, %v1627
        %v1636 = vmul.f32 %v1628, %v1628
        %v1637 = vmul.f32 %v1629, %v1629
        %v1638 = vmul.f32 %v1630, %v1630
        %v1639 = vmul.f32 %v1631, %v1631
        %1648 = vrot.lane.b32.xlu0 %v1632, 32
        %v1649 = vpop.permute.xlu0 %1648
        %1650 = vrot.lane.b32.xlu0 %v1633, 32
        %v1651 = vpop.permute.xlu0 %1650
        %1652 = vrot.lane.b32.xlu0 %v1634, 32
        %v1653 = vpop.permute.xlu0 %1652
        %1654 = vrot.lane.b32.xlu0 %v1635, 32
        %v1655 = vpop.permute.xlu0 %1654
        %1656 = vrot.lane.b32.xlu0 %v1636, 32
        %v1657 = vpop.permute.xlu0 %1656
        %1658 = vrot.lane.b32.xlu0 %v1637, 32
        %v1659 = vpop.permute.xlu0 %1658
        %1660 = vrot.lane.b32.xlu0 %v1638, 32
        %v1661 = vpop.permute.xlu0 %1660
        %1662 = vrot.lane.b32.xlu0 %v1639, 32
        %v1663 = vpop.permute.xlu0 %1662
        %v1672 = vsel %vm241, %v1649, 0.0
        %1673 = vadd.xlane.f32.xlu0 %v1672
        %v1674 = vpop.xlane.xlu0 %1673
        %v1675 = vsel %vm241, %v1651, 0.0
        %1676 = vadd.xlane.f32.xlu0 %v1675
        %v1677 = vpop.xlane.xlu0 %1676
        %v1678 = vsel %vm241, %v1653, 0.0
        %1679 = vadd.xlane.f32.xlu0 %v1678
        %v1680 = vpop.xlane.xlu0 %1679
        %v1681 = vsel %vm241, %v1655, 0.0
        %1682 = vadd.xlane.f32.xlu0 %v1681
        %v1683 = vpop.xlane.xlu0 %1682
        %v1684 = vsel %vm241, %v1657, 0.0
        %1685 = vadd.xlane.f32.xlu0 %v1684
        %v1686 = vpop.xlane.xlu0 %1685
        %v1687 = vsel %vm241, %v1659, 0.0
        %1688 = vadd.xlane.f32.xlu0 %v1687
        %v1689 = vpop.xlane.xlu0 %1688
        %v1690 = vsel %vm241, %v1661, 0.0
        %1691 = vadd.xlane.f32.xlu0 %v1690
        %v1692 = vpop.xlane.xlu0 %1691
        %v1693 = vsel %vm241, %v1663, 0.0
        %1694 = vadd.xlane.f32.xlu0 %v1693
        %v1695 = vpop.xlane.xlu0 %1694
        %v1696 = vmul.f32 %v1674, %v395
        %v1697 = vmul.f32 %v1677, %v395
        %v1698 = vmul.f32 %v1680, %v395
        %v1699 = vmul.f32 %v1683, %v395
        %v1700 = vmul.f32 %v1686, %v395
        %v1701 = vmul.f32 %v1689, %v395
        %v1702 = vmul.f32 %v1692, %v395
        %v1703 = vmul.f32 %v1695, %v395
        %v1704 = vadd.f32 %v1696, 1e-05
        %v1705 = vadd.f32 %v1697, 1e-05
        %v1706 = vadd.f32 %v1698, 1e-05
        %v1707 = vadd.f32 %v1699, 1e-05
        %v1708 = vadd.f32 %v1700, 1e-05
        %v1709 = vadd.f32 %v1701, 1e-05
        %v1710 = vadd.f32 %v1702, 1e-05
        %v1711 = vadd.f32 %v1703, 1e-05
        %v1712 = vrsqrt.pop %v1704
        %v1713 = vrsqrt.pop %v1705
        %v1714 = vrsqrt.pop %v1706
        %v1715 = vrsqrt.pop %v1707
        %v1716 = vrsqrt.pop %v1708
        %v1717 = vrsqrt.pop %v1709
        %v1718 = vrsqrt.pop %v1710
        %v1719 = vrsqrt.pop %v1711
        %v1720 = vmul.f32 %v1624, %v1712
        %v1721 = vmul.f32 %v1625, %v1713
        %v1722 = vmul.f32 %v1626, %v1714
        %v1723 = vmul.f32 %v1627, %v1715
        %v1724 = vmul.f32 %v1628, %v1716
        %v1725 = vmul.f32 %v1629, %v1717
        %v1726 = vmul.f32 %v1630, %v1718
        %v1727 = vmul.f32 %v1631, %v1719
        %v1728 = vsel %vm241, %v1232, %v1400
        %v1729 = vsel %vm241, %v1233, %v1401
        %v1730 = vsel %vm241, %v1234, %v1402
        %v1731 = vsel %vm241, %v1235, %v1403
        %v1732 = vsel %vm241, %v1236, %v1404
        %v1733 = vsel %vm241, %v1237, %v1405
        %v1734 = vsel %vm241, %v1238, %v1406
        %v1735 = vsel %vm241, %v1239, %v1407
        %v1736 = vsel %vm972, %v1728, %v1560
        %v1737 = vsel %vm972, %v1729, %v1561
        %v1738 = vsel %vm972, %v1730, %v1562
        %v1739 = vsel %vm972, %v1731, %v1563
        %v1740 = vsel %vm972, %v1732, %v1564
        %v1741 = vsel %vm972, %v1733, %v1565
        %v1742 = vsel %vm972, %v1734, %v1566
        %v1743 = vsel %vm972, %v1735, %v1567
        %v1744 = vsel %vm981, %v1736, %v1720
        %v1745 = vsel %vm981, %v1737, %v1721
        %v1746 = vsel %vm981, %v1738, %v1722
        %v1747 = vsel %vm981, %v1739, %v1723
        %v1748 = vsel %vm981, %v1740, %v1724
        %v1749 = vsel %vm981, %v1741, %v1725
        %v1750 = vsel %vm981, %v1742, %v1726
        %v1751 = vsel %vm981, %v1743, %v1727
        %v1752 = vmul.f32 %v1744, %v994
        %v1753 = vmul.f32 %v1745, %v994
        %v1754 = vmul.f32 %v1746, %v994
        %v1755 = vmul.f32 %v1747, %v994
        %v1756 = vmul.f32 %v1748, %v994
        %v1757 = vmul.f32 %v1749, %v994
        %v1758 = vmul.f32 %v1750, %v994
        %v1759 = vmul.f32 %v1751, %v994
        %v1760 = vadd.f32 %v1752, %v1008
        %v1761 = vadd.f32 %v1753, %v1008
        %v1762 = vadd.f32 %v1754, %v1008
        %v1763 = vadd.f32 %v1755, %v1008
        %v1764 = vadd.f32 %v1756, %v1008
        %v1765 = vadd.f32 %v1757, %v1008
        %v1766 = vadd.f32 %v1758, %v1008
        %v1767 = vadd.f32 %v1759, %v1008
        %s1768 = scalar_lea.vmem %s215, 8 [#allocation2]
        %1769 = vst [vmem:[%s1768] sm:$0xff] %v1760
        %1770 = vst [vmem:[%s1768 + $0x20] sm:$0xff] %v1761
        %1771 = vst [vmem:[%s1768 + $0x40] sm:$0xff] %v1762
        %1772 = vst [vmem:[%s1768 + $0x60] sm:$0xff] %v1763
        %1773 = vst [vmem:[%s1768 + $0x80] sm:$0xff] %v1764
        %1774 = vst [vmem:[%s1768 + $0xa0] sm:$0xff] %v1765
        %1775 = vst [vmem:[%s1768 + $0xc0] sm:$0xff] %v1766
        %1776 = vst [vmem:[%s1768 + $0xe0] sm:$0xff] %v1767
        %s1777 = scalar_lea.vmem %s1, 64
        %v1778 = vld [vmem:[%s1777] sm:$0xff]
        %v1779 = vld [vmem:[%s1777 + $0x8] sm:$0xff]
        %v1780 = vld [vmem:[%s1777 + $0x10] sm:$0xff]
        %v1781 = vld [vmem:[%s1777 + $0x18] sm:$0xff]
        %1782 = vmatprep.subr.mxu0 0.0
        %1783 = vmatpush1.msra.mxu0 %v1778
        %1784 = vmatprep.subr.mxu0 0.0
        %1785 = vmatpush1.msra.mxu0 %v1779
        %1786 = vmatprep.subr.mxu0 0.0
        %1787 = vmatpush1.msra.mxu0 %v1780
        %1788 = vmatprep.subr.mxu0 0.0
        %1789 = vmatpush1.msra.mxu0 %v1781
        %1790 = vmatprep.subr.mxu0 0.0
        %1791 = vmatpush1.msra.mxu0 0.0
        %1792 = vmatprep.subr.mxu0 0.0
        %1793 = vmatpush1.msra.mxu0 0.0
        %1794 = vmatprep.subr.mxu0 0.0
        %1795 = vmatpush1.msra.mxu0 0.0
        %1796 = vmatprep.subr.mxu0 0.0
        %1797 = vmatpush1.msra.mxu0 0.0
        %1798 = vmatprep.subr.mxu0 0.0
        %1799 = vmatpush1.msra.mxu0 0.0
        %1800 = vmatprep.subr.mxu0 0.0
        %1801 = vmatpush1.msra.mxu0 0.0
        %1802 = vmatprep.subr.mxu0 0.0
        %1803 = vmatpush1.msra.mxu0 0.0
        %1804 = vmatprep.subr.mxu0 0.0
        %1805 = vmatpush1.msra.mxu0 0.0
        %1806 = vmatprep.subr.mxu0 0.0
        %1807 = vmatpush1.msra.mxu0 0.0
        %1808 = vmatprep.subr.mxu0 0.0
        %1809 = vmatpush1.msra.mxu0 0.0
        %1810 = vmatprep.subr.mxu0 0.0
        %1811 = vmatpush1.msra.mxu0 0.0
        %1812 = vmatprep.subr.mxu0 0.0
        %1813 = vmatpush1.msra.mxu0 0.0
        %1814 = vmatprep.subr.mxu0 0.0
        %1815 = vmatpush1.msra.mxu0 0.0
        %1816 = vmatprep.subr.mxu0 0.0
        %1817 = vmatpush1.msra.mxu0 0.0
        %1818 = vmatprep.subr.mxu0 0.0
        %1819 = vmatpush1.msra.mxu0 0.0
        %1820 = vmatprep.subr.mxu0 0.0
        %1821 = vmatpush1.msra.mxu0 0.0
        %1822 = vmatprep.subr.mxu0 0.0
        %1823 = vmatpush1.msra.mxu0 0.0
        %1824 = vmatprep.subr.mxu0 0.0
        %1825 = vmatpush1.msra.mxu0 0.0
        %1826 = vmatprep.subr.mxu0 0.0
        %1827 = vmatpush1.msra.mxu0 0.0
        %1828 = vmatprep.subr.mxu0 0.0
        %1829 = vmatpush1.msra.mxu0 0.0
        %1830 = vmatprep.subr.mxu0 0.0
        %1831 = vmatpush1.msra.mxu0 0.0
        %1832 = vmatprep.subr.mxu0 0.0
        %1833 = vmatpush1.msra.mxu0 0.0
        %1834 = vmatprep.subr.mxu0 0.0
        %1835 = vmatpush1.msra.mxu0 0.0
        %1836 = vmatprep.subr.mxu0 0.0
        %1837 = vmatpush1.msra.mxu0 0.0
        %1838 = vmatprep.subr.mxu0 0.0
        %1839 = vmatpush1.msra.mxu0 0.0
        %1840 = vmatprep.subr.mxu0 0.0
        %1841 = vmatpush1.msra.mxu0 0.0
        %1842 = vmatprep.subr.mxu0 0.0
        %1843 = vmatpush1.msra.mxu0 0.0
        %1844 = vmatprep.subr.mxu0 0.0
        %1845 = vmatpush1.msra.mxu0 0.0
        %1846 = vmatprep.mubr.f32.mxu0 0.0
        %1847 = vmatmul.mubr.f32.gmra.mrb[0].mxu0 %v243
        %v1848 = vpop.f32.mrb[0].mxu0
        %v1849 = vadd.f32 0.0, %v1848
        %v1850 = vpop.f32.mrb[0].mxu0
        %1851 = vmatprep.mubr.f32.mxu0 0.0
        %1852 = vmatmul.mubr.f32.gmra.mrb[0].mxu0 %v246
        %v1853 = vpop.f32.mrb[0].mxu0
        %v1854 = vadd.f32 0.0, %v1853
        %v1855 = vpop.f32.mrb[0].mxu0
        %1856 = vmatprep.mubr.f32.mxu0 0.0
        %1857 = vmatmul.mubr.f32.gmra.mrb[0].mxu0 %v249
        %v1858 = vpop.f32.mrb[0].mxu0
        %v1859 = vadd.f32 0.0, %v1858
        %v1860 = vpop.f32.mrb[0].mxu0
        %1861 = vmatprep.mubr.f32.mxu0 0.0
        %1862 = vmatmul.mubr.f32.gmra.mrb[0].mxu0 %v252
        %v1863 = vpop.f32.mrb[0].mxu0
        %v1864 = vadd.f32 0.0, %v1863
        %v1865 = vpop.f32.mrb[0].mxu0
        %1866 = vmatprep.mubr.f32.mxu0 0.0
        %1867 = vmatmul.mubr.f32.gmra.mrb[0].mxu0 %v255
        %v1868 = vpop.f32.mrb[0].mxu0
        %v1869 = vadd.f32 0.0, %v1868
        %v1870 = vpop.f32.mrb[0].mxu0
        %1871 = vmatprep.mubr.f32.mxu0 0.0
        %1872 = vmatmul.mubr.f32.gmra.mrb[0].mxu0 %v258
        %v1873 = vpop.f32.mrb[0].mxu0
        %v1874 = vadd.f32 0.0, %v1873
        %v1875 = vpop.f32.mrb[0].mxu0
        %1876 = vmatprep.mubr.f32.mxu0 0.0
        %1877 = vmatmul.mubr.f32.gmra.mrb[0].mxu0 %v261
        %v1878 = vpop.f32.mrb[0].mxu0
        %v1879 = vadd.f32 0.0, %v1878
        %v1880 = vpop.f32.mrb[0].mxu0
        %1881 = vmatprep.mubr.f32.mxu0 0.0
        %1882 = vmatmul.mubr.f32.gmra.mrb[0].mxu0 %v264
        %v1883 = vpop.f32.mrb[0].mxu0
        %v1884 = vadd.f32 0.0, %v1883
        %v1885 = vpop.f32.mrb[0].mxu0
        %1886 = vdwg.mxu0
        %v1887 = vsel %vm241, %v1849, 0.0
        %1888 = vadd.xlane.f32.xlu0 %v1887
        %v1889 = vpop.xlane.xlu0 %1888
        %v1890 = vsel %vm241, %v1854, 0.0
        %1891 = vadd.xlane.f32.xlu0 %v1890
        %v1892 = vpop.xlane.xlu0 %1891
        %v1893 = vsel %vm241, %v1859, 0.0
        %1894 = vadd.xlane.f32.xlu0 %v1893
        %v1895 = vpop.xlane.xlu0 %1894
        %v1896 = vsel %vm241, %v1864, 0.0
        %1897 = vadd.xlane.f32.xlu0 %v1896
        %v1898 = vpop.xlane.xlu0 %1897
        %v1899 = vsel %vm241, %v1869, 0.0
        %1900 = vadd.xlane.f32.xlu0 %v1899
        %v1901 = vpop.xlane.xlu0 %1900
        %v1902 = vsel %vm241, %v1874, 0.0
        %1903 = vadd.xlane.f32.xlu0 %v1902
        %v1904 = vpop.xlane.xlu0 %1903
        %v1905 = vsel %vm241, %v1879, 0.0
        %1906 = vadd.xlane.f32.xlu0 %v1905
        %v1907 = vpop.xlane.xlu0 %1906
        %v1908 = vsel %vm241, %v1884, 0.0
        %1909 = vadd.xlane.f32.xlu0 %v1908
        %v1910 = vpop.xlane.xlu0 %1909
        %v1911 = vmul.f32 %v1889, %v395
        %v1912 = vmul.f32 %v1892, %v395
        %v1913 = vmul.f32 %v1895, %v395
        %v1914 = vmul.f32 %v1898, %v395
        %v1915 = vmul.f32 %v1901, %v395
        %v1916 = vmul.f32 %v1904, %v395
        %v1917 = vmul.f32 %v1907, %v395
        %v1918 = vmul.f32 %v1910, %v395
        %v1919 = vsub.f32 %v1849, %v1911
        %v1920 = vsub.f32 %v1854, %v1912
        %v1921 = vsub.f32 %v1859, %v1913
        %v1922 = vsub.f32 %v1864, %v1914
        %v1923 = vsub.f32 %v1869, %v1915
        %v1924 = vsub.f32 %v1874, %v1916
        %v1925 = vsub.f32 %v1879, %v1917
        %v1926 = vsub.f32 %v1884, %v1918
        %v1927 = vmul.f32 %v1919, %v1919
        %v1928 = vmul.f32 %v1920, %v1920
        %v1929 = vmul.f32 %v1921, %v1921
        %v1930 = vmul.f32 %v1922, %v1922
        %v1931 = vmul.f32 %v1923, %v1923
        %v1932 = vmul.f32 %v1924, %v1924
        %v1933 = vmul.f32 %v1925, %v1925
        %v1934 = vmul.f32 %v1926, %v1926
        %v1935 = vsel %vm241, %v1927, 0.0
        %1936 = vadd.xlane.f32.xlu0 %v1935
        %v1937 = vpop.xlane.xlu0 %1936
        %v1938 = vsel %vm241, %v1928, 0.0
        %1939 = vadd.xlane.f32.xlu0 %v1938
        %v1940 = vpop.xlane.xlu0 %1939
        %v1941 = vsel %vm241, %v1929, 0.0
        %1942 = vadd.xlane.f32.xlu0 %v1941
        %v1943 = vpop.xlane.xlu0 %1942
        %v1944 = vsel %vm241, %v1930, 0.0
        %1945 = vadd.xlane.f32.xlu0 %v1944
        %v1946 = vpop.xlane.xlu0 %1945
        %v1947 = vsel %vm241, %v1931, 0.0
        %1948 = vadd.xlane.f32.xlu0 %v1947
        %v1949 = vpop.xlane.xlu0 %1948
        %v1950 = vsel %vm241, %v1932, 0.0
        %1951 = vadd.xlane.f32.xlu0 %v1950
        %v1952 = vpop.xlane.xlu0 %1951
        %v1953 = vsel %vm241, %v1933, 0.0
        %1954 = vadd.xlane.f32.xlu0 %v1953
        %v1955 = vpop.xlane.xlu0 %1954
        %v1956 = vsel %vm241, %v1934, 0.0
        %1957 = vadd.xlane.f32.xlu0 %v1956
        %v1958 = vpop.xlane.xlu0 %1957
        %v1959 = vmul.f32 %v1937, %v395
        %v1960 = vmul.f32 %v1940, %v395
        %v1961 = vmul.f32 %v1943, %v395
        %v1962 = vmul.f32 %v1946, %v395
        %v1963 = vmul.f32 %v1949, %v395
        %v1964 = vmul.f32 %v1952, %v395
        %v1965 = vmul.f32 %v1955, %v395
        %v1966 = vmul.f32 %v1958, %v395
        %v1967 = vadd.f32 %v1959, 1e-05
        %v1968 = vadd.f32 %v1960, 1e-05
        %v1969 = vadd.f32 %v1961, 1e-05
        %v1970 = vadd.f32 %v1962, 1e-05
        %v1971 = vadd.f32 %v1963, 1e-05
        %v1972 = vadd.f32 %v1964, 1e-05
        %v1973 = vadd.f32 %v1965, 1e-05
        %v1974 = vadd.f32 %v1966, 1e-05
        %v1975 = vrsqrt.pop %v1967
        %v1976 = vrsqrt.pop %v1968
        %v1977 = vrsqrt.pop %v1969
        %v1978 = vrsqrt.pop %v1970
        %v1979 = vrsqrt.pop %v1971
        %v1980 = vrsqrt.pop %v1972
        %v1981 = vrsqrt.pop %v1973
        %v1982 = vrsqrt.pop %v1974
        %v1983 = vmul.f32 %v1919, %v1975
        %v1984 = vmul.f32 %v1920, %v1976
        %v1985 = vmul.f32 %v1921, %v1977
        %v1986 = vmul.f32 %v1922, %v1978
        %v1987 = vmul.f32 %v1923, %v1979
        %v1988 = vmul.f32 %v1924, %v1980
        %v1989 = vmul.f32 %v1925, %v1981
        %v1990 = vmul.f32 %v1926, %v1982
        %1999 = vrot.lane.b32.xlu0 %v1849, 96
        %v2000 = vpop.permute.xlu0 %1999
        %2001 = vrot.lane.b32.xlu0 %v1854, 96
        %v2002 = vpop.permute.xlu0 %2001
        %2003 = vrot.lane.b32.xlu0 %v1859, 96
        %v2004 = vpop.permute.xlu0 %2003
        %2005 = vrot.lane.b32.xlu0 %v1864, 96
        %v2006 = vpop.permute.xlu0 %2005
        %2007 = vrot.lane.b32.xlu0 %v1869, 96
        %v2008 = vpop.permute.xlu0 %2007
        %2009 = vrot.lane.b32.xlu0 %v1874, 96
        %v2010 = vpop.permute.xlu0 %2009
        %2011 = vrot.lane.b32.xlu0 %v1879, 96
        %v2012 = vpop.permute.xlu0 %2011
        %2013 = vrot.lane.b32.xlu0 %v1884, 96
        %v2014 = vpop.permute.xlu0 %2013
        %v2023 = vsel %vm241, %v2000, 0.0
        %2024 = vadd.xlane.f32.xlu0 %v2023
        %v2025 = vpop.xlane.xlu0 %2024
        %v2026 = vsel %vm241, %v2002, 0.0
        %2027 = vadd.xlane.f32.xlu0 %v2026
        %v2028 = vpop.xlane.xlu0 %2027
        %v2029 = vsel %vm241, %v2004, 0.0
        %2030 = vadd.xlane.f32.xlu0 %v2029
        %v2031 = vpop.xlane.xlu0 %2030
        %v2032 = vsel %vm241, %v2006, 0.0
        %2033 = vadd.xlane.f32.xlu0 %v2032
        %v2034 = vpop.xlane.xlu0 %2033
        %v2035 = vsel %vm241, %v2008, 0.0
        %2036 = vadd.xlane.f32.xlu0 %v2035
        %v2037 = vpop.xlane.xlu0 %2036
        %v2038 = vsel %vm241, %v2010, 0.0
        %2039 = vadd.xlane.f32.xlu0 %v2038
        %v2040 = vpop.xlane.xlu0 %2039
        %v2041 = vsel %vm241, %v2012, 0.0
        %2042 = vadd.xlane.f32.xlu0 %v2041
        %v2043 = vpop.xlane.xlu0 %2042
        %v2044 = vsel %vm241, %v2014, 0.0
        %2045 = vadd.xlane.f32.xlu0 %v2044
        %v2046 = vpop.xlane.xlu0 %2045
        %v2047 = vmul.f32 %v2025, %v395
        %v2048 = vmul.f32 %v2028, %v395
        %v2049 = vmul.f32 %v2031, %v395
        %v2050 = vmul.f32 %v2034, %v395
        %v2051 = vmul.f32 %v2037, %v395
        %v2052 = vmul.f32 %v2040, %v395
        %v2053 = vmul.f32 %v2043, %v395
        %v2054 = vmul.f32 %v2046, %v395
        %v2055 = vsub.f32 %v1849, %v2047
        %v2056 = vsub.f32 %v1854, %v2048
        %v2057 = vsub.f32 %v1859, %v2049
        %v2058 = vsub.f32 %v1864, %v2050
        %v2059 = vsub.f32 %v1869, %v2051
        %v2060 = vsub.f32 %v1874, %v2052
        %v2061 = vsub.f32 %v1879, %v2053
        %v2062 = vsub.f32 %v1884, %v2054
        %v2063 = vmul.f32 %v2055, %v2055
        %v2064 = vmul.f32 %v2056, %v2056
        %v2065 = vmul.f32 %v2057, %v2057
        %v2066 = vmul.f32 %v2058, %v2058
        %v2067 = vmul.f32 %v2059, %v2059
        %v2068 = vmul.f32 %v2060, %v2060
        %v2069 = vmul.f32 %v2061, %v2061
        %v2070 = vmul.f32 %v2062, %v2062
        %2079 = vrot.lane.b32.xlu0 %v2063, 96
        %v2080 = vpop.permute.xlu0 %2079
        %2081 = vrot.lane.b32.xlu0 %v2064, 96
        %v2082 = vpop.permute.xlu0 %2081
        %2083 = vrot.lane.b32.xlu0 %v2065, 96
        %v2084 = vpop.permute.xlu0 %2083
        %2085 = vrot.lane.b32.xlu0 %v2066, 96
        %v2086 = vpop.permute.xlu0 %2085
        %2087 = vrot.lane.b32.xlu0 %v2067, 96
        %v2088 = vpop.permute.xlu0 %2087
        %2089 = vrot.lane.b32.xlu0 %v2068, 96
        %v2090 = vpop.permute.xlu0 %2089
        %2091 = vrot.lane.b32.xlu0 %v2069, 96
        %v2092 = vpop.permute.xlu0 %2091
        %2093 = vrot.lane.b32.xlu0 %v2070, 96
        %v2094 = vpop.permute.xlu0 %2093
        %v2103 = vsel %vm241, %v2080, 0.0
        %2104 = vadd.xlane.f32.xlu0 %v2103
        %v2105 = vpop.xlane.xlu0 %2104
        %v2106 = vsel %vm241, %v2082, 0.0
        %2107 = vadd.xlane.f32.xlu0 %v2106
        %v2108 = vpop.xlane.xlu0 %2107
        %v2109 = vsel %vm241, %v2084, 0.0
        %2110 = vadd.xlane.f32.xlu0 %v2109
        %v2111 = vpop.xlane.xlu0 %2110
        %v2112 = vsel %vm241, %v2086, 0.0
        %2113 = vadd.xlane.f32.xlu0 %v2112
        %v2114 = vpop.xlane.xlu0 %2113
        %v2115 = vsel %vm241, %v2088, 0.0
        %2116 = vadd.xlane.f32.xlu0 %v2115
        %v2117 = vpop.xlane.xlu0 %2116
        %v2118 = vsel %vm241, %v2090, 0.0
        %2119 = vadd.xlane.f32.xlu0 %v2118
        %v2120 = vpop.xlane.xlu0 %2119
        %v2121 = vsel %vm241, %v2092, 0.0
        %2122 = vadd.xlane.f32.xlu0 %v2121
        %v2123 = vpop.xlane.xlu0 %2122
        %v2124 = vsel %vm241, %v2094, 0.0
        %2125 = vadd.xlane.f32.xlu0 %v2124
        %v2126 = vpop.xlane.xlu0 %2125
        %v2127 = vmul.f32 %v2105, %v395
        %v2128 = vmul.f32 %v2108, %v395
        %v2129 = vmul.f32 %v2111, %v395
        %v2130 = vmul.f32 %v2114, %v395
        %v2131 = vmul.f32 %v2117, %v395
        %v2132 = vmul.f32 %v2120, %v395
        %v2133 = vmul.f32 %v2123, %v395
        %v2134 = vmul.f32 %v2126, %v395
        %v2135 = vadd.f32 %v2127, 1e-05
        %v2136 = vadd.f32 %v2128, 1e-05
        %v2137 = vadd.f32 %v2129, 1e-05
        %v2138 = vadd.f32 %v2130, 1e-05
        %v2139 = vadd.f32 %v2131, 1e-05
        %v2140 = vadd.f32 %v2132, 1e-05
        %v2141 = vadd.f32 %v2133, 1e-05
        %v2142 = vadd.f32 %v2134, 1e-05
        %v2143 = vrsqrt.pop %v2135
        %v2144 = vrsqrt.pop %v2136
        %v2145 = vrsqrt.pop %v2137
        %v2146 = vrsqrt.pop %v2138
        %v2147 = vrsqrt.pop %v2139
        %v2148 = vrsqrt.pop %v2140
        %v2149 = vrsqrt.pop %v2141
        %v2150 = vrsqrt.pop %v2142
        %v2151 = vmul.f32 %v2055, %v2143
        %v2152 = vmul.f32 %v2056, %v2144
        %v2153 = vmul.f32 %v2057, %v2145
        %v2154 = vmul.f32 %v2058, %v2146
        %v2155 = vmul.f32 %v2059, %v2147
        %v2156 = vmul.f32 %v2060, %v2148
        %v2157 = vmul.f32 %v2061, %v2149
        %v2158 = vmul.f32 %v2062, %v2150
        %2159 = vrot.lane.b32.xlu0 %v1849, 64
        %v2160 = vpop.permute.xlu0 %2159
        %2161 = vrot.lane.b32.xlu0 %v1854, 64
        %v2162 = vpop.permute.xlu0 %2161
        %2163 = vrot.lane.b32.xlu0 %v1859, 64
        %v2164 = vpop.permute.xlu0 %2163
        %2165 = vrot.lane.b32.xlu0 %v1864, 64
        %v2166 = vpop.permute.xlu0 %2165
        %2167 = vrot.lane.b32.xlu0 %v1869, 64
        %v2168 = vpop.permute.xlu0 %2167
        %2169 = vrot.lane.b32.xlu0 %v1874, 64
        %v2170 = vpop.permute.xlu0 %2169
        %2171 = vrot.lane.b32.xlu0 %v1879, 64
        %v2172 = vpop.permute.xlu0 %2171
        %2173 = vrot.lane.b32.xlu0 %v1884, 64
        %v2174 = vpop.permute.xlu0 %2173
        %v2183 = vsel %vm241, %v2160, 0.0
        %2184 = vadd.xlane.f32.xlu0 %v2183
        %v2185 = vpop.xlane.xlu0 %2184
        %v2186 = vsel %vm241, %v2162, 0.0
        %2187 = vadd.xlane.f32.xlu0 %v2186
        %v2188 = vpop.xlane.xlu0 %2187
        %v2189 = vsel %vm241, %v2164, 0.0
        %2190 = vadd.xlane.f32.xlu0 %v2189
        %v2191 = vpop.xlane.xlu0 %2190
        %v2192 = vsel %vm241, %v2166, 0.0
        %2193 = vadd.xlane.f32.xlu0 %v2192
        %v2194 = vpop.xlane.xlu0 %2193
        %v2195 = vsel %vm241, %v2168, 0.0
        %2196 = vadd.xlane.f32.xlu0 %v2195
        %v2197 = vpop.xlane.xlu0 %2196
        %v2198 = vsel %vm241, %v2170, 0.0
        %2199 = vadd.xlane.f32.xlu0 %v2198
        %v2200 = vpop.xlane.xlu0 %2199
        %v2201 = vsel %vm241, %v2172, 0.0
        %2202 = vadd.xlane.f32.xlu0 %v2201
        %v2203 = vpop.xlane.xlu0 %2202
        %v2204 = vsel %vm241, %v2174, 0.0
        %2205 = vadd.xlane.f32.xlu0 %v2204
        %v2206 = vpop.xlane.xlu0 %2205
        %v2207 = vmul.f32 %v2185, %v395
        %v2208 = vmul.f32 %v2188, %v395
        %v2209 = vmul.f32 %v2191, %v395
        %v2210 = vmul.f32 %v2194, %v395
        %v2211 = vmul.f32 %v2197, %v395
        %v2212 = vmul.f32 %v2200, %v395
        %v2213 = vmul.f32 %v2203, %v395
        %v2214 = vmul.f32 %v2206, %v395
        %v2215 = vsub.f32 %v1849, %v2207
        %v2216 = vsub.f32 %v1854, %v2208
        %v2217 = vsub.f32 %v1859, %v2209
        %v2218 = vsub.f32 %v1864, %v2210
        %v2219 = vsub.f32 %v1869, %v2211
        %v2220 = vsub.f32 %v1874, %v2212
        %v2221 = vsub.f32 %v1879, %v2213
        %v2222 = vsub.f32 %v1884, %v2214
        %v2223 = vmul.f32 %v2215, %v2215
        %v2224 = vmul.f32 %v2216, %v2216
        %v2225 = vmul.f32 %v2217, %v2217
        %v2226 = vmul.f32 %v2218, %v2218
        %v2227 = vmul.f32 %v2219, %v2219
        %v2228 = vmul.f32 %v2220, %v2220
        %v2229 = vmul.f32 %v2221, %v2221
        %v2230 = vmul.f32 %v2222, %v2222
        %2239 = vrot.lane.b32.xlu0 %v2223, 64
        %v2240 = vpop.permute.xlu0 %2239
        %2241 = vrot.lane.b32.xlu0 %v2224, 64
        %v2242 = vpop.permute.xlu0 %2241
        %2243 = vrot.lane.b32.xlu0 %v2225, 64
        %v2244 = vpop.permute.xlu0 %2243
        %2245 = vrot.lane.b32.xlu0 %v2226, 64
        %v2246 = vpop.permute.xlu0 %2245
        %2247 = vrot.lane.b32.xlu0 %v2227, 64
        %v2248 = vpop.permute.xlu0 %2247
        %2249 = vrot.lane.b32.xlu0 %v2228, 64
        %v2250 = vpop.permute.xlu0 %2249
        %2251 = vrot.lane.b32.xlu0 %v2229, 64
        %v2252 = vpop.permute.xlu0 %2251
        %2253 = vrot.lane.b32.xlu0 %v2230, 64
        %v2254 = vpop.permute.xlu0 %2253
        %v2263 = vsel %vm241, %v2240, 0.0
        %2264 = vadd.xlane.f32.xlu0 %v2263
        %v2265 = vpop.xlane.xlu0 %2264
        %v2266 = vsel %vm241, %v2242, 0.0
        %2267 = vadd.xlane.f32.xlu0 %v2266
        %v2268 = vpop.xlane.xlu0 %2267
        %v2269 = vsel %vm241, %v2244, 0.0
        %2270 = vadd.xlane.f32.xlu0 %v2269
        %v2271 = vpop.xlane.xlu0 %2270
        %v2272 = vsel %vm241, %v2246, 0.0
        %2273 = vadd.xlane.f32.xlu0 %v2272
        %v2274 = vpop.xlane.xlu0 %2273
        %v2275 = vsel %vm241, %v2248, 0.0
        %2276 = vadd.xlane.f32.xlu0 %v2275
        %v2277 = vpop.xlane.xlu0 %2276
        %v2278 = vsel %vm241, %v2250, 0.0
        %2279 = vadd.xlane.f32.xlu0 %v2278
        %v2280 = vpop.xlane.xlu0 %2279
        %v2281 = vsel %vm241, %v2252, 0.0
        %2282 = vadd.xlane.f32.xlu0 %v2281
        %v2283 = vpop.xlane.xlu0 %2282
        %v2284 = vsel %vm241, %v2254, 0.0
        %2285 = vadd.xlane.f32.xlu0 %v2284
        %v2286 = vpop.xlane.xlu0 %2285
        %v2287 = vmul.f32 %v2265, %v395
        %v2288 = vmul.f32 %v2268, %v395
        %v2289 = vmul.f32 %v2271, %v395
        %v2290 = vmul.f32 %v2274, %v395
        %v2291 = vmul.f32 %v2277, %v395
        %v2292 = vmul.f32 %v2280, %v395
        %v2293 = vmul.f32 %v2283, %v395
        %v2294 = vmul.f32 %v2286, %v395
        %v2295 = vadd.f32 %v2287, 1e-05
        %v2296 = vadd.f32 %v2288, 1e-05
        %v2297 = vadd.f32 %v2289, 1e-05
        %v2298 = vadd.f32 %v2290, 1e-05
        %v2299 = vadd.f32 %v2291, 1e-05
        %v2300 = vadd.f32 %v2292, 1e-05
        %v2301 = vadd.f32 %v2293, 1e-05
        %v2302 = vadd.f32 %v2294, 1e-05
        %v2303 = vrsqrt.pop %v2295
        %v2304 = vrsqrt.pop %v2296
        %v2305 = vrsqrt.pop %v2297
        %v2306 = vrsqrt.pop %v2298
        %v2307 = vrsqrt.pop %v2299
        %v2308 = vrsqrt.pop %v2300
        %v2309 = vrsqrt.pop %v2301
        %v2310 = vrsqrt.pop %v2302
        %v2311 = vmul.f32 %v2215, %v2303
        %v2312 = vmul.f32 %v2216, %v2304
        %v2313 = vmul.f32 %v2217, %v2305
        %v2314 = vmul.f32 %v2218, %v2306
        %v2315 = vmul.f32 %v2219, %v2307
        %v2316 = vmul.f32 %v2220, %v2308
        %v2317 = vmul.f32 %v2221, %v2309
        %v2318 = vmul.f32 %v2222, %v2310
        %2319 = vrot.lane.b32.xlu0 %v1849, 32
        %v2320 = vpop.permute.xlu0 %2319
        %2321 = vrot.lane.b32.xlu0 %v1854, 32
        %v2322 = vpop.permute.xlu0 %2321
        %2323 = vrot.lane.b32.xlu0 %v1859, 32
        %v2324 = vpop.permute.xlu0 %2323
        %2325 = vrot.lane.b32.xlu0 %v1864, 32
        %v2326 = vpop.permute.xlu0 %2325
        %2327 = vrot.lane.b32.xlu0 %v1869, 32
        %v2328 = vpop.permute.xlu0 %2327
        %2329 = vrot.lane.b32.xlu0 %v1874, 32
        %v2330 = vpop.permute.xlu0 %2329
        %2331 = vrot.lane.b32.xlu0 %v1879, 32
        %v2332 = vpop.permute.xlu0 %2331
        %2333 = vrot.lane.b32.xlu0 %v1884, 32
        %v2334 = vpop.permute.xlu0 %2333
        %v2343 = vsel %vm241, %v2320, 0.0
        %2344 = vadd.xlane.f32.xlu0 %v2343
        %v2345 = vpop.xlane.xlu0 %2344
        %v2346 = vsel %vm241, %v2322, 0.0
        %2347 = vadd.xlane.f32.xlu0 %v2346
        %v2348 = vpop.xlane.xlu0 %2347
        %v2349 = vsel %vm241, %v2324, 0.0
        %2350 = vadd.xlane.f32.xlu0 %v2349
        %v2351 = vpop.xlane.xlu0 %2350
        %v2352 = vsel %vm241, %v2326, 0.0
        %2353 = vadd.xlane.f32.xlu0 %v2352
        %v2354 = vpop.xlane.xlu0 %2353
        %v2355 = vsel %vm241, %v2328, 0.0
        %2356 = vadd.xlane.f32.xlu0 %v2355
        %v2357 = vpop.xlane.xlu0 %2356
        %v2358 = vsel %vm241, %v2330, 0.0
        %2359 = vadd.xlane.f32.xlu0 %v2358
        %v2360 = vpop.xlane.xlu0 %2359
        %v2361 = vsel %vm241, %v2332, 0.0
        %2362 = vadd.xlane.f32.xlu0 %v2361
        %v2363 = vpop.xlane.xlu0 %2362
        %v2364 = vsel %vm241, %v2334, 0.0
        %2365 = vadd.xlane.f32.xlu0 %v2364
        %v2366 = vpop.xlane.xlu0 %2365
        %v2367 = vmul.f32 %v2345, %v395
        %v2368 = vmul.f32 %v2348, %v395
        %v2369 = vmul.f32 %v2351, %v395
        %v2370 = vmul.f32 %v2354, %v395
        %v2371 = vmul.f32 %v2357, %v395
        %v2372 = vmul.f32 %v2360, %v395
        %v2373 = vmul.f32 %v2363, %v395
        %v2374 = vmul.f32 %v2366, %v395
        %v2375 = vsub.f32 %v1849, %v2367
        %v2376 = vsub.f32 %v1854, %v2368
        %v2377 = vsub.f32 %v1859, %v2369
        %v2378 = vsub.f32 %v1864, %v2370
        %v2379 = vsub.f32 %v1869, %v2371
        %v2380 = vsub.f32 %v1874, %v2372
        %v2381 = vsub.f32 %v1879, %v2373
        %v2382 = vsub.f32 %v1884, %v2374
        %v2383 = vmul.f32 %v2375, %v2375
        %v2384 = vmul.f32 %v2376, %v2376
        %v2385 = vmul.f32 %v2377, %v2377
        %v2386 = vmul.f32 %v2378, %v2378
        %v2387 = vmul.f32 %v2379, %v2379
        %v2388 = vmul.f32 %v2380, %v2380
        %v2389 = vmul.f32 %v2381, %v2381
        %v2390 = vmul.f32 %v2382, %v2382
        %2399 = vrot.lane.b32.xlu0 %v2383, 32
        %v2400 = vpop.permute.xlu0 %2399
        %2401 = vrot.lane.b32.xlu0 %v2384, 32
        %v2402 = vpop.permute.xlu0 %2401
        %2403 = vrot.lane.b32.xlu0 %v2385, 32
        %v2404 = vpop.permute.xlu0 %2403
        %2405 = vrot.lane.b32.xlu0 %v2386, 32
        %v2406 = vpop.permute.xlu0 %2405
        %2407 = vrot.lane.b32.xlu0 %v2387, 32
        %v2408 = vpop.permute.xlu0 %2407
        %2409 = vrot.lane.b32.xlu0 %v2388, 32
        %v2410 = vpop.permute.xlu0 %2409
        %2411 = vrot.lane.b32.xlu0 %v2389, 32
        %v2412 = vpop.permute.xlu0 %2411
        %2413 = vrot.lane.b32.xlu0 %v2390, 32
        %v2414 = vpop.permute.xlu0 %2413
        %v2423 = vsel %vm241, %v2400, 0.0
        %2424 = vadd.xlane.f32.xlu0 %v2423
        %v2425 = vpop.xlane.xlu0 %2424
        %v2426 = vsel %vm241, %v2402, 0.0
        %2427 = vadd.xlane.f32.xlu0 %v2426
        %v2428 = vpop.xlane.xlu0 %2427
        %v2429 = vsel %vm241, %v2404, 0.0
        %2430 = vadd.xlane.f32.xlu0 %v2429
        %v2431 = vpop.xlane.xlu0 %2430
        %v2432 = vsel %vm241, %v2406, 0.0
        %2433 = vadd.xlane.f32.xlu0 %v2432
        %v2434 = vpop.xlane.xlu0 %2433
        %v2435 = vsel %vm241, %v2408, 0.0
        %2436 = vadd.xlane.f32.xlu0 %v2435
        %v2437 = vpop.xlane.xlu0 %2436
        %v2438 = vsel %vm241, %v2410, 0.0
        %2439 = vadd.xlane.f32.xlu0 %v2438
        %v2440 = vpop.xlane.xlu0 %2439
        %v2441 = vsel %vm241, %v2412, 0.0
        %2442 = vadd.xlane.f32.xlu0 %v2441
        %v2443 = vpop.xlane.xlu0 %2442
        %v2444 = vsel %vm241, %v2414, 0.0
        %2445 = vadd.xlane.f32.xlu0 %v2444
        %v2446 = vpop.xlane.xlu0 %2445
        %v2447 = vmul.f32 %v2425, %v395
        %v2448 = vmul.f32 %v2428, %v395
        %v2449 = vmul.f32 %v2431, %v395
        %v2450 = vmul.f32 %v2434, %v395
        %v2451 = vmul.f32 %v2437, %v395
        %v2452 = vmul.f32 %v2440, %v395
        %v2453 = vmul.f32 %v2443, %v395
        %v2454 = vmul.f32 %v2446, %v395
        %v2455 = vadd.f32 %v2447, 1e-05
        %v2456 = vadd.f32 %v2448, 1e-05
        %v2457 = vadd.f32 %v2449, 1e-05
        %v2458 = vadd.f32 %v2450, 1e-05
        %v2459 = vadd.f32 %v2451, 1e-05
        %v2460 = vadd.f32 %v2452, 1e-05
        %v2461 = vadd.f32 %v2453, 1e-05
        %v2462 = vadd.f32 %v2454, 1e-05
        %v2463 = vrsqrt.pop %v2455
        %v2464 = vrsqrt.pop %v2456
        %v2465 = vrsqrt.pop %v2457
        %v2466 = vrsqrt.pop %v2458
        %v2467 = vrsqrt.pop %v2459
        %v2468 = vrsqrt.pop %v2460
        %v2469 = vrsqrt.pop %v2461
        %v2470 = vrsqrt.pop %v2462
        %v2471 = vmul.f32 %v2375, %v2463
        %v2472 = vmul.f32 %v2376, %v2464
        %v2473 = vmul.f32 %v2377, %v2465
        %v2474 = vmul.f32 %v2378, %v2466
        %v2475 = vmul.f32 %v2379, %v2467
        %v2476 = vmul.f32 %v2380, %v2468
        %v2477 = vmul.f32 %v2381, %v2469
        %v2478 = vmul.f32 %v2382, %v2470
        %v2479 = vsel %vm241, %v1983, %v2151
        %v2480 = vsel %vm241, %v1984, %v2152
        %v2481 = vsel %vm241, %v1985, %v2153
        %v2482 = vsel %vm241, %v1986, %v2154
        %v2483 = vsel %vm241, %v1987, %v2155
        %v2484 = vsel %vm241, %v1988, %v2156
        %v2485 = vsel %vm241, %v1989, %v2157
        %v2486 = vsel %vm241, %v1990, %v2158
        %v2487 = vsel %vm972, %v2479, %v2311
        %v2488 = vsel %vm972, %v2480, %v2312
        %v2489 = vsel %vm972, %v2481, %v2313
        %v2490 = vsel %vm972, %v2482, %v2314
        %v2491 = vsel %vm972, %v2483, %v2315
        %v2492 = vsel %vm972, %v2484, %v2316
        %v2493 = vsel %vm972, %v2485, %v2317
        %v2494 = vsel %vm972, %v2486, %v2318
        %v2495 = vsel %vm981, %v2487, %v2471
        %v2496 = vsel %vm981, %v2488, %v2472
        %v2497 = vsel %vm981, %v2489, %v2473
        %v2498 = vsel %vm981, %v2490, %v2474
        %v2499 = vsel %vm981, %v2491, %v2475
        %v2500 = vsel %vm981, %v2492, %v2476
        %v2501 = vsel %vm981, %v2493, %v2477
        %v2502 = vsel %vm981, %v2494, %v2478
        %v2503 = vmul.f32 %v2495, %v994
        %v2504 = vmul.f32 %v2496, %v994
        %v2505 = vmul.f32 %v2497, %v994
        %v2506 = vmul.f32 %v2498, %v994
        %v2507 = vmul.f32 %v2499, %v994
        %v2508 = vmul.f32 %v2500, %v994
        %v2509 = vmul.f32 %v2501, %v994
        %v2510 = vmul.f32 %v2502, %v994
        %v2511 = vadd.f32 %v2503, %v1008
        %v2512 = vadd.f32 %v2504, %v1008
        %v2513 = vadd.f32 %v2505, %v1008
        %v2514 = vadd.f32 %v2506, %v1008
        %v2515 = vadd.f32 %v2507, %v1008
        %v2516 = vadd.f32 %v2508, %v1008
        %v2517 = vadd.f32 %v2509, %v1008
        %v2518 = vadd.f32 %v2510, %v1008
        %s2519 = scalar_lea.vmem %s215, 16 [#allocation2]
        %2520 = vst [vmem:[%s2519] sm:$0xff] %v2511
        %2521 = vst [vmem:[%s2519 + $0x20] sm:$0xff] %v2512
        %2522 = vst [vmem:[%s2519 + $0x40] sm:$0xff] %v2513
        %2523 = vst [vmem:[%s2519 + $0x60] sm:$0xff] %v2514
        %2524 = vst [vmem:[%s2519 + $0x80] sm:$0xff] %v2515
        %2525 = vst [vmem:[%s2519 + $0xa0] sm:$0xff] %v2516
        %2526 = vst [vmem:[%s2519 + $0xc0] sm:$0xff] %v2517
        %2527 = vst [vmem:[%s2519 + $0xe0] sm:$0xff] %v2518
        %s2528 = scalar_lea.vmem %s1, 96
        %v2529 = vld [vmem:[%s2528] sm:$0xff]
        %v2530 = vld [vmem:[%s2528 + $0x8] sm:$0xff]
        %v2531 = vld [vmem:[%s2528 + $0x10] sm:$0xff]
        %v2532 = vld [vmem:[%s2528 + $0x18] sm:$0xff]
        %2533 = vmatprep.subr.mxu0 0.0
        %2534 = vmatpush1.msra.mxu0 %v2529
        %2535 = vmatprep.subr.mxu0 0.0
        %2536 = vmatpush1.msra.mxu0 %v2530
        %2537 = vmatprep.subr.mxu0 0.0
        %2538 = vmatpush1.msra.mxu0 %v2531
        %2539 = vmatprep.subr.mxu0 0.0
        %2540 = vmatpush1.msra.mxu0 %v2532
        %2541 = vmatprep.subr.mxu0 0.0
        %2542 = vmatpush1.msra.mxu0 0.0
        %2543 = vmatprep.subr.mxu0 0.0
        %2544 = vmatpush1.msra.mxu0 0.0
        %2545 = vmatprep.subr.mxu0 0.0
        %2546 = vmatpush1.msra.mxu0 0.0
        %2547 = vmatprep.subr.mxu0 0.0
        %2548 = vmatpush1.msra.mxu0 0.0
        %2549 = vmatprep.subr.mxu0 0.0
        %2550 = vmatpush1.msra.mxu0 0.0
        %2551 = vmatprep.subr.mxu0 0.0
        %2552 = vmatpush1.msra.mxu0 0.0
        %2553 = vmatprep.subr.mxu0 0.0
        %2554 = vmatpush1.msra.mxu0 0.0
        %2555 = vmatprep.subr.mxu0 0.0
        %2556 = vmatpush1.msra.mxu0 0.0
        %2557 = vmatprep.subr.mxu0 0.0
        %2558 = vmatpush1.msra.mxu0 0.0
        %2559 = vmatprep.subr.mxu0 0.0
        %2560 = vmatpush1.msra.mxu0 0.0
        %2561 = vmatprep.subr.mxu0 0.0
        %2562 = vmatpush1.msra.mxu0 0.0
        %2563 = vmatprep.subr.mxu0 0.0
        %2564 = vmatpush1.msra.mxu0 0.0
        %2565 = vmatprep.subr.mxu0 0.0
        %2566 = vmatpush1.msra.mxu0 0.0
        %2567 = vmatprep.subr.mxu0 0.0
        %2568 = vmatpush1.msra.mxu0 0.0
        %2569 = vmatprep.subr.mxu0 0.0
        %2570 = vmatpush1.msra.mxu0 0.0
        %2571 = vmatprep.subr.mxu0 0.0
        %2572 = vmatpush1.msra.mxu0 0.0
        %2573 = vmatprep.subr.mxu0 0.0
        %2574 = vmatpush1.msra.mxu0 0.0
        %2575 = vmatprep.subr.mxu0 0.0
        %2576 = vmatpush1.msra.mxu0 0.0
        %2577 = vmatprep.subr.mxu0 0.0
        %2578 = vmatpush1.msra.mxu0 0.0
        %2579 = vmatprep.subr.mxu0 0.0
        %2580 = vmatpush1.msra.mxu0 0.0
        %2581 = vmatprep.subr.mxu0 0.0
        %2582 = vmatpush1.msra.mxu0 0.0
        %2583 = vmatprep.subr.mxu0 0.0
        %2584 = vmatpush1.msra.mxu0 0.0
        %2585 = vmatprep.subr.mxu0 0.0
        %2586 = vmatpush1.msra.mxu0 0.0
        %2587 = vmatprep.subr.mxu0 0.0
        %2588 = vmatpush1.msra.mxu0 0.0
        %2589 = vmatprep.subr.mxu0 0.0
        %2590 = vmatpush1.msra.mxu0 0.0
        %2591 = vmatprep.subr.mxu0 0.0
        %2592 = vmatpush1.msra.mxu0 0.0
        %2593 = vmatprep.subr.mxu0 0.0
        %2594 = vmatpush1.msra.mxu0 0.0
        %2595 = vmatprep.subr.mxu0 0.0
        %2596 = vmatpush1.msra.mxu0 0.0
        %2597 = vmatprep.mubr.f32.mxu0 0.0
        %2598 = vmatmul.mubr.f32.gmra.mrb[0].mxu0 %v243
        %v2599 = vpop.f32.mrb[0].mxu0
        %v2600 = vadd.f32 0.0, %v2599
        %v2601 = vpop.f32.mrb[0].mxu0
        %2602 = vmatprep.mubr.f32.mxu0 0.0
        %2603 = vmatmul.mubr.f32.gmra.mrb[0].mxu0 %v246
        %v2604 = vpop.f32.mrb[0].mxu0
        %v2605 = vadd.f32 0.0, %v2604
        %v2606 = vpop.f32.mrb[0].mxu0
        %2607 = vmatprep.mubr.f32.mxu0 0.0
        %2608 = vmatmul.mubr.f32.gmra.mrb[0].mxu0 %v249
        %v2609 = vpop.f32.mrb[0].mxu0
        %v2610 = vadd.f32 0.0, %v2609
        %v2611 = vpop.f32.mrb[0].mxu0
        %2612 = vmatprep.mubr.f32.mxu0 0.0
        %2613 = vmatmul.mubr.f32.gmra.mrb[0].mxu0 %v252
        %v2614 = vpop.f32.mrb[0].mxu0
        %v2615 = vadd.f32 0.0, %v2614
        %v2616 = vpop.f32.mrb[0].mxu0
        %2617 = vmatprep.mubr.f32.mxu0 0.0
        %2618 = vmatmul.mubr.f32.gmra.mrb[0].mxu0 %v255
        %v2619 = vpop.f32.mrb[0].mxu0
        %v2620 = vadd.f32 0.0, %v2619
        %v2621 = vpop.f32.mrb[0].mxu0
        %2622 = vmatprep.mubr.f32.mxu0 0.0
        %2623 = vmatmul.mubr.f32.gmra.mrb[0].mxu0 %v258
        %v2624 = vpop.f32.mrb[0].mxu0
        %v2625 = vadd.f32 0.0, %v2624
        %v2626 = vpop.f32.mrb[0].mxu0
        %2627 = vmatprep.mubr.f32.mxu0 0.0
        %2628 = vmatmul.mubr.f32.gmra.mrb[0].mxu0 %v261
        %v2629 = vpop.f32.mrb[0].mxu0
        %v2630 = vadd.f32 0.0, %v2629
        %v2631 = vpop.f32.mrb[0].mxu0
        %2632 = vmatprep.mubr.f32.mxu0 0.0
        %2633 = vmatmul.mubr.f32.gmra.mrb[0].mxu0 %v264
        %v2634 = vpop.f32.mrb[0].mxu0
        %v2635 = vadd.f32 0.0, %v2634
        %v2636 = vpop.f32.mrb[0].mxu0
        %2637 = vdwg.mxu0
        %v2638 = vsel %vm241, %v2600, 0.0
        %2639 = vadd.xlane.f32.xlu0 %v2638
        %v2640 = vpop.xlane.xlu0 %2639
        %v2641 = vsel %vm241, %v2605, 0.0
        %2642 = vadd.xlane.f32.xlu0 %v2641
        %v2643 = vpop.xlane.xlu0 %2642
        %v2644 = vsel %vm241, %v2610, 0.0
        %2645 = vadd.xlane.f32.xlu0 %v2644
        %v2646 = vpop.xlane.xlu0 %2645
        %v2647 = vsel %vm241, %v2615, 0.0
        %2648 = vadd.xlane.f32.xlu0 %v2647
        %v2649 = vpop.xlane.xlu0 %2648
        %v2650 = vsel %vm241, %v2620, 0.0
        %2651 = vadd.xlane.f32.xlu0 %v2650
        %v2652 = vpop.xlane.xlu0 %2651
        %v2653 = vsel %vm241, %v2625, 0.0
        %2654 = vadd.xlane.f32.xlu0 %v2653
        %v2655 = vpop.xlane.xlu0 %2654
        %v2656 = vsel %vm241, %v2630, 0.0
        %2657 = vadd.xlane.f32.xlu0 %v2656
        %v2658 = vpop.xlane.xlu0 %2657
        %v2659 = vsel %vm241, %v2635, 0.0
        %2660 = vadd.xlane.f32.xlu0 %v2659
        %v2661 = vpop.xlane.xlu0 %2660
        %v2662 = vmul.f32 %v2640, %v395
        %v2663 = vmul.f32 %v2643, %v395
        %v2664 = vmul.f32 %v2646, %v395
        %v2665 = vmul.f32 %v2649, %v395
        %v2666 = vmul.f32 %v2652, %v395
        %v2667 = vmul.f32 %v2655, %v395
        %v2668 = vmul.f32 %v2658, %v395
        %v2669 = vmul.f32 %v2661, %v395
        %v2670 = vsub.f32 %v2600, %v2662
        %v2671 = vsub.f32 %v2605, %v2663
        %v2672 = vsub.f32 %v2610, %v2664
        %v2673 = vsub.f32 %v2615, %v2665
        %v2674 = vsub.f32 %v2620, %v2666
        %v2675 = vsub.f32 %v2625, %v2667
        %v2676 = vsub.f32 %v2630, %v2668
        %v2677 = vsub.f32 %v2635, %v2669
        %v2678 = vmul.f32 %v2670, %v2670
        %v2679 = vmul.f32 %v2671, %v2671
        %v2680 = vmul.f32 %v2672, %v2672
        %v2681 = vmul.f32 %v2673, %v2673
        %v2682 = vmul.f32 %v2674, %v2674
        %v2683 = vmul.f32 %v2675, %v2675
        %v2684 = vmul.f32 %v2676, %v2676
        %v2685 = vmul.f32 %v2677, %v2677
        %v2686 = vsel %vm241, %v2678, 0.0
        %2687 = vadd.xlane.f32.xlu0 %v2686
        %v2688 = vpop.xlane.xlu0 %2687
        %v2689 = vsel %vm241, %v2679, 0.0
        %2690 = vadd.xlane.f32.xlu0 %v2689
        %v2691 = vpop.xlane.xlu0 %2690
        %v2692 = vsel %vm241, %v2680, 0.0
        %2693 = vadd.xlane.f32.xlu0 %v2692
        %v2694 = vpop.xlane.xlu0 %2693
        %v2695 = vsel %vm241, %v2681, 0.0
        %2696 = vadd.xlane.f32.xlu0 %v2695
        %v2697 = vpop.xlane.xlu0 %2696
        %v2698 = vsel %vm241, %v2682, 0.0
        %2699 = vadd.xlane.f32.xlu0 %v2698
        %v2700 = vpop.xlane.xlu0 %2699
        %v2701 = vsel %vm241, %v2683, 0.0
        %2702 = vadd.xlane.f32.xlu0 %v2701
        %v2703 = vpop.xlane.xlu0 %2702
        %v2704 = vsel %vm241, %v2684, 0.0
        %2705 = vadd.xlane.f32.xlu0 %v2704
        %v2706 = vpop.xlane.xlu0 %2705
        %v2707 = vsel %vm241, %v2685, 0.0
        %2708 = vadd.xlane.f32.xlu0 %v2707
        %v2709 = vpop.xlane.xlu0 %2708
        %v2710 = vmul.f32 %v2688, %v395
        %v2711 = vmul.f32 %v2691, %v395
        %v2712 = vmul.f32 %v2694, %v395
        %v2713 = vmul.f32 %v2697, %v395
        %v2714 = vmul.f32 %v2700, %v395
        %v2715 = vmul.f32 %v2703, %v395
        %v2716 = vmul.f32 %v2706, %v395
        %v2717 = vmul.f32 %v2709, %v395
        %v2718 = vadd.f32 %v2710, 1e-05
        %v2719 = vadd.f32 %v2711, 1e-05
        %v2720 = vadd.f32 %v2712, 1e-05
        %v2721 = vadd.f32 %v2713, 1e-05
        %v2722 = vadd.f32 %v2714, 1e-05
        %v2723 = vadd.f32 %v2715, 1e-05
        %v2724 = vadd.f32 %v2716, 1e-05
        %v2725 = vadd.f32 %v2717, 1e-05
        %v2726 = vrsqrt.pop %v2718
        %v2727 = vrsqrt.pop %v2719
        %v2728 = vrsqrt.pop %v2720
        %v2729 = vrsqrt.pop %v2721
        %v2730 = vrsqrt.pop %v2722
        %v2731 = vrsqrt.pop %v2723
        %v2732 = vrsqrt.pop %v2724
        %v2733 = vrsqrt.pop %v2725
        %v2734 = vmul.f32 %v2670, %v2726
        %v2735 = vmul.f32 %v2671, %v2727
        %v2736 = vmul.f32 %v2672, %v2728
        %v2737 = vmul.f32 %v2673, %v2729
        %v2738 = vmul.f32 %v2674, %v2730
        %v2739 = vmul.f32 %v2675, %v2731
        %v2740 = vmul.f32 %v2676, %v2732
        %v2741 = vmul.f32 %v2677, %v2733
        %2750 = vrot.lane.b32.xlu0 %v2600, 96
        %v2751 = vpop.permute.xlu0 %2750
        %2752 = vrot.lane.b32.xlu0 %v2605, 96
        %v2753 = vpop.permute.xlu0 %2752
        %2754 = vrot.lane.b32.xlu0 %v2610, 96
        %v2755 = vpop.permute.xlu0 %2754
        %2756 = vrot.lane.b32.xlu0 %v2615, 96
        %v2757 = vpop.permute.xlu0 %2756
        %2758 = vrot.lane.b32.xlu0 %v2620, 96
        %v2759 = vpop.permute.xlu0 %2758
        %2760 = vrot.lane.b32.xlu0 %v2625, 96
        %v2761 = vpop.permute.xlu0 %2760
        %2762 = vrot.lane.b32.xlu0 %v2630, 96
        %v2763 = vpop.permute.xlu0 %2762
        %2764 = vrot.lane.b32.xlu0 %v2635, 96
        %v2765 = vpop.permute.xlu0 %2764
        %v2774 = vsel %vm241, %v2751, 0.0
        %2775 = vadd.xlane.f32.xlu0 %v2774
        %v2776 = vpop.xlane.xlu0 %2775
        %v2777 = vsel %vm241, %v2753, 0.0
        %2778 = vadd.xlane.f32.xlu0 %v2777
        %v2779 = vpop.xlane.xlu0 %2778
        %v2780 = vsel %vm241, %v2755, 0.0
        %2781 = vadd.xlane.f32.xlu0 %v2780
        %v2782 = vpop.xlane.xlu0 %2781
        %v2783 = vsel %vm241, %v2757, 0.0
        %2784 = vadd.xlane.f32.xlu0 %v2783
        %v2785 = vpop.xlane.xlu0 %2784
        %v2786 = vsel %vm241, %v2759, 0.0
        %2787 = vadd.xlane.f32.xlu0 %v2786
        %v2788 = vpop.xlane.xlu0 %2787
        %v2789 = vsel %vm241, %v2761, 0.0
        %2790 = vadd.xlane.f32.xlu0 %v2789
        %v2791 = vpop.xlane.xlu0 %2790
        %v2792 = vsel %vm241, %v2763, 0.0
        %2793 = vadd.xlane.f32.xlu0 %v2792
        %v2794 = vpop.xlane.xlu0 %2793
        %v2795 = vsel %vm241, %v2765, 0.0
        %2796 = vadd.xlane.f32.xlu0 %v2795
        %v2797 = vpop.xlane.xlu0 %2796
        %v2798 = vmul.f32 %v2776, %v395
        %v2799 = vmul.f32 %v2779, %v395
        %v2800 = vmul.f32 %v2782, %v395
        %v2801 = vmul.f32 %v2785, %v395
        %v2802 = vmul.f32 %v2788, %v395
        %v2803 = vmul.f32 %v2791, %v395
        %v2804 = vmul.f32 %v2794, %v395
        %v2805 = vmul.f32 %v2797, %v395
        %v2806 = vsub.f32 %v2600, %v2798
        %v2807 = vsub.f32 %v2605, %v2799
        %v2808 = vsub.f32 %v2610, %v2800
        %v2809 = vsub.f32 %v2615, %v2801
        %v2810 = vsub.f32 %v2620, %v2802
        %v2811 = vsub.f32 %v2625, %v2803
        %v2812 = vsub.f32 %v2630, %v2804
        %v2813 = vsub.f32 %v2635, %v2805
        %v2814 = vmul.f32 %v2806, %v2806
        %v2815 = vmul.f32 %v2807, %v2807
        %v2816 = vmul.f32 %v2808, %v2808
        %v2817 = vmul.f32 %v2809, %v2809
        %v2818 = vmul.f32 %v2810, %v2810
        %v2819 = vmul.f32 %v2811, %v2811
        %v2820 = vmul.f32 %v2812, %v2812
        %v2821 = vmul.f32 %v2813, %v2813
        %2830 = vrot.lane.b32.xlu0 %v2814, 96
        %v2831 = vpop.permute.xlu0 %2830
        %2832 = vrot.lane.b32.xlu0 %v2815, 96
        %v2833 = vpop.permute.xlu0 %2832
        %2834 = vrot.lane.b32.xlu0 %v2816, 96
        %v2835 = vpop.permute.xlu0 %2834
        %2836 = vrot.lane.b32.xlu0 %v2817, 96
        %v2837 = vpop.permute.xlu0 %2836
        %2838 = vrot.lane.b32.xlu0 %v2818, 96
        %v2839 = vpop.permute.xlu0 %2838
        %2840 = vrot.lane.b32.xlu0 %v2819, 96
        %v2841 = vpop.permute.xlu0 %2840
        %2842 = vrot.lane.b32.xlu0 %v2820, 96
        %v2843 = vpop.permute.xlu0 %2842
        %2844 = vrot.lane.b32.xlu0 %v2821, 96
        %v2845 = vpop.permute.xlu0 %2844
        %v2854 = vsel %vm241, %v2831, 0.0
        %2855 = vadd.xlane.f32.xlu0 %v2854
        %v2856 = vpop.xlane.xlu0 %2855
        %v2857 = vsel %vm241, %v2833, 0.0
        %2858 = vadd.xlane.f32.xlu0 %v2857
        %v2859 = vpop.xlane.xlu0 %2858
        %v2860 = vsel %vm241, %v2835, 0.0
        %2861 = vadd.xlane.f32.xlu0 %v2860
        %v2862 = vpop.xlane.xlu0 %2861
        %v2863 = vsel %vm241, %v2837, 0.0
        %2864 = vadd.xlane.f32.xlu0 %v2863
        %v2865 = vpop.xlane.xlu0 %2864
        %v2866 = vsel %vm241, %v2839, 0.0
        %2867 = vadd.xlane.f32.xlu0 %v2866
        %v2868 = vpop.xlane.xlu0 %2867
        %v2869 = vsel %vm241, %v2841, 0.0
        %2870 = vadd.xlane.f32.xlu0 %v2869
        %v2871 = vpop.xlane.xlu0 %2870
        %v2872 = vsel %vm241, %v2843, 0.0
        %2873 = vadd.xlane.f32.xlu0 %v2872
        %v2874 = vpop.xlane.xlu0 %2873
        %v2875 = vsel %vm241, %v2845, 0.0
        %2876 = vadd.xlane.f32.xlu0 %v2875
        %v2877 = vpop.xlane.xlu0 %2876
        %v2878 = vmul.f32 %v2856, %v395
        %v2879 = vmul.f32 %v2859, %v395
        %v2880 = vmul.f32 %v2862, %v395
        %v2881 = vmul.f32 %v2865, %v395
        %v2882 = vmul.f32 %v2868, %v395
        %v2883 = vmul.f32 %v2871, %v395
        %v2884 = vmul.f32 %v2874, %v395
        %v2885 = vmul.f32 %v2877, %v395
        %v2886 = vadd.f32 %v2878, 1e-05
        %v2887 = vadd.f32 %v2879, 1e-05
        %v2888 = vadd.f32 %v2880, 1e-05
        %v2889 = vadd.f32 %v2881, 1e-05
        %v2890 = vadd.f32 %v2882, 1e-05
        %v2891 = vadd.f32 %v2883, 1e-05
        %v2892 = vadd.f32 %v2884, 1e-05
        %v2893 = vadd.f32 %v2885, 1e-05
        %v2894 = vrsqrt.pop %v2886
        %v2895 = vrsqrt.pop %v2887
        %v2896 = vrsqrt.pop %v2888
        %v2897 = vrsqrt.pop %v2889
        %v2898 = vrsqrt.pop %v2890
        %v2899 = vrsqrt.pop %v2891
        %v2900 = vrsqrt.pop %v2892
        %v2901 = vrsqrt.pop %v2893
        %v2902 = vmul.f32 %v2806, %v2894
        %v2903 = vmul.f32 %v2807, %v2895
        %v2904 = vmul.f32 %v2808, %v2896
        %v2905 = vmul.f32 %v2809, %v2897
        %v2906 = vmul.f32 %v2810, %v2898
        %v2907 = vmul.f32 %v2811, %v2899
        %v2908 = vmul.f32 %v2812, %v2900
        %v2909 = vmul.f32 %v2813, %v2901
        %2910 = vrot.lane.b32.xlu0 %v2600, 64
        %v2911 = vpop.permute.xlu0 %2910
        %2912 = vrot.lane.b32.xlu0 %v2605, 64
        %v2913 = vpop.permute.xlu0 %2912
        %2914 = vrot.lane.b32.xlu0 %v2610, 64
        %v2915 = vpop.permute.xlu0 %2914
        %2916 = vrot.lane.b32.xlu0 %v2615, 64
        %v2917 = vpop.permute.xlu0 %2916
        %2918 = vrot.lane.b32.xlu0 %v2620, 64
        %v2919 = vpop.permute.xlu0 %2918
        %2920 = vrot.lane.b32.xlu0 %v2625, 64
        %v2921 = vpop.permute.xlu0 %2920
        %2922 = vrot.lane.b32.xlu0 %v2630, 64
        %v2923 = vpop.permute.xlu0 %2922
        %2924 = vrot.lane.b32.xlu0 %v2635, 64
        %v2925 = vpop.permute.xlu0 %2924
        %v2934 = vsel %vm241, %v2911, 0.0
        %2935 = vadd.xlane.f32.xlu0 %v2934
        %v2936 = vpop.xlane.xlu0 %2935
        %v2937 = vsel %vm241, %v2913, 0.0
        %2938 = vadd.xlane.f32.xlu0 %v2937
        %v2939 = vpop.xlane.xlu0 %2938
        %v2940 = vsel %vm241, %v2915, 0.0
        %2941 = vadd.xlane.f32.xlu0 %v2940
        %v2942 = vpop.xlane.xlu0 %2941
        %v2943 = vsel %vm241, %v2917, 0.0
        %2944 = vadd.xlane.f32.xlu0 %v2943
        %v2945 = vpop.xlane.xlu0 %2944
        %v2946 = vsel %vm241, %v2919, 0.0
        %2947 = vadd.xlane.f32.xlu0 %v2946
        %v2948 = vpop.xlane.xlu0 %2947
        %v2949 = vsel %vm241, %v2921, 0.0
        %2950 = vadd.xlane.f32.xlu0 %v2949
        %v2951 = vpop.xlane.xlu0 %2950
        %v2952 = vsel %vm241, %v2923, 0.0
        %2953 = vadd.xlane.f32.xlu0 %v2952
        %v2954 = vpop.xlane.xlu0 %2953
        %v2955 = vsel %vm241, %v2925, 0.0
        %2956 = vadd.xlane.f32.xlu0 %v2955
        %v2957 = vpop.xlane.xlu0 %2956
        %v2958 = vmul.f32 %v2936, %v395
        %v2959 = vmul.f32 %v2939, %v395
        %v2960 = vmul.f32 %v2942, %v395
        %v2961 = vmul.f32 %v2945, %v395
        %v2962 = vmul.f32 %v2948, %v395
        %v2963 = vmul.f32 %v2951, %v395
        %v2964 = vmul.f32 %v2954, %v395
        %v2965 = vmul.f32 %v2957, %v395
        %v2966 = vsub.f32 %v2600, %v2958
        %v2967 = vsub.f32 %v2605, %v2959
        %v2968 = vsub.f32 %v2610, %v2960
        %v2969 = vsub.f32 %v2615, %v2961
        %v2970 = vsub.f32 %v2620, %v2962
        %v2971 = vsub.f32 %v2625, %v2963
        %v2972 = vsub.f32 %v2630, %v2964
        %v2973 = vsub.f32 %v2635, %v2965
        %v2974 = vmul.f32 %v2966, %v2966
        %v2975 = vmul.f32 %v2967, %v2967
        %v2976 = vmul.f32 %v2968, %v2968
        %v2977 = vmul.f32 %v2969, %v2969
        %v2978 = vmul.f32 %v2970, %v2970
        %v2979 = vmul.f32 %v2971, %v2971
        %v2980 = vmul.f32 %v2972, %v2972
        %v2981 = vmul.f32 %v2973, %v2973
        %2990 = vrot.lane.b32.xlu0 %v2974, 64
        %v2991 = vpop.permute.xlu0 %2990
        %2992 = vrot.lane.b32.xlu0 %v2975, 64
        %v2993 = vpop.permute.xlu0 %2992
        %2994 = vrot.lane.b32.xlu0 %v2976, 64
        %v2995 = vpop.permute.xlu0 %2994
        %2996 = vrot.lane.b32.xlu0 %v2977, 64
        %v2997 = vpop.permute.xlu0 %2996
        %2998 = vrot.lane.b32.xlu0 %v2978, 64
        %v2999 = vpop.permute.xlu0 %2998
        %3000 = vrot.lane.b32.xlu0 %v2979, 64
        %v3001 = vpop.permute.xlu0 %3000
        %3002 = vrot.lane.b32.xlu0 %v2980, 64
        %v3003 = vpop.permute.xlu0 %3002
        %3004 = vrot.lane.b32.xlu0 %v2981, 64
        %v3005 = vpop.permute.xlu0 %3004
        %v3014 = vsel %vm241, %v2991, 0.0
        %3015 = vadd.xlane.f32.xlu0 %v3014
        %v3016 = vpop.xlane.xlu0 %3015
        %v3017 = vsel %vm241, %v2993, 0.0
        %3018 = vadd.xlane.f32.xlu0 %v3017
        %v3019 = vpop.xlane.xlu0 %3018
        %v3020 = vsel %vm241, %v2995, 0.0
        %3021 = vadd.xlane.f32.xlu0 %v3020
        %v3022 = vpop.xlane.xlu0 %3021
        %v3023 = vsel %vm241, %v2997, 0.0
        %3024 = vadd.xlane.f32.xlu0 %v3023
        %v3025 = vpop.xlane.xlu0 %3024
        %v3026 = vsel %vm241, %v2999, 0.0
        %3027 = vadd.xlane.f32.xlu0 %v3026
        %v3028 = vpop.xlane.xlu0 %3027
        %v3029 = vsel %vm241, %v3001, 0.0
        %3030 = vadd.xlane.f32.xlu0 %v3029
        %v3031 = vpop.xlane.xlu0 %3030
        %v3032 = vsel %vm241, %v3003, 0.0
        %3033 = vadd.xlane.f32.xlu0 %v3032
        %v3034 = vpop.xlane.xlu0 %3033
        %v3035 = vsel %vm241, %v3005, 0.0
        %3036 = vadd.xlane.f32.xlu0 %v3035
        %v3037 = vpop.xlane.xlu0 %3036
        %v3038 = vmul.f32 %v3016, %v395
        %v3039 = vmul.f32 %v3019, %v395
        %v3040 = vmul.f32 %v3022, %v395
        %v3041 = vmul.f32 %v3025, %v395
        %v3042 = vmul.f32 %v3028, %v395
        %v3043 = vmul.f32 %v3031, %v395
        %v3044 = vmul.f32 %v3034, %v395
        %v3045 = vmul.f32 %v3037, %v395
        %v3046 = vadd.f32 %v3038, 1e-05
        %v3047 = vadd.f32 %v3039, 1e-05
        %v3048 = vadd.f32 %v3040, 1e-05
        %v3049 = vadd.f32 %v3041, 1e-05
        %v3050 = vadd.f32 %v3042, 1e-05
        %v3051 = vadd.f32 %v3043, 1e-05
        %v3052 = vadd.f32 %v3044, 1e-05
        %v3053 = vadd.f32 %v3045, 1e-05
        %v3054 = vrsqrt.pop %v3046
        %v3055 = vrsqrt.pop %v3047
        %v3056 = vrsqrt.pop %v3048
        %v3057 = vrsqrt.pop %v3049
        %v3058 = vrsqrt.pop %v3050
        %v3059 = vrsqrt.pop %v3051
        %v3060 = vrsqrt.pop %v3052
        %v3061 = vrsqrt.pop %v3053
        %v3062 = vmul.f32 %v2966, %v3054
        %v3063 = vmul.f32 %v2967, %v3055
        %v3064 = vmul.f32 %v2968, %v3056
        %v3065 = vmul.f32 %v2969, %v3057
        %v3066 = vmul.f32 %v2970, %v3058
        %v3067 = vmul.f32 %v2971, %v3059
        %v3068 = vmul.f32 %v2972, %v3060
        %v3069 = vmul.f32 %v2973, %v3061
        %3070 = vrot.lane.b32.xlu0 %v2600, 32
        %v3071 = vpop.permute.xlu0 %3070
        %3072 = vrot.lane.b32.xlu0 %v2605, 32
        %v3073 = vpop.permute.xlu0 %3072
        %3074 = vrot.lane.b32.xlu0 %v2610, 32
        %v3075 = vpop.permute.xlu0 %3074
        %3076 = vrot.lane.b32.xlu0 %v2615, 32
        %v3077 = vpop.permute.xlu0 %3076
        %3078 = vrot.lane.b32.xlu0 %v2620, 32
        %v3079 = vpop.permute.xlu0 %3078
        %3080 = vrot.lane.b32.xlu0 %v2625, 32
        %v3081 = vpop.permute.xlu0 %3080
        %3082 = vrot.lane.b32.xlu0 %v2630, 32
        %v3083 = vpop.permute.xlu0 %3082
        %3084 = vrot.lane.b32.xlu0 %v2635, 32
        %v3085 = vpop.permute.xlu0 %3084
        %v3094 = vsel %vm241, %v3071, 0.0
        %3095 = vadd.xlane.f32.xlu0 %v3094
        %v3096 = vpop.xlane.xlu0 %3095
        %v3097 = vsel %vm241, %v3073, 0.0
        %3098 = vadd.xlane.f32.xlu0 %v3097
        %v3099 = vpop.xlane.xlu0 %3098
        %v3100 = vsel %vm241, %v3075, 0.0
        %3101 = vadd.xlane.f32.xlu0 %v3100
        %v3102 = vpop.xlane.xlu0 %3101
        %v3103 = vsel %vm241, %v3077, 0.0
        %3104 = vadd.xlane.f32.xlu0 %v3103
        %v3105 = vpop.xlane.xlu0 %3104
        %v3106 = vsel %vm241, %v3079, 0.0
        %3107 = vadd.xlane.f32.xlu0 %v3106
        %v3108 = vpop.xlane.xlu0 %3107
        %v3109 = vsel %vm241, %v3081, 0.0
        %3110 = vadd.xlane.f32.xlu0 %v3109
        %v3111 = vpop.xlane.xlu0 %3110
        %v3112 = vsel %vm241, %v3083, 0.0
        %3113 = vadd.xlane.f32.xlu0 %v3112
        %v3114 = vpop.xlane.xlu0 %3113
        %v3115 = vsel %vm241, %v3085, 0.0
        %3116 = vadd.xlane.f32.xlu0 %v3115
        %v3117 = vpop.xlane.xlu0 %3116
        %v3118 = vmul.f32 %v3096, %v395
        %v3119 = vmul.f32 %v3099, %v395
        %v3120 = vmul.f32 %v3102, %v395
        %v3121 = vmul.f32 %v3105, %v395
        %v3122 = vmul.f32 %v3108, %v395
        %v3123 = vmul.f32 %v3111, %v395
        %v3124 = vmul.f32 %v3114, %v395
        %v3125 = vmul.f32 %v3117, %v395
        %v3126 = vsub.f32 %v2600, %v3118
        %v3127 = vsub.f32 %v2605, %v3119
        %v3128 = vsub.f32 %v2610, %v3120
        %v3129 = vsub.f32 %v2615, %v3121
        %v3130 = vsub.f32 %v2620, %v3122
        %v3131 = vsub.f32 %v2625, %v3123
        %v3132 = vsub.f32 %v2630, %v3124
        %v3133 = vsub.f32 %v2635, %v3125
        %v3134 = vmul.f32 %v3126, %v3126
        %v3135 = vmul.f32 %v3127, %v3127
        %v3136 = vmul.f32 %v3128, %v3128
        %v3137 = vmul.f32 %v3129, %v3129
        %v3138 = vmul.f32 %v3130, %v3130
        %v3139 = vmul.f32 %v3131, %v3131
        %v3140 = vmul.f32 %v3132, %v3132
        %v3141 = vmul.f32 %v3133, %v3133
        %3150 = vrot.lane.b32.xlu0 %v3134, 32
        %v3151 = vpop.permute.xlu0 %3150
        %3152 = vrot.lane.b32.xlu0 %v3135, 32
        %v3153 = vpop.permute.xlu0 %3152
        %3154 = vrot.lane.b32.xlu0 %v3136, 32
        %v3155 = vpop.permute.xlu0 %3154
        %3156 = vrot.lane.b32.xlu0 %v3137, 32
        %v3157 = vpop.permute.xlu0 %3156
        %3158 = vrot.lane.b32.xlu0 %v3138, 32
        %v3159 = vpop.permute.xlu0 %3158
        %3160 = vrot.lane.b32.xlu0 %v3139, 32
        %v3161 = vpop.permute.xlu0 %3160
        %3162 = vrot.lane.b32.xlu0 %v3140, 32
        %v3163 = vpop.permute.xlu0 %3162
        %3164 = vrot.lane.b32.xlu0 %v3141, 32
        %v3165 = vpop.permute.xlu0 %3164
        %v3174 = vsel %vm241, %v3151, 0.0
        %3175 = vadd.xlane.f32.xlu0 %v3174
        %v3176 = vpop.xlane.xlu0 %3175
        %v3177 = vsel %vm241, %v3153, 0.0
        %3178 = vadd.xlane.f32.xlu0 %v3177
        %v3179 = vpop.xlane.xlu0 %3178
        %v3180 = vsel %vm241, %v3155, 0.0
        %3181 = vadd.xlane.f32.xlu0 %v3180
        %v3182 = vpop.xlane.xlu0 %3181
        %v3183 = vsel %vm241, %v3157, 0.0
        %3184 = vadd.xlane.f32.xlu0 %v3183
        %v3185 = vpop.xlane.xlu0 %3184
        %v3186 = vsel %vm241, %v3159, 0.0
        %3187 = vadd.xlane.f32.xlu0 %v3186
        %v3188 = vpop.xlane.xlu0 %3187
        %v3189 = vsel %vm241, %v3161, 0.0
        %3190 = vadd.xlane.f32.xlu0 %v3189
        %v3191 = vpop.xlane.xlu0 %3190
        %v3192 = vsel %vm241, %v3163, 0.0
        %3193 = vadd.xlane.f32.xlu0 %v3192
        %v3194 = vpop.xlane.xlu0 %3193
        %v3195 = vsel %vm241, %v3165, 0.0
        %3196 = vadd.xlane.f32.xlu0 %v3195
        %v3197 = vpop.xlane.xlu0 %3196
        %v3198 = vmul.f32 %v3176, %v395
        %v3199 = vmul.f32 %v3179, %v395
        %v3200 = vmul.f32 %v3182, %v395
        %v3201 = vmul.f32 %v3185, %v395
        %v3202 = vmul.f32 %v3188, %v395
        %v3203 = vmul.f32 %v3191, %v395
        %v3204 = vmul.f32 %v3194, %v395
        %v3205 = vmul.f32 %v3197, %v395
        %v3206 = vadd.f32 %v3198, 1e-05
        %v3207 = vadd.f32 %v3199, 1e-05
        %v3208 = vadd.f32 %v3200, 1e-05
        %v3209 = vadd.f32 %v3201, 1e-05
        %v3210 = vadd.f32 %v3202, 1e-05
        %v3211 = vadd.f32 %v3203, 1e-05
        %v3212 = vadd.f32 %v3204, 1e-05
        %v3213 = vadd.f32 %v3205, 1e-05
        %v3214 = vrsqrt.pop %v3206
        %v3215 = vrsqrt.pop %v3207
        %v3216 = vrsqrt.pop %v3208
        %v3217 = vrsqrt.pop %v3209
        %v3218 = vrsqrt.pop %v3210
        %v3219 = vrsqrt.pop %v3211
        %v3220 = vrsqrt.pop %v3212
        %v3221 = vrsqrt.pop %v3213
        %v3222 = vmul.f32 %v3126, %v3214
        %v3223 = vmul.f32 %v3127, %v3215
        %v3224 = vmul.f32 %v3128, %v3216
        %v3225 = vmul.f32 %v3129, %v3217
        %v3226 = vmul.f32 %v3130, %v3218
        %v3227 = vmul.f32 %v3131, %v3219
        %v3228 = vmul.f32 %v3132, %v3220
        %v3229 = vmul.f32 %v3133, %v3221
        %v3230 = vsel %vm241, %v2734, %v2902
        %v3231 = vsel %vm241, %v2735, %v2903
        %v3232 = vsel %vm241, %v2736, %v2904
        %v3233 = vsel %vm241, %v2737, %v2905
        %v3234 = vsel %vm241, %v2738, %v2906
        %v3235 = vsel %vm241, %v2739, %v2907
        %v3236 = vsel %vm241, %v2740, %v2908
        %v3237 = vsel %vm241, %v2741, %v2909
        %v3238 = vsel %vm972, %v3230, %v3062
        %v3239 = vsel %vm972, %v3231, %v3063
        %v3240 = vsel %vm972, %v3232, %v3064
        %v3241 = vsel %vm972, %v3233, %v3065
        %v3242 = vsel %vm972, %v3234, %v3066
        %v3243 = vsel %vm972, %v3235, %v3067
        %v3244 = vsel %vm972, %v3236, %v3068
        %v3245 = vsel %vm972, %v3237, %v3069
        %v3246 = vsel %vm981, %v3238, %v3222
        %v3247 = vsel %vm981, %v3239, %v3223
        %v3248 = vsel %vm981, %v3240, %v3224
        %v3249 = vsel %vm981, %v3241, %v3225
        %v3250 = vsel %vm981, %v3242, %v3226
        %v3251 = vsel %vm981, %v3243, %v3227
        %v3252 = vsel %vm981, %v3244, %v3228
        %v3253 = vsel %vm981, %v3245, %v3229
        %v3254 = vmul.f32 %v3246, %v994
        %v3255 = vmul.f32 %v3247, %v994
        %v3256 = vmul.f32 %v3248, %v994
        %v3257 = vmul.f32 %v3249, %v994
        %v3258 = vmul.f32 %v3250, %v994
        %v3259 = vmul.f32 %v3251, %v994
        %v3260 = vmul.f32 %v3252, %v994
        %v3261 = vmul.f32 %v3253, %v994
        %v3262 = vadd.f32 %v3254, %v1008
        %v3263 = vadd.f32 %v3255, %v1008
        %v3264 = vadd.f32 %v3256, %v1008
        %v3265 = vadd.f32 %v3257, %v1008
        %v3266 = vadd.f32 %v3258, %v1008
        %v3267 = vadd.f32 %v3259, %v1008
        %v3268 = vadd.f32 %v3260, %v1008
        %v3269 = vadd.f32 %v3261, %v1008
        %s3270 = scalar_lea.vmem %s215, 24 [#allocation2]
        %3271 = vst [vmem:[%s3270] sm:$0xff] %v3262
        %3272 = vst [vmem:[%s3270 + $0x20] sm:$0xff] %v3263
        %3273 = vst [vmem:[%s3270 + $0x40] sm:$0xff] %v3264
        %3274 = vst [vmem:[%s3270 + $0x60] sm:$0xff] %v3265
        %3275 = vst [vmem:[%s3270 + $0x80] sm:$0xff] %v3266
        %3276 = vst [vmem:[%s3270 + $0xa0] sm:$0xff] %v3267
        %3277 = vst [vmem:[%s3270 + $0xc0] sm:$0xff] %v3268
        %3278 = vst [vmem:[%s3270 + $0xe0] sm:$0xff] %v3269
        %s3279 = sand.u32 %s131, 1
        %s3280 = scalar_lea.sflag [#allocation3], %s3279
        %s3281 = sand.u32 %s131, 1
        %s3282 = smul.addr %s3281, 256
        %s3283 = scalar_lea.vmem [#allocation2], %s3282
        // Predicated region
        $region37: #{tpu_custom_call.1} parent=35 // pred_check
          %p3284 = pneg %p141
        $region38: #{tpu_custom_call.1} parent=35 // pred_check_branch
          %3286 = sbr.rel (%p3284) target = $region40
        $region39: #{tpu_custom_call.1} parent=35 // pred_region
          %s3287 = smul.u32 8, %s23
          %s3289 = ssub.s32 4096, 4096
          %3290 = vsyncadd %s3280, %s3289
          %s3291 = smul.addr %s3287, 4
          %s3292 = smul.addr %s22, 32
          %s3293 = sadd.s32 %s3291, %s3292
          %s3294 = smul.addr %s3293, 128
          %s3295 = scalar_lea.hbm %s4, %s3294
          %s3296 = sshll.u32 %s3283, 4
          %s3297 = int_to_ptr.vmem [resolvable:$true] %s3296
          %3302 = dma.vmem_to_hbm [thread:$0]  %s3297, 4096, %s3295, %s3280, 128, 128, 8
        $region40: #{tpu_custom_call.1} parent=35 // pred_fallthru
          _
      $region36: #{tpu_custom_call.1} parent=5 // pred_fallthru
        _
      %p3303 = scmp.le.s32.totalorder 2, %s13
      // Predicated region
      $region41: #{tpu_custom_call.1} parent=5 // pred_check
        %p3304 = pneg %p3303
      $region42: #{tpu_custom_call.1} parent=5 // pred_check_branch
        %3306 = sbr.rel (%p3304) target = $region44
      $region43: #{tpu_custom_call.1} parent=5 // pred_region
        %s3307 = ssub.s32 %s13, 2
        // Predicated region
        $region45: #{tpu_custom_call.1} parent=43 // pred_check
          %p3308 = pneg %p147
        $region46: #{tpu_custom_call.1} parent=43 // pred_check_branch
          %3310 = sbr.rel (%p3308) target = $region48
        $region47: #{tpu_custom_call.1} parent=43 // pred_region
          %s3311 = sand.u32 %s132, 1
          %s3312 = scalar_lea.sflag [#allocation3], %s3311
          %s3313 = sand.u32 %s132, 1
          %s3314 = smul.addr %s3313, 256
          %s3315 = scalar_lea.vmem [#allocation2], %s3314
          %3316 = dma.done %s3312, 4096
        $region48: #{tpu_custom_call.1} parent=43 // pred_fallthru
          _
      $region44: #{tpu_custom_call.1} parent=5 // pred_fallthru
        _
    $region6: #{tpu_custom_call.1} parent=1 // loop_footer
      %s17 = sadd.s32 1, %s13
    $region7: #{tpu_custom_call.1} parent=1 // loop_footer_branch
      %12 = sbr.rel target = $region3
    $region8: #{tpu_custom_call.1} parent=1 // loop_exit
      _
    %3317 = vsyncpa [#allocation3], 1
    %s3318 = scalar_lea.sflag [#allocation3], 1
    %3319 = vsyncpa %s3318, 1

</llo_original>
